<compile_context>
chip_gen: v7x
topology: tpu7x:2x2x1
jax: 0.10.0
libtpu: 0.0.40
codegen_flags: <defaults>
</compile_context>

<pallas_src>
import jax
import jax.numpy as jnp
from jax.experimental import pallas as pl
from jax.experimental.pallas import tpu as pltpu

# TODO(synk): self.convIN exists in __init__ but is not called in forward(); omitted on purpose.


def _acnet_kernel(x_ref, w1_ref, b1_ref, w2_ref, b2_ref, wh_ref, bh_ref,
                  wv2_ref, bv2_ref, wl1_ref, bl1_ref, wl2_ref, bl2_ref,
                  pol_ref, val_ref):
    N, H, W, C = x_ref.shape
    M = N * H * W
    HW = H * W
    PW = 8                      # horizontal zero-pad width; multiple of the f32 sublane tile

    def im2col(a, k):
        """(N,H,W,C) activation -> (N*H*W, k*k*C) SAME-padded patch matrix (stays in VMEM)."""
        p = (k - 1) // 2
        zw = jnp.zeros((N, H, PW, C), a.dtype)
        ap = jnp.concatenate([zw, a, zw], axis=2)            # pad W: tile-aligned pieces
        zh = jnp.zeros((N, p, W + 2 * PW, C), a.dtype)
        ap = jnp.concatenate([zh, ap, zh], axis=1)           # pad H: untiled axis
        cols = []
        for ky in range(k):
            for kx in range(k):
                x0 = PW - p + kx
                cols.append(ap[:, ky:ky + H, x0:x0 + W, :].reshape(M, C))
        return jnp.concatenate(cols, axis=-1)                # (M, k*k*C)

    def conv_relu(a, k, w_ref_, b_ref_):
        patches = im2col(a, k).astype(jnp.bfloat16)          # bf16 MXU operands
        y = jnp.dot(patches, w_ref_[...], preferred_element_type=jnp.float32)
        return jnp.maximum(y + b_ref_[...], 0.0).reshape(N, H, W, C)   # f32 activations

    # ---- trunk: conv1 (5x5) then the SHARED-weight conv2 (3x3) applied 7x ----
    a = x_ref[...]
    a = conv_relu(a, 5, w1_ref, b1_ref)
    for _ in range(7):
        a = conv_relu(a, 3, w2_ref, b2_ref)

    # ---- fused heads: one im2col + one matmul; cols [0:C)=value conv1, col C=policy ----
    p3 = im2col(a, 3).astype(jnp.bfloat16)                   # (M, 9*C)
    heads = jnp.dot(p3, wh_ref[...], preferred_element_type=jnp.float32) + bh_ref[...]
    v1 = jnp.maximum(heads[:, :C], 0.0)                      # value conv1 + ReLU, (M, C)
    logits = heads[:, C:C + 1]                               # raw policy logits,  (M, 1)

    # value conv2: 1x1, C -> 1, + ReLU
    v2 = jnp.dot(v1, wv2_ref[...], preferred_element_type=jnp.float32) + bv2_ref[...]
    v2 = jnp.maximum(v2, 0.0)                                # (M, 1)

    wl1 = wl1_ref[...]
    bl1 = bl1_ref[...]
    wl2 = wl2_ref[...]
    bl2 = bl2_ref[...]
    for n in range(N):                                       # N is tiny and static
        # policy head: softmax over the flattened board of sample n
        l_n = logits[n * HW:(n + 1) * HW, :]                 # (HW, 1), aligned slice
        m_n = jnp.max(l_n, axis=0, keepdims=True)
        e_n = jnp.exp(l_n - m_n)
        pol_ref[n] = e_n / jnp.sum(e_n, axis=0, keepdims=True)

        # value head: Flatten -> Linear(HW,256)+ReLU -> Linear(256,1)+Tanh
        v_n = v2[n * HW:(n + 1) * HW, :]                     # (HW, 1)
        h_n = jnp.sum(v_n * wl1, axis=0, keepdims=True) + bl1        # (1, 256)
        h_n = jnp.maximum(h_n, 0.0)
        o_n = jnp.dot(h_n, wl2, preferred_element_type=jnp.float32) + bl2
        val_ref[n] = jnp.tanh(o_n)                           # (1, 1)


def acnet_forward(x_nchw, params):
    """ACNet forward. x is NCHW (PyTorch layout). Returns (policy (N,H*W), value (N,1))."""
    x = jnp.transpose(x_nchw, (0, 2, 3, 1))                  # NHWC: C=128 maps onto lanes
    N, H, W, C = x.shape
    HW = H * W

    # HWIO conv weights flattened to (K*K*Cin, Cout); MXU operands pre-cast to bf16.
    w1 = params["w_c1"].reshape(-1, C).astype(jnp.bfloat16)          # (25*C, C)
    w2 = params["w_c2"].reshape(-1, C).astype(jnp.bfloat16)          # (9*C, C)

    # Merge value-conv1 (Cout=C) and policy-conv (Cout=1) into one lane-dense matmul.
    kk = 9 * C
    wh = jnp.zeros((kk, 2 * C), jnp.float32)
    wh = wh.at[:, :C].set(params["w_v1"].reshape(kk, C))
    wh = wh.at[:, C:C + 1].set(params["w_p"].reshape(kk, 1))
    wh = wh.astype(jnp.bfloat16)
    bh = jnp.zeros((1, 2 * C), jnp.float32)
    bh = bh.at[:, :C].set(params["b_v1"])
    bh = bh.at[:, C:C + 1].set(params["b_p"])

    wv2 = params["w_v2"].reshape(C, 1)                               # 1x1 conv as (C, 1)

    pol, val = pl.pallas_call(
        _acnet_kernel,
        out_shape=(jax.ShapeDtypeStruct((N, HW, 1), jnp.float32),
                   jax.ShapeDtypeStruct((N, 1, 1), jnp.float32)),
        compiler_params=pltpu.CompilerParams(vmem_limit_bytes=32 * 1024 * 1024),
    )(x, w1, params["b_c1"], w2, params["b_c2"], wh, bh,
      wv2, params["b_v2"], params["w_l1"], params["b_l1"],
      params["w_l2"], params["b_l2"])

    return pol.reshape(N, HW), val.reshape(N, 1)


def init_conv(key, K, cin, cout):
    k1, k2 = jax.random.split(key)
    w = jax.random.normal(k1, (K, K, cin, cout), jnp.float32) * ((K * K * cin) ** -0.5)
    b = jax.random.normal(k2, (1, cout), jnp.float32) * 0.01
    return w, b


if __name__ == "__main__":
    key = jax.random.PRNGKey(0)
    keys = jax.random.split(key, 12)

    # forward() starts at conv1, which expects 128 input channels.
    N, C, H, W = 2, 128, 8, 8
    num_points = H * W                                               # encoder.num_points

    x_nchw = jax.random.normal(keys[0], (N, C, H, W), jnp.float32)

    params = {}
    params["w_c1"], params["b_c1"] = init_conv(keys[1], 5, 128, 128)  # conv1
    params["w_c2"], params["b_c2"] = init_conv(keys[2], 3, 128, 128)  # conv2 (shared)
    params["w_p"], params["b_p"] = init_conv(keys[3], 3, 128, 1)      # policy conv
    params["w_v1"], params["b_v1"] = init_conv(keys[4], 3, 128, 128)  # value conv 3x3
    params["w_v2"], params["b_v2"] = init_conv(keys[5], 1, 128, 1)    # value conv 1x1
    params["w_l1"] = jax.random.normal(keys[6], (num_points, 256), jnp.float32) * (num_points ** -0.5)
    params["b_l1"] = jax.random.normal(keys[7], (1, 256), jnp.float32) * 0.01
    params["w_l2"] = jax.random.normal(keys[8], (256, 1), jnp.float32) * (256 ** -0.5)
    params["b_l2"] = jax.random.normal(keys[9], (1, 1), jnp.float32) * 0.01

    fwd = jax.jit(acnet_forward)
    policy_out, value_out = fwd(x_nchw, params)
    jax.block_until_ready((policy_out, value_out))

    assert policy_out.shape == (N, num_points)
    assert value_out.shape == (N, 1)
    print("KERNEL_OK")
</pallas_src>

<mosaic_0001>
module attributes {stable_mosaic.version = 11 : i64} {
  func.func @_acnet_kernel(%arg0: memref<2x8x8x128xf32, #tpu.memory_space<vmem>>, %arg1: memref<3200x128xbf16, #tpu.memory_space<vmem>>, %arg2: memref<1x128xf32, #tpu.memory_space<vmem>>, %arg3: memref<1152x128xbf16, #tpu.memory_space<vmem>>, %arg4: memref<1x128xf32, #tpu.memory_space<vmem>>, %arg5: memref<1152x256xbf16, #tpu.memory_space<vmem>>, %arg6: memref<1x256xf32, #tpu.memory_space<vmem>>, %arg7: memref<128x1xf32, #tpu.memory_space<vmem>>, %arg8: memref<1x1xf32, #tpu.memory_space<vmem>>, %arg9: memref<64x256xf32, #tpu.memory_space<vmem>>, %arg10: memref<1x256xf32, #tpu.memory_space<vmem>>, %arg11: memref<256x1xf32, #tpu.memory_space<vmem>>, %arg12: memref<1x1xf32, #tpu.memory_space<vmem>>, %arg13: memref<2x64x1xf32, #tpu.memory_space<vmem>>, %arg14: memref<2x1x1xf32, #tpu.memory_space<vmem>>) attributes {dimension_semantics = [], scalar_prefetch = 0 : i64, scratch_operands = 0 : i64, tpu.core_type = #tpu.core_type<tc>} {
    %c0 = arith.constant 0 : index
    %c0_0 = arith.constant 0 : index
    %c0_1 = arith.constant 0 : index
    %c0_2 = arith.constant 0 : index
    %0 = vector.load %arg0[%c0, %c0_0, %c0_1, %c0_2] : memref<2x8x8x128xf32, #tpu.memory_space<vmem>>, vector<2x8x8x128xf32>
    %cst = arith.constant 0.000000e+00 : f32
    %1 = vector.broadcast %cst : f32 to vector<2x8x8x128xf32>
    %2 = tpu.concatenate %1, %0, %1 in 2 : vector<2x8x8x128xf32>, vector<2x8x8x128xf32>, vector<2x8x8x128xf32> -> vector<2x8x24x128xf32>
    %cst_3 = arith.constant 0.000000e+00 : f32
    %3 = vector.broadcast %cst_3 : f32 to vector<2x2x24x128xf32>
    %4 = tpu.concatenate %3, %2, %3 in 1 : vector<2x2x24x128xf32>, vector<2x8x24x128xf32>, vector<2x2x24x128xf32> -> vector<2x12x24x128xf32>
    %5 = vector.extract_strided_slice %4 {offsets = [0, 0, 6, 0], sizes = [2, 8, 8, 128], strides = [1, 1, 1, 1]} : vector<2x12x24x128xf32> to vector<2x8x8x128xf32>
    %6 = vector.shape_cast %5 : vector<2x8x8x128xf32> to vector<128x128xf32>
    %7 = vector.extract_strided_slice %4 {offsets = [0, 0, 7, 0], sizes = [2, 8, 8, 128], strides = [1, 1, 1, 1]} : vector<2x12x24x128xf32> to vector<2x8x8x128xf32>
    %8 = vector.shape_cast %7 : vector<2x8x8x128xf32> to vector<128x128xf32>
    %9 = vector.extract_strided_slice %4 {offsets = [0, 0, 8, 0], sizes = [2, 8, 8, 128], strides = [1, 1, 1, 1]} : vector<2x12x24x128xf32> to vector<2x8x8x128xf32>
    %10 = vector.shape_cast %9 : vector<2x8x8x128xf32> to vector<128x128xf32>
    %11 = vector.extract_strided_slice %4 {offsets = [0, 0, 9, 0], sizes = [2, 8, 8, 128], strides = [1, 1, 1, 1]} : vector<2x12x24x128xf32> to vector<2x8x8x128xf32>
    %12 = vector.shape_cast %11 : vector<2x8x8x128xf32> to vector<128x128xf32>
    %13 = vector.extract_strided_slice %4 {offsets = [0, 0, 10, 0], sizes = [2, 8, 8, 128], strides = [1, 1, 1, 1]} : vector<2x12x24x128xf32> to vector<2x8x8x128xf32>
    %14 = vector.shape_cast %13 : vector<2x8x8x128xf32> to vector<128x128xf32>
    %15 = vector.extract_strided_slice %4 {offsets = [0, 1, 6, 0], sizes = [2, 8, 8, 128], strides = [1, 1, 1, 1]} : vector<2x12x24x128xf32> to vector<2x8x8x128xf32>
    %16 = vector.shape_cast %15 : vector<2x8x8x128xf32> to vector<128x128xf32>
    %17 = vector.extract_strided_slice %4 {offsets = [0, 1, 7, 0], sizes = [2, 8, 8, 128], strides = [1, 1, 1, 1]} : vector<2x12x24x128xf32> to vector<2x8x8x128xf32>
    %18 = vector.shape_cast %17 : vector<2x8x8x128xf32> to vector<128x128xf32>
    %19 = vector.extract_strided_slice %4 {offsets = [0, 1, 8, 0], sizes = [2, 8, 8, 128], strides = [1, 1, 1, 1]} : vector<2x12x24x128xf32> to vector<2x8x8x128xf32>
    %20 = vector.shape_cast %19 : vector<2x8x8x128xf32> to vector<128x128xf32>
    %21 = vector.extract_strided_slice %4 {offsets = [0, 1, 9, 0], sizes = [2, 8, 8, 128], strides = [1, 1, 1, 1]} : vector<2x12x24x128xf32> to vector<2x8x8x128xf32>
    %22 = vector.shape_cast %21 : vector<2x8x8x128xf32> to vector<128x128xf32>
    %23 = vector.extract_strided_slice %4 {offsets = [0, 1, 10, 0], sizes = [2, 8, 8, 128], strides = [1, 1, 1, 1]} : vector<2x12x24x128xf32> to vector<2x8x8x128xf32>
    %24 = vector.shape_cast %23 : vector<2x8x8x128xf32> to vector<128x128xf32>
    %25 = vector.extract_strided_slice %4 {offsets = [0, 2, 6, 0], sizes = [2, 8, 8, 128], strides = [1, 1, 1, 1]} : vector<2x12x24x128xf32> to vector<2x8x8x128xf32>
    %26 = vector.shape_cast %25 : vector<2x8x8x128xf32> to vector<128x128xf32>
    %27 = vector.extract_strided_slice %4 {offsets = [0, 2, 7, 0], sizes = [2, 8, 8, 128], strides = [1, 1, 1, 1]} : vector<2x12x24x128xf32> to vector<2x8x8x128xf32>
    %28 = vector.shape_cast %27 : vector<2x8x8x128xf32> to vector<128x128xf32>
    %29 = vector.extract_strided_slice %4 {offsets = [0, 2, 8, 0], sizes = [2, 8, 8, 128], strides = [1, 1, 1, 1]} : vector<2x12x24x128xf32> to vector<2x8x8x128xf32>
    %30 = vector.shape_cast %29 : vector<2x8x8x128xf32> to vector<128x128xf32>
    %31 = vector.extract_strided_slice %4 {offsets = [0, 2, 9, 0], sizes = [2, 8, 8, 128], strides = [1, 1, 1, 1]} : vector<2x12x24x128xf32> to vector<2x8x8x128xf32>
    %32 = vector.shape_cast %31 : vector<2x8x8x128xf32> to vector<128x128xf32>
    %33 = vector.extract_strided_slice %4 {offsets = [0, 2, 10, 0], sizes = [2, 8, 8, 128], strides = [1, 1, 1, 1]} : vector<2x12x24x128xf32> to vector<2x8x8x128xf32>
    %34 = vector.shape_cast %33 : vector<2x8x8x128xf32> to vector<128x128xf32>
    %35 = vector.extract_strided_slice %4 {offsets = [0, 3, 6, 0], sizes = [2, 8, 8, 128], strides = [1, 1, 1, 1]} : vector<2x12x24x128xf32> to vector<2x8x8x128xf32>
    %36 = vector.shape_cast %35 : vector<2x8x8x128xf32> to vector<128x128xf32>
    %37 = vector.extract_strided_slice %4 {offsets = [0, 3, 7, 0], sizes = [2, 8, 8, 128], strides = [1, 1, 1, 1]} : vector<2x12x24x128xf32> to vector<2x8x8x128xf32>
    %38 = vector.shape_cast %37 : vector<2x8x8x128xf32> to vector<128x128xf32>
    %39 = vector.extract_strided_slice %4 {offsets = [0, 3, 8, 0], sizes = [2, 8, 8, 128], strides = [1, 1, 1, 1]} : vector<2x12x24x128xf32> to vector<2x8x8x128xf32>
    %40 = vector.shape_cast %39 : vector<2x8x8x128xf32> to vector<128x128xf32>
    %41 = vector.extract_strided_slice %4 {offsets = [0, 3, 9, 0], sizes = [2, 8, 8, 128], strides = [1, 1, 1, 1]} : vector<2x12x24x128xf32> to vector<2x8x8x128xf32>
    %42 = vector.shape_cast %41 : vector<2x8x8x128xf32> to vector<128x128xf32>
    %43 = vector.extract_strided_slice %4 {offsets = [0, 3, 10, 0], sizes = [2, 8, 8, 128], strides = [1, 1, 1, 1]} : vector<2x12x24x128xf32> to vector<2x8x8x128xf32>
    %44 = vector.shape_cast %43 : vector<2x8x8x128xf32> to vector<128x128xf32>
    %45 = vector.extract_strided_slice %4 {offsets = [0, 4, 6, 0], sizes = [2, 8, 8, 128], strides = [1, 1, 1, 1]} : vector<2x12x24x128xf32> to vector<2x8x8x128xf32>
    %46 = vector.shape_cast %45 : vector<2x8x8x128xf32> to vector<128x128xf32>
    %47 = vector.extract_strided_slice %4 {offsets = [0, 4, 7, 0], sizes = [2, 8, 8, 128], strides = [1, 1, 1, 1]} : vector<2x12x24x128xf32> to vector<2x8x8x128xf32>
    %48 = vector.shape_cast %47 : vector<2x8x8x128xf32> to vector<128x128xf32>
    %49 = vector.extract_strided_slice %4 {offsets = [0, 4, 8, 0], sizes = [2, 8, 8, 128], strides = [1, 1, 1, 1]} : vector<2x12x24x128xf32> to vector<2x8x8x128xf32>
    %50 = vector.shape_cast %49 : vector<2x8x8x128xf32> to vector<128x128xf32>
    %51 = vector.extract_strided_slice %4 {offsets = [0, 4, 9, 0], sizes = [2, 8, 8, 128], strides = [1, 1, 1, 1]} : vector<2x12x24x128xf32> to vector<2x8x8x128xf32>
    %52 = vector.shape_cast %51 : vector<2x8x8x128xf32> to vector<128x128xf32>
    %53 = vector.extract_strided_slice %4 {offsets = [0, 4, 10, 0], sizes = [2, 8, 8, 128], strides = [1, 1, 1, 1]} : vector<2x12x24x128xf32> to vector<2x8x8x128xf32>
    %54 = vector.shape_cast %53 : vector<2x8x8x128xf32> to vector<128x128xf32>
    %55 = tpu.concatenate %6, %8, %10, %12, %14, %16, %18, %20, %22, %24, %26, %28, %30, %32, %34, %36 in 1 : vector<128x128xf32>, vector<128x128xf32>, vector<128x128xf32>, vector<128x128xf32>, vector<128x128xf32>, vector<128x128xf32>, vector<128x128xf32>, vector<128x128xf32>, vector<128x128xf32>, vector<128x128xf32>, vector<128x128xf32>, vector<128x128xf32>, vector<128x128xf32>, vector<128x128xf32>, vector<128x128xf32>, vector<128x128xf32> -> vector<128x2048xf32>
    %56 = tpu.concatenate %38, %40, %42, %44, %46, %48, %50, %52, %54 in 1 : vector<128x128xf32>, vector<128x128xf32>, vector<128x128xf32>, vector<128x128xf32>, vector<128x128xf32>, vector<128x128xf32>, vector<128x128xf32>, vector<128x128xf32>, vector<128x128xf32> -> vector<128x1152xf32>
    %57 = tpu.concatenate %55, %56 in 1 : vector<128x2048xf32>, vector<128x1152xf32> -> vector<128x3200xf32>
    %58 = arith.truncf %57 : vector<128x3200xf32> to vector<128x3200xbf16>
    %c0_4 = arith.constant 0 : index
    %c0_5 = arith.constant 0 : index
    %59 = vector.load %arg1[%c0_4, %c0_5] : memref<3200x128xbf16, #tpu.memory_space<vmem>>, vector<3200x128xbf16>
    %cst_6 = arith.constant dense<0.000000e+00> : vector<128x128xf32>
    %60 = tpu.matmul %58, %59, %cst_6 {dimension_numbers = #tpu.dot_dimension_numbers<[1], [0], [0], [1], [0, 0, 1, 1], [], []>} : vector<128x3200xbf16>, vector<3200x128xbf16>, vector<128x128xf32> -> vector<128x128xf32>
    %c0_7 = arith.constant 0 : index
    %c0_8 = arith.constant 0 : index
    %61 = vector.load %arg2[%c0_7, %c0_8] : memref<1x128xf32, #tpu.memory_space<vmem>>, vector<1x128xf32>
    %62 = vector.broadcast %61 : vector<1x128xf32> to vector<128x128xf32>
    %63 = arith.addf %60, %62 : vector<128x128xf32>
    %cst_9 = arith.constant 0.000000e+00 : f32
    %64 = vector.broadcast %cst_9 : f32 to vector<128x128xf32>
    %65 = arith.maximumf %63, %64 : vector<128x128xf32>
    %66 = vector.shape_cast %65 : vector<128x128xf32> to vector<2x8x8x128xf32>
    %cst_10 = arith.constant 0.000000e+00 : f32
    %67 = vector.broadcast %cst_10 : f32 to vector<2x8x8x128xf32>
    %68 = tpu.concatenate %67, %66, %67 in 2 : vector<2x8x8x128xf32>, vector<2x8x8x128xf32>, vector<2x8x8x128xf32> -> vector<2x8x24x128xf32>
    %cst_11 = arith.constant 0.000000e+00 : f32
    %69 = vector.broadcast %cst_11 : f32 to vector<2x1x24x128xf32>
    %70 = tpu.concatenate %69, %68, %69 in 1 : vector<2x1x24x128xf32>, vector<2x8x24x128xf32>, vector<2x1x24x128xf32> -> vector<2x10x24x128xf32>
    %71 = vector.extract_strided_slice %70 {offsets = [0, 0, 7, 0], sizes = [2, 8, 8, 128], strides = [1, 1, 1, 1]} : vector<2x10x24x128xf32> to vector<2x8x8x128xf32>
    %72 = vector.shape_cast %71 : vector<2x8x8x128xf32> to vector<128x128xf32>
    %73 = vector.extract_strided_slice %70 {offsets = [0, 0, 8, 0], sizes = [2, 8, 8, 128], strides = [1, 1, 1, 1]} : vector<2x10x24x128xf32> to vector<2x8x8x128xf32>
    %74 = vector.shape_cast %73 : vector<2x8x8x128xf32> to vector<128x128xf32>
    %75 = vector.extract_strided_slice %70 {offsets = [0, 0, 9, 0], sizes = [2, 8, 8, 128], strides = [1, 1, 1, 1]} : vector<2x10x24x128xf32> to vector<2x8x8x128xf32>
    %76 = vector.shape_cast %75 : vector<2x8x8x128xf32> to vector<128x128xf32>
    %77 = vector.extract_strided_slice %70 {offsets = [0, 1, 7, 0], sizes = [2, 8, 8, 128], strides = [1, 1, 1, 1]} : vector<2x10x24x128xf32> to vector<2x8x8x128xf32>
    %78 = vector.shape_cast %77 : vector<2x8x8x128xf32> to vector<128x128xf32>
    %79 = vector.extract_strided_slice %70 {offsets = [0, 1, 8, 0], sizes = [2, 8, 8, 128], strides = [1, 1, 1, 1]} : vector<2x10x24x128xf32> to vector<2x8x8x128xf32>
    %80 = vector.shape_cast %79 : vector<2x8x8x128xf32> to vector<128x128xf32>
    %81 = vector.extract_strided_slice %70 {offsets = [0, 1, 9, 0], sizes = [2, 8, 8, 128], strides = [1, 1, 1, 1]} : vector<2x10x24x128xf32> to vector<2x8x8x128xf32>
    %82 = vector.shape_cast %81 : vector<2x8x8x128xf32> to vector<128x128xf32>
    %83 = vector.extract_strided_slice %70 {offsets = [0, 2, 7, 0], sizes = [2, 8, 8, 128], strides = [1, 1, 1, 1]} : vector<2x10x24x128xf32> to vector<2x8x8x128xf32>
    %84 = vector.shape_cast %83 : vector<2x8x8x128xf32> to vector<128x128xf32>
    %85 = vector.extract_strided_slice %70 {offsets = [0, 2, 8, 0], sizes = [2, 8, 8, 128], strides = [1, 1, 1, 1]} : vector<2x10x24x128xf32> to vector<2x8x8x128xf32>
    %86 = vector.shape_cast %85 : vector<2x8x8x128xf32> to vector<128x128xf32>
    %87 = vector.extract_strided_slice %70 {offsets = [0, 2, 9, 0], sizes = [2, 8, 8, 128], strides = [1, 1, 1, 1]} : vector<2x10x24x128xf32> to vector<2x8x8x128xf32>
    %88 = vector.shape_cast %87 : vector<2x8x8x128xf32> to vector<128x128xf32>
    %89 = tpu.concatenate %72, %74, %76, %78, %80, %82, %84, %86, %88 in 1 : vector<128x128xf32>, vector<128x128xf32>, vector<128x128xf32>, vector<128x128xf32>, vector<128x128xf32>, vector<128x128xf32>, vector<128x128xf32>, vector<128x128xf32>, vector<128x128xf32> -> vector<128x1152xf32>
    %90 = arith.truncf %89 : vector<128x1152xf32> to vector<128x1152xbf16>
    %c0_12 = arith.constant 0 : index
    %c0_13 = arith.constant 0 : index
    %91 = vector.load %arg3[%c0_12, %c0_13] : memref<1152x128xbf16, #tpu.memory_space<vmem>>, vector<1152x128xbf16>
    %cst_14 = arith.constant dense<0.000000e+00> : vector<128x128xf32>
    %92 = tpu.matmul %90, %91, %cst_14 {dimension_numbers = #tpu.dot_dimension_numbers<[1], [0], [0], [1], [0, 0, 1, 1], [], []>} : vector<128x1152xbf16>, vector<1152x128xbf16>, vector<128x128xf32> -> vector<128x128xf32>
    %c0_15 = arith.constant 0 : index
    %c0_16 = arith.constant 0 : index
    %93 = vector.load %arg4[%c0_15, %c0_16] : memref<1x128xf32, #tpu.memory_space<vmem>>, vector<1x128xf32>
    %94 = vector.broadcast %93 : vector<1x128xf32> to vector<128x128xf32>
    %95 = arith.addf %92, %94 : vector<128x128xf32>
    %cst_17 = arith.constant 0.000000e+00 : f32
    %96 = vector.broadcast %cst_17 : f32 to vector<128x128xf32>
    %97 = arith.maximumf %95, %96 : vector<128x128xf32>
    %98 = vector.shape_cast %97 : vector<128x128xf32> to vector<2x8x8x128xf32>
    %cst_18 = arith.constant 0.000000e+00 : f32
    %99 = vector.broadcast %cst_18 : f32 to vector<2x8x8x128xf32>
    %100 = tpu.concatenate %99, %98, %99 in 2 : vector<2x8x8x128xf32>, vector<2x8x8x128xf32>, vector<2x8x8x128xf32> -> vector<2x8x24x128xf32>
    %cst_19 = arith.constant 0.000000e+00 : f32
    %101 = vector.broadcast %cst_19 : f32 to vector<2x1x24x128xf32>
    %102 = tpu.concatenate %101, %100, %101 in 1 : vector<2x1x24x128xf32>, vector<2x8x24x128xf32>, vector<2x1x24x128xf32> -> vector<2x10x24x128xf32>
    %103 = vector.extract_strided_slice %102 {offsets = [0, 0, 7, 0], sizes = [2, 8, 8, 128], strides = [1, 1, 1, 1]} : vector<2x10x24x128xf32> to vector<2x8x8x128xf32>
    %104 = vector.shape_cast %103 : vector<2x8x8x128xf32> to vector<128x128xf32>
    %105 = vector.extract_strided_slice %102 {offsets = [0, 0, 8, 0], sizes = [2, 8, 8, 128], strides = [1, 1, 1, 1]} : vector<2x10x24x128xf32> to vector<2x8x8x128xf32>
    %106 = vector.shape_cast %105 : vector<2x8x8x128xf32> to vector<128x128xf32>
    %107 = vector.extract_strided_slice %102 {offsets = [0, 0, 9, 0], sizes = [2, 8, 8, 128], strides = [1, 1, 1, 1]} : vector<2x10x24x128xf32> to vector<2x8x8x128xf32>
    %108 = vector.shape_cast %107 : vector<2x8x8x128xf32> to vector<128x128xf32>
    %109 = vector.extract_strided_slice %102 {offsets = [0, 1, 7, 0], sizes = [2, 8, 8, 128], strides = [1, 1, 1, 1]} : vector<2x10x24x128xf32> to vector<2x8x8x128xf32>
    %110 = vector.shape_cast %109 : vector<2x8x8x128xf32> to vector<128x128xf32>
    %111 = vector.extract_strided_slice %102 {offsets = [0, 1, 8, 0], sizes = [2, 8, 8, 128], strides = [1, 1, 1, 1]} : vector<2x10x24x128xf32> to vector<2x8x8x128xf32>
    %112 = vector.shape_cast %111 : vector<2x8x8x128xf32> to vector<128x128xf32>
    %113 = vector.extract_strided_slice %102 {offsets = [0, 1, 9, 0], sizes = [2, 8, 8, 128], strides = [1, 1, 1, 1]} : vector<2x10x24x128xf32> to vector<2x8x8x128xf32>
    %114 = vector.shape_cast %113 : vector<2x8x8x128xf32> to vector<128x128xf32>
    %115 = vector.extract_strided_slice %102 {offsets = [0, 2, 7, 0], sizes = [2, 8, 8, 128], strides = [1, 1, 1, 1]} : vector<2x10x24x128xf32> to vector<2x8x8x128xf32>
    %116 = vector.shape_cast %115 : vector<2x8x8x128xf32> to vector<128x128xf32>
    %117 = vector.extract_strided_slice %102 {offsets = [0, 2, 8, 0], sizes = [2, 8, 8, 128], strides = [1, 1, 1, 1]} : vector<2x10x24x128xf32> to vector<2x8x8x128xf32>
    %118 = vector.shape_cast %117 : vector<2x8x8x128xf32> to vector<128x128xf32>
    %119 = vector.extract_strided_slice %102 {offsets = [0, 2, 9, 0], sizes = [2, 8, 8, 128], strides = [1, 1, 1, 1]} : vector<2x10x24x128xf32> to vector<2x8x8x128xf32>
    %120 = vector.shape_cast %119 : vector<2x8x8x128xf32> to vector<128x128xf32>
    %121 = tpu.concatenate %104, %106, %108, %110, %112, %114, %116, %118, %120 in 1 : vector<128x128xf32>, vector<128x128xf32>, vector<128x128xf32>, vector<128x128xf32>, vector<128x128xf32>, vector<128x128xf32>, vector<128x128xf32>, vector<128x128xf32>, vector<128x128xf32> -> vector<128x1152xf32>
    %122 = arith.truncf %121 : vector<128x1152xf32> to vector<128x1152xbf16>
    %c0_20 = arith.constant 0 : index
    %c0_21 = arith.constant 0 : index
    %123 = vector.load %arg3[%c0_20, %c0_21] : memref<1152x128xbf16, #tpu.memory_space<vmem>>, vector<1152x128xbf16>
    %cst_22 = arith.constant dense<0.000000e+00> : vector<128x128xf32>
    %124 = tpu.matmul %122, %123, %cst_22 {dimension_numbers = #tpu.dot_dimension_numbers<[1], [0], [0], [1], [0, 0, 1, 1], [], []>} : vector<128x1152xbf16>, vector<1152x128xbf16>, vector<128x128xf32> -> vector<128x128xf32>
    %c0_23 = arith.constant 0 : index
    %c0_24 = arith.constant 0 : index
    %125 = vector.load %arg4[%c0_23, %c0_24] : memref<1x128xf32, #tpu.memory_space<vmem>>, vector<1x128xf32>
    %126 = vector.broadcast %125 : vector<1x128xf32> to vector<128x128xf32>
    %127 = arith.addf %124, %126 : vector<128x128xf32>
    %cst_25 = arith.constant 0.000000e+00 : f32
    %128 = vector.broadcast %cst_25 : f32 to vector<128x128xf32>
    %129 = arith.maximumf %127, %128 : vector<128x128xf32>
    %130 = vector.shape_cast %129 : vector<128x128xf32> to vector<2x8x8x128xf32>
    %cst_26 = arith.constant 0.000000e+00 : f32
    %131 = vector.broadcast %cst_26 : f32 to vector<2x8x8x128xf32>
    %132 = tpu.concatenate %131, %130, %131 in 2 : vector<2x8x8x128xf32>, vector<2x8x8x128xf32>, vector<2x8x8x128xf32> -> vector<2x8x24x128xf32>
    %cst_27 = arith.constant 0.000000e+00 : f32
    %133 = vector.broadcast %cst_27 : f32 to vector<2x1x24x128xf32>
    %134 = tpu.concatenate %133, %132, %133 in 1 : vector<2x1x24x128xf32>, vector<2x8x24x128xf32>, vector<2x1x24x128xf32> -> vector<2x10x24x128xf32>
    %135 = vector.extract_strided_slice %134 {offsets = [0, 0, 7, 0], sizes = [2, 8, 8, 128], strides = [1, 1, 1, 1]} : vector<2x10x24x128xf32> to vector<2x8x8x128xf32>
    %136 = vector.shape_cast %135 : vector<2x8x8x128xf32> to vector<128x128xf32>
    %137 = vector.extract_strided_slice %134 {offsets = [0, 0, 8, 0], sizes = [2, 8, 8, 128], strides = [1, 1, 1, 1]} : vector<2x10x24x128xf32> to vector<2x8x8x128xf32>
    %138 = vector.shape_cast %137 : vector<2x8x8x128xf32> to vector<128x128xf32>
    %139 = vector.extract_strided_slice %134 {offsets = [0, 0, 9, 0], sizes = [2, 8, 8, 128], strides = [1, 1, 1, 1]} : vector<2x10x24x128xf32> to vector<2x8x8x128xf32>
    %140 = vector.shape_cast %139 : vector<2x8x8x128xf32> to vector<128x128xf32>
    %141 = vector.extract_strided_slice %134 {offsets = [0, 1, 7, 0], sizes = [2, 8, 8, 128], strides = [1, 1, 1, 1]} : vector<2x10x24x128xf32> to vector<2x8x8x128xf32>
    %142 = vector.shape_cast %141 : vector<2x8x8x128xf32> to vector<128x128xf32>
    %143 = vector.extract_strided_slice %134 {offsets = [0, 1, 8, 0], sizes = [2, 8, 8, 128], strides = [1, 1, 1, 1]} : vector<2x10x24x128xf32> to vector<2x8x8x128xf32>
    %144 = vector.shape_cast %143 : vector<2x8x8x128xf32> to vector<128x128xf32>
    %145 = vector.extract_strided_slice %134 {offsets = [0, 1, 9, 0], sizes = [2, 8, 8, 128], strides = [1, 1, 1, 1]} : vector<2x10x24x128xf32> to vector<2x8x8x128xf32>
    %146 = vector.shape_cast %145 : vector<2x8x8x128xf32> to vector<128x128xf32>
    %147 = vector.extract_strided_slice %134 {offsets = [0, 2, 7, 0], sizes = [2, 8, 8, 128], strides = [1, 1, 1, 1]} : vector<2x10x24x128xf32> to vector<2x8x8x128xf32>
    %148 = vector.shape_cast %147 : vector<2x8x8x128xf32> to vector<128x128xf32>
    %149 = vector.extract_strided_slice %134 {offsets = [0, 2, 8, 0], sizes = [2, 8, 8, 128], strides = [1, 1, 1, 1]} : vector<2x10x24x128xf32> to vector<2x8x8x128xf32>
    %150 = vector.shape_cast %149 : vector<2x8x8x128xf32> to vector<128x128xf32>
    %151 = vector.extract_strided_slice %134 {offsets = [0, 2, 9, 0], sizes = [2, 8, 8, 128], strides = [1, 1, 1, 1]} : vector<2x10x24x128xf32> to vector<2x8x8x128xf32>
    %152 = vector.shape_cast %151 : vector<2x8x8x128xf32> to vector<128x128xf32>
    %153 = tpu.concatenate %136, %138, %140, %142, %144, %146, %148, %150, %152 in 1 : vector<128x128xf32>, vector<128x128xf32>, vector<128x128xf32>, vector<128x128xf32>, vector<128x128xf32>, vector<128x128xf32>, vector<128x128xf32>, vector<128x128xf32>, vector<128x128xf32> -> vector<128x1152xf32>
    %154 = arith.truncf %153 : vector<128x1152xf32> to vector<128x1152xbf16>
    %c0_28 = arith.constant 0 : index
    %c0_29 = arith.constant 0 : index
    %155 = vector.load %arg3[%c0_28, %c0_29] : memref<1152x128xbf16, #tpu.memory_space<vmem>>, vector<1152x128xbf16>
    %cst_30 = arith.constant dense<0.000000e+00> : vector<128x128xf32>
    %156 = tpu.matmul %154, %155, %cst_30 {dimension_numbers = #tpu.dot_dimension_numbers<[1], [0], [0], [1], [0, 0, 1, 1], [], []>} : vector<128x1152xbf16>, vector<1152x128xbf16>, vector<128x128xf32> -> vector<128x128xf32>
    %c0_31 = arith.constant 0 : index
    %c0_32 = arith.constant 0 : index
    %157 = vector.load %arg4[%c0_31, %c0_32] : memref<1x128xf32, #tpu.memory_space<vmem>>, vector<1x128xf32>
    %158 = vector.broadcast %157 : vector<1x128xf32> to vector<128x128xf32>
    %159 = arith.addf %156, %158 : vector<128x128xf32>
    %cst_33 = arith.constant 0.000000e+00 : f32
    %160 = vector.broadcast %cst_33 : f32 to vector<128x128xf32>
    %161 = arith.maximumf %159, %160 : vector<128x128xf32>
    %162 = vector.shape_cast %161 : vector<128x128xf32> to vector<2x8x8x128xf32>
    %cst_34 = arith.constant 0.000000e+00 : f32
    %163 = vector.broadcast %cst_34 : f32 to vector<2x8x8x128xf32>
    %164 = tpu.concatenate %163, %162, %163 in 2 : vector<2x8x8x128xf32>, vector<2x8x8x128xf32>, vector<2x8x8x128xf32> -> vector<2x8x24x128xf32>
    %cst_35 = arith.constant 0.000000e+00 : f32
    %165 = vector.broadcast %cst_35 : f32 to vector<2x1x24x128xf32>
    %166 = tpu.concatenate %165, %164, %165 in 1 : vector<2x1x24x128xf32>, vector<2x8x24x128xf32>, vector<2x1x24x128xf32> -> vector<2x10x24x128xf32>
    %167 = vector.extract_strided_slice %166 {offsets = [0, 0, 7, 0], sizes = [2, 8, 8, 128], strides = [1, 1, 1, 1]} : vector<2x10x24x128xf32> to vector<2x8x8x128xf32>
    %168 = vector.shape_cast %167 : vector<2x8x8x128xf32> to vector<128x128xf32>
    %169 = vector.extract_strided_slice %166 {offsets = [0, 0, 8, 0], sizes = [2, 8, 8, 128], strides = [1, 1, 1, 1]} : vector<2x10x24x128xf32> to vector<2x8x8x128xf32>
    %170 = vector.shape_cast %169 : vector<2x8x8x128xf32> to vector<128x128xf32>
    %171 = vector.extract_strided_slice %166 {offsets = [0, 0, 9, 0], sizes = [2, 8, 8, 128], strides = [1, 1, 1, 1]} : vector<2x10x24x128xf32> to vector<2x8x8x128xf32>
    %172 = vector.shape_cast %171 : vector<2x8x8x128xf32> to vector<128x128xf32>
    %173 = vector.extract_strided_slice %166 {offsets = [0, 1, 7, 0], sizes = [2, 8, 8, 128], strides = [1, 1, 1, 1]} : vector<2x10x24x128xf32> to vector<2x8x8x128xf32>
    %174 = vector.shape_cast %173 : vector<2x8x8x128xf32> to vector<128x128xf32>
    %175 = vector.extract_strided_slice %166 {offsets = [0, 1, 8, 0], sizes = [2, 8, 8, 128], strides = [1, 1, 1, 1]} : vector<2x10x24x128xf32> to vector<2x8x8x128xf32>
    %176 = vector.shape_cast %175 : vector<2x8x8x128xf32> to vector<128x128xf32>
    %177 = vector.extract_strided_slice %166 {offsets = [0, 1, 9, 0], sizes = [2, 8, 8, 128], strides = [1, 1, 1, 1]} : vector<2x10x24x128xf32> to vector<2x8x8x128xf32>
    %178 = vector.shape_cast %177 : vector<2x8x8x128xf32> to vector<128x128xf32>
    %179 = vector.extract_strided_slice %166 {offsets = [0, 2, 7, 0], sizes = [2, 8, 8, 128], strides = [1, 1, 1, 1]} : vector<2x10x24x128xf32> to vector<2x8x8x128xf32>
    %180 = vector.shape_cast %179 : vector<2x8x8x128xf32> to vector<128x128xf32>
    %181 = vector.extract_strided_slice %166 {offsets = [0, 2, 8, 0], sizes = [2, 8, 8, 128], strides = [1, 1, 1, 1]} : vector<2x10x24x128xf32> to vector<2x8x8x128xf32>
    %182 = vector.shape_cast %181 : vector<2x8x8x128xf32> to vector<128x128xf32>
    %183 = vector.extract_strided_slice %166 {offsets = [0, 2, 9, 0], sizes = [2, 8, 8, 128], strides = [1, 1, 1, 1]} : vector<2x10x24x128xf32> to vector<2x8x8x128xf32>
    %184 = vector.shape_cast %183 : vector<2x8x8x128xf32> to vector<128x128xf32>
    %185 = tpu.concatenate %168, %170, %172, %174, %176, %178, %180, %182, %184 in 1 : vector<128x128xf32>, vector<128x128xf32>, vector<128x128xf32>, vector<128x128xf32>, vector<128x128xf32>, vector<128x128xf32>, vector<128x128xf32>, vector<128x128xf32>, vector<128x128xf32> -> vector<128x1152xf32>
    %186 = arith.truncf %185 : vector<128x1152xf32> to vector<128x1152xbf16>
    %c0_36 = arith.constant 0 : index
    %c0_37 = arith.constant 0 : index
    %187 = vector.load %arg3[%c0_36, %c0_37] : memref<1152x128xbf16, #tpu.memory_space<vmem>>, vector<1152x128xbf16>
    %cst_38 = arith.constant dense<0.000000e+00> : vector<128x128xf32>
    %188 = tpu.matmul %186, %187, %cst_38 {dimension_numbers = #tpu.dot_dimension_numbers<[1], [0], [0], [1], [0, 0, 1, 1], [], []>} : vector<128x1152xbf16>, vector<1152x128xbf16>, vector<128x128xf32> -> vector<128x128xf32>
    %c0_39 = arith.constant 0 : index
    %c0_40 = arith.constant 0 : index
    %189 = vector.load %arg4[%c0_39, %c0_40] : memref<1x128xf32, #tpu.memory_space<vmem>>, vector<1x128xf32>
    %190 = vector.broadcast %189 : vector<1x128xf32> to vector<128x128xf32>
    %191 = arith.addf %188, %190 : vector<128x128xf32>
    %cst_41 = arith.constant 0.000000e+00 : f32
    %192 = vector.broadcast %cst_41 : f32 to vector<128x128xf32>
    %193 = arith.maximumf %191, %192 : vector<128x128xf32>
    %194 = vector.shape_cast %193 : vector<128x128xf32> to vector<2x8x8x128xf32>
    %cst_42 = arith.constant 0.000000e+00 : f32
    %195 = vector.broadcast %cst_42 : f32 to vector<2x8x8x128xf32>
    %196 = tpu.concatenate %195, %194, %195 in 2 : vector<2x8x8x128xf32>, vector<2x8x8x128xf32>, vector<2x8x8x128xf32> -> vector<2x8x24x128xf32>
    %cst_43 = arith.constant 0.000000e+00 : f32
    %197 = vector.broadcast %cst_43 : f32 to vector<2x1x24x128xf32>
    %198 = tpu.concatenate %197, %196, %197 in 1 : vector<2x1x24x128xf32>, vector<2x8x24x128xf32>, vector<2x1x24x128xf32> -> vector<2x10x24x128xf32>
    %199 = vector.extract_strided_slice %198 {offsets = [0, 0, 7, 0], sizes = [2, 8, 8, 128], strides = [1, 1, 1, 1]} : vector<2x10x24x128xf32> to vector<2x8x8x128xf32>
    %200 = vector.shape_cast %199 : vector<2x8x8x128xf32> to vector<128x128xf32>
    %201 = vector.extract_strided_slice %198 {offsets = [0, 0, 8, 0], sizes = [2, 8, 8, 128], strides = [1, 1, 1, 1]} : vector<2x10x24x128xf32> to vector<2x8x8x128xf32>
    %202 = vector.shape_cast %201 : vector<2x8x8x128xf32> to vector<128x128xf32>
    %203 = vector.extract_strided_slice %198 {offsets = [0, 0, 9, 0], sizes = [2, 8, 8, 128], strides = [1, 1, 1, 1]} : vector<2x10x24x128xf32> to vector<2x8x8x128xf32>
    %204 = vector.shape_cast %203 : vector<2x8x8x128xf32> to vector<128x128xf32>
    %205 = vector.extract_strided_slice %198 {offsets = [0, 1, 7, 0], sizes = [2, 8, 8, 128], strides = [1, 1, 1, 1]} : vector<2x10x24x128xf32> to vector<2x8x8x128xf32>
    %206 = vector.shape_cast %205 : vector<2x8x8x128xf32> to vector<128x128xf32>
    %207 = vector.extract_strided_slice %198 {offsets = [0, 1, 8, 0], sizes = [2, 8, 8, 128], strides = [1, 1, 1, 1]} : vector<2x10x24x128xf32> to vector<2x8x8x128xf32>
    %208 = vector.shape_cast %207 : vector<2x8x8x128xf32> to vector<128x128xf32>
    %209 = vector.extract_strided_slice %198 {offsets = [0, 1, 9, 0], sizes = [2, 8, 8, 128], strides = [1, 1, 1, 1]} : vector<2x10x24x128xf32> to vector<2x8x8x128xf32>
    %210 = vector.shape_cast %209 : vector<2x8x8x128xf32> to vector<128x128xf32>
    %211 = vector.extract_strided_slice %198 {offsets = [0, 2, 7, 0], sizes = [2, 8, 8, 128], strides = [1, 1, 1, 1]} : vector<2x10x24x128xf32> to vector<2x8x8x128xf32>
    %212 = vector.shape_cast %211 : vector<2x8x8x128xf32> to vector<128x128xf32>
    %213 = vector.extract_strided_slice %198 {offsets = [0, 2, 8, 0], sizes = [2, 8, 8, 128], strides = [1, 1, 1, 1]} : vector<2x10x24x128xf32> to vector<2x8x8x128xf32>
    %214 = vector.shape_cast %213 : vector<2x8x8x128xf32> to vector<128x128xf32>
    %215 = vector.extract_strided_slice %198 {offsets = [0, 2, 9, 0], sizes = [2, 8, 8, 128], strides = [1, 1, 1, 1]} : vector<2x10x24x128xf32> to vector<2x8x8x128xf32>
    %216 = vector.shape_cast %215 : vector<2x8x8x128xf32> to vector<128x128xf32>
    %217 = tpu.concatenate %200, %202, %204, %206, %208, %210, %212, %214, %216 in 1 : vector<128x128xf32>, vector<128x128xf32>, vector<128x128xf32>, vector<128x128xf32>, vector<128x128xf32>, vector<128x128xf32>, vector<128x128xf32>, vector<128x128xf32>, vector<128x128xf32> -> vector<128x1152xf32>
    %218 = arith.truncf %217 : vector<128x1152xf32> to vector<128x1152xbf16>
    %c0_44 = arith.constant 0 : index
    %c0_45 = arith.constant 0 : index
    %219 = vector.load %arg3[%c0_44, %c0_45] : memref<1152x128xbf16, #tpu.memory_space<vmem>>, vector<1152x128xbf16>
    %cst_46 = arith.constant dense<0.000000e+00> : vector<128x128xf32>
    %220 = tpu.matmul %218, %219, %cst_46 {dimension_numbers = #tpu.dot_dimension_numbers<[1], [0], [0], [1], [0, 0, 1, 1], [], []>} : vector<128x1152xbf16>, vector<1152x128xbf16>, vector<128x128xf32> -> vector<128x128xf32>
    %c0_47 = arith.constant 0 : index
    %c0_48 = arith.constant 0 : index
    %221 = vector.load %arg4[%c0_47, %c0_48] : memref<1x128xf32, #tpu.memory_space<vmem>>, vector<1x128xf32>
    %222 = vector.broadcast %221 : vector<1x128xf32> to vector<128x128xf32>
    %223 = arith.addf %220, %222 : vector<128x128xf32>
    %cst_49 = arith.constant 0.000000e+00 : f32
    %224 = vector.broadcast %cst_49 : f32 to vector<128x128xf32>
    %225 = arith.maximumf %223, %224 : vector<128x128xf32>
    %226 = vector.shape_cast %225 : vector<128x128xf32> to vector<2x8x8x128xf32>
    %cst_50 = arith.constant 0.000000e+00 : f32
    %227 = vector.broadcast %cst_50 : f32 to vector<2x8x8x128xf32>
    %228 = tpu.concatenate %227, %226, %227 in 2 : vector<2x8x8x128xf32>, vector<2x8x8x128xf32>, vector<2x8x8x128xf32> -> vector<2x8x24x128xf32>
    %cst_51 = arith.constant 0.000000e+00 : f32
    %229 = vector.broadcast %cst_51 : f32 to vector<2x1x24x128xf32>
    %230 = tpu.concatenate %229, %228, %229 in 1 : vector<2x1x24x128xf32>, vector<2x8x24x128xf32>, vector<2x1x24x128xf32> -> vector<2x10x24x128xf32>
    %231 = vector.extract_strided_slice %230 {offsets = [0, 0, 7, 0], sizes = [2, 8, 8, 128], strides = [1, 1, 1, 1]} : vector<2x10x24x128xf32> to vector<2x8x8x128xf32>
    %232 = vector.shape_cast %231 : vector<2x8x8x128xf32> to vector<128x128xf32>
    %233 = vector.extract_strided_slice %230 {offsets = [0, 0, 8, 0], sizes = [2, 8, 8, 128], strides = [1, 1, 1, 1]} : vector<2x10x24x128xf32> to vector<2x8x8x128xf32>
    %234 = vector.shape_cast %233 : vector<2x8x8x128xf32> to vector<128x128xf32>
    %235 = vector.extract_strided_slice %230 {offsets = [0, 0, 9, 0], sizes = [2, 8, 8, 128], strides = [1, 1, 1, 1]} : vector<2x10x24x128xf32> to vector<2x8x8x128xf32>
    %236 = vector.shape_cast %235 : vector<2x8x8x128xf32> to vector<128x128xf32>
    %237 = vector.extract_strided_slice %230 {offsets = [0, 1, 7, 0], sizes = [2, 8, 8, 128], strides = [1, 1, 1, 1]} : vector<2x10x24x128xf32> to vector<2x8x8x128xf32>
    %238 = vector.shape_cast %237 : vector<2x8x8x128xf32> to vector<128x128xf32>
    %239 = vector.extract_strided_slice %230 {offsets = [0, 1, 8, 0], sizes = [2, 8, 8, 128], strides = [1, 1, 1, 1]} : vector<2x10x24x128xf32> to vector<2x8x8x128xf32>
    %240 = vector.shape_cast %239 : vector<2x8x8x128xf32> to vector<128x128xf32>
    %241 = vector.extract_strided_slice %230 {offsets = [0, 1, 9, 0], sizes = [2, 8, 8, 128], strides = [1, 1, 1, 1]} : vector<2x10x24x128xf32> to vector<2x8x8x128xf32>
    %242 = vector.shape_cast %241 : vector<2x8x8x128xf32> to vector<128x128xf32>
    %243 = vector.extract_strided_slice %230 {offsets = [0, 2, 7, 0], sizes = [2, 8, 8, 128], strides = [1, 1, 1, 1]} : vector<2x10x24x128xf32> to vector<2x8x8x128xf32>
    %244 = vector.shape_cast %243 : vector<2x8x8x128xf32> to vector<128x128xf32>
    %245 = vector.extract_strided_slice %230 {offsets = [0, 2, 8, 0], sizes = [2, 8, 8, 128], strides = [1, 1, 1, 1]} : vector<2x10x24x128xf32> to vector<2x8x8x128xf32>
    %246 = vector.shape_cast %245 : vector<2x8x8x128xf32> to vector<128x128xf32>
    %247 = vector.extract_strided_slice %230 {offsets = [0, 2, 9, 0], sizes = [2, 8, 8, 128], strides = [1, 1, 1, 1]} : vector<2x10x24x128xf32> to vector<2x8x8x128xf32>
    %248 = vector.shape_cast %247 : vector<2x8x8x128xf32> to vector<128x128xf32>
    %249 = tpu.concatenate %232, %234, %236, %238, %240, %242, %244, %246, %248 in 1 : vector<128x128xf32>, vector<128x128xf32>, vector<128x128xf32>, vector<128x128xf32>, vector<128x128xf32>, vector<128x128xf32>, vector<128x128xf32>, vector<128x128xf32>, vector<128x128xf32> -> vector<128x1152xf32>
    %250 = arith.truncf %249 : vector<128x1152xf32> to vector<128x1152xbf16>
    %c0_52 = arith.constant 0 : index
    %c0_53 = arith.constant 0 : index
    %251 = vector.load %arg3[%c0_52, %c0_53] : memref<1152x128xbf16, #tpu.memory_space<vmem>>, vector<1152x128xbf16>
    %cst_54 = arith.constant dense<0.000000e+00> : vector<128x128xf32>
    %252 = tpu.matmul %250, %251, %cst_54 {dimension_numbers = #tpu.dot_dimension_numbers<[1], [0], [0], [1], [0, 0, 1, 1], [], []>} : vector<128x1152xbf16>, vector<1152x128xbf16>, vector<128x128xf32> -> vector<128x128xf32>
    %c0_55 = arith.constant 0 : index
    %c0_56 = arith.constant 0 : index
    %253 = vector.load %arg4[%c0_55, %c0_56] : memref<1x128xf32, #tpu.memory_space<vmem>>, vector<1x128xf32>
    %254 = vector.broadcast %253 : vector<1x128xf32> to vector<128x128xf32>
    %255 = arith.addf %252, %254 : vector<128x128xf32>
    %cst_57 = arith.constant 0.000000e+00 : f32
    %256 = vector.broadcast %cst_57 : f32 to vector<128x128xf32>
    %257 = arith.maximumf %255, %256 : vector<128x128xf32>
    %258 = vector.shape_cast %257 : vector<128x128xf32> to vector<2x8x8x128xf32>
    %cst_58 = arith.constant 0.000000e+00 : f32
    %259 = vector.broadcast %cst_58 : f32 to vector<2x8x8x128xf32>
    %260 = tpu.concatenate %259, %258, %259 in 2 : vector<2x8x8x128xf32>, vector<2x8x8x128xf32>, vector<2x8x8x128xf32> -> vector<2x8x24x128xf32>
    %cst_59 = arith.constant 0.000000e+00 : f32
    %261 = vector.broadcast %cst_59 : f32 to vector<2x1x24x128xf32>
    %262 = tpu.concatenate %261, %260, %261 in 1 : vector<2x1x24x128xf32>, vector<2x8x24x128xf32>, vector<2x1x24x128xf32> -> vector<2x10x24x128xf32>
    %263 = vector.extract_strided_slice %262 {offsets = [0, 0, 7, 0], sizes = [2, 8, 8, 128], strides = [1, 1, 1, 1]} : vector<2x10x24x128xf32> to vector<2x8x8x128xf32>
    %264 = vector.shape_cast %263 : vector<2x8x8x128xf32> to vector<128x128xf32>
    %265 = vector.extract_strided_slice %262 {offsets = [0, 0, 8, 0], sizes = [2, 8, 8, 128], strides = [1, 1, 1, 1]} : vector<2x10x24x128xf32> to vector<2x8x8x128xf32>
    %266 = vector.shape_cast %265 : vector<2x8x8x128xf32> to vector<128x128xf32>
    %267 = vector.extract_strided_slice %262 {offsets = [0, 0, 9, 0], sizes = [2, 8, 8, 128], strides = [1, 1, 1, 1]} : vector<2x10x24x128xf32> to vector<2x8x8x128xf32>
    %268 = vector.shape_cast %267 : vector<2x8x8x128xf32> to vector<128x128xf32>
    %269 = vector.extract_strided_slice %262 {offsets = [0, 1, 7, 0], sizes = [2, 8, 8, 128], strides = [1, 1, 1, 1]} : vector<2x10x24x128xf32> to vector<2x8x8x128xf32>
    %270 = vector.shape_cast %269 : vector<2x8x8x128xf32> to vector<128x128xf32>
    %271 = vector.extract_strided_slice %262 {offsets = [0, 1, 8, 0], sizes = [2, 8, 8, 128], strides = [1, 1, 1, 1]} : vector<2x10x24x128xf32> to vector<2x8x8x128xf32>
    %272 = vector.shape_cast %271 : vector<2x8x8x128xf32> to vector<128x128xf32>
    %273 = vector.extract_strided_slice %262 {offsets = [0, 1, 9, 0], sizes = [2, 8, 8, 128], strides = [1, 1, 1, 1]} : vector<2x10x24x128xf32> to vector<2x8x8x128xf32>
    %274 = vector.shape_cast %273 : vector<2x8x8x128xf32> to vector<128x128xf32>
    %275 = vector.extract_strided_slice %262 {offsets = [0, 2, 7, 0], sizes = [2, 8, 8, 128], strides = [1, 1, 1, 1]} : vector<2x10x24x128xf32> to vector<2x8x8x128xf32>
    %276 = vector.shape_cast %275 : vector<2x8x8x128xf32> to vector<128x128xf32>
    %277 = vector.extract_strided_slice %262 {offsets = [0, 2, 8, 0], sizes = [2, 8, 8, 128], strides = [1, 1, 1, 1]} : vector<2x10x24x128xf32> to vector<2x8x8x128xf32>
    %278 = vector.shape_cast %277 : vector<2x8x8x128xf32> to vector<128x128xf32>
    %279 = vector.extract_strided_slice %262 {offsets = [0, 2, 9, 0], sizes = [2, 8, 8, 128], strides = [1, 1, 1, 1]} : vector<2x10x24x128xf32> to vector<2x8x8x128xf32>
    %280 = vector.shape_cast %279 : vector<2x8x8x128xf32> to vector<128x128xf32>
    %281 = tpu.concatenate %264, %266, %268, %270, %272, %274, %276, %278, %280 in 1 : vector<128x128xf32>, vector<128x128xf32>, vector<128x128xf32>, vector<128x128xf32>, vector<128x128xf32>, vector<128x128xf32>, vector<128x128xf32>, vector<128x128xf32>, vector<128x128xf32> -> vector<128x1152xf32>
    %282 = arith.truncf %281 : vector<128x1152xf32> to vector<128x1152xbf16>
    %c0_60 = arith.constant 0 : index
    %c0_61 = arith.constant 0 : index
    %283 = vector.load %arg3[%c0_60, %c0_61] : memref<1152x128xbf16, #tpu.memory_space<vmem>>, vector<1152x128xbf16>
    %cst_62 = arith.constant dense<0.000000e+00> : vector<128x128xf32>
    %284 = tpu.matmul %282, %283, %cst_62 {dimension_numbers = #tpu.dot_dimension_numbers<[1], [0], [0], [1], [0, 0, 1, 1], [], []>} : vector<128x1152xbf16>, vector<1152x128xbf16>, vector<128x128xf32> -> vector<128x128xf32>
    %c0_63 = arith.constant 0 : index
    %c0_64 = arith.constant 0 : index
    %285 = vector.load %arg4[%c0_63, %c0_64] : memref<1x128xf32, #tpu.memory_space<vmem>>, vector<1x128xf32>
    %286 = vector.broadcast %285 : vector<1x128xf32> to vector<128x128xf32>
    %287 = arith.addf %284, %286 : vector<128x128xf32>
    %cst_65 = arith.constant 0.000000e+00 : f32
    %288 = vector.broadcast %cst_65 : f32 to vector<128x128xf32>
    %289 = arith.maximumf %287, %288 : vector<128x128xf32>
    %290 = vector.shape_cast %289 : vector<128x128xf32> to vector<2x8x8x128xf32>
    %cst_66 = arith.constant 0.000000e+00 : f32
    %291 = vector.broadcast %cst_66 : f32 to vector<2x8x8x128xf32>
    %292 = tpu.concatenate %291, %290, %291 in 2 : vector<2x8x8x128xf32>, vector<2x8x8x128xf32>, vector<2x8x8x128xf32> -> vector<2x8x24x128xf32>
    %cst_67 = arith.constant 0.000000e+00 : f32
    %293 = vector.broadcast %cst_67 : f32 to vector<2x1x24x128xf32>
    %294 = tpu.concatenate %293, %292, %293 in 1 : vector<2x1x24x128xf32>, vector<2x8x24x128xf32>, vector<2x1x24x128xf32> -> vector<2x10x24x128xf32>
    %295 = vector.extract_strided_slice %294 {offsets = [0, 0, 7, 0], sizes = [2, 8, 8, 128], strides = [1, 1, 1, 1]} : vector<2x10x24x128xf32> to vector<2x8x8x128xf32>
    %296 = vector.shape_cast %295 : vector<2x8x8x128xf32> to vector<128x128xf32>
    %297 = vector.extract_strided_slice %294 {offsets = [0, 0, 8, 0], sizes = [2, 8, 8, 128], strides = [1, 1, 1, 1]} : vector<2x10x24x128xf32> to vector<2x8x8x128xf32>
    %298 = vector.shape_cast %297 : vector<2x8x8x128xf32> to vector<128x128xf32>
    %299 = vector.extract_strided_slice %294 {offsets = [0, 0, 9, 0], sizes = [2, 8, 8, 128], strides = [1, 1, 1, 1]} : vector<2x10x24x128xf32> to vector<2x8x8x128xf32>
    %300 = vector.shape_cast %299 : vector<2x8x8x128xf32> to vector<128x128xf32>
    %301 = vector.extract_strided_slice %294 {offsets = [0, 1, 7, 0], sizes = [2, 8, 8, 128], strides = [1, 1, 1, 1]} : vector<2x10x24x128xf32> to vector<2x8x8x128xf32>
    %302 = vector.shape_cast %301 : vector<2x8x8x128xf32> to vector<128x128xf32>
    %303 = vector.extract_strided_slice %294 {offsets = [0, 1, 8, 0], sizes = [2, 8, 8, 128], strides = [1, 1, 1, 1]} : vector<2x10x24x128xf32> to vector<2x8x8x128xf32>
    %304 = vector.shape_cast %303 : vector<2x8x8x128xf32> to vector<128x128xf32>
    %305 = vector.extract_strided_slice %294 {offsets = [0, 1, 9, 0], sizes = [2, 8, 8, 128], strides = [1, 1, 1, 1]} : vector<2x10x24x128xf32> to vector<2x8x8x128xf32>
    %306 = vector.shape_cast %305 : vector<2x8x8x128xf32> to vector<128x128xf32>
    %307 = vector.extract_strided_slice %294 {offsets = [0, 2, 7, 0], sizes = [2, 8, 8, 128], strides = [1, 1, 1, 1]} : vector<2x10x24x128xf32> to vector<2x8x8x128xf32>
    %308 = vector.shape_cast %307 : vector<2x8x8x128xf32> to vector<128x128xf32>
    %309 = vector.extract_strided_slice %294 {offsets = [0, 2, 8, 0], sizes = [2, 8, 8, 128], strides = [1, 1, 1, 1]} : vector<2x10x24x128xf32> to vector<2x8x8x128xf32>
    %310 = vector.shape_cast %309 : vector<2x8x8x128xf32> to vector<128x128xf32>
    %311 = vector.extract_strided_slice %294 {offsets = [0, 2, 9, 0], sizes = [2, 8, 8, 128], strides = [1, 1, 1, 1]} : vector<2x10x24x128xf32> to vector<2x8x8x128xf32>
    %312 = vector.shape_cast %311 : vector<2x8x8x128xf32> to vector<128x128xf32>
    %313 = tpu.concatenate %296, %298, %300, %302, %304, %306, %308, %310, %312 in 1 : vector<128x128xf32>, vector<128x128xf32>, vector<128x128xf32>, vector<128x128xf32>, vector<128x128xf32>, vector<128x128xf32>, vector<128x128xf32>, vector<128x128xf32>, vector<128x128xf32> -> vector<128x1152xf32>
    %314 = arith.truncf %313 : vector<128x1152xf32> to vector<128x1152xbf16>
    %c0_68 = arith.constant 0 : index
    %c0_69 = arith.constant 0 : index
    %315 = vector.load %arg5[%c0_68, %c0_69] : memref<1152x256xbf16, #tpu.memory_space<vmem>>, vector<1152x256xbf16>
    %cst_70 = arith.constant dense<0.000000e+00> : vector<128x256xf32>
    %316 = tpu.matmul %314, %315, %cst_70 {dimension_numbers = #tpu.dot_dimension_numbers<[1], [0], [0], [1], [0, 0, 1, 1], [], []>} : vector<128x1152xbf16>, vector<1152x256xbf16>, vector<128x256xf32> -> vector<128x256xf32>
    %c0_71 = arith.constant 0 : index
    %c0_72 = arith.constant 0 : index
    %317 = vector.load %arg6[%c0_71, %c0_72] : memref<1x256xf32, #tpu.memory_space<vmem>>, vector<1x256xf32>
    %318 = vector.broadcast %317 : vector<1x256xf32> to vector<128x256xf32>
    %319 = arith.addf %316, %318 : vector<128x256xf32>
    %320 = vector.extract_strided_slice %319 {offsets = [0, 0], sizes = [128, 128], strides = [1, 1]} : vector<128x256xf32> to vector<128x128xf32>
    %cst_73 = arith.constant 0.000000e+00 : f32
    %321 = vector.broadcast %cst_73 : f32 to vector<128x128xf32>
    %322 = arith.maximumf %320, %321 : vector<128x128xf32>
    %323 = vector.extract_strided_slice %319 {offsets = [0, 128], sizes = [128, 1], strides = [1, 1]} : vector<128x256xf32> to vector<128x1xf32>
    %c0_74 = arith.constant 0 : index
    %c0_75 = arith.constant 0 : index
    %324 = vector.load %arg7[%c0_74, %c0_75] : memref<128x1xf32, #tpu.memory_space<vmem>>, vector<128x1xf32>
    %cst_76 = arith.constant dense<0.000000e+00> : vector<128x1xf32>
    %325 = tpu.matmul %322, %324, %cst_76 {dimension_numbers = #tpu.dot_dimension_numbers<[1], [0], [0], [1], [0, 0, 1, 1], [], []>} : vector<128x128xf32>, vector<128x1xf32>, vector<128x1xf32> -> vector<128x1xf32>
    %c0_77 = arith.constant 0 : index
    %c0_78 = arith.constant 0 : index
    %326 = vector.load %arg8[%c0_77, %c0_78] : memref<1x1xf32, #tpu.memory_space<vmem>>, vector<1x1xf32>
    %327 = vector.broadcast %326 : vector<1x1xf32> to vector<128x1xf32>
    %328 = arith.addf %325, %327 : vector<128x1xf32>
    %cst_79 = arith.constant 0.000000e+00 : f32
    %329 = vector.broadcast %cst_79 : f32 to vector<128x1xf32>
    %330 = arith.maximumf %328, %329 : vector<128x1xf32>
    %c0_80 = arith.constant 0 : index
    %c0_81 = arith.constant 0 : index
    %331 = vector.load %arg9[%c0_80, %c0_81] : memref<64x256xf32, #tpu.memory_space<vmem>>, vector<64x256xf32>
    %c0_82 = arith.constant 0 : index
    %c0_83 = arith.constant 0 : index
    %332 = vector.load %arg10[%c0_82, %c0_83] : memref<1x256xf32, #tpu.memory_space<vmem>>, vector<1x256xf32>
    %c0_84 = arith.constant 0 : index
    %c0_85 = arith.constant 0 : index
    %333 = vector.load %arg11[%c0_84, %c0_85] : memref<256x1xf32, #tpu.memory_space<vmem>>, vector<256x1xf32>
    %c0_86 = arith.constant 0 : index
    %c0_87 = arith.constant 0 : index
    %334 = vector.load %arg12[%c0_86, %c0_87] : memref<1x1xf32, #tpu.memory_space<vmem>>, vector<1x1xf32>
    %335 = vector.extract_strided_slice %323 {offsets = [0, 0], sizes = [64, 1], strides = [1, 1]} : vector<128x1xf32> to vector<64x1xf32>
    %cst_88 = arith.constant dense<0xFF800000> : vector<1xf32>
    %336 = vector.multi_reduction <maximumf>, %335, %cst_88 [0] : vector<64x1xf32> to vector<1xf32>
    %337 = vector.shape_cast %336 : vector<1xf32> to vector<1x1xf32>
    %338 = vector.broadcast %337 : vector<1x1xf32> to vector<64x1xf32>
    %339 = arith.subf %335, %338 : vector<64x1xf32>
    %340 = math.exp %339 : vector<64x1xf32>
    %cst_89 = arith.constant dense<0.000000e+00> : vector<1xf32>
    %341 = vector.multi_reduction <add>, %340, %cst_89 [0] : vector<64x1xf32> to vector<1xf32>
    %342 = vector.shape_cast %341 : vector<1xf32> to vector<1x1xf32>
    %343 = vector.broadcast %342 : vector<1x1xf32> to vector<64x1xf32>
    %344 = arith.divf %340, %343 : vector<64x1xf32>
    %c0_90 = arith.constant 0 : index
    %c0_91 = arith.constant 0 : index
    %c0_92 = arith.constant 0 : index
    %345 = vector.load %arg13[%c0_90, %c0_91, %c0_92] : memref<2x64x1xf32, #tpu.memory_space<vmem>>, vector<1x64x1xf32>
    %346 = vector.shape_cast %345 : vector<1x64x1xf32> to vector<64x1xf32>
    %347 = vector.shape_cast %344 : vector<64x1xf32> to vector<1x64x1xf32>
    tpu.vector_store %arg13[%c0_90, %c0_91, %c0_92], %347 {strides = array<i32>} : memref<2x64x1xf32, #tpu.memory_space<vmem>>, vector<1x64x1xf32>,
    %348 = vector.extract_strided_slice %330 {offsets = [0, 0], sizes = [64, 1], strides = [1, 1]} : vector<128x1xf32> to vector<64x1xf32>
    %349 = vector.broadcast %348 : vector<64x1xf32> to vector<64x256xf32>
    %350 = arith.mulf %349, %331 : vector<64x256xf32>
    %cst_93 = arith.constant dense<0.000000e+00> : vector<256xf32>
    %351 = vector.multi_reduction <add>, %350, %cst_93 [0] : vector<64x256xf32> to vector<256xf32>
    %352 = vector.shape_cast %351 : vector<256xf32> to vector<1x256xf32>
    %353 = arith.addf %352, %332 : vector<1x256xf32>
    %cst_94 = arith.constant 0.000000e+00 : f32
    %354 = vector.broadcast %cst_94 : f32 to vector<1x256xf32>
    %355 = arith.maximumf %353, %354 : vector<1x256xf32>
    %cst_95 = arith.constant dense<0.000000e+00> : vector<1x1xf32>
    %356 = tpu.matmul %355, %333, %cst_95 {dimension_numbers = #tpu.dot_dimension_numbers<[1], [0], [0], [1], [0, 0, 1, 1], [], []>} : vector<1x256xf32>, vector<256x1xf32>, vector<1x1xf32> -> vector<1x1xf32>
    %357 = arith.addf %356, %334 : vector<1x1xf32>
    %358 = math.tanh %357 : vector<1x1xf32>
    %c0_96 = arith.constant 0 : index
    %c0_97 = arith.constant 0 : index
    %c0_98 = arith.constant 0 : index
    %359 = vector.load %arg14[%c0_96, %c0_97, %c0_98] : memref<2x1x1xf32, #tpu.memory_space<vmem>>, vector<1x1x1xf32>
    %360 = vector.shape_cast %359 : vector<1x1x1xf32> to vector<1x1xf32>
    %361 = vector.shape_cast %358 : vector<1x1xf32> to vector<1x1x1xf32>
    tpu.vector_store %arg14[%c0_96, %c0_97, %c0_98], %361 {strides = array<i32>} : memref<2x1x1xf32, #tpu.memory_space<vmem>>, vector<1x1x1xf32>,
    %362 = vector.extract_strided_slice %323 {offsets = [64, 0], sizes = [64, 1], strides = [1, 1]} : vector<128x1xf32> to vector<64x1xf32>
    %cst_99 = arith.constant dense<0xFF800000> : vector<1xf32>
    %363 = vector.multi_reduction <maximumf>, %362, %cst_99 [0] : vector<64x1xf32> to vector<1xf32>
    %364 = vector.shape_cast %363 : vector<1xf32> to vector<1x1xf32>
    %365 = vector.broadcast %364 : vector<1x1xf32> to vector<64x1xf32>
    %366 = arith.subf %362, %365 : vector<64x1xf32>
    %367 = math.exp %366 : vector<64x1xf32>
    %cst_100 = arith.constant dense<0.000000e+00> : vector<1xf32>
    %368 = vector.multi_reduction <add>, %367, %cst_100 [0] : vector<64x1xf32> to vector<1xf32>
    %369 = vector.shape_cast %368 : vector<1xf32> to vector<1x1xf32>
    %370 = vector.broadcast %369 : vector<1x1xf32> to vector<64x1xf32>
    %371 = arith.divf %367, %370 : vector<64x1xf32>
    %c1 = arith.constant 1 : index
    %c0_101 = arith.constant 0 : index
    %c0_102 = arith.constant 0 : index
    %372 = vector.load %arg13[%c1, %c0_101, %c0_102] : memref<2x64x1xf32, #tpu.memory_space<vmem>>, vector<1x64x1xf32>
    %373 = vector.shape_cast %372 : vector<1x64x1xf32> to vector<64x1xf32>
    %374 = vector.shape_cast %371 : vector<64x1xf32> to vector<1x64x1xf32>
    tpu.vector_store %arg13[%c1, %c0_101, %c0_102], %374 {strides = array<i32>} : memref<2x64x1xf32, #tpu.memory_space<vmem>>, vector<1x64x1xf32>,
    %375 = vector.extract_strided_slice %330 {offsets = [64, 0], sizes = [64, 1], strides = [1, 1]} : vector<128x1xf32> to vector<64x1xf32>
    %376 = vector.broadcast %375 : vector<64x1xf32> to vector<64x256xf32>
    %377 = arith.mulf %376, %331 : vector<64x256xf32>
    %cst_103 = arith.constant dense<0.000000e+00> : vector<256xf32>
    %378 = vector.multi_reduction <add>, %377, %cst_103 [0] : vector<64x256xf32> to vector<256xf32>
    %379 = vector.shape_cast %378 : vector<256xf32> to vector<1x256xf32>
    %380 = arith.addf %379, %332 : vector<1x256xf32>
    %cst_104 = arith.constant 0.000000e+00 : f32
    %381 = vector.broadcast %cst_104 : f32 to vector<1x256xf32>
    %382 = arith.maximumf %380, %381 : vector<1x256xf32>
    %cst_105 = arith.constant dense<0.000000e+00> : vector<1x1xf32>
    %383 = tpu.matmul %382, %333, %cst_105 {dimension_numbers = #tpu.dot_dimension_numbers<[1], [0], [0], [1], [0, 0, 1, 1], [], []>} : vector<1x256xf32>, vector<256x1xf32>, vector<1x1xf32> -> vector<1x1xf32>
    %384 = arith.addf %383, %334 : vector<1x1xf32>
    %385 = math.tanh %384 : vector<1x1xf32>
    %c1_106 = arith.constant 1 : index
    %c0_107 = arith.constant 0 : index
    %c0_108 = arith.constant 0 : index
    %386 = vector.load %arg14[%c1_106, %c0_107, %c0_108] : memref<2x1x1xf32, #tpu.memory_space<vmem>>, vector<1x1x1xf32>
    %387 = vector.shape_cast %386 : vector<1x1x1xf32> to vector<1x1xf32>
    %388 = vector.shape_cast %385 : vector<1x1xf32> to vector<1x1x1xf32>
    tpu.vector_store %arg14[%c1_106, %c0_107, %c0_108], %388 {strides = array<i32>} : memref<2x1x1xf32, #tpu.memory_space<vmem>>, vector<1x1x1xf32>,
    return
  }
}

</mosaic_0001>

<llo_original>
// kernel: acnet_forward.1
$region0: #{acnet_forward.1}
  #allocation0 [shape = 'u32[]', space=smem, size = 0x4, offset = 0x4, fixed_abs, tag = 'smem constant byte address 0x4 - core index']
  #allocation1 [shape = 'u32[144,128]{1,0:T(1,128)}', space=vmem, size = 0x12000, scoped, tag = 'internal scratch']
  #allocation2 [shape = 'f32[1,1]{1,0:T(1,128)S(1)}', space=vmem, size = 0x200, scoped, tag = 'scoped memory for acnet_forward.1']
  #allocation3 [shape = 'f32[1,1]{1,0:T(1,128)S(1)}', space=vmem, size = 0x200, scoped, tag = 'scoped memory for acnet_forward.1']
  %s0 = inlined_call_operand.vmem [shape: f32[2,8,8,128], index: 0, kind: input, shape index: {}]
  %s1 = inlined_call_operand.vmem [shape: bf16[3200,128], index: 1, kind: input, shape index: {}]
  %s2 = inlined_call_operand.vmem [shape: f32[1,128], index: 2, kind: input, shape index: {}]
  %s3 = inlined_call_operand.vmem [shape: bf16[1152,128], index: 3, kind: input, shape index: {}]
  %s4 = inlined_call_operand.vmem [shape: f32[1,128], index: 4, kind: input, shape index: {}]
  %s5 = inlined_call_operand.vmem [shape: bf16[1152,256], index: 5, kind: input, shape index: {}]
  %s6 = inlined_call_operand.vmem [shape: f32[1,256], index: 6, kind: input, shape index: {}]
  %s7 = inlined_call_operand.vmem [shape: f32[128,1], index: 7, kind: input, shape index: {}]
  %s8 = inlined_call_operand.<no memory space> [shape: f32[1,1], index: 8, kind: input, shape index: {}]
  %s9 = inlined_call_operand.vmem [shape: f32[64,256], index: 9, kind: input, shape index: {}]
  %s10 = inlined_call_operand.vmem [shape: f32[1,256], index: 10, kind: input, shape index: {}]
  %s11 = inlined_call_operand.vmem [shape: f32[256,1], index: 11, kind: input, shape index: {}]
  %s12 = inlined_call_operand.<no memory space> [shape: f32[1,1], index: 12, kind: input, shape index: {}]
  %s13 = inlined_call_operand.vmem [shape: f32[2,64,1], index: 13, kind: output, shape index: {0}]
  %s14 = inlined_call_operand.vmem [shape: f32[2,1,1], index: 14, kind: output, shape index: {1}]
  %15 = xla_tuple %s13, %s14
  %s16 = sld [smem:[#allocation0]]
  $region70: #{acnet_forward.1} parent=0
    _
  %s18 = ssub.s32 1, %s16
  %s19 = scalar_select 0, %s18, %s16
  %v20 = vstv %s8
  %21 = vst [vmem:[#allocation2] sm:$0x1] %v20
  %v22 = vstv %s12
  %23 = vst [vmem:[#allocation3] sm:$0x1] %v22
  // Predicated region
  $region2: #{acnet_forward.1} parent=0 // pred_check
    _
  $region3: #{acnet_forward.1} parent=0 // pred_check_branch
    %25 = sbr.rel (0) target = $region5
  $region4: #{acnet_forward.1} parent=0 // pred_region
    _
  $region5: #{acnet_forward.1} parent=0 // pred_fallthru
    _
  // Predicated region
  $region6: #{acnet_forward.1} parent=0 // pred_check
    _
  $region7: #{acnet_forward.1} parent=0 // pred_check_branch
    %27 = sbr.rel (0) target = $region9
  $region8: #{acnet_forward.1} parent=0 // pred_region
    _
  $region9: #{acnet_forward.1} parent=0 // pred_fallthru
    _
  // Predicated region
  $region10: #{acnet_forward.1} parent=0 // pred_check
    _
  $region11: #{acnet_forward.1} parent=0 // pred_check_branch
    %29 = sbr.rel (0) target = $region13
  $region12: #{acnet_forward.1} parent=0 // pred_region
    _
  $region13: #{acnet_forward.1} parent=0 // pred_fallthru
    _
  // Predicated region
  $region14: #{acnet_forward.1} parent=0 // pred_check
    _
  $region15: #{acnet_forward.1} parent=0 // pred_check_branch
    %31 = sbr.rel (0) target = $region17
  $region16: #{acnet_forward.1} parent=0 // pred_region
    _
  $region17: #{acnet_forward.1} parent=0 // pred_fallthru
    _
  // Predicated region
  $region18: #{acnet_forward.1} parent=0 // pred_check
    _
  $region19: #{acnet_forward.1} parent=0 // pred_check_branch
    %33 = sbr.rel (0) target = $region21
  $region20: #{acnet_forward.1} parent=0 // pred_region
    _
  $region21: #{acnet_forward.1} parent=0 // pred_fallthru
    _
  // Predicated region
  $region22: #{acnet_forward.1} parent=0 // pred_check
    _
  $region23: #{acnet_forward.1} parent=0 // pred_check_branch
    %35 = sbr.rel (0) target = $region25
  $region24: #{acnet_forward.1} parent=0 // pred_region
    _
  $region25: #{acnet_forward.1} parent=0 // pred_fallthru
    _
  // Predicated region
  $region26: #{acnet_forward.1} parent=0 // pred_check
    _
  $region27: #{acnet_forward.1} parent=0 // pred_check_branch
    %37 = sbr.rel (0) target = $region29
  $region28: #{acnet_forward.1} parent=0 // pred_region
    _
  $region29: #{acnet_forward.1} parent=0 // pred_fallthru
    _
  // Predicated region
  $region30: #{acnet_forward.1} parent=0 // pred_check
    _
  $region31: #{acnet_forward.1} parent=0 // pred_check_branch
    %39 = sbr.rel (0) target = $region33
  $region32: #{acnet_forward.1} parent=0 // pred_region
    _
  $region33: #{acnet_forward.1} parent=0 // pred_fallthru
    _
  // Predicated region
  $region34: #{acnet_forward.1} parent=0 // pred_check
    _
  $region35: #{acnet_forward.1} parent=0 // pred_check_branch
    %41 = sbr.rel (0) target = $region37
  $region36: #{acnet_forward.1} parent=0 // pred_region
    _
  $region37: #{acnet_forward.1} parent=0 // pred_fallthru
    _
  // Predicated region
  $region38: #{acnet_forward.1} parent=0 // pred_check
    _
  $region39: #{acnet_forward.1} parent=0 // pred_check_branch
    %43 = sbr.rel (0) target = $region41
  $region40: #{acnet_forward.1} parent=0 // pred_region
    _
  $region41: #{acnet_forward.1} parent=0 // pred_fallthru
    _
  // Predicated region
  $region42: #{acnet_forward.1} parent=0 // pred_check
    _
  $region43: #{acnet_forward.1} parent=0 // pred_check_branch
    %45 = sbr.rel (0) target = $region45
  $region44: #{acnet_forward.1} parent=0 // pred_region
    _
  $region45: #{acnet_forward.1} parent=0 // pred_fallthru
    _
  // Predicated region
  $region46: #{acnet_forward.1} parent=0 // pred_check
    _
  $region47: #{acnet_forward.1} parent=0 // pred_check_branch
    %47 = sbr.rel (0) target = $region49
  $region48: #{acnet_forward.1} parent=0 // pred_region
    _
  $region49: #{acnet_forward.1} parent=0 // pred_fallthru
    _
  // Predicated region
  $region50: #{acnet_forward.1} parent=0 // pred_check
    _
  $region51: #{acnet_forward.1} parent=0 // pred_check_branch
    %49 = sbr.rel (0) target = $region53
  $region52: #{acnet_forward.1} parent=0 // pred_region
    _
  $region53: #{acnet_forward.1} parent=0 // pred_fallthru
    _
  %v51 = vld [vmem:[%s0] sm:$0xff]
  %v52 = vld [vmem:[%s0 + $0x8] sm:$0xff]
  %v53 = vld [vmem:[%s0 + $0x10] sm:$0xff]
  %v54 = vld [vmem:[%s0 + $0x18] sm:$0xff]
  %v55 = vld [vmem:[%s0 + $0x20] sm:$0xff]
  %v56 = vld [vmem:[%s0 + $0x28] sm:$0xff]
  %v57 = vld [vmem:[%s0 + $0x30] sm:$0xff]
  %v58 = vld [vmem:[%s0 + $0x38] sm:$0xff]
  %v59 = vld [vmem:[%s0 + $0x40] sm:$0xff]
  %v60 = vld [vmem:[%s0 + $0x48] sm:$0xff]
  %v61 = vld [vmem:[%s0 + $0x50] sm:$0xff]
  %v62 = vld [vmem:[%s0 + $0x58] sm:$0xff]
  %v63 = vld [vmem:[%s0 + $0x60] sm:$0xff]
  %v64 = vld [vmem:[%s0 + $0x68] sm:$0xff]
  %v65 = vld [vmem:[%s0 + $0x70] sm:$0xff]
  %v66 = vld [vmem:[%s0 + $0x78] sm:$0xff]
  %vm80 = vcmask 1041408
  %v81 = vrot.slane 0.0, 6
  %v82 = vsel %vm80, %v81, %v81
  %v83 = vrot.slane %v51, 6
  %v84 = vsel %vm80, %v81, %v83
  %v85 = vrot.slane %v52, 6
  %v86 = vsel %vm80, %v81, %v85
  %v87 = vrot.slane %v53, 6
  %v88 = vsel %vm80, %v81, %v87
  %v89 = vrot.slane %v54, 6
  %v90 = vsel %vm80, %v81, %v89
  %v91 = vrot.slane %v55, 6
  %v92 = vsel %vm80, %v81, %v91
  %v93 = vrot.slane %v56, 6
  %v94 = vsel %vm80, %v81, %v93
  %v95 = vrot.slane %v59, 6
  %v96 = vsel %vm80, %v81, %v95
  %v97 = vrot.slane %v60, 6
  %v98 = vsel %vm80, %v81, %v97
  %v99 = vrot.slane %v61, 6
  %v100 = vsel %vm80, %v81, %v99
  %v101 = vrot.slane %v62, 6
  %v102 = vsel %vm80, %v81, %v101
  %v103 = vrot.slane %v63, 6
  %v104 = vsel %vm80, %v81, %v103
  %v105 = vrot.slane %v64, 6
  %v106 = vsel %vm80, %v81, %v105
  %vm120 = vcmask 1040384
  %v121 = vrot.slane 0.0, 7
  %v122 = vsel %vm120, %v121, %v121
  %v123 = vrot.slane %v51, 7
  %v124 = vsel %vm120, %v121, %v123
  %v125 = vrot.slane %v52, 7
  %v126 = vsel %vm120, %v121, %v125
  %v127 = vrot.slane %v53, 7
  %v128 = vsel %vm120, %v121, %v127
  %v129 = vrot.slane %v54, 7
  %v130 = vsel %vm120, %v121, %v129
  %v131 = vrot.slane %v55, 7
  %v132 = vsel %vm120, %v121, %v131
  %v133 = vrot.slane %v56, 7
  %v134 = vsel %vm120, %v121, %v133
  %v135 = vrot.slane %v59, 7
  %v136 = vsel %vm120, %v121, %v135
  %v137 = vrot.slane %v60, 7
  %v138 = vsel %vm120, %v121, %v137
  %v139 = vrot.slane %v61, 7
  %v140 = vsel %vm120, %v121, %v139
  %v141 = vrot.slane %v62, 7
  %v142 = vsel %vm120, %v121, %v141
  %v143 = vrot.slane %v63, 7
  %v144 = vsel %vm120, %v121, %v143
  %v145 = vrot.slane %v64, 7
  %v146 = vsel %vm120, %v121, %v145
  %vm160 = vcmask 1046528
  %v161 = vrot.slane 0.0, 1
  %v162 = vsel %vm160, %v161, %v161
  %v163 = vrot.slane %v51, 1
  %v164 = vsel %vm160, %v163, %v161
  %v165 = vrot.slane %v52, 1
  %v166 = vsel %vm160, %v165, %v161
  %v167 = vrot.slane %v53, 1
  %v168 = vsel %vm160, %v167, %v161
  %v169 = vrot.slane %v54, 1
  %v170 = vsel %vm160, %v169, %v161
  %v171 = vrot.slane %v55, 1
  %v172 = vsel %vm160, %v171, %v161
  %v173 = vrot.slane %v56, 1
  %v174 = vsel %vm160, %v173, %v161
  %v175 = vrot.slane %v59, 1
  %v176 = vsel %vm160, %v175, %v161
  %v177 = vrot.slane %v60, 1
  %v178 = vsel %vm160, %v177, %v161
  %v179 = vrot.slane %v61, 1
  %v180 = vsel %vm160, %v179, %v161
  %v181 = vrot.slane %v62, 1
  %v182 = vsel %vm160, %v181, %v161
  %v183 = vrot.slane %v63, 1
  %v184 = vsel %vm160, %v183, %v161
  %v185 = vrot.slane %v64, 1
  %v186 = vsel %vm160, %v185, %v161
  %vm200 = vcmask 1045504
  %v201 = vrot.slane 0.0, 2
  %v202 = vsel %vm200, %v201, %v201
  %v203 = vrot.slane %v51, 2
  %v204 = vsel %vm200, %v203, %v201
  %v205 = vrot.slane %v52, 2
  %v206 = vsel %vm200, %v205, %v201
  %v207 = vrot.slane %v53, 2
  %v208 = vsel %vm200, %v207, %v201
  %v209 = vrot.slane %v54, 2
  %v210 = vsel %vm200, %v209, %v201
  %v211 = vrot.slane %v55, 2
  %v212 = vsel %vm200, %v211, %v201
  %v213 = vrot.slane %v56, 2
  %v214 = vsel %vm200, %v213, %v201
  %v215 = vrot.slane %v59, 2
  %v216 = vsel %vm200, %v215, %v201
  %v217 = vrot.slane %v60, 2
  %v218 = vsel %vm200, %v217, %v201
  %v219 = vrot.slane %v61, 2
  %v220 = vsel %vm200, %v219, %v201
  %v221 = vrot.slane %v62, 2
  %v222 = vsel %vm200, %v221, %v201
  %v223 = vrot.slane %v63, 2
  %v224 = vsel %vm200, %v223, %v201
  %v225 = vrot.slane %v64, 2
  %v226 = vsel %vm200, %v225, %v201
  %v242 = vrot.slane %v57, 6
  %v243 = vsel %vm80, %v81, %v242
  %v244 = vrot.slane %v65, 6
  %v245 = vsel %vm80, %v81, %v244
  %v248 = vrot.slane %v57, 7
  %v249 = vsel %vm120, %v121, %v248
  %v250 = vrot.slane %v65, 7
  %v251 = vsel %vm120, %v121, %v250
  %v254 = vrot.slane %v57, 1
  %v255 = vsel %vm160, %v254, %v161
  %v256 = vrot.slane %v65, 1
  %v257 = vsel %vm160, %v256, %v161
  %v260 = vrot.slane %v57, 2
  %v261 = vsel %vm200, %v260, %v201
  %v262 = vrot.slane %v65, 2
  %v263 = vsel %vm200, %v262, %v201
  %v268 = vrot.slane %v58, 6
  %v269 = vsel %vm80, %v81, %v268
  %v270 = vrot.slane %v66, 6
  %v271 = vsel %vm80, %v81, %v270
  %v274 = vrot.slane %v58, 7
  %v275 = vsel %vm120, %v121, %v274
  %v276 = vrot.slane %v66, 7
  %v277 = vsel %vm120, %v121, %v276
  %v280 = vrot.slane %v58, 1
  %v281 = vsel %vm160, %v280, %v161
  %v282 = vrot.slane %v66, 1
  %v283 = vsel %vm160, %v282, %v161
  %v286 = vrot.slane %v58, 2
  %v287 = vsel %vm200, %v286, %v201
  %v288 = vrot.slane %v66, 2
  %v289 = vsel %vm200, %v288, %v201
  %v292 = vpack.c.bf16 %v82, %v82
  %v293 = vpack.c.bf16 %v122, %v122
  %v294 = vpack.c.bf16 0.0, 0.0
  %v295 = vpack.c.bf16 %v162, %v162
  %v296 = vpack.c.bf16 %v202, %v202
  %v297 = vpack.c.bf16 %v84, %v82
  %v298 = vpack.c.bf16 %v124, %v122
  %v299 = vpack.c.bf16 %v51, 0.0
  %v300 = vpack.c.bf16 %v164, %v162
  %v301 = vpack.c.bf16 %v204, %v202
  %v302 = vpack.c.bf16 %v86, %v84
  %v303 = vpack.c.bf16 %v126, %v124
  %v304 = vpack.c.bf16 %v52, %v51
  %v305 = vpack.c.bf16 %v166, %v164
  %v306 = vpack.c.bf16 %v206, %v204
  %v307 = vpack.c.bf16 %v88, %v86
  %v308 = vpack.c.bf16 %v128, %v126
  %v309 = vpack.c.bf16 %v53, %v52
  %v310 = vpack.c.bf16 %v168, %v166
  %v311 = vpack.c.bf16 %v208, %v206
  %v312 = vpack.c.bf16 %v90, %v88
  %v313 = vpack.c.bf16 %v130, %v128
  %v314 = vpack.c.bf16 %v54, %v53
  %v315 = vpack.c.bf16 %v170, %v168
  %v316 = vpack.c.bf16 %v210, %v208
  %v317 = vpack.c.bf16 %v92, %v90
  %v318 = vpack.c.bf16 %v132, %v130
  %v319 = vpack.c.bf16 %v55, %v54
  %v320 = vpack.c.bf16 %v172, %v170
  %v321 = vpack.c.bf16 %v212, %v210
  %v322 = vpack.c.bf16 %v94, %v92
  %v323 = vpack.c.bf16 %v134, %v132
  %v324 = vpack.c.bf16 %v56, %v55
  %v325 = vpack.c.bf16 %v174, %v172
  %v326 = vpack.c.bf16 %v214, %v212
  %v327 = vpack.c.bf16 %v243, %v94
  %v328 = vpack.c.bf16 %v249, %v134
  %v329 = vpack.c.bf16 %v57, %v56
  %v330 = vpack.c.bf16 %v255, %v174
  %v331 = vpack.c.bf16 %v261, %v214
  %v332 = vpack.c.bf16 %v269, %v243
  %v333 = vpack.c.bf16 %v275, %v249
  %v334 = vpack.c.bf16 %v58, %v57
  %v335 = vpack.c.bf16 %v281, %v255
  %v336 = vpack.c.bf16 %v287, %v261
  %v337 = vpack.c.bf16 %v82, %v269
  %v338 = vpack.c.bf16 %v122, %v275
  %v339 = vpack.c.bf16 0.0, %v58
  %v340 = vpack.c.bf16 %v162, %v281
  %v341 = vpack.c.bf16 %v202, %v287
  %v342 = vpack.c.bf16 %v96, %v82
  %v343 = vpack.c.bf16 %v136, %v122
  %v344 = vpack.c.bf16 %v59, 0.0
  %v345 = vpack.c.bf16 %v176, %v162
  %v346 = vpack.c.bf16 %v216, %v202
  %v347 = vpack.c.bf16 %v98, %v96
  %v348 = vpack.c.bf16 %v138, %v136
  %v349 = vpack.c.bf16 %v60, %v59
  %v350 = vpack.c.bf16 %v178, %v176
  %v351 = vpack.c.bf16 %v218, %v216
  %v352 = vpack.c.bf16 %v100, %v98
  %v353 = vpack.c.bf16 %v140, %v138
  %v354 = vpack.c.bf16 %v61, %v60
  %v355 = vpack.c.bf16 %v180, %v178
  %v356 = vpack.c.bf16 %v220, %v218
  %v357 = vpack.c.bf16 %v102, %v100
  %v358 = vpack.c.bf16 %v142, %v140
  %v359 = vpack.c.bf16 %v62, %v61
  %v360 = vpack.c.bf16 %v182, %v180
  %v361 = vpack.c.bf16 %v222, %v220
  %v362 = vpack.c.bf16 %v104, %v102
  %v363 = vpack.c.bf16 %v144, %v142
  %v364 = vpack.c.bf16 %v63, %v62
  %v365 = vpack.c.bf16 %v184, %v182
  %v366 = vpack.c.bf16 %v224, %v222
  %v367 = vpack.c.bf16 %v106, %v104
  %v368 = vpack.c.bf16 %v146, %v144
  %v369 = vpack.c.bf16 %v64, %v63
  %v370 = vpack.c.bf16 %v186, %v184
  %v371 = vpack.c.bf16 %v226, %v224
  %v372 = vpack.c.bf16 %v245, %v106
  %v373 = vpack.c.bf16 %v251, %v146
  %v374 = vpack.c.bf16 %v65, %v64
  %v375 = vpack.c.bf16 %v257, %v186
  %v376 = vpack.c.bf16 %v263, %v226
  %v377 = vpack.c.bf16 %v271, %v245
  %v378 = vpack.c.bf16 %v277, %v251
  %v379 = vpack.c.bf16 %v66, %v65
  %v380 = vpack.c.bf16 %v283, %v257
  %v381 = vpack.c.bf16 %v289, %v263
  %v382 = vpack.c.bf16 %v82, %v271
  %v383 = vpack.c.bf16 %v122, %v277
  %v384 = vpack.c.bf16 0.0, %v66
  %v385 = vpack.c.bf16 %v162, %v283
  %v386 = vpack.c.bf16 %v202, %v289
  %v387 = vld [vmem:[%s1] sm:$0xf]
  %v388 = vld [vmem:[%s1 + $0x4] sm:$0xf]
  %v389 = vld [vmem:[%s1 + $0x8] sm:$0xf]
  %v390 = vld [vmem:[%s1 + $0xc] sm:$0xf]
  %v391 = vld [vmem:[%s1 + $0x10] sm:$0xf]
  %v392 = vld [vmem:[%s1 + $0x14] sm:$0xf]
  %v393 = vld [vmem:[%s1 + $0x18] sm:$0xf]
  %v394 = vld [vmem:[%s1 + $0x1c] sm:$0xf]
  %v395 = vld [vmem:[%s1 + $0x20] sm:$0xf]
  %v396 = vld [vmem:[%s1 + $0x24] sm:$0xf]
  %v397 = vld [vmem:[%s1 + $0x28] sm:$0xf]
  %v398 = vld [vmem:[%s1 + $0x2c] sm:$0xf]
  %v399 = vld [vmem:[%s1 + $0x30] sm:$0xf]
  %v400 = vld [vmem:[%s1 + $0x34] sm:$0xf]
  %v401 = vld [vmem:[%s1 + $0x38] sm:$0xf]
  %v402 = vld [vmem:[%s1 + $0x3c] sm:$0xf]
  %v403 = vld [vmem:[%s1 + $0x40] sm:$0xf]
  %v404 = vld [vmem:[%s1 + $0x44] sm:$0xf]
  %v405 = vld [vmem:[%s1 + $0x48] sm:$0xf]
  %v406 = vld [vmem:[%s1 + $0x4c] sm:$0xf]
  %v407 = vld [vmem:[%s1 + $0x50] sm:$0xf]
  %v408 = vld [vmem:[%s1 + $0x54] sm:$0xf]
  %v409 = vld [vmem:[%s1 + $0x58] sm:$0xf]
  %v410 = vld [vmem:[%s1 + $0x5c] sm:$0xf]
  %v411 = vld [vmem:[%s1 + $0x60] sm:$0xf]
  %v412 = vld [vmem:[%s1 + $0x64] sm:$0xf]
  %v413 = vld [vmem:[%s1 + $0x68] sm:$0xf]
  %v414 = vld [vmem:[%s1 + $0x6c] sm:$0xf]
  %v415 = vld [vmem:[%s1 + $0x70] sm:$0xf]
  %v416 = vld [vmem:[%s1 + $0x74] sm:$0xf]
  %v417 = vld [vmem:[%s1 + $0x78] sm:$0xf]
  %v418 = vld [vmem:[%s1 + $0x7c] sm:$0xf]
  %v419 = vld [vmem:[%s1 + $0x80] sm:$0xf]
  %v420 = vld [vmem:[%s1 + $0x84] sm:$0xf]
  %v421 = vld [vmem:[%s1 + $0x88] sm:$0xf]
  %v422 = vld [vmem:[%s1 + $0x8c] sm:$0xf]
  %v423 = vld [vmem:[%s1 + $0x90] sm:$0xf]
  %v424 = vld [vmem:[%s1 + $0x94] sm:$0xf]
  %v425 = vld [vmem:[%s1 + $0x98] sm:$0xf]
  %v426 = vld [vmem:[%s1 + $0x9c] sm:$0xf]
  %v427 = vld [vmem:[%s1 + $0xa0] sm:$0xf]
  %v428 = vld [vmem:[%s1 + $0xa4] sm:$0xf]
  %v429 = vld [vmem:[%s1 + $0xa8] sm:$0xf]
  %v430 = vld [vmem:[%s1 + $0xac] sm:$0xf]
  %v431 = vld [vmem:[%s1 + $0xb0] sm:$0xf]
  %v432 = vld [vmem:[%s1 + $0xb4] sm:$0xf]
  %v433 = vld [vmem:[%s1 + $0xb8] sm:$0xf]
  %v434 = vld [vmem:[%s1 + $0xbc] sm:$0xf]
  %v435 = vld [vmem:[%s1 + $0xc0] sm:$0xf]
  %v436 = vld [vmem:[%s1 + $0xc4] sm:$0xf]
  %v437 = vld [vmem:[%s1 + $0xc8] sm:$0xf]
  %v438 = vld [vmem:[%s1 + $0xcc] sm:$0xf]
  %v439 = vld [vmem:[%s1 + $0xd0] sm:$0xf]
  %v440 = vld [vmem:[%s1 + $0xd4] sm:$0xf]
  %v441 = vld [vmem:[%s1 + $0xd8] sm:$0xf]
  %v442 = vld [vmem:[%s1 + $0xdc] sm:$0xf]
  %v443 = vld [vmem:[%s1 + $0xe0] sm:$0xf]
  %v444 = vld [vmem:[%s1 + $0xe4] sm:$0xf]
  %v445 = vld [vmem:[%s1 + $0xe8] sm:$0xf]
  %v446 = vld [vmem:[%s1 + $0xec] sm:$0xf]
  %v447 = vld [vmem:[%s1 + $0xf0] sm:$0xf]
  %v448 = vld [vmem:[%s1 + $0xf4] sm:$0xf]
  %v449 = vld [vmem:[%s1 + $0xf8] sm:$0xf]
  %v450 = vld [vmem:[%s1 + $0xfc] sm:$0xf]
  %v451 = vld [vmem:[%s1 + $0x100] sm:$0xf]
  %v452 = vld [vmem:[%s1 + $0x104] sm:$0xf]
  %v453 = vld [vmem:[%s1 + $0x108] sm:$0xf]
  %v454 = vld [vmem:[%s1 + $0x10c] sm:$0xf]
  %v455 = vld [vmem:[%s1 + $0x110] sm:$0xf]
  %v456 = vld [vmem:[%s1 + $0x114] sm:$0xf]
  %v457 = vld [vmem:[%s1 + $0x118] sm:$0xf]
  %v458 = vld [vmem:[%s1 + $0x11c] sm:$0xf]
  %v459 = vld [vmem:[%s1 + $0x120] sm:$0xf]
  %v460 = vld [vmem:[%s1 + $0x124] sm:$0xf]
  %v461 = vld [vmem:[%s1 + $0x128] sm:$0xf]
  %v462 = vld [vmem:[%s1 + $0x12c] sm:$0xf]
  %v463 = vld [vmem:[%s1 + $0x130] sm:$0xf]
  %v464 = vld [vmem:[%s1 + $0x134] sm:$0xf]
  %v465 = vld [vmem:[%s1 + $0x138] sm:$0xf]
  %v466 = vld [vmem:[%s1 + $0x13c] sm:$0xf]
  %v467 = vld [vmem:[%s1 + $0x140] sm:$0xf]
  %v468 = vld [vmem:[%s1 + $0x144] sm:$0xf]
  %v469 = vld [vmem:[%s1 + $0x148] sm:$0xf]
  %v470 = vld [vmem:[%s1 + $0x14c] sm:$0xf]
  %v471 = vld [vmem:[%s1 + $0x150] sm:$0xf]
  %v472 = vld [vmem:[%s1 + $0x154] sm:$0xf]
  %v473 = vld [vmem:[%s1 + $0x158] sm:$0xf]
  %v474 = vld [vmem:[%s1 + $0x15c] sm:$0xf]
  %v475 = vld [vmem:[%s1 + $0x160] sm:$0xf]
  %v476 = vld [vmem:[%s1 + $0x164] sm:$0xf]
  %v477 = vld [vmem:[%s1 + $0x168] sm:$0xf]
  %v478 = vld [vmem:[%s1 + $0x16c] sm:$0xf]
  %v479 = vld [vmem:[%s1 + $0x170] sm:$0xf]
  %v480 = vld [vmem:[%s1 + $0x174] sm:$0xf]
  %v481 = vld [vmem:[%s1 + $0x178] sm:$0xf]
  %v482 = vld [vmem:[%s1 + $0x17c] sm:$0xf]
  %v483 = vld [vmem:[%s1 + $0x180] sm:$0xf]
  %v484 = vld [vmem:[%s1 + $0x184] sm:$0xf]
  %v485 = vld [vmem:[%s1 + $0x188] sm:$0xf]
  %v486 = vld [vmem:[%s1 + $0x18c] sm:$0xf]
  %v487 = vld [vmem:[%s1 + $0x190] sm:$0xf]
  %v488 = vld [vmem:[%s1 + $0x194] sm:$0xf]
  %v489 = vld [vmem:[%s1 + $0x198] sm:$0xf]
  %v490 = vld [vmem:[%s1 + $0x19c] sm:$0xf]
  %v491 = vld [vmem:[%s1 + $0x1a0] sm:$0xf]
  %v492 = vld [vmem:[%s1 + $0x1a4] sm:$0xf]
  %v493 = vld [vmem:[%s1 + $0x1a8] sm:$0xf]
  %v494 = vld [vmem:[%s1 + $0x1ac] sm:$0xf]
  %v495 = vld [vmem:[%s1 + $0x1b0] sm:$0xf]
  %v496 = vld [vmem:[%s1 + $0x1b4] sm:$0xf]
  %v497 = vld [vmem:[%s1 + $0x1b8] sm:$0xf]
  %v498 = vld [vmem:[%s1 + $0x1bc] sm:$0xf]
  %v499 = vld [vmem:[%s1 + $0x1c0] sm:$0xf]
  %v500 = vld [vmem:[%s1 + $0x1c4] sm:$0xf]
  %v501 = vld [vmem:[%s1 + $0x1c8] sm:$0xf]
  %v502 = vld [vmem:[%s1 + $0x1cc] sm:$0xf]
  %v503 = vld [vmem:[%s1 + $0x1d0] sm:$0xf]
  %v504 = vld [vmem:[%s1 + $0x1d4] sm:$0xf]
  %v505 = vld [vmem:[%s1 + $0x1d8] sm:$0xf]
  %v506 = vld [vmem:[%s1 + $0x1dc] sm:$0xf]
  %v507 = vld [vmem:[%s1 + $0x1e0] sm:$0xf]
  %v508 = vld [vmem:[%s1 + $0x1e4] sm:$0xf]
  %v509 = vld [vmem:[%s1 + $0x1e8] sm:$0xf]
  %v510 = vld [vmem:[%s1 + $0x1ec] sm:$0xf]
  %v511 = vld [vmem:[%s1 + $0x1f0] sm:$0xf]
  %v512 = vld [vmem:[%s1 + $0x1f4] sm:$0xf]
  %v513 = vld [vmem:[%s1 + $0x1f8] sm:$0xf]
  %v514 = vld [vmem:[%s1 + $0x1fc] sm:$0xf]
  %v515 = vld [vmem:[%s1 + $0x200] sm:$0xf]
  %v516 = vld [vmem:[%s1 + $0x204] sm:$0xf]
  %v517 = vld [vmem:[%s1 + $0x208] sm:$0xf]
  %v518 = vld [vmem:[%s1 + $0x20c] sm:$0xf]
  %v519 = vld [vmem:[%s1 + $0x210] sm:$0xf]
  %v520 = vld [vmem:[%s1 + $0x214] sm:$0xf]
  %v521 = vld [vmem:[%s1 + $0x218] sm:$0xf]
  %v522 = vld [vmem:[%s1 + $0x21c] sm:$0xf]
  %v523 = vld [vmem:[%s1 + $0x220] sm:$0xf]
  %v524 = vld [vmem:[%s1 + $0x224] sm:$0xf]
  %v525 = vld [vmem:[%s1 + $0x228] sm:$0xf]
  %v526 = vld [vmem:[%s1 + $0x22c] sm:$0xf]
  %v527 = vld [vmem:[%s1 + $0x230] sm:$0xf]
  %v528 = vld [vmem:[%s1 + $0x234] sm:$0xf]
  %v529 = vld [vmem:[%s1 + $0x238] sm:$0xf]
  %v530 = vld [vmem:[%s1 + $0x23c] sm:$0xf]
  %v531 = vld [vmem:[%s1 + $0x240] sm:$0xf]
  %v532 = vld [vmem:[%s1 + $0x244] sm:$0xf]
  %v533 = vld [vmem:[%s1 + $0x248] sm:$0xf]
  %v534 = vld [vmem:[%s1 + $0x24c] sm:$0xf]
  %v535 = vld [vmem:[%s1 + $0x250] sm:$0xf]
  %v536 = vld [vmem:[%s1 + $0x254] sm:$0xf]
  %v537 = vld [vmem:[%s1 + $0x258] sm:$0xf]
  %v538 = vld [vmem:[%s1 + $0x25c] sm:$0xf]
  %v539 = vld [vmem:[%s1 + $0x260] sm:$0xf]
  %v540 = vld [vmem:[%s1 + $0x264] sm:$0xf]
  %v541 = vld [vmem:[%s1 + $0x268] sm:$0xf]
  %v542 = vld [vmem:[%s1 + $0x26c] sm:$0xf]
  %v543 = vld [vmem:[%s1 + $0x270] sm:$0xf]
  %v544 = vld [vmem:[%s1 + $0x274] sm:$0xf]
  %v545 = vld [vmem:[%s1 + $0x278] sm:$0xf]
  %v546 = vld [vmem:[%s1 + $0x27c] sm:$0xf]
  %v547 = vld [vmem:[%s1 + $0x280] sm:$0xf]
  %v548 = vld [vmem:[%s1 + $0x284] sm:$0xf]
  %v549 = vld [vmem:[%s1 + $0x288] sm:$0xf]
  %v550 = vld [vmem:[%s1 + $0x28c] sm:$0xf]
  %v551 = vld [vmem:[%s1 + $0x290] sm:$0xf]
  %v552 = vld [vmem:[%s1 + $0x294] sm:$0xf]
  %v553 = vld [vmem:[%s1 + $0x298] sm:$0xf]
  %v554 = vld [vmem:[%s1 + $0x29c] sm:$0xf]
  %v555 = vld [vmem:[%s1 + $0x2a0] sm:$0xf]
  %v556 = vld [vmem:[%s1 + $0x2a4] sm:$0xf]
  %v557 = vld [vmem:[%s1 + $0x2a8] sm:$0xf]
  %v558 = vld [vmem:[%s1 + $0x2ac] sm:$0xf]
  %v559 = vld [vmem:[%s1 + $0x2b0] sm:$0xf]
  %v560 = vld [vmem:[%s1 + $0x2b4] sm:$0xf]
  %v561 = vld [vmem:[%s1 + $0x2b8] sm:$0xf]
  %v562 = vld [vmem:[%s1 + $0x2bc] sm:$0xf]
  %v563 = vld [vmem:[%s1 + $0x2c0] sm:$0xf]
  %v564 = vld [vmem:[%s1 + $0x2c4] sm:$0xf]
  %v565 = vld [vmem:[%s1 + $0x2c8] sm:$0xf]
  %v566 = vld [vmem:[%s1 + $0x2cc] sm:$0xf]
  %v567 = vld [vmem:[%s1 + $0x2d0] sm:$0xf]
  %v568 = vld [vmem:[%s1 + $0x2d4] sm:$0xf]
  %v569 = vld [vmem:[%s1 + $0x2d8] sm:$0xf]
  %v570 = vld [vmem:[%s1 + $0x2dc] sm:$0xf]
  %v571 = vld [vmem:[%s1 + $0x2e0] sm:$0xf]
  %v572 = vld [vmem:[%s1 + $0x2e4] sm:$0xf]
  %v573 = vld [vmem:[%s1 + $0x2e8] sm:$0xf]
  %v574 = vld [vmem:[%s1 + $0x2ec] sm:$0xf]
  %v575 = vld [vmem:[%s1 + $0x2f0] sm:$0xf]
  %v576 = vld [vmem:[%s1 + $0x2f4] sm:$0xf]
  %v577 = vld [vmem:[%s1 + $0x2f8] sm:$0xf]
  %v578 = vld [vmem:[%s1 + $0x2fc] sm:$0xf]
  %v579 = vld [vmem:[%s1 + $0x300] sm:$0xf]
  %v580 = vld [vmem:[%s1 + $0x304] sm:$0xf]
  %v581 = vld [vmem:[%s1 + $0x308] sm:$0xf]
  %v582 = vld [vmem:[%s1 + $0x30c] sm:$0xf]
  %v583 = vld [vmem:[%s1 + $0x310] sm:$0xf]
  %v584 = vld [vmem:[%s1 + $0x314] sm:$0xf]
  %v585 = vld [vmem:[%s1 + $0x318] sm:$0xf]
  %v586 = vld [vmem:[%s1 + $0x31c] sm:$0xf]
  %v587 = vld [vmem:[%s1 + $0x320] sm:$0xf]
  %v588 = vld [vmem:[%s1 + $0x324] sm:$0xf]
  %v589 = vld [vmem:[%s1 + $0x328] sm:$0xf]
  %v590 = vld [vmem:[%s1 + $0x32c] sm:$0xf]
  %v591 = vld [vmem:[%s1 + $0x330] sm:$0xf]
  %v592 = vld [vmem:[%s1 + $0x334] sm:$0xf]
  %v593 = vld [vmem:[%s1 + $0x338] sm:$0xf]
  %v594 = vld [vmem:[%s1 + $0x33c] sm:$0xf]
  %v595 = vld [vmem:[%s1 + $0x340] sm:$0xf]
  %v596 = vld [vmem:[%s1 + $0x344] sm:$0xf]
  %v597 = vld [vmem:[%s1 + $0x348] sm:$0xf]
  %v598 = vld [vmem:[%s1 + $0x34c] sm:$0xf]
  %v599 = vld [vmem:[%s1 + $0x350] sm:$0xf]
  %v600 = vld [vmem:[%s1 + $0x354] sm:$0xf]
  %v601 = vld [vmem:[%s1 + $0x358] sm:$0xf]
  %v602 = vld [vmem:[%s1 + $0x35c] sm:$0xf]
  %v603 = vld [vmem:[%s1 + $0x360] sm:$0xf]
  %v604 = vld [vmem:[%s1 + $0x364] sm:$0xf]
  %v605 = vld [vmem:[%s1 + $0x368] sm:$0xf]
  %v606 = vld [vmem:[%s1 + $0x36c] sm:$0xf]
  %v607 = vld [vmem:[%s1 + $0x370] sm:$0xf]
  %v608 = vld [vmem:[%s1 + $0x374] sm:$0xf]
  %v609 = vld [vmem:[%s1 + $0x378] sm:$0xf]
  %v610 = vld [vmem:[%s1 + $0x37c] sm:$0xf]
  %v611 = vld [vmem:[%s1 + $0x380] sm:$0xf]
  %v612 = vld [vmem:[%s1 + $0x384] sm:$0xf]
  %v613 = vld [vmem:[%s1 + $0x388] sm:$0xf]
  %v614 = vld [vmem:[%s1 + $0x38c] sm:$0xf]
  %v615 = vld [vmem:[%s1 + $0x390] sm:$0xf]
  %v616 = vld [vmem:[%s1 + $0x394] sm:$0xf]
  %v617 = vld [vmem:[%s1 + $0x398] sm:$0xf]
  %v618 = vld [vmem:[%s1 + $0x39c] sm:$0xf]
  %v619 = vld [vmem:[%s1 + $0x3a0] sm:$0xf]
  %v620 = vld [vmem:[%s1 + $0x3a4] sm:$0xf]
  %v621 = vld [vmem:[%s1 + $0x3a8] sm:$0xf]
  %v622 = vld [vmem:[%s1 + $0x3ac] sm:$0xf]
  %v623 = vld [vmem:[%s1 + $0x3b0] sm:$0xf]
  %v624 = vld [vmem:[%s1 + $0x3b4] sm:$0xf]
  %v625 = vld [vmem:[%s1 + $0x3b8] sm:$0xf]
  %v626 = vld [vmem:[%s1 + $0x3bc] sm:$0xf]
  %v627 = vld [vmem:[%s1 + $0x3c0] sm:$0xf]
  %v628 = vld [vmem:[%s1 + $0x3c4] sm:$0xf]
  %v629 = vld [vmem:[%s1 + $0x3c8] sm:$0xf]
  %v630 = vld [vmem:[%s1 + $0x3cc] sm:$0xf]
  %v631 = vld [vmem:[%s1 + $0x3d0] sm:$0xf]
  %v632 = vld [vmem:[%s1 + $0x3d4] sm:$0xf]
  %v633 = vld [vmem:[%s1 + $0x3d8] sm:$0xf]
  %v634 = vld [vmem:[%s1 + $0x3dc] sm:$0xf]
  %v635 = vld [vmem:[%s1 + $0x3e0] sm:$0xf]
  %v636 = vld [vmem:[%s1 + $0x3e4] sm:$0xf]
  %v637 = vld [vmem:[%s1 + $0x3e8] sm:$0xf]
  %v638 = vld [vmem:[%s1 + $0x3ec] sm:$0xf]
  %v639 = vld [vmem:[%s1 + $0x3f0] sm:$0xf]
  %v640 = vld [vmem:[%s1 + $0x3f4] sm:$0xf]
  %v641 = vld [vmem:[%s1 + $0x3f8] sm:$0xf]
  %v642 = vld [vmem:[%s1 + $0x3fc] sm:$0xf]
  %v643 = vld [vmem:[%s1 + $0x400] sm:$0xf]
  %v644 = vld [vmem:[%s1 + $0x404] sm:$0xf]
  %v645 = vld [vmem:[%s1 + $0x408] sm:$0xf]
  %v646 = vld [vmem:[%s1 + $0x40c] sm:$0xf]
  %v647 = vld [vmem:[%s1 + $0x410] sm:$0xf]
  %v648 = vld [vmem:[%s1 + $0x414] sm:$0xf]
  %v649 = vld [vmem:[%s1 + $0x418] sm:$0xf]
  %v650 = vld [vmem:[%s1 + $0x41c] sm:$0xf]
  %v651 = vld [vmem:[%s1 + $0x420] sm:$0xf]
  %v652 = vld [vmem:[%s1 + $0x424] sm:$0xf]
  %v653 = vld [vmem:[%s1 + $0x428] sm:$0xf]
  %v654 = vld [vmem:[%s1 + $0x42c] sm:$0xf]
  %v655 = vld [vmem:[%s1 + $0x430] sm:$0xf]
  %v656 = vld [vmem:[%s1 + $0x434] sm:$0xf]
  %v657 = vld [vmem:[%s1 + $0x438] sm:$0xf]
  %v658 = vld [vmem:[%s1 + $0x43c] sm:$0xf]
  %v659 = vld [vmem:[%s1 + $0x440] sm:$0xf]
  %v660 = vld [vmem:[%s1 + $0x444] sm:$0xf]
  %v661 = vld [vmem:[%s1 + $0x448] sm:$0xf]
  %v662 = vld [vmem:[%s1 + $0x44c] sm:$0xf]
  %v663 = vld [vmem:[%s1 + $0x450] sm:$0xf]
  %v664 = vld [vmem:[%s1 + $0x454] sm:$0xf]
  %v665 = vld [vmem:[%s1 + $0x458] sm:$0xf]
  %v666 = vld [vmem:[%s1 + $0x45c] sm:$0xf]
  %v667 = vld [vmem:[%s1 + $0x460] sm:$0xf]
  %v668 = vld [vmem:[%s1 + $0x464] sm:$0xf]
  %v669 = vld [vmem:[%s1 + $0x468] sm:$0xf]
  %v670 = vld [vmem:[%s1 + $0x46c] sm:$0xf]
  %v671 = vld [vmem:[%s1 + $0x470] sm:$0xf]
  %v672 = vld [vmem:[%s1 + $0x474] sm:$0xf]
  %v673 = vld [vmem:[%s1 + $0x478] sm:$0xf]
  %v674 = vld [vmem:[%s1 + $0x47c] sm:$0xf]
  %v675 = vld [vmem:[%s1 + $0x480] sm:$0xf]
  %v676 = vld [vmem:[%s1 + $0x484] sm:$0xf]
  %v677 = vld [vmem:[%s1 + $0x488] sm:$0xf]
  %v678 = vld [vmem:[%s1 + $0x48c] sm:$0xf]
  %v679 = vld [vmem:[%s1 + $0x490] sm:$0xf]
  %v680 = vld [vmem:[%s1 + $0x494] sm:$0xf]
  %v681 = vld [vmem:[%s1 + $0x498] sm:$0xf]
  %v682 = vld [vmem:[%s1 + $0x49c] sm:$0xf]
  %v683 = vld [vmem:[%s1 + $0x4a0] sm:$0xf]
  %v684 = vld [vmem:[%s1 + $0x4a4] sm:$0xf]
  %v685 = vld [vmem:[%s1 + $0x4a8] sm:$0xf]
  %v686 = vld [vmem:[%s1 + $0x4ac] sm:$0xf]
  %v687 = vld [vmem:[%s1 + $0x4b0] sm:$0xf]
  %v688 = vld [vmem:[%s1 + $0x4b4] sm:$0xf]
  %v689 = vld [vmem:[%s1 + $0x4b8] sm:$0xf]
  %v690 = vld [vmem:[%s1 + $0x4bc] sm:$0xf]
  %v691 = vld [vmem:[%s1 + $0x4c0] sm:$0xf]
  %v692 = vld [vmem:[%s1 + $0x4c4] sm:$0xf]
  %v693 = vld [vmem:[%s1 + $0x4c8] sm:$0xf]
  %v694 = vld [vmem:[%s1 + $0x4cc] sm:$0xf]
  %v695 = vld [vmem:[%s1 + $0x4d0] sm:$0xf]
  %v696 = vld [vmem:[%s1 + $0x4d4] sm:$0xf]
  %v697 = vld [vmem:[%s1 + $0x4d8] sm:$0xf]
  %v698 = vld [vmem:[%s1 + $0x4dc] sm:$0xf]
  %v699 = vld [vmem:[%s1 + $0x4e0] sm:$0xf]
  %v700 = vld [vmem:[%s1 + $0x4e4] sm:$0xf]
  %v701 = vld [vmem:[%s1 + $0x4e8] sm:$0xf]
  %v702 = vld [vmem:[%s1 + $0x4ec] sm:$0xf]
  %v703 = vld [vmem:[%s1 + $0x4f0] sm:$0xf]
  %v704 = vld [vmem:[%s1 + $0x4f4] sm:$0xf]
  %v705 = vld [vmem:[%s1 + $0x4f8] sm:$0xf]
  %v706 = vld [vmem:[%s1 + $0x4fc] sm:$0xf]
  %v707 = vld [vmem:[%s1 + $0x500] sm:$0xf]
  %v708 = vld [vmem:[%s1 + $0x504] sm:$0xf]
  %v709 = vld [vmem:[%s1 + $0x508] sm:$0xf]
  %v710 = vld [vmem:[%s1 + $0x50c] sm:$0xf]
  %v711 = vld [vmem:[%s1 + $0x510] sm:$0xf]
  %v712 = vld [vmem:[%s1 + $0x514] sm:$0xf]
  %v713 = vld [vmem:[%s1 + $0x518] sm:$0xf]
  %v714 = vld [vmem:[%s1 + $0x51c] sm:$0xf]
  %v715 = vld [vmem:[%s1 + $0x520] sm:$0xf]
  %v716 = vld [vmem:[%s1 + $0x524] sm:$0xf]
  %v717 = vld [vmem:[%s1 + $0x528] sm:$0xf]
  %v718 = vld [vmem:[%s1 + $0x52c] sm:$0xf]
  %v719 = vld [vmem:[%s1 + $0x530] sm:$0xf]
  %v720 = vld [vmem:[%s1 + $0x534] sm:$0xf]
  %v721 = vld [vmem:[%s1 + $0x538] sm:$0xf]
  %v722 = vld [vmem:[%s1 + $0x53c] sm:$0xf]
  %v723 = vld [vmem:[%s1 + $0x540] sm:$0xf]
  %v724 = vld [vmem:[%s1 + $0x544] sm:$0xf]
  %v725 = vld [vmem:[%s1 + $0x548] sm:$0xf]
  %v726 = vld [vmem:[%s1 + $0x54c] sm:$0xf]
  %v727 = vld [vmem:[%s1 + $0x550] sm:$0xf]
  %v728 = vld [vmem:[%s1 + $0x554] sm:$0xf]
  %v729 = vld [vmem:[%s1 + $0x558] sm:$0xf]
  %v730 = vld [vmem:[%s1 + $0x55c] sm:$0xf]
  %v731 = vld [vmem:[%s1 + $0x560] sm:$0xf]
  %v732 = vld [vmem:[%s1 + $0x564] sm:$0xf]
  %v733 = vld [vmem:[%s1 + $0x568] sm:$0xf]
  %v734 = vld [vmem:[%s1 + $0x56c] sm:$0xf]
  %v735 = vld [vmem:[%s1 + $0x570] sm:$0xf]
  %v736 = vld [vmem:[%s1 + $0x574] sm:$0xf]
  %v737 = vld [vmem:[%s1 + $0x578] sm:$0xf]
  %v738 = vld [vmem:[%s1 + $0x57c] sm:$0xf]
  %v739 = vld [vmem:[%s1 + $0x580] sm:$0xf]
  %v740 = vld [vmem:[%s1 + $0x584] sm:$0xf]
  %v741 = vld [vmem:[%s1 + $0x588] sm:$0xf]
  %v742 = vld [vmem:[%s1 + $0x58c] sm:$0xf]
  %v743 = vld [vmem:[%s1 + $0x590] sm:$0xf]
  %v744 = vld [vmem:[%s1 + $0x594] sm:$0xf]
  %v745 = vld [vmem:[%s1 + $0x598] sm:$0xf]
  %v746 = vld [vmem:[%s1 + $0x59c] sm:$0xf]
  %v747 = vld [vmem:[%s1 + $0x5a0] sm:$0xf]
  %v748 = vld [vmem:[%s1 + $0x5a4] sm:$0xf]
  %v749 = vld [vmem:[%s1 + $0x5a8] sm:$0xf]
  %v750 = vld [vmem:[%s1 + $0x5ac] sm:$0xf]
  %v751 = vld [vmem:[%s1 + $0x5b0] sm:$0xf]
  %v752 = vld [vmem:[%s1 + $0x5b4] sm:$0xf]
  %v753 = vld [vmem:[%s1 + $0x5b8] sm:$0xf]
  %v754 = vld [vmem:[%s1 + $0x5bc] sm:$0xf]
  %v755 = vld [vmem:[%s1 + $0x5c0] sm:$0xf]
  %v756 = vld [vmem:[%s1 + $0x5c4] sm:$0xf]
  %v757 = vld [vmem:[%s1 + $0x5c8] sm:$0xf]
  %v758 = vld [vmem:[%s1 + $0x5cc] sm:$0xf]
  %v759 = vld [vmem:[%s1 + $0x5d0] sm:$0xf]
  %v760 = vld [vmem:[%s1 + $0x5d4] sm:$0xf]
  %v761 = vld [vmem:[%s1 + $0x5d8] sm:$0xf]
  %v762 = vld [vmem:[%s1 + $0x5dc] sm:$0xf]
  %v763 = vld [vmem:[%s1 + $0x5e0] sm:$0xf]
  %v764 = vld [vmem:[%s1 + $0x5e4] sm:$0xf]
  %v765 = vld [vmem:[%s1 + $0x5e8] sm:$0xf]
  %v766 = vld [vmem:[%s1 + $0x5ec] sm:$0xf]
  %v767 = vld [vmem:[%s1 + $0x5f0] sm:$0xf]
  %v768 = vld [vmem:[%s1 + $0x5f4] sm:$0xf]
  %v769 = vld [vmem:[%s1 + $0x5f8] sm:$0xf]
  %v770 = vld [vmem:[%s1 + $0x5fc] sm:$0xf]
  %v771 = vld [vmem:[%s1 + $0x600] sm:$0xf]
  %v772 = vld [vmem:[%s1 + $0x604] sm:$0xf]
  %v773 = vld [vmem:[%s1 + $0x608] sm:$0xf]
  %v774 = vld [vmem:[%s1 + $0x60c] sm:$0xf]
  %v775 = vld [vmem:[%s1 + $0x610] sm:$0xf]
  %v776 = vld [vmem:[%s1 + $0x614] sm:$0xf]
  %v777 = vld [vmem:[%s1 + $0x618] sm:$0xf]
  %v778 = vld [vmem:[%s1 + $0x61c] sm:$0xf]
  %v779 = vld [vmem:[%s1 + $0x620] sm:$0xf]
  %v780 = vld [vmem:[%s1 + $0x624] sm:$0xf]
  %v781 = vld [vmem:[%s1 + $0x628] sm:$0xf]
  %v782 = vld [vmem:[%s1 + $0x62c] sm:$0xf]
  %v783 = vld [vmem:[%s1 + $0x630] sm:$0xf]
  %v784 = vld [vmem:[%s1 + $0x634] sm:$0xf]
  %v785 = vld [vmem:[%s1 + $0x638] sm:$0xf]
  %v786 = vld [vmem:[%s1 + $0x63c] sm:$0xf]
  %v787 = vld [vmem:[%s2] sm:$0x1]
  %v789 = vlaneseq
  %v790 = vshrl.u32 %v789, 7
  %v791 = vsub.s32 0, %v790
  %v792 = vrot.slane %v787, %v791
  %v1194 = vunpack.c.l.b16 %v387
  %v1195 = vunpack.c.l.b16 %v388
  %v1196 = vunpack.c.l.b16 %v389
  %v1197 = vunpack.c.l.b16 %v390
  %v1198 = vunpack.c.l.b16 %v391
  %v1199 = vunpack.c.l.b16 %v392
  %v1200 = vunpack.c.l.b16 %v393
  %v1201 = vunpack.c.l.b16 %v394
  %v1202 = vunpack.c.l.b16 %v395
  %v1203 = vunpack.c.l.b16 %v396
  %v1204 = vunpack.c.l.b16 %v397
  %v1205 = vunpack.c.l.b16 %v398
  %v1206 = vunpack.c.l.b16 %v399
  %v1207 = vunpack.c.l.b16 %v400
  %v1208 = vunpack.c.l.b16 %v401
  %v1209 = vunpack.c.l.b16 %v402
  %v1210 = vunpack.c.l.b16 %v403
  %v1211 = vunpack.c.l.b16 %v404
  %v1212 = vunpack.c.l.b16 %v405
  %v1213 = vunpack.c.l.b16 %v406
  %v1214 = vunpack.c.l.b16 %v407
  %v1215 = vunpack.c.l.b16 %v408
  %v1216 = vunpack.c.l.b16 %v409
  %v1217 = vunpack.c.l.b16 %v410
  %v1218 = vunpack.c.l.b16 %v411
  %v1219 = vunpack.c.l.b16 %v412
  %v1220 = vunpack.c.l.b16 %v413
  %v1221 = vunpack.c.l.b16 %v414
  %v1222 = vunpack.c.l.b16 %v415
  %v1223 = vunpack.c.l.b16 %v416
  %v1224 = vunpack.c.l.b16 %v417
  %v1225 = vunpack.c.l.b16 %v418
  %v1226 = vunpack.c.l.b16 %v419
  %v1227 = vunpack.c.l.b16 %v420
  %v1228 = vunpack.c.l.b16 %v421
  %v1229 = vunpack.c.l.b16 %v422
  %v1230 = vunpack.c.l.b16 %v423
  %v1231 = vunpack.c.l.b16 %v424
  %v1232 = vunpack.c.l.b16 %v425
  %v1233 = vunpack.c.l.b16 %v426
  %v1234 = vunpack.c.l.b16 %v427
  %v1235 = vunpack.c.l.b16 %v428
  %v1236 = vunpack.c.l.b16 %v429
  %v1237 = vunpack.c.l.b16 %v430
  %v1238 = vunpack.c.l.b16 %v431
  %v1239 = vunpack.c.l.b16 %v432
  %v1240 = vunpack.c.l.b16 %v433
  %v1241 = vunpack.c.l.b16 %v434
  %v1242 = vunpack.c.l.b16 %v435
  %v1243 = vunpack.c.l.b16 %v436
  %v1244 = vunpack.c.l.b16 %v437
  %v1245 = vunpack.c.l.b16 %v438
  %v1246 = vunpack.c.l.b16 %v439
  %v1247 = vunpack.c.l.b16 %v440
  %v1248 = vunpack.c.l.b16 %v441
  %v1249 = vunpack.c.l.b16 %v442
  %v1250 = vunpack.c.l.b16 %v443
  %v1251 = vunpack.c.l.b16 %v444
  %v1252 = vunpack.c.l.b16 %v445
  %v1253 = vunpack.c.l.b16 %v446
  %v1254 = vunpack.c.l.b16 %v447
  %v1255 = vunpack.c.l.b16 %v448
  %v1256 = vunpack.c.l.b16 %v449
  %v1257 = vunpack.c.l.b16 %v450
  %v1258 = vunpack.c.l.b16 %v451
  %v1259 = vunpack.c.l.b16 %v452
  %v1260 = vunpack.c.l.b16 %v453
  %v1261 = vunpack.c.l.b16 %v454
  %v1262 = vunpack.c.l.b16 %v455
  %v1263 = vunpack.c.l.b16 %v456
  %v1264 = vunpack.c.l.b16 %v457
  %v1265 = vunpack.c.l.b16 %v458
  %v1266 = vunpack.c.l.b16 %v459
  %v1267 = vunpack.c.l.b16 %v460
  %v1268 = vunpack.c.l.b16 %v461
  %v1269 = vunpack.c.l.b16 %v462
  %v1270 = vunpack.c.l.b16 %v463
  %v1271 = vunpack.c.l.b16 %v464
  %v1272 = vunpack.c.l.b16 %v465
  %v1273 = vunpack.c.l.b16 %v466
  %v1274 = vunpack.c.l.b16 %v467
  %v1275 = vunpack.c.l.b16 %v468
  %v1276 = vunpack.c.l.b16 %v469
  %v1277 = vunpack.c.l.b16 %v470
  %v1278 = vunpack.c.l.b16 %v471
  %v1279 = vunpack.c.l.b16 %v472
  %v1280 = vunpack.c.l.b16 %v473
  %v1281 = vunpack.c.l.b16 %v474
  %v1282 = vunpack.c.l.b16 %v475
  %v1283 = vunpack.c.l.b16 %v476
  %v1284 = vunpack.c.l.b16 %v477
  %v1285 = vunpack.c.l.b16 %v478
  %v1286 = vunpack.c.l.b16 %v479
  %v1287 = vunpack.c.l.b16 %v480
  %v1288 = vunpack.c.l.b16 %v481
  %v1289 = vunpack.c.l.b16 %v482
  %v1290 = vunpack.c.l.b16 %v483
  %v1291 = vunpack.c.l.b16 %v484
  %v1292 = vunpack.c.l.b16 %v485
  %v1293 = vunpack.c.l.b16 %v486
  %v1294 = vunpack.c.l.b16 %v487
  %v1295 = vunpack.c.l.b16 %v488
  %v1296 = vunpack.c.l.b16 %v489
  %v1297 = vunpack.c.l.b16 %v490
  %v1298 = vunpack.c.l.b16 %v491
  %v1299 = vunpack.c.l.b16 %v492
  %v1300 = vunpack.c.l.b16 %v493
  %v1301 = vunpack.c.l.b16 %v494
  %v1302 = vunpack.c.l.b16 %v495
  %v1303 = vunpack.c.l.b16 %v496
  %v1304 = vunpack.c.l.b16 %v497
  %v1305 = vunpack.c.l.b16 %v498
  %v1306 = vunpack.c.l.b16 %v499
  %v1307 = vunpack.c.l.b16 %v500
  %v1308 = vunpack.c.l.b16 %v501
  %v1309 = vunpack.c.l.b16 %v502
  %v1310 = vunpack.c.l.b16 %v503
  %v1311 = vunpack.c.l.b16 %v504
  %v1312 = vunpack.c.l.b16 %v505
  %v1313 = vunpack.c.l.b16 %v506
  %v1314 = vunpack.c.l.b16 %v507
  %v1315 = vunpack.c.l.b16 %v508
  %v1316 = vunpack.c.l.b16 %v509
  %v1317 = vunpack.c.l.b16 %v510
  %v1318 = vunpack.c.l.b16 %v511
  %v1319 = vunpack.c.l.b16 %v512
  %v1320 = vunpack.c.l.b16 %v513
  %v1321 = vunpack.c.l.b16 %v514
  %v1322 = vunpack.c.l.b16 %v515
  %v1323 = vunpack.c.l.b16 %v516
  %v1324 = vunpack.c.l.b16 %v517
  %v1325 = vunpack.c.l.b16 %v518
  %v1326 = vunpack.c.l.b16 %v519
  %v1327 = vunpack.c.l.b16 %v520
  %v1328 = vunpack.c.l.b16 %v521
  %v1329 = vunpack.c.l.b16 %v522
  %v1330 = vunpack.c.l.b16 %v523
  %v1331 = vunpack.c.l.b16 %v524
  %v1332 = vunpack.c.l.b16 %v525
  %v1333 = vunpack.c.l.b16 %v526
  %v1334 = vunpack.c.l.b16 %v527
  %v1335 = vunpack.c.l.b16 %v528
  %v1336 = vunpack.c.l.b16 %v529
  %v1337 = vunpack.c.l.b16 %v530
  %v1338 = vunpack.c.l.b16 %v531
  %v1339 = vunpack.c.l.b16 %v532
  %v1340 = vunpack.c.l.b16 %v533
  %v1341 = vunpack.c.l.b16 %v534
  %v1342 = vunpack.c.l.b16 %v535
  %v1343 = vunpack.c.l.b16 %v536
  %v1344 = vunpack.c.l.b16 %v537
  %v1345 = vunpack.c.l.b16 %v538
  %v1346 = vunpack.c.l.b16 %v539
  %v1347 = vunpack.c.l.b16 %v540
  %v1348 = vunpack.c.l.b16 %v541
  %v1349 = vunpack.c.l.b16 %v542
  %v1350 = vunpack.c.l.b16 %v543
  %v1351 = vunpack.c.l.b16 %v544
  %v1352 = vunpack.c.l.b16 %v545
  %v1353 = vunpack.c.l.b16 %v546
  %v1354 = vunpack.c.l.b16 %v547
  %v1355 = vunpack.c.l.b16 %v548
  %v1356 = vunpack.c.l.b16 %v549
  %v1357 = vunpack.c.l.b16 %v550
  %v1358 = vunpack.c.l.b16 %v551
  %v1359 = vunpack.c.l.b16 %v552
  %v1360 = vunpack.c.l.b16 %v553
  %v1361 = vunpack.c.l.b16 %v554
  %v1362 = vunpack.c.l.b16 %v555
  %v1363 = vunpack.c.l.b16 %v556
  %v1364 = vunpack.c.l.b16 %v557
  %v1365 = vunpack.c.l.b16 %v558
  %v1366 = vunpack.c.l.b16 %v559
  %v1367 = vunpack.c.l.b16 %v560
  %v1368 = vunpack.c.l.b16 %v561
  %v1369 = vunpack.c.l.b16 %v562
  %v1370 = vunpack.c.l.b16 %v563
  %v1371 = vunpack.c.l.b16 %v564
  %v1372 = vunpack.c.l.b16 %v565
  %v1373 = vunpack.c.l.b16 %v566
  %v1374 = vunpack.c.l.b16 %v567
  %v1375 = vunpack.c.l.b16 %v568
  %v1376 = vunpack.c.l.b16 %v569
  %v1377 = vunpack.c.l.b16 %v570
  %v1378 = vunpack.c.l.b16 %v571
  %v1379 = vunpack.c.l.b16 %v572
  %v1380 = vunpack.c.l.b16 %v573
  %v1381 = vunpack.c.l.b16 %v574
  %v1382 = vunpack.c.l.b16 %v575
  %v1383 = vunpack.c.l.b16 %v576
  %v1384 = vunpack.c.l.b16 %v577
  %v1385 = vunpack.c.l.b16 %v578
  %v1386 = vunpack.c.l.b16 %v579
  %v1387 = vunpack.c.l.b16 %v580
  %v1388 = vunpack.c.l.b16 %v581
  %v1389 = vunpack.c.l.b16 %v582
  %v1390 = vunpack.c.l.b16 %v583
  %v1391 = vunpack.c.l.b16 %v584
  %v1392 = vunpack.c.l.b16 %v585
  %v1393 = vunpack.c.l.b16 %v586
  %v1394 = vunpack.c.l.b16 %v587
  %v1395 = vunpack.c.l.b16 %v588
  %v1396 = vunpack.c.l.b16 %v589
  %v1397 = vunpack.c.l.b16 %v590
  %v1398 = vunpack.c.l.b16 %v591
  %v1399 = vunpack.c.l.b16 %v592
  %v1400 = vunpack.c.l.b16 %v593
  %v1401 = vunpack.c.l.b16 %v594
  %v1402 = vunpack.c.l.b16 %v595
  %v1403 = vunpack.c.l.b16 %v596
  %v1404 = vunpack.c.l.b16 %v597
  %v1405 = vunpack.c.l.b16 %v598
  %v1406 = vunpack.c.l.b16 %v599
  %v1407 = vunpack.c.l.b16 %v600
  %v1408 = vunpack.c.l.b16 %v601
  %v1409 = vunpack.c.l.b16 %v602
  %v1410 = vunpack.c.l.b16 %v603
  %v1411 = vunpack.c.l.b16 %v604
  %v1412 = vunpack.c.l.b16 %v605
  %v1413 = vunpack.c.l.b16 %v606
  %v1414 = vunpack.c.l.b16 %v607
  %v1415 = vunpack.c.l.b16 %v608
  %v1416 = vunpack.c.l.b16 %v609
  %v1417 = vunpack.c.l.b16 %v610
  %v1418 = vunpack.c.l.b16 %v611
  %v1419 = vunpack.c.l.b16 %v612
  %v1420 = vunpack.c.l.b16 %v613
  %v1421 = vunpack.c.l.b16 %v614
  %v1422 = vunpack.c.l.b16 %v615
  %v1423 = vunpack.c.l.b16 %v616
  %v1424 = vunpack.c.l.b16 %v617
  %v1425 = vunpack.c.l.b16 %v618
  %v1426 = vunpack.c.l.b16 %v619
  %v1427 = vunpack.c.l.b16 %v620
  %v1428 = vunpack.c.l.b16 %v621
  %v1429 = vunpack.c.l.b16 %v622
  %v1430 = vunpack.c.l.b16 %v623
  %v1431 = vunpack.c.l.b16 %v624
  %v1432 = vunpack.c.l.b16 %v625
  %v1433 = vunpack.c.l.b16 %v626
  %v1434 = vunpack.c.l.b16 %v627
  %v1435 = vunpack.c.l.b16 %v628
  %v1436 = vunpack.c.l.b16 %v629
  %v1437 = vunpack.c.l.b16 %v630
  %v1438 = vunpack.c.l.b16 %v631
  %v1439 = vunpack.c.l.b16 %v632
  %v1440 = vunpack.c.l.b16 %v633
  %v1441 = vunpack.c.l.b16 %v634
  %v1442 = vunpack.c.l.b16 %v635
  %v1443 = vunpack.c.l.b16 %v636
  %v1444 = vunpack.c.l.b16 %v637
  %v1445 = vunpack.c.l.b16 %v638
  %v1446 = vunpack.c.l.b16 %v639
  %v1447 = vunpack.c.l.b16 %v640
  %v1448 = vunpack.c.l.b16 %v641
  %v1449 = vunpack.c.l.b16 %v642
  %v1450 = vunpack.c.l.b16 %v643
  %v1451 = vunpack.c.l.b16 %v644
  %v1452 = vunpack.c.l.b16 %v645
  %v1453 = vunpack.c.l.b16 %v646
  %v1454 = vunpack.c.l.b16 %v647
  %v1455 = vunpack.c.l.b16 %v648
  %v1456 = vunpack.c.l.b16 %v649
  %v1457 = vunpack.c.l.b16 %v650
  %v1458 = vunpack.c.l.b16 %v651
  %v1459 = vunpack.c.l.b16 %v652
  %v1460 = vunpack.c.l.b16 %v653
  %v1461 = vunpack.c.l.b16 %v654
  %v1462 = vunpack.c.l.b16 %v655
  %v1463 = vunpack.c.l.b16 %v656
  %v1464 = vunpack.c.l.b16 %v657
  %v1465 = vunpack.c.l.b16 %v658
  %v1466 = vunpack.c.l.b16 %v659
  %v1467 = vunpack.c.l.b16 %v660
  %v1468 = vunpack.c.l.b16 %v661
  %v1469 = vunpack.c.l.b16 %v662
  %v1470 = vunpack.c.l.b16 %v663
  %v1471 = vunpack.c.l.b16 %v664
  %v1472 = vunpack.c.l.b16 %v665
  %v1473 = vunpack.c.l.b16 %v666
  %v1474 = vunpack.c.l.b16 %v667
  %v1475 = vunpack.c.l.b16 %v668
  %v1476 = vunpack.c.l.b16 %v669
  %v1477 = vunpack.c.l.b16 %v670
  %v1478 = vunpack.c.l.b16 %v671
  %v1479 = vunpack.c.l.b16 %v672
  %v1480 = vunpack.c.l.b16 %v673
  %v1481 = vunpack.c.l.b16 %v674
  %v1482 = vunpack.c.l.b16 %v675
  %v1483 = vunpack.c.l.b16 %v676
  %v1484 = vunpack.c.l.b16 %v677
  %v1485 = vunpack.c.l.b16 %v678
  %v1486 = vunpack.c.l.b16 %v679
  %v1487 = vunpack.c.l.b16 %v680
  %v1488 = vunpack.c.l.b16 %v681
  %v1489 = vunpack.c.l.b16 %v682
  %v1490 = vunpack.c.l.b16 %v683
  %v1491 = vunpack.c.l.b16 %v684
  %v1492 = vunpack.c.l.b16 %v685
  %v1493 = vunpack.c.l.b16 %v686
  %v1494 = vunpack.c.l.b16 %v687
  %v1495 = vunpack.c.l.b16 %v688
  %v1496 = vunpack.c.l.b16 %v689
  %v1497 = vunpack.c.l.b16 %v690
  %v1498 = vunpack.c.l.b16 %v691
  %v1499 = vunpack.c.l.b16 %v692
  %v1500 = vunpack.c.l.b16 %v693
  %v1501 = vunpack.c.l.b16 %v694
  %v1502 = vunpack.c.l.b16 %v695
  %v1503 = vunpack.c.l.b16 %v696
  %v1504 = vunpack.c.l.b16 %v697
  %v1505 = vunpack.c.l.b16 %v698
  %v1506 = vunpack.c.l.b16 %v699
  %v1507 = vunpack.c.l.b16 %v700
  %v1508 = vunpack.c.l.b16 %v701
  %v1509 = vunpack.c.l.b16 %v702
  %v1510 = vunpack.c.l.b16 %v703
  %v1511 = vunpack.c.l.b16 %v704
  %v1512 = vunpack.c.l.b16 %v705
  %v1513 = vunpack.c.l.b16 %v706
  %v1514 = vunpack.c.l.b16 %v707
  %v1515 = vunpack.c.l.b16 %v708
  %v1516 = vunpack.c.l.b16 %v709
  %v1517 = vunpack.c.l.b16 %v710
  %v1518 = vunpack.c.l.b16 %v711
  %v1519 = vunpack.c.l.b16 %v712
  %v1520 = vunpack.c.l.b16 %v713
  %v1521 = vunpack.c.l.b16 %v714
  %v1522 = vunpack.c.l.b16 %v715
  %v1523 = vunpack.c.l.b16 %v716
  %v1524 = vunpack.c.l.b16 %v717
  %v1525 = vunpack.c.l.b16 %v718
  %v1526 = vunpack.c.l.b16 %v719
  %v1527 = vunpack.c.l.b16 %v720
  %v1528 = vunpack.c.l.b16 %v721
  %v1529 = vunpack.c.l.b16 %v722
  %v1530 = vunpack.c.l.b16 %v723
  %v1531 = vunpack.c.l.b16 %v724
  %v1532 = vunpack.c.l.b16 %v725
  %v1533 = vunpack.c.l.b16 %v726
  %v1534 = vunpack.c.l.b16 %v727
  %v1535 = vunpack.c.l.b16 %v728
  %v1536 = vunpack.c.l.b16 %v729
  %v1537 = vunpack.c.l.b16 %v730
  %v1538 = vunpack.c.l.b16 %v731
  %v1539 = vunpack.c.l.b16 %v732
  %v1540 = vunpack.c.l.b16 %v733
  %v1541 = vunpack.c.l.b16 %v734
  %v1542 = vunpack.c.l.b16 %v735
  %v1543 = vunpack.c.l.b16 %v736
  %v1544 = vunpack.c.l.b16 %v737
  %v1545 = vunpack.c.l.b16 %v738
  %v1546 = vunpack.c.l.b16 %v739
  %v1547 = vunpack.c.l.b16 %v740
  %v1548 = vunpack.c.l.b16 %v741
  %v1549 = vunpack.c.l.b16 %v742
  %v1550 = vunpack.c.l.b16 %v743
  %v1551 = vunpack.c.l.b16 %v744
  %v1552 = vunpack.c.l.b16 %v745
  %v1553 = vunpack.c.l.b16 %v746
  %v1554 = vunpack.c.l.b16 %v747
  %v1555 = vunpack.c.l.b16 %v748
  %v1556 = vunpack.c.l.b16 %v749
  %v1557 = vunpack.c.l.b16 %v750
  %v1558 = vunpack.c.l.b16 %v751
  %v1559 = vunpack.c.l.b16 %v752
  %v1560 = vunpack.c.l.b16 %v753
  %v1561 = vunpack.c.l.b16 %v754
  %v1562 = vunpack.c.l.b16 %v755
  %v1563 = vunpack.c.l.b16 %v756
  %v1564 = vunpack.c.l.b16 %v757
  %v1565 = vunpack.c.l.b16 %v758
  %v1566 = vunpack.c.l.b16 %v759
  %v1567 = vunpack.c.l.b16 %v760
  %v1568 = vunpack.c.l.b16 %v761
  %v1569 = vunpack.c.l.b16 %v762
  %v1570 = vunpack.c.l.b16 %v763
  %v1571 = vunpack.c.l.b16 %v764
  %v1572 = vunpack.c.l.b16 %v765
  %v1573 = vunpack.c.l.b16 %v766
  %v1574 = vunpack.c.l.b16 %v767
  %v1575 = vunpack.c.l.b16 %v768
  %v1576 = vunpack.c.l.b16 %v769
  %v1577 = vunpack.c.l.b16 %v770
  %v1578 = vunpack.c.l.b16 %v771
  %v1579 = vunpack.c.l.b16 %v772
  %v1580 = vunpack.c.l.b16 %v773
  %v1581 = vunpack.c.l.b16 %v774
  %v1582 = vunpack.c.l.b16 %v775
  %v1583 = vunpack.c.l.b16 %v776
  %v1584 = vunpack.c.l.b16 %v777
  %v1585 = vunpack.c.l.b16 %v778
  %v1586 = vunpack.c.l.b16 %v779
  %v1587 = vunpack.c.l.b16 %v780
  %v1588 = vunpack.c.l.b16 %v781
  %v1589 = vunpack.c.l.b16 %v782
  %v1590 = vunpack.c.l.b16 %v783
  %v1591 = vunpack.c.l.b16 %v784
  %v1592 = vunpack.c.l.b16 %v785
  %v1593 = vunpack.c.l.b16 %v786
  %v1594 = vpack.c.b16 %v1195, %v1194
  %v1595 = vpack.c.b16 %v1197, %v1196
  %v1596 = vpack.c.b16 %v1199, %v1198
  %v1597 = vpack.c.b16 %v1201, %v1200
  %v1598 = vpack.c.b16 %v1203, %v1202
  %v1599 = vpack.c.b16 %v1205, %v1204
  %v1600 = vpack.c.b16 %v1207, %v1206
  %v1601 = vpack.c.b16 %v1209, %v1208
  %v1602 = vpack.c.b16 %v1211, %v1210
  %v1603 = vpack.c.b16 %v1213, %v1212
  %v1604 = vpack.c.b16 %v1215, %v1214
  %v1605 = vpack.c.b16 %v1217, %v1216
  %v1606 = vpack.c.b16 %v1219, %v1218
  %v1607 = vpack.c.b16 %v1221, %v1220
  %v1608 = vpack.c.b16 %v1223, %v1222
  %v1609 = vpack.c.b16 %v1225, %v1224
  %v1610 = vpack.c.b16 %v1227, %v1226
  %v1611 = vpack.c.b16 %v1229, %v1228
  %v1612 = vpack.c.b16 %v1231, %v1230
  %v1613 = vpack.c.b16 %v1233, %v1232
  %v1614 = vpack.c.b16 %v1235, %v1234
  %v1615 = vpack.c.b16 %v1237, %v1236
  %v1616 = vpack.c.b16 %v1239, %v1238
  %v1617 = vpack.c.b16 %v1241, %v1240
  %v1618 = vpack.c.b16 %v1243, %v1242
  %v1619 = vpack.c.b16 %v1245, %v1244
  %v1620 = vpack.c.b16 %v1247, %v1246
  %v1621 = vpack.c.b16 %v1249, %v1248
  %v1622 = vpack.c.b16 %v1251, %v1250
  %v1623 = vpack.c.b16 %v1253, %v1252
  %v1624 = vpack.c.b16 %v1255, %v1254
  %v1625 = vpack.c.b16 %v1257, %v1256
  %v1626 = vpack.c.b16 %v1259, %v1258
  %v1627 = vpack.c.b16 %v1261, %v1260
  %v1628 = vpack.c.b16 %v1263, %v1262
  %v1629 = vpack.c.b16 %v1265, %v1264
  %v1630 = vpack.c.b16 %v1267, %v1266
  %v1631 = vpack.c.b16 %v1269, %v1268
  %v1632 = vpack.c.b16 %v1271, %v1270
  %v1633 = vpack.c.b16 %v1273, %v1272
  %v1634 = vpack.c.b16 %v1275, %v1274
  %v1635 = vpack.c.b16 %v1277, %v1276
  %v1636 = vpack.c.b16 %v1279, %v1278
  %v1637 = vpack.c.b16 %v1281, %v1280
  %v1638 = vpack.c.b16 %v1283, %v1282
  %v1639 = vpack.c.b16 %v1285, %v1284
  %v1640 = vpack.c.b16 %v1287, %v1286
  %v1641 = vpack.c.b16 %v1289, %v1288
  %v1642 = vpack.c.b16 %v1291, %v1290
  %v1643 = vpack.c.b16 %v1293, %v1292
  %v1644 = vpack.c.b16 %v1295, %v1294
  %v1645 = vpack.c.b16 %v1297, %v1296
  %v1646 = vpack.c.b16 %v1299, %v1298
  %v1647 = vpack.c.b16 %v1301, %v1300
  %v1648 = vpack.c.b16 %v1303, %v1302
  %v1649 = vpack.c.b16 %v1305, %v1304
  %v1650 = vpack.c.b16 %v1307, %v1306
  %v1651 = vpack.c.b16 %v1309, %v1308
  %v1652 = vpack.c.b16 %v1311, %v1310
  %v1653 = vpack.c.b16 %v1313, %v1312
  %v1654 = vpack.c.b16 %v1315, %v1314
  %v1655 = vpack.c.b16 %v1317, %v1316
  %v1656 = vpack.c.b16 %v1319, %v1318
  %v1657 = vpack.c.b16 %v1321, %v1320
  %v1658 = vpack.c.b16 %v1323, %v1322
  %v1659 = vpack.c.b16 %v1325, %v1324
  %v1660 = vpack.c.b16 %v1327, %v1326
  %v1661 = vpack.c.b16 %v1329, %v1328
  %v1662 = vpack.c.b16 %v1331, %v1330
  %v1663 = vpack.c.b16 %v1333, %v1332
  %v1664 = vpack.c.b16 %v1335, %v1334
  %v1665 = vpack.c.b16 %v1337, %v1336
  %v1666 = vpack.c.b16 %v1339, %v1338
  %v1667 = vpack.c.b16 %v1341, %v1340
  %v1668 = vpack.c.b16 %v1343, %v1342
  %v1669 = vpack.c.b16 %v1345, %v1344
  %v1670 = vpack.c.b16 %v1347, %v1346
  %v1671 = vpack.c.b16 %v1349, %v1348
  %v1672 = vpack.c.b16 %v1351, %v1350
  %v1673 = vpack.c.b16 %v1353, %v1352
  %v1674 = vpack.c.b16 %v1355, %v1354
  %v1675 = vpack.c.b16 %v1357, %v1356
  %v1676 = vpack.c.b16 %v1359, %v1358
  %v1677 = vpack.c.b16 %v1361, %v1360
  %v1678 = vpack.c.b16 %v1363, %v1362
  %v1679 = vpack.c.b16 %v1365, %v1364
  %v1680 = vpack.c.b16 %v1367, %v1366
  %v1681 = vpack.c.b16 %v1369, %v1368
  %v1682 = vpack.c.b16 %v1371, %v1370
  %v1683 = vpack.c.b16 %v1373, %v1372
  %v1684 = vpack.c.b16 %v1375, %v1374
  %v1685 = vpack.c.b16 %v1377, %v1376
  %v1686 = vpack.c.b16 %v1379, %v1378
  %v1687 = vpack.c.b16 %v1381, %v1380
  %v1688 = vpack.c.b16 %v1383, %v1382
  %v1689 = vpack.c.b16 %v1385, %v1384
  %v1690 = vpack.c.b16 %v1387, %v1386
  %v1691 = vpack.c.b16 %v1389, %v1388
  %v1692 = vpack.c.b16 %v1391, %v1390
  %v1693 = vpack.c.b16 %v1393, %v1392
  %v1694 = vpack.c.b16 %v1395, %v1394
  %v1695 = vpack.c.b16 %v1397, %v1396
  %v1696 = vpack.c.b16 %v1399, %v1398
  %v1697 = vpack.c.b16 %v1401, %v1400
  %v1698 = vpack.c.b16 %v1403, %v1402
  %v1699 = vpack.c.b16 %v1405, %v1404
  %v1700 = vpack.c.b16 %v1407, %v1406
  %v1701 = vpack.c.b16 %v1409, %v1408
  %v1702 = vpack.c.b16 %v1411, %v1410
  %v1703 = vpack.c.b16 %v1413, %v1412
  %v1704 = vpack.c.b16 %v1415, %v1414
  %v1705 = vpack.c.b16 %v1417, %v1416
  %v1706 = vpack.c.b16 %v1419, %v1418
  %v1707 = vpack.c.b16 %v1421, %v1420
  %v1708 = vpack.c.b16 %v1423, %v1422
  %v1709 = vpack.c.b16 %v1425, %v1424
  %v1710 = vpack.c.b16 %v1427, %v1426
  %v1711 = vpack.c.b16 %v1429, %v1428
  %v1712 = vpack.c.b16 %v1431, %v1430
  %v1713 = vpack.c.b16 %v1433, %v1432
  %v1714 = vpack.c.b16 %v1435, %v1434
  %v1715 = vpack.c.b16 %v1437, %v1436
  %v1716 = vpack.c.b16 %v1439, %v1438
  %v1717 = vpack.c.b16 %v1441, %v1440
  %v1718 = vpack.c.b16 %v1443, %v1442
  %v1719 = vpack.c.b16 %v1445, %v1444
  %v1720 = vpack.c.b16 %v1447, %v1446
  %v1721 = vpack.c.b16 %v1449, %v1448
  %v1722 = vpack.c.b16 %v1451, %v1450
  %v1723 = vpack.c.b16 %v1453, %v1452
  %v1724 = vpack.c.b16 %v1455, %v1454
  %v1725 = vpack.c.b16 %v1457, %v1456
  %v1726 = vpack.c.b16 %v1459, %v1458
  %v1727 = vpack.c.b16 %v1461, %v1460
  %v1728 = vpack.c.b16 %v1463, %v1462
  %v1729 = vpack.c.b16 %v1465, %v1464
  %v1730 = vpack.c.b16 %v1467, %v1466
  %v1731 = vpack.c.b16 %v1469, %v1468
  %v1732 = vpack.c.b16 %v1471, %v1470
  %v1733 = vpack.c.b16 %v1473, %v1472
  %v1734 = vpack.c.b16 %v1475, %v1474
  %v1735 = vpack.c.b16 %v1477, %v1476
  %v1736 = vpack.c.b16 %v1479, %v1478
  %v1737 = vpack.c.b16 %v1481, %v1480
  %v1738 = vpack.c.b16 %v1483, %v1482
  %v1739 = vpack.c.b16 %v1485, %v1484
  %v1740 = vpack.c.b16 %v1487, %v1486
  %v1741 = vpack.c.b16 %v1489, %v1488
  %v1742 = vpack.c.b16 %v1491, %v1490
  %v1743 = vpack.c.b16 %v1493, %v1492
  %v1744 = vpack.c.b16 %v1495, %v1494
  %v1745 = vpack.c.b16 %v1497, %v1496
  %v1746 = vpack.c.b16 %v1499, %v1498
  %v1747 = vpack.c.b16 %v1501, %v1500
  %v1748 = vpack.c.b16 %v1503, %v1502
  %v1749 = vpack.c.b16 %v1505, %v1504
  %v1750 = vpack.c.b16 %v1507, %v1506
  %v1751 = vpack.c.b16 %v1509, %v1508
  %v1752 = vpack.c.b16 %v1511, %v1510
  %v1753 = vpack.c.b16 %v1513, %v1512
  %v1754 = vpack.c.b16 %v1515, %v1514
  %v1755 = vpack.c.b16 %v1517, %v1516
  %v1756 = vpack.c.b16 %v1519, %v1518
  %v1757 = vpack.c.b16 %v1521, %v1520
  %v1758 = vpack.c.b16 %v1523, %v1522
  %v1759 = vpack.c.b16 %v1525, %v1524
  %v1760 = vpack.c.b16 %v1527, %v1526
  %v1761 = vpack.c.b16 %v1529, %v1528
  %v1762 = vpack.c.b16 %v1531, %v1530
  %v1763 = vpack.c.b16 %v1533, %v1532
  %v1764 = vpack.c.b16 %v1535, %v1534
  %v1765 = vpack.c.b16 %v1537, %v1536
  %v1766 = vpack.c.b16 %v1539, %v1538
  %v1767 = vpack.c.b16 %v1541, %v1540
  %v1768 = vpack.c.b16 %v1543, %v1542
  %v1769 = vpack.c.b16 %v1545, %v1544
  %v1770 = vpack.c.b16 %v1547, %v1546
  %v1771 = vpack.c.b16 %v1549, %v1548
  %v1772 = vpack.c.b16 %v1551, %v1550
  %v1773 = vpack.c.b16 %v1553, %v1552
  %v1774 = vpack.c.b16 %v1555, %v1554
  %v1775 = vpack.c.b16 %v1557, %v1556
  %v1776 = vpack.c.b16 %v1559, %v1558
  %v1777 = vpack.c.b16 %v1561, %v1560
  %v1778 = vpack.c.b16 %v1563, %v1562
  %v1779 = vpack.c.b16 %v1565, %v1564
  %v1780 = vpack.c.b16 %v1567, %v1566
  %v1781 = vpack.c.b16 %v1569, %v1568
  %v1782 = vpack.c.b16 %v1571, %v1570
  %v1783 = vpack.c.b16 %v1573, %v1572
  %v1784 = vpack.c.b16 %v1575, %v1574
  %v1785 = vpack.c.b16 %v1577, %v1576
  %v1786 = vpack.c.b16 %v1579, %v1578
  %v1787 = vpack.c.b16 %v1581, %v1580
  %v1788 = vpack.c.b16 %v1583, %v1582
  %v1789 = vpack.c.b16 %v1585, %v1584
  %v1790 = vpack.c.b16 %v1587, %v1586
  %v1791 = vpack.c.b16 %v1589, %v1588
  %v1792 = vpack.c.b16 %v1591, %v1590
  %v1793 = vpack.c.b16 %v1593, %v1592
  %1994 = vmatprep.subr.bf16.mxu0 0
  %1995 = vmatpush1.bf16.msra.mxu0 %v1594
  %1996 = vmatprep.subr.bf16.mxu0 0
  %1997 = vmatpush1.bf16.msra.mxu0 %v1595
  %1998 = vmatprep.subr.bf16.mxu0 0
  %1999 = vmatpush1.bf16.msra.mxu0 %v1596
  %2000 = vmatprep.subr.bf16.mxu0 0
  %2001 = vmatpush1.bf16.msra.mxu0 %v1597
  %2002 = vmatprep.subr.bf16.mxu0 0
  %2003 = vmatpush1.bf16.msra.mxu0 %v1598
  %2004 = vmatprep.subr.bf16.mxu0 0
  %2005 = vmatpush1.bf16.msra.mxu0 %v1599
  %2006 = vmatprep.subr.bf16.mxu0 0
  %2007 = vmatpush1.bf16.msra.mxu0 %v1600
  %2008 = vmatprep.subr.bf16.mxu0 0
  %2009 = vmatpush1.bf16.msra.mxu0 %v1601
  %2010 = vmatprep.subr.bf16.mxu0 0
  %2011 = vmatpush1.bf16.msra.mxu0 %v1602
  %2012 = vmatprep.subr.bf16.mxu0 0
  %2013 = vmatpush1.bf16.msra.mxu0 %v1603
  %2014 = vmatprep.subr.bf16.mxu0 0
  %2015 = vmatpush1.bf16.msra.mxu0 %v1604
  %2016 = vmatprep.subr.bf16.mxu0 0
  %2017 = vmatpush1.bf16.msra.mxu0 %v1605
  %2018 = vmatprep.subr.bf16.mxu0 0
  %2019 = vmatpush1.bf16.msra.mxu0 %v1606
  %2020 = vmatprep.subr.bf16.mxu0 0
  %2021 = vmatpush1.bf16.msra.mxu0 %v1607
  %2022 = vmatprep.subr.bf16.mxu0 0
  %2023 = vmatpush1.bf16.msra.mxu0 %v1608
  %2024 = vmatprep.subr.bf16.mxu0 0
  %2025 = vmatpush1.bf16.msra.mxu0 %v1609
  %2026 = vmatprep.mubr.bf16.mxu0 %v293
  %2027 = vmatmul.mubr.bf16.gmra.mrb[0].mxu0 %v292
  %v2028 = vpop.f32.mrb[0].mxu0
  %v2029 = vadd.f32 %v792, %v2028
  %v2030 = vpop.f32.mrb[0].mxu0
  %v2031 = vpop.f32.mrb[0].mxu0
  %v2032 = vadd.f32 %v792, %v2031
  %v2033 = vpop.f32.mrb[0].mxu0
  %2034 = vmatprep.mubr.bf16.mxu0 %v303
  %2035 = vmatmul.mubr.bf16.gmra.mrb[0].mxu0 %v302
  %v2036 = vpop.f32.mrb[0].mxu0
  %v2037 = vadd.f32 %v792, %v2036
  %v2038 = vpop.f32.mrb[0].mxu0
  %v2039 = vpop.f32.mrb[0].mxu0
  %v2040 = vadd.f32 %v792, %v2039
  %v2041 = vpop.f32.mrb[0].mxu0
  %2042 = vmatprep.mubr.bf16.mxu0 %v313
  %2043 = vmatmul.mubr.bf16.gmra.mrb[0].mxu0 %v312
  %v2044 = vpop.f32.mrb[0].mxu0
  %v2045 = vadd.f32 %v792, %v2044
  %v2046 = vpop.f32.mrb[0].mxu0
  %v2047 = vpop.f32.mrb[0].mxu0
  %v2048 = vadd.f32 %v792, %v2047
  %v2049 = vpop.f32.mrb[0].mxu0
  %2050 = vmatprep.mubr.bf16.mxu0 %v323
  %2051 = vmatmul.mubr.bf16.gmra.mrb[0].mxu0 %v322
  %v2052 = vpop.f32.mrb[0].mxu0
  %v2053 = vadd.f32 %v792, %v2052
  %v2054 = vpop.f32.mrb[0].mxu0
  %v2055 = vpop.f32.mrb[0].mxu0
  %v2056 = vadd.f32 %v792, %v2055
  %v2057 = vpop.f32.mrb[0].mxu0
  %2058 = vmatprep.mubr.bf16.mxu0 %v293
  %2059 = vmatmul.mubr.bf16.gmra.mrb[0].mxu0 %v292
  %v2060 = vpop.f32.mrb[0].mxu0
  %v2061 = vadd.f32 %v792, %v2060
  %v2062 = vpop.f32.mrb[0].mxu0
  %v2063 = vpop.f32.mrb[0].mxu0
  %v2064 = vadd.f32 %v792, %v2063
  %v2065 = vpop.f32.mrb[0].mxu0
  %2066 = vmatprep.mubr.bf16.mxu0 %v348
  %2067 = vmatmul.mubr.bf16.gmra.mrb[0].mxu0 %v347
  %v2068 = vpop.f32.mrb[0].mxu0
  %v2069 = vadd.f32 %v792, %v2068
  %v2070 = vpop.f32.mrb[0].mxu0
  %v2071 = vpop.f32.mrb[0].mxu0
  %v2072 = vadd.f32 %v792, %v2071
  %v2073 = vpop.f32.mrb[0].mxu0
  %2074 = vmatprep.mubr.bf16.mxu0 %v358
  %2075 = vmatmul.mubr.bf16.gmra.mrb[0].mxu0 %v357
  %v2076 = vpop.f32.mrb[0].mxu0
  %v2077 = vadd.f32 %v792, %v2076
  %v2078 = vpop.f32.mrb[0].mxu0
  %v2079 = vpop.f32.mrb[0].mxu0
  %v2080 = vadd.f32 %v792, %v2079
  %v2081 = vpop.f32.mrb[0].mxu0
  %2082 = vmatprep.mubr.bf16.mxu0 %v368
  %2083 = vmatmul.mubr.bf16.gmra.mrb[0].mxu0 %v367
  %v2084 = vpop.f32.mrb[0].mxu0
  %v2085 = vadd.f32 %v792, %v2084
  %v2086 = vpop.f32.mrb[0].mxu0
  %v2087 = vpop.f32.mrb[0].mxu0
  %v2088 = vadd.f32 %v792, %v2087
  %v2089 = vpop.f32.mrb[0].mxu0
  %2090 = vdwg.mxu0
  %2091 = vmatprep.subr.bf16.mxu0 0
  %2092 = vmatpush1.bf16.msra.mxu0 %v1610
  %2093 = vmatprep.subr.bf16.mxu0 0
  %2094 = vmatpush1.bf16.msra.mxu0 %v1611
  %2095 = vmatprep.subr.bf16.mxu0 0
  %2096 = vmatpush1.bf16.msra.mxu0 %v1612
  %2097 = vmatprep.subr.bf16.mxu0 0
  %2098 = vmatpush1.bf16.msra.mxu0 %v1613
  %2099 = vmatprep.subr.bf16.mxu0 0
  %2100 = vmatpush1.bf16.msra.mxu0 %v1614
  %2101 = vmatprep.subr.bf16.mxu0 0
  %2102 = vmatpush1.bf16.msra.mxu0 %v1615
  %2103 = vmatprep.subr.bf16.mxu0 0
  %2104 = vmatpush1.bf16.msra.mxu0 %v1616
  %2105 = vmatprep.subr.bf16.mxu0 0
  %2106 = vmatpush1.bf16.msra.mxu0 %v1617
  %2107 = vmatprep.subr.bf16.mxu0 0
  %2108 = vmatpush1.bf16.msra.mxu0 %v1618
  %2109 = vmatprep.subr.bf16.mxu0 0
  %2110 = vmatpush1.bf16.msra.mxu0 %v1619
  %2111 = vmatprep.subr.bf16.mxu0 0
  %2112 = vmatpush1.bf16.msra.mxu0 %v1620
  %2113 = vmatprep.subr.bf16.mxu0 0
  %2114 = vmatpush1.bf16.msra.mxu0 %v1621
  %2115 = vmatprep.subr.bf16.mxu0 0
  %2116 = vmatpush1.bf16.msra.mxu0 %v1622
  %2117 = vmatprep.subr.bf16.mxu0 0
  %2118 = vmatpush1.bf16.msra.mxu0 %v1623
  %2119 = vmatprep.subr.bf16.mxu0 0
  %2120 = vmatpush1.bf16.msra.mxu0 %v1624
  %2121 = vmatprep.subr.bf16.mxu0 0
  %2122 = vmatpush1.bf16.msra.mxu0 %v1625
  %2123 = vmatprep.mubr.bf16.mxu0 %v295
  %2124 = vmatmul.mubr.bf16.gmra.mrb[0].mxu0 %v294
  %v2125 = vpop.f32.mrb[0].mxu0
  %v2126 = vadd.f32 %v2029, %v2125
  %v2127 = vpop.f32.mrb[0].mxu0
  %v2128 = vpop.f32.mrb[0].mxu0
  %v2129 = vadd.f32 %v2032, %v2128
  %v2130 = vpop.f32.mrb[0].mxu0
  %2131 = vmatprep.mubr.bf16.mxu0 %v305
  %2132 = vmatmul.mubr.bf16.gmra.mrb[0].mxu0 %v304
  %v2133 = vpop.f32.mrb[0].mxu0
  %v2134 = vadd.f32 %v2037, %v2133
  %v2135 = vpop.f32.mrb[0].mxu0
  %v2136 = vpop.f32.mrb[0].mxu0
  %v2137 = vadd.f32 %v2040, %v2136
  %v2138 = vpop.f32.mrb[0].mxu0
  %2139 = vmatprep.mubr.bf16.mxu0 %v315
  %2140 = vmatmul.mubr.bf16.gmra.mrb[0].mxu0 %v314
  %v2141 = vpop.f32.mrb[0].mxu0
  %v2142 = vadd.f32 %v2045, %v2141
  %v2143 = vpop.f32.mrb[0].mxu0
  %v2144 = vpop.f32.mrb[0].mxu0
  %v2145 = vadd.f32 %v2048, %v2144
  %v2146 = vpop.f32.mrb[0].mxu0
  %2147 = vmatprep.mubr.bf16.mxu0 %v325
  %2148 = vmatmul.mubr.bf16.gmra.mrb[0].mxu0 %v324
  %v2149 = vpop.f32.mrb[0].mxu0
  %v2150 = vadd.f32 %v2053, %v2149
  %v2151 = vpop.f32.mrb[0].mxu0
  %v2152 = vpop.f32.mrb[0].mxu0
  %v2153 = vadd.f32 %v2056, %v2152
  %v2154 = vpop.f32.mrb[0].mxu0
  %2155 = vmatprep.mubr.bf16.mxu0 %v295
  %2156 = vmatmul.mubr.bf16.gmra.mrb[0].mxu0 %v294
  %v2157 = vpop.f32.mrb[0].mxu0
  %v2158 = vadd.f32 %v2061, %v2157
  %v2159 = vpop.f32.mrb[0].mxu0
  %v2160 = vpop.f32.mrb[0].mxu0
  %v2161 = vadd.f32 %v2064, %v2160
  %v2162 = vpop.f32.mrb[0].mxu0
  %2163 = vmatprep.mubr.bf16.mxu0 %v350
  %2164 = vmatmul.mubr.bf16.gmra.mrb[0].mxu0 %v349
  %v2165 = vpop.f32.mrb[0].mxu0
  %v2166 = vadd.f32 %v2069, %v2165
  %v2167 = vpop.f32.mrb[0].mxu0
  %v2168 = vpop.f32.mrb[0].mxu0
  %v2169 = vadd.f32 %v2072, %v2168
  %v2170 = vpop.f32.mrb[0].mxu0
  %2171 = vmatprep.mubr.bf16.mxu0 %v360
  %2172 = vmatmul.mubr.bf16.gmra.mrb[0].mxu0 %v359
  %v2173 = vpop.f32.mrb[0].mxu0
  %v2174 = vadd.f32 %v2077, %v2173
  %v2175 = vpop.f32.mrb[0].mxu0
  %v2176 = vpop.f32.mrb[0].mxu0
  %v2177 = vadd.f32 %v2080, %v2176
  %v2178 = vpop.f32.mrb[0].mxu0
  %2179 = vmatprep.mubr.bf16.mxu0 %v370
  %2180 = vmatmul.mubr.bf16.gmra.mrb[0].mxu0 %v369
  %v2181 = vpop.f32.mrb[0].mxu0
  %v2182 = vadd.f32 %v2085, %v2181
  %v2183 = vpop.f32.mrb[0].mxu0
  %v2184 = vpop.f32.mrb[0].mxu0
  %v2185 = vadd.f32 %v2088, %v2184
  %v2186 = vpop.f32.mrb[0].mxu0
  %2187 = vdwg.mxu0
  %2188 = vmatprep.subr.bf16.mxu0 0
  %2189 = vmatpush1.bf16.msra.mxu0 %v1626
  %2190 = vmatprep.subr.bf16.mxu0 0
  %2191 = vmatpush1.bf16.msra.mxu0 %v1627
  %2192 = vmatprep.subr.bf16.mxu0 0
  %2193 = vmatpush1.bf16.msra.mxu0 %v1628
  %2194 = vmatprep.subr.bf16.mxu0 0
  %2195 = vmatpush1.bf16.msra.mxu0 %v1629
  %2196 = vmatprep.subr.bf16.mxu0 0
  %2197 = vmatpush1.bf16.msra.mxu0 %v1630
  %2198 = vmatprep.subr.bf16.mxu0 0
  %2199 = vmatpush1.bf16.msra.mxu0 %v1631
  %2200 = vmatprep.subr.bf16.mxu0 0
  %2201 = vmatpush1.bf16.msra.mxu0 %v1632
  %2202 = vmatprep.subr.bf16.mxu0 0
  %2203 = vmatpush1.bf16.msra.mxu0 %v1633
  %2204 = vmatprep.subr.bf16.mxu0 0
  %2205 = vmatpush1.bf16.msra.mxu0 %v1634
  %2206 = vmatprep.subr.bf16.mxu0 0
  %2207 = vmatpush1.bf16.msra.mxu0 %v1635
  %2208 = vmatprep.subr.bf16.mxu0 0
  %2209 = vmatpush1.bf16.msra.mxu0 %v1636
  %2210 = vmatprep.subr.bf16.mxu0 0
  %2211 = vmatpush1.bf16.msra.mxu0 %v1637
  %2212 = vmatprep.subr.bf16.mxu0 0
  %2213 = vmatpush1.bf16.msra.mxu0 %v1638
  %2214 = vmatprep.subr.bf16.mxu0 0
  %2215 = vmatpush1.bf16.msra.mxu0 %v1639
  %2216 = vmatprep.subr.bf16.mxu0 0
  %2217 = vmatpush1.bf16.msra.mxu0 %v1640
  %2218 = vmatprep.subr.bf16.mxu0 0
  %2219 = vmatpush1.bf16.msra.mxu0 %v1641
  %2220 = vmatprep.mubr.bf16.mxu0 %v297
  %2221 = vmatmul.mubr.bf16.gmra.mrb[0].mxu0 %v296
  %v2222 = vpop.f32.mrb[0].mxu0
  %v2223 = vadd.f32 %v2126, %v2222
  %v2224 = vpop.f32.mrb[0].mxu0
  %v2225 = vpop.f32.mrb[0].mxu0
  %v2226 = vadd.f32 %v2129, %v2225
  %v2227 = vpop.f32.mrb[0].mxu0
  %2228 = vmatprep.mubr.bf16.mxu0 %v307
  %2229 = vmatmul.mubr.bf16.gmra.mrb[0].mxu0 %v306
  %v2230 = vpop.f32.mrb[0].mxu0
  %v2231 = vadd.f32 %v2134, %v2230
  %v2232 = vpop.f32.mrb[0].mxu0
  %v2233 = vpop.f32.mrb[0].mxu0
  %v2234 = vadd.f32 %v2137, %v2233
  %v2235 = vpop.f32.mrb[0].mxu0
  %2236 = vmatprep.mubr.bf16.mxu0 %v317
  %2237 = vmatmul.mubr.bf16.gmra.mrb[0].mxu0 %v316
  %v2238 = vpop.f32.mrb[0].mxu0
  %v2239 = vadd.f32 %v2142, %v2238
  %v2240 = vpop.f32.mrb[0].mxu0
  %v2241 = vpop.f32.mrb[0].mxu0
  %v2242 = vadd.f32 %v2145, %v2241
  %v2243 = vpop.f32.mrb[0].mxu0
  %2244 = vmatprep.mubr.bf16.mxu0 %v327
  %2245 = vmatmul.mubr.bf16.gmra.mrb[0].mxu0 %v326
  %v2246 = vpop.f32.mrb[0].mxu0
  %v2247 = vadd.f32 %v2150, %v2246
  %v2248 = vpop.f32.mrb[0].mxu0
  %v2249 = vpop.f32.mrb[0].mxu0
  %v2250 = vadd.f32 %v2153, %v2249
  %v2251 = vpop.f32.mrb[0].mxu0
  %2252 = vmatprep.mubr.bf16.mxu0 %v342
  %2253 = vmatmul.mubr.bf16.gmra.mrb[0].mxu0 %v296
  %v2254 = vpop.f32.mrb[0].mxu0
  %v2255 = vadd.f32 %v2158, %v2254
  %v2256 = vpop.f32.mrb[0].mxu0
  %v2257 = vpop.f32.mrb[0].mxu0
  %v2258 = vadd.f32 %v2161, %v2257
  %v2259 = vpop.f32.mrb[0].mxu0
  %2260 = vmatprep.mubr.bf16.mxu0 %v352
  %2261 = vmatmul.mubr.bf16.gmra.mrb[0].mxu0 %v351
  %v2262 = vpop.f32.mrb[0].mxu0
  %v2263 = vadd.f32 %v2166, %v2262
  %v2264 = vpop.f32.mrb[0].mxu0
  %v2265 = vpop.f32.mrb[0].mxu0
  %v2266 = vadd.f32 %v2169, %v2265
  %v2267 = vpop.f32.mrb[0].mxu0
  %2268 = vmatprep.mubr.bf16.mxu0 %v362
  %2269 = vmatmul.mubr.bf16.gmra.mrb[0].mxu0 %v361
  %v2270 = vpop.f32.mrb[0].mxu0
  %v2271 = vadd.f32 %v2174, %v2270
  %v2272 = vpop.f32.mrb[0].mxu0
  %v2273 = vpop.f32.mrb[0].mxu0
  %v2274 = vadd.f32 %v2177, %v2273
  %v2275 = vpop.f32.mrb[0].mxu0
  %2276 = vmatprep.mubr.bf16.mxu0 %v372
  %2277 = vmatmul.mubr.bf16.gmra.mrb[0].mxu0 %v371
  %v2278 = vpop.f32.mrb[0].mxu0
  %v2279 = vadd.f32 %v2182, %v2278
  %v2280 = vpop.f32.mrb[0].mxu0
  %v2281 = vpop.f32.mrb[0].mxu0
  %v2282 = vadd.f32 %v2185, %v2281
  %v2283 = vpop.f32.mrb[0].mxu0
  %2284 = vdwg.mxu0
  %2285 = vmatprep.subr.bf16.mxu0 0
  %2286 = vmatpush1.bf16.msra.mxu0 %v1642
  %2287 = vmatprep.subr.bf16.mxu0 0
  %2288 = vmatpush1.bf16.msra.mxu0 %v1643
  %2289 = vmatprep.subr.bf16.mxu0 0
  %2290 = vmatpush1.bf16.msra.mxu0 %v1644
  %2291 = vmatprep.subr.bf16.mxu0 0
  %2292 = vmatpush1.bf16.msra.mxu0 %v1645
  %2293 = vmatprep.subr.bf16.mxu0 0
  %2294 = vmatpush1.bf16.msra.mxu0 %v1646
  %2295 = vmatprep.subr.bf16.mxu0 0
  %2296 = vmatpush1.bf16.msra.mxu0 %v1647
  %2297 = vmatprep.subr.bf16.mxu0 0
  %2298 = vmatpush1.bf16.msra.mxu0 %v1648
  %2299 = vmatprep.subr.bf16.mxu0 0
  %2300 = vmatpush1.bf16.msra.mxu0 %v1649
  %2301 = vmatprep.subr.bf16.mxu0 0
  %2302 = vmatpush1.bf16.msra.mxu0 %v1650
  %2303 = vmatprep.subr.bf16.mxu0 0
  %2304 = vmatpush1.bf16.msra.mxu0 %v1651
  %2305 = vmatprep.subr.bf16.mxu0 0
  %2306 = vmatpush1.bf16.msra.mxu0 %v1652
  %2307 = vmatprep.subr.bf16.mxu0 0
  %2308 = vmatpush1.bf16.msra.mxu0 %v1653
  %2309 = vmatprep.subr.bf16.mxu0 0
  %2310 = vmatpush1.bf16.msra.mxu0 %v1654
  %2311 = vmatprep.subr.bf16.mxu0 0
  %2312 = vmatpush1.bf16.msra.mxu0 %v1655
  %2313 = vmatprep.subr.bf16.mxu0 0
  %2314 = vmatpush1.bf16.msra.mxu0 %v1656
  %2315 = vmatprep.subr.bf16.mxu0 0
  %2316 = vmatpush1.bf16.msra.mxu0 %v1657
  %2317 = vmatprep.mubr.bf16.mxu0 %v299
  %2318 = vmatmul.mubr.bf16.gmra.mrb[0].mxu0 %v298
  %v2319 = vpop.f32.mrb[0].mxu0
  %v2320 = vadd.f32 %v2223, %v2319
  %v2321 = vpop.f32.mrb[0].mxu0
  %v2322 = vpop.f32.mrb[0].mxu0
  %v2323 = vadd.f32 %v2226, %v2322
  %v2324 = vpop.f32.mrb[0].mxu0
  %2325 = vmatprep.mubr.bf16.mxu0 %v309
  %2326 = vmatmul.mubr.bf16.gmra.mrb[0].mxu0 %v308
  %v2327 = vpop.f32.mrb[0].mxu0
  %v2328 = vadd.f32 %v2231, %v2327
  %v2329 = vpop.f32.mrb[0].mxu0
  %v2330 = vpop.f32.mrb[0].mxu0
  %v2331 = vadd.f32 %v2234, %v2330
  %v2332 = vpop.f32.mrb[0].mxu0
  %2333 = vmatprep.mubr.bf16.mxu0 %v319
  %2334 = vmatmul.mubr.bf16.gmra.mrb[0].mxu0 %v318
  %v2335 = vpop.f32.mrb[0].mxu0
  %v2336 = vadd.f32 %v2239, %v2335
  %v2337 = vpop.f32.mrb[0].mxu0
  %v2338 = vpop.f32.mrb[0].mxu0
  %v2339 = vadd.f32 %v2242, %v2338
  %v2340 = vpop.f32.mrb[0].mxu0
  %2341 = vmatprep.mubr.bf16.mxu0 %v329
  %2342 = vmatmul.mubr.bf16.gmra.mrb[0].mxu0 %v328
  %v2343 = vpop.f32.mrb[0].mxu0
  %v2344 = vadd.f32 %v2247, %v2343
  %v2345 = vpop.f32.mrb[0].mxu0
  %v2346 = vpop.f32.mrb[0].mxu0
  %v2347 = vadd.f32 %v2250, %v2346
  %v2348 = vpop.f32.mrb[0].mxu0
  %2349 = vmatprep.mubr.bf16.mxu0 %v344
  %2350 = vmatmul.mubr.bf16.gmra.mrb[0].mxu0 %v343
  %v2351 = vpop.f32.mrb[0].mxu0
  %v2352 = vadd.f32 %v2255, %v2351
  %v2353 = vpop.f32.mrb[0].mxu0
  %v2354 = vpop.f32.mrb[0].mxu0
  %v2355 = vadd.f32 %v2258, %v2354
  %v2356 = vpop.f32.mrb[0].mxu0
  %2357 = vmatprep.mubr.bf16.mxu0 %v354
  %2358 = vmatmul.mubr.bf16.gmra.mrb[0].mxu0 %v353
  %v2359 = vpop.f32.mrb[0].mxu0
  %v2360 = vadd.f32 %v2263, %v2359
  %v2361 = vpop.f32.mrb[0].mxu0
  %v2362 = vpop.f32.mrb[0].mxu0
  %v2363 = vadd.f32 %v2266, %v2362
  %v2364 = vpop.f32.mrb[0].mxu0
  %2365 = vmatprep.mubr.bf16.mxu0 %v364
  %2366 = vmatmul.mubr.bf16.gmra.mrb[0].mxu0 %v363
  %v2367 = vpop.f32.mrb[0].mxu0
  %v2368 = vadd.f32 %v2271, %v2367
  %v2369 = vpop.f32.mrb[0].mxu0
  %v2370 = vpop.f32.mrb[0].mxu0
  %v2371 = vadd.f32 %v2274, %v2370
  %v2372 = vpop.f32.mrb[0].mxu0
  %2373 = vmatprep.mubr.bf16.mxu0 %v374
  %2374 = vmatmul.mubr.bf16.gmra.mrb[0].mxu0 %v373
  %v2375 = vpop.f32.mrb[0].mxu0
  %v2376 = vadd.f32 %v2279, %v2375
  %v2377 = vpop.f32.mrb[0].mxu0
  %v2378 = vpop.f32.mrb[0].mxu0
  %v2379 = vadd.f32 %v2282, %v2378
  %v2380 = vpop.f32.mrb[0].mxu0
  %2381 = vdwg.mxu0
  %2382 = vmatprep.subr.bf16.mxu0 0
  %2383 = vmatpush1.bf16.msra.mxu0 %v1658
  %2384 = vmatprep.subr.bf16.mxu0 0
  %2385 = vmatpush1.bf16.msra.mxu0 %v1659
  %2386 = vmatprep.subr.bf16.mxu0 0
  %2387 = vmatpush1.bf16.msra.mxu0 %v1660
  %2388 = vmatprep.subr.bf16.mxu0 0
  %2389 = vmatpush1.bf16.msra.mxu0 %v1661
  %2390 = vmatprep.subr.bf16.mxu0 0
  %2391 = vmatpush1.bf16.msra.mxu0 %v1662
  %2392 = vmatprep.subr.bf16.mxu0 0
  %2393 = vmatpush1.bf16.msra.mxu0 %v1663
  %2394 = vmatprep.subr.bf16.mxu0 0
  %2395 = vmatpush1.bf16.msra.mxu0 %v1664
  %2396 = vmatprep.subr.bf16.mxu0 0
  %2397 = vmatpush1.bf16.msra.mxu0 %v1665
  %2398 = vmatprep.subr.bf16.mxu0 0
  %2399 = vmatpush1.bf16.msra.mxu0 %v1666
  %2400 = vmatprep.subr.bf16.mxu0 0
  %2401 = vmatpush1.bf16.msra.mxu0 %v1667
  %2402 = vmatprep.subr.bf16.mxu0 0
  %2403 = vmatpush1.bf16.msra.mxu0 %v1668
  %2404 = vmatprep.subr.bf16.mxu0 0
  %2405 = vmatpush1.bf16.msra.mxu0 %v1669
  %2406 = vmatprep.subr.bf16.mxu0 0
  %2407 = vmatpush1.bf16.msra.mxu0 %v1670
  %2408 = vmatprep.subr.bf16.mxu0 0
  %2409 = vmatpush1.bf16.msra.mxu0 %v1671
  %2410 = vmatprep.subr.bf16.mxu0 0
  %2411 = vmatpush1.bf16.msra.mxu0 %v1672
  %2412 = vmatprep.subr.bf16.mxu0 0
  %2413 = vmatpush1.bf16.msra.mxu0 %v1673
  %2414 = vmatprep.mubr.bf16.mxu0 %v301
  %2415 = vmatmul.mubr.bf16.gmra.mrb[0].mxu0 %v300
  %v2416 = vpop.f32.mrb[0].mxu0
  %v2417 = vadd.f32 %v2320, %v2416
  %v2418 = vpop.f32.mrb[0].mxu0
  %v2419 = vpop.f32.mrb[0].mxu0
  %v2420 = vadd.f32 %v2323, %v2419
  %v2421 = vpop.f32.mrb[0].mxu0
  %2422 = vmatprep.mubr.bf16.mxu0 %v311
  %2423 = vmatmul.mubr.bf16.gmra.mrb[0].mxu0 %v310
  %v2424 = vpop.f32.mrb[0].mxu0
  %v2425 = vadd.f32 %v2328, %v2424
  %v2426 = vpop.f32.mrb[0].mxu0
  %v2427 = vpop.f32.mrb[0].mxu0
  %v2428 = vadd.f32 %v2331, %v2427
  %v2429 = vpop.f32.mrb[0].mxu0
  %2430 = vmatprep.mubr.bf16.mxu0 %v321
  %2431 = vmatmul.mubr.bf16.gmra.mrb[0].mxu0 %v320
  %v2432 = vpop.f32.mrb[0].mxu0
  %v2433 = vadd.f32 %v2336, %v2432
  %v2434 = vpop.f32.mrb[0].mxu0
  %v2435 = vpop.f32.mrb[0].mxu0
  %v2436 = vadd.f32 %v2339, %v2435
  %v2437 = vpop.f32.mrb[0].mxu0
  %2438 = vmatprep.mubr.bf16.mxu0 %v331
  %2439 = vmatmul.mubr.bf16.gmra.mrb[0].mxu0 %v330
  %v2440 = vpop.f32.mrb[0].mxu0
  %v2441 = vadd.f32 %v2344, %v2440
  %v2442 = vpop.f32.mrb[0].mxu0
  %v2443 = vpop.f32.mrb[0].mxu0
  %v2444 = vadd.f32 %v2347, %v2443
  %v2445 = vpop.f32.mrb[0].mxu0
  %2446 = vmatprep.mubr.bf16.mxu0 %v346
  %2447 = vmatmul.mubr.bf16.gmra.mrb[0].mxu0 %v345
  %v2448 = vpop.f32.mrb[0].mxu0
  %v2449 = vadd.f32 %v2352, %v2448
  %v2450 = vpop.f32.mrb[0].mxu0
  %v2451 = vpop.f32.mrb[0].mxu0
  %v2452 = vadd.f32 %v2355, %v2451
  %v2453 = vpop.f32.mrb[0].mxu0
  %2454 = vmatprep.mubr.bf16.mxu0 %v356
  %2455 = vmatmul.mubr.bf16.gmra.mrb[0].mxu0 %v355
  %v2456 = vpop.f32.mrb[0].mxu0
  %v2457 = vadd.f32 %v2360, %v2456
  %v2458 = vpop.f32.mrb[0].mxu0
  %v2459 = vpop.f32.mrb[0].mxu0
  %v2460 = vadd.f32 %v2363, %v2459
  %v2461 = vpop.f32.mrb[0].mxu0
  %2462 = vmatprep.mubr.bf16.mxu0 %v366
  %2463 = vmatmul.mubr.bf16.gmra.mrb[0].mxu0 %v365
  %v2464 = vpop.f32.mrb[0].mxu0
  %v2465 = vadd.f32 %v2368, %v2464
  %v2466 = vpop.f32.mrb[0].mxu0
  %v2467 = vpop.f32.mrb[0].mxu0
  %v2468 = vadd.f32 %v2371, %v2467
  %v2469 = vpop.f32.mrb[0].mxu0
  %2470 = vmatprep.mubr.bf16.mxu0 %v376
  %2471 = vmatmul.mubr.bf16.gmra.mrb[0].mxu0 %v375
  %v2472 = vpop.f32.mrb[0].mxu0
  %v2473 = vadd.f32 %v2376, %v2472
  %v2474 = vpop.f32.mrb[0].mxu0
  %v2475 = vpop.f32.mrb[0].mxu0
  %v2476 = vadd.f32 %v2379, %v2475
  %v2477 = vpop.f32.mrb[0].mxu0
  %2478 = vdwg.mxu0
  %2479 = vmatprep.subr.bf16.mxu0 0
  %2480 = vmatpush1.bf16.msra.mxu0 %v1674
  %2481 = vmatprep.subr.bf16.mxu0 0
  %2482 = vmatpush1.bf16.msra.mxu0 %v1675
  %2483 = vmatprep.subr.bf16.mxu0 0
  %2484 = vmatpush1.bf16.msra.mxu0 %v1676
  %2485 = vmatprep.subr.bf16.mxu0 0
  %2486 = vmatpush1.bf16.msra.mxu0 %v1677
  %2487 = vmatprep.subr.bf16.mxu0 0
  %2488 = vmatpush1.bf16.msra.mxu0 %v1678
  %2489 = vmatprep.subr.bf16.mxu0 0
  %2490 = vmatpush1.bf16.msra.mxu0 %v1679
  %2491 = vmatprep.subr.bf16.mxu0 0
  %2492 = vmatpush1.bf16.msra.mxu0 %v1680
  %2493 = vmatprep.subr.bf16.mxu0 0
  %2494 = vmatpush1.bf16.msra.mxu0 %v1681
  %2495 = vmatprep.subr.bf16.mxu0 0
  %2496 = vmatpush1.bf16.msra.mxu0 %v1682
  %2497 = vmatprep.subr.bf16.mxu0 0
  %2498 = vmatpush1.bf16.msra.mxu0 %v1683
  %2499 = vmatprep.subr.bf16.mxu0 0
  %2500 = vmatpush1.bf16.msra.mxu0 %v1684
  %2501 = vmatprep.subr.bf16.mxu0 0
  %2502 = vmatpush1.bf16.msra.mxu0 %v1685
  %2503 = vmatprep.subr.bf16.mxu0 0
  %2504 = vmatpush1.bf16.msra.mxu0 %v1686
  %2505 = vmatprep.subr.bf16.mxu0 0
  %2506 = vmatpush1.bf16.msra.mxu0 %v1687
  %2507 = vmatprep.subr.bf16.mxu0 0
  %2508 = vmatpush1.bf16.msra.mxu0 %v1688
  %2509 = vmatprep.subr.bf16.mxu0 0
  %2510 = vmatpush1.bf16.msra.mxu0 %v1689
  %2511 = vmatprep.mubr.bf16.mxu0 %v303
  %2512 = vmatmul.mubr.bf16.gmra.mrb[0].mxu0 %v302
  %v2513 = vpop.f32.mrb[0].mxu0
  %v2514 = vadd.f32 %v2417, %v2513
  %v2515 = vpop.f32.mrb[0].mxu0
  %v2516 = vpop.f32.mrb[0].mxu0
  %v2517 = vadd.f32 %v2420, %v2516
  %v2518 = vpop.f32.mrb[0].mxu0
  %2519 = vmatprep.mubr.bf16.mxu0 %v313
  %2520 = vmatmul.mubr.bf16.gmra.mrb[0].mxu0 %v312
  %v2521 = vpop.f32.mrb[0].mxu0
  %v2522 = vadd.f32 %v2425, %v2521
  %v2523 = vpop.f32.mrb[0].mxu0
  %v2524 = vpop.f32.mrb[0].mxu0
  %v2525 = vadd.f32 %v2428, %v2524
  %v2526 = vpop.f32.mrb[0].mxu0
  %2527 = vmatprep.mubr.bf16.mxu0 %v323
  %2528 = vmatmul.mubr.bf16.gmra.mrb[0].mxu0 %v322
  %v2529 = vpop.f32.mrb[0].mxu0
  %v2530 = vadd.f32 %v2433, %v2529
  %v2531 = vpop.f32.mrb[0].mxu0
  %v2532 = vpop.f32.mrb[0].mxu0
  %v2533 = vadd.f32 %v2436, %v2532
  %v2534 = vpop.f32.mrb[0].mxu0
  %2535 = vmatprep.mubr.bf16.mxu0 %v333
  %2536 = vmatmul.mubr.bf16.gmra.mrb[0].mxu0 %v332
  %v2537 = vpop.f32.mrb[0].mxu0
  %v2538 = vadd.f32 %v2441, %v2537
  %v2539 = vpop.f32.mrb[0].mxu0
  %v2540 = vpop.f32.mrb[0].mxu0
  %v2541 = vadd.f32 %v2444, %v2540
  %v2542 = vpop.f32.mrb[0].mxu0
  %2543 = vmatprep.mubr.bf16.mxu0 %v348
  %2544 = vmatmul.mubr.bf16.gmra.mrb[0].mxu0 %v347
  %v2545 = vpop.f32.mrb[0].mxu0
  %v2546 = vadd.f32 %v2449, %v2545
  %v2547 = vpop.f32.mrb[0].mxu0
  %v2548 = vpop.f32.mrb[0].mxu0
  %v2549 = vadd.f32 %v2452, %v2548
  %v2550 = vpop.f32.mrb[0].mxu0
  %2551 = vmatprep.mubr.bf16.mxu0 %v358
  %2552 = vmatmul.mubr.bf16.gmra.mrb[0].mxu0 %v357
  %v2553 = vpop.f32.mrb[0].mxu0
  %v2554 = vadd.f32 %v2457, %v2553
  %v2555 = vpop.f32.mrb[0].mxu0
  %v2556 = vpop.f32.mrb[0].mxu0
  %v2557 = vadd.f32 %v2460, %v2556
  %v2558 = vpop.f32.mrb[0].mxu0
  %2559 = vmatprep.mubr.bf16.mxu0 %v368
  %2560 = vmatmul.mubr.bf16.gmra.mrb[0].mxu0 %v367
  %v2561 = vpop.f32.mrb[0].mxu0
  %v2562 = vadd.f32 %v2465, %v2561
  %v2563 = vpop.f32.mrb[0].mxu0
  %v2564 = vpop.f32.mrb[0].mxu0
  %v2565 = vadd.f32 %v2468, %v2564
  %v2566 = vpop.f32.mrb[0].mxu0
  %2567 = vmatprep.mubr.bf16.mxu0 %v378
  %2568 = vmatmul.mubr.bf16.gmra.mrb[0].mxu0 %v377
  %v2569 = vpop.f32.mrb[0].mxu0
  %v2570 = vadd.f32 %v2473, %v2569
  %v2571 = vpop.f32.mrb[0].mxu0
  %v2572 = vpop.f32.mrb[0].mxu0
  %v2573 = vadd.f32 %v2476, %v2572
  %v2574 = vpop.f32.mrb[0].mxu0
  %2575 = vdwg.mxu0
  %2576 = vmatprep.subr.bf16.mxu0 0
  %2577 = vmatpush1.bf16.msra.mxu0 %v1690
  %2578 = vmatprep.subr.bf16.mxu0 0
  %2579 = vmatpush1.bf16.msra.mxu0 %v1691
  %2580 = vmatprep.subr.bf16.mxu0 0
  %2581 = vmatpush1.bf16.msra.mxu0 %v1692
  %2582 = vmatprep.subr.bf16.mxu0 0
  %2583 = vmatpush1.bf16.msra.mxu0 %v1693
  %2584 = vmatprep.subr.bf16.mxu0 0
  %2585 = vmatpush1.bf16.msra.mxu0 %v1694
  %2586 = vmatprep.subr.bf16.mxu0 0
  %2587 = vmatpush1.bf16.msra.mxu0 %v1695
  %2588 = vmatprep.subr.bf16.mxu0 0
  %2589 = vmatpush1.bf16.msra.mxu0 %v1696
  %2590 = vmatprep.subr.bf16.mxu0 0
  %2591 = vmatpush1.bf16.msra.mxu0 %v1697
  %2592 = vmatprep.subr.bf16.mxu0 0
  %2593 = vmatpush1.bf16.msra.mxu0 %v1698
  %2594 = vmatprep.subr.bf16.mxu0 0
  %2595 = vmatpush1.bf16.msra.mxu0 %v1699
  %2596 = vmatprep.subr.bf16.mxu0 0
  %2597 = vmatpush1.bf16.msra.mxu0 %v1700
  %2598 = vmatprep.subr.bf16.mxu0 0
  %2599 = vmatpush1.bf16.msra.mxu0 %v1701
  %2600 = vmatprep.subr.bf16.mxu0 0
  %2601 = vmatpush1.bf16.msra.mxu0 %v1702
  %2602 = vmatprep.subr.bf16.mxu0 0
  %2603 = vmatpush1.bf16.msra.mxu0 %v1703
  %2604 = vmatprep.subr.bf16.mxu0 0
  %2605 = vmatpush1.bf16.msra.mxu0 %v1704
  %2606 = vmatprep.subr.bf16.mxu0 0
  %2607 = vmatpush1.bf16.msra.mxu0 %v1705
  %2608 = vmatprep.mubr.bf16.mxu0 %v305
  %2609 = vmatmul.mubr.bf16.gmra.mrb[0].mxu0 %v304
  %v2610 = vpop.f32.mrb[0].mxu0
  %v2611 = vadd.f32 %v2514, %v2610
  %v2612 = vpop.f32.mrb[0].mxu0
  %v2613 = vpop.f32.mrb[0].mxu0
  %v2614 = vadd.f32 %v2517, %v2613
  %v2615 = vpop.f32.mrb[0].mxu0
  %2616 = vmatprep.mubr.bf16.mxu0 %v315
  %2617 = vmatmul.mubr.bf16.gmra.mrb[0].mxu0 %v314
  %v2618 = vpop.f32.mrb[0].mxu0
  %v2619 = vadd.f32 %v2522, %v2618
  %v2620 = vpop.f32.mrb[0].mxu0
  %v2621 = vpop.f32.mrb[0].mxu0
  %v2622 = vadd.f32 %v2525, %v2621
  %v2623 = vpop.f32.mrb[0].mxu0
  %2624 = vmatprep.mubr.bf16.mxu0 %v325
  %2625 = vmatmul.mubr.bf16.gmra.mrb[0].mxu0 %v324
  %v2626 = vpop.f32.mrb[0].mxu0
  %v2627 = vadd.f32 %v2530, %v2626
  %v2628 = vpop.f32.mrb[0].mxu0
  %v2629 = vpop.f32.mrb[0].mxu0
  %v2630 = vadd.f32 %v2533, %v2629
  %v2631 = vpop.f32.mrb[0].mxu0
  %2632 = vmatprep.mubr.bf16.mxu0 %v335
  %2633 = vmatmul.mubr.bf16.gmra.mrb[0].mxu0 %v334
  %v2634 = vpop.f32.mrb[0].mxu0
  %v2635 = vadd.f32 %v2538, %v2634
  %v2636 = vpop.f32.mrb[0].mxu0
  %v2637 = vpop.f32.mrb[0].mxu0
  %v2638 = vadd.f32 %v2541, %v2637
  %v2639 = vpop.f32.mrb[0].mxu0
  %2640 = vmatprep.mubr.bf16.mxu0 %v350
  %2641 = vmatmul.mubr.bf16.gmra.mrb[0].mxu0 %v349
  %v2642 = vpop.f32.mrb[0].mxu0
  %v2643 = vadd.f32 %v2546, %v2642
  %v2644 = vpop.f32.mrb[0].mxu0
  %v2645 = vpop.f32.mrb[0].mxu0
  %v2646 = vadd.f32 %v2549, %v2645
  %v2647 = vpop.f32.mrb[0].mxu0
  %2648 = vmatprep.mubr.bf16.mxu0 %v360
  %2649 = vmatmul.mubr.bf16.gmra.mrb[0].mxu0 %v359
  %v2650 = vpop.f32.mrb[0].mxu0
  %v2651 = vadd.f32 %v2554, %v2650
  %v2652 = vpop.f32.mrb[0].mxu0
  %v2653 = vpop.f32.mrb[0].mxu0
  %v2654 = vadd.f32 %v2557, %v2653
  %v2655 = vpop.f32.mrb[0].mxu0
  %2656 = vmatprep.mubr.bf16.mxu0 %v370
  %2657 = vmatmul.mubr.bf16.gmra.mrb[0].mxu0 %v369
  %v2658 = vpop.f32.mrb[0].mxu0
  %v2659 = vadd.f32 %v2562, %v2658
  %v2660 = vpop.f32.mrb[0].mxu0
  %v2661 = vpop.f32.mrb[0].mxu0
  %v2662 = vadd.f32 %v2565, %v2661
  %v2663 = vpop.f32.mrb[0].mxu0
  %2664 = vmatprep.mubr.bf16.mxu0 %v380
  %2665 = vmatmul.mubr.bf16.gmra.mrb[0].mxu0 %v379
  %v2666 = vpop.f32.mrb[0].mxu0
  %v2667 = vadd.f32 %v2570, %v2666
  %v2668 = vpop.f32.mrb[0].mxu0
  %v2669 = vpop.f32.mrb[0].mxu0
  %v2670 = vadd.f32 %v2573, %v2669
  %v2671 = vpop.f32.mrb[0].mxu0
  %2672 = vdwg.mxu0
  %2673 = vmatprep.subr.bf16.mxu0 0
  %2674 = vmatpush1.bf16.msra.mxu0 %v1706
  %2675 = vmatprep.subr.bf16.mxu0 0
  %2676 = vmatpush1.bf16.msra.mxu0 %v1707
  %2677 = vmatprep.subr.bf16.mxu0 0
  %2678 = vmatpush1.bf16.msra.mxu0 %v1708
  %2679 = vmatprep.subr.bf16.mxu0 0
  %2680 = vmatpush1.bf16.msra.mxu0 %v1709
  %2681 = vmatprep.subr.bf16.mxu0 0
  %2682 = vmatpush1.bf16.msra.mxu0 %v1710
  %2683 = vmatprep.subr.bf16.mxu0 0
  %2684 = vmatpush1.bf16.msra.mxu0 %v1711
  %2685 = vmatprep.subr.bf16.mxu0 0
  %2686 = vmatpush1.bf16.msra.mxu0 %v1712
  %2687 = vmatprep.subr.bf16.mxu0 0
  %2688 = vmatpush1.bf16.msra.mxu0 %v1713
  %2689 = vmatprep.subr.bf16.mxu0 0
  %2690 = vmatpush1.bf16.msra.mxu0 %v1714
  %2691 = vmatprep.subr.bf16.mxu0 0
  %2692 = vmatpush1.bf16.msra.mxu0 %v1715
  %2693 = vmatprep.subr.bf16.mxu0 0
  %2694 = vmatpush1.bf16.msra.mxu0 %v1716
  %2695 = vmatprep.subr.bf16.mxu0 0
  %2696 = vmatpush1.bf16.msra.mxu0 %v1717
  %2697 = vmatprep.subr.bf16.mxu0 0
  %2698 = vmatpush1.bf16.msra.mxu0 %v1718
  %2699 = vmatprep.subr.bf16.mxu0 0
  %2700 = vmatpush1.bf16.msra.mxu0 %v1719
  %2701 = vmatprep.subr.bf16.mxu0 0
  %2702 = vmatpush1.bf16.msra.mxu0 %v1720
  %2703 = vmatprep.subr.bf16.mxu0 0
  %2704 = vmatpush1.bf16.msra.mxu0 %v1721
  %2705 = vmatprep.mubr.bf16.mxu0 %v307
  %2706 = vmatmul.mubr.bf16.gmra.mrb[0].mxu0 %v306
  %v2707 = vpop.f32.mrb[0].mxu0
  %v2708 = vadd.f32 %v2611, %v2707
  %v2709 = vpop.f32.mrb[0].mxu0
  %v2710 = vpop.f32.mrb[0].mxu0
  %v2711 = vadd.f32 %v2614, %v2710
  %v2712 = vpop.f32.mrb[0].mxu0
  %2713 = vmatprep.mubr.bf16.mxu0 %v317
  %2714 = vmatmul.mubr.bf16.gmra.mrb[0].mxu0 %v316
  %v2715 = vpop.f32.mrb[0].mxu0
  %v2716 = vadd.f32 %v2619, %v2715
  %v2717 = vpop.f32.mrb[0].mxu0
  %v2718 = vpop.f32.mrb[0].mxu0
  %v2719 = vadd.f32 %v2622, %v2718
  %v2720 = vpop.f32.mrb[0].mxu0
  %2721 = vmatprep.mubr.bf16.mxu0 %v327
  %2722 = vmatmul.mubr.bf16.gmra.mrb[0].mxu0 %v326
  %v2723 = vpop.f32.mrb[0].mxu0
  %v2724 = vadd.f32 %v2627, %v2723
  %v2725 = vpop.f32.mrb[0].mxu0
  %v2726 = vpop.f32.mrb[0].mxu0
  %v2727 = vadd.f32 %v2630, %v2726
  %v2728 = vpop.f32.mrb[0].mxu0
  %2729 = vmatprep.mubr.bf16.mxu0 %v337
  %2730 = vmatmul.mubr.bf16.gmra.mrb[0].mxu0 %v336
  %v2731 = vpop.f32.mrb[0].mxu0
  %v2732 = vadd.f32 %v2635, %v2731
  %v2733 = vpop.f32.mrb[0].mxu0
  %v2734 = vpop.f32.mrb[0].mxu0
  %v2735 = vadd.f32 %v2638, %v2734
  %v2736 = vpop.f32.mrb[0].mxu0
  %2737 = vmatprep.mubr.bf16.mxu0 %v352
  %2738 = vmatmul.mubr.bf16.gmra.mrb[0].mxu0 %v351
  %v2739 = vpop.f32.mrb[0].mxu0
  %v2740 = vadd.f32 %v2643, %v2739
  %v2741 = vpop.f32.mrb[0].mxu0
  %v2742 = vpop.f32.mrb[0].mxu0
  %v2743 = vadd.f32 %v2646, %v2742
  %v2744 = vpop.f32.mrb[0].mxu0
  %2745 = vmatprep.mubr.bf16.mxu0 %v362
  %2746 = vmatmul.mubr.bf16.gmra.mrb[0].mxu0 %v361
  %v2747 = vpop.f32.mrb[0].mxu0
  %v2748 = vadd.f32 %v2651, %v2747
  %v2749 = vpop.f32.mrb[0].mxu0
  %v2750 = vpop.f32.mrb[0].mxu0
  %v2751 = vadd.f32 %v2654, %v2750
  %v2752 = vpop.f32.mrb[0].mxu0
  %2753 = vmatprep.mubr.bf16.mxu0 %v372
  %2754 = vmatmul.mubr.bf16.gmra.mrb[0].mxu0 %v371
  %v2755 = vpop.f32.mrb[0].mxu0
  %v2756 = vadd.f32 %v2659, %v2755
  %v2757 = vpop.f32.mrb[0].mxu0
  %v2758 = vpop.f32.mrb[0].mxu0
  %v2759 = vadd.f32 %v2662, %v2758
  %v2760 = vpop.f32.mrb[0].mxu0
  %2761 = vmatprep.mubr.bf16.mxu0 %v382
  %2762 = vmatmul.mubr.bf16.gmra.mrb[0].mxu0 %v381
  %v2763 = vpop.f32.mrb[0].mxu0
  %v2764 = vadd.f32 %v2667, %v2763
  %v2765 = vpop.f32.mrb[0].mxu0
  %v2766 = vpop.f32.mrb[0].mxu0
  %v2767 = vadd.f32 %v2670, %v2766
  %v2768 = vpop.f32.mrb[0].mxu0
  %2769 = vdwg.mxu0
  %2770 = vmatprep.subr.bf16.mxu0 0
  %2771 = vmatpush1.bf16.msra.mxu0 %v1722
  %2772 = vmatprep.subr.bf16.mxu0 0
  %2773 = vmatpush1.bf16.msra.mxu0 %v1723
  %2774 = vmatprep.subr.bf16.mxu0 0
  %2775 = vmatpush1.bf16.msra.mxu0 %v1724
  %2776 = vmatprep.subr.bf16.mxu0 0
  %2777 = vmatpush1.bf16.msra.mxu0 %v1725
  %2778 = vmatprep.subr.bf16.mxu0 0
  %2779 = vmatpush1.bf16.msra.mxu0 %v1726
  %2780 = vmatprep.subr.bf16.mxu0 0
  %2781 = vmatpush1.bf16.msra.mxu0 %v1727
  %2782 = vmatprep.subr.bf16.mxu0 0
  %2783 = vmatpush1.bf16.msra.mxu0 %v1728
  %2784 = vmatprep.subr.bf16.mxu0 0
  %2785 = vmatpush1.bf16.msra.mxu0 %v1729
  %2786 = vmatprep.subr.bf16.mxu0 0
  %2787 = vmatpush1.bf16.msra.mxu0 %v1730
  %2788 = vmatprep.subr.bf16.mxu0 0
  %2789 = vmatpush1.bf16.msra.mxu0 %v1731
  %2790 = vmatprep.subr.bf16.mxu0 0
  %2791 = vmatpush1.bf16.msra.mxu0 %v1732
  %2792 = vmatprep.subr.bf16.mxu0 0
  %2793 = vmatpush1.bf16.msra.mxu0 %v1733
  %2794 = vmatprep.subr.bf16.mxu0 0
  %2795 = vmatpush1.bf16.msra.mxu0 %v1734
  %2796 = vmatprep.subr.bf16.mxu0 0
  %2797 = vmatpush1.bf16.msra.mxu0 %v1735
  %2798 = vmatprep.subr.bf16.mxu0 0
  %2799 = vmatpush1.bf16.msra.mxu0 %v1736
  %2800 = vmatprep.subr.bf16.mxu0 0
  %2801 = vmatpush1.bf16.msra.mxu0 %v1737
  %2802 = vmatprep.mubr.bf16.mxu0 %v309
  %2803 = vmatmul.mubr.bf16.gmra.mrb[0].mxu0 %v308
  %v2804 = vpop.f32.mrb[0].mxu0
  %v2805 = vadd.f32 %v2708, %v2804
  %v2806 = vpop.f32.mrb[0].mxu0
  %v2807 = vpop.f32.mrb[0].mxu0
  %v2808 = vadd.f32 %v2711, %v2807
  %v2809 = vpop.f32.mrb[0].mxu0
  %2810 = vmatprep.mubr.bf16.mxu0 %v319
  %2811 = vmatmul.mubr.bf16.gmra.mrb[0].mxu0 %v318
  %v2812 = vpop.f32.mrb[0].mxu0
  %v2813 = vadd.f32 %v2716, %v2812
  %v2814 = vpop.f32.mrb[0].mxu0
  %v2815 = vpop.f32.mrb[0].mxu0
  %v2816 = vadd.f32 %v2719, %v2815
  %v2817 = vpop.f32.mrb[0].mxu0
  %2818 = vmatprep.mubr.bf16.mxu0 %v329
  %2819 = vmatmul.mubr.bf16.gmra.mrb[0].mxu0 %v328
  %v2820 = vpop.f32.mrb[0].mxu0
  %v2821 = vadd.f32 %v2724, %v2820
  %v2822 = vpop.f32.mrb[0].mxu0
  %v2823 = vpop.f32.mrb[0].mxu0
  %v2824 = vadd.f32 %v2727, %v2823
  %v2825 = vpop.f32.mrb[0].mxu0
  %2826 = vmatprep.mubr.bf16.mxu0 %v339
  %2827 = vmatmul.mubr.bf16.gmra.mrb[0].mxu0 %v338
  %v2828 = vpop.f32.mrb[0].mxu0
  %v2829 = vadd.f32 %v2732, %v2828
  %v2830 = vpop.f32.mrb[0].mxu0
  %v2831 = vpop.f32.mrb[0].mxu0
  %v2832 = vadd.f32 %v2735, %v2831
  %v2833 = vpop.f32.mrb[0].mxu0
  %2834 = vmatprep.mubr.bf16.mxu0 %v354
  %2835 = vmatmul.mubr.bf16.gmra.mrb[0].mxu0 %v353
  %v2836 = vpop.f32.mrb[0].mxu0
  %v2837 = vadd.f32 %v2740, %v2836
  %v2838 = vpop.f32.mrb[0].mxu0
  %v2839 = vpop.f32.mrb[0].mxu0
  %v2840 = vadd.f32 %v2743, %v2839
  %v2841 = vpop.f32.mrb[0].mxu0
  %2842 = vmatprep.mubr.bf16.mxu0 %v364
  %2843 = vmatmul.mubr.bf16.gmra.mrb[0].mxu0 %v363
  %v2844 = vpop.f32.mrb[0].mxu0
  %v2845 = vadd.f32 %v2748, %v2844
  %v2846 = vpop.f32.mrb[0].mxu0
  %v2847 = vpop.f32.mrb[0].mxu0
  %v2848 = vadd.f32 %v2751, %v2847
  %v2849 = vpop.f32.mrb[0].mxu0
  %2850 = vmatprep.mubr.bf16.mxu0 %v374
  %2851 = vmatmul.mubr.bf16.gmra.mrb[0].mxu0 %v373
  %v2852 = vpop.f32.mrb[0].mxu0
  %v2853 = vadd.f32 %v2756, %v2852
  %v2854 = vpop.f32.mrb[0].mxu0
  %v2855 = vpop.f32.mrb[0].mxu0
  %v2856 = vadd.f32 %v2759, %v2855
  %v2857 = vpop.f32.mrb[0].mxu0
  %2858 = vmatprep.mubr.bf16.mxu0 %v384
  %2859 = vmatmul.mubr.bf16.gmra.mrb[0].mxu0 %v383
  %v2860 = vpop.f32.mrb[0].mxu0
  %v2861 = vadd.f32 %v2764, %v2860
  %v2862 = vpop.f32.mrb[0].mxu0
  %v2863 = vpop.f32.mrb[0].mxu0
  %v2864 = vadd.f32 %v2767, %v2863
  %v2865 = vpop.f32.mrb[0].mxu0
  %2866 = vdwg.mxu0
  %2867 = vmatprep.subr.bf16.mxu0 0
  %2868 = vmatpush1.bf16.msra.mxu0 %v1738
  %2869 = vmatprep.subr.bf16.mxu0 0
  %2870 = vmatpush1.bf16.msra.mxu0 %v1739
  %2871 = vmatprep.subr.bf16.mxu0 0
  %2872 = vmatpush1.bf16.msra.mxu0 %v1740
  %2873 = vmatprep.subr.bf16.mxu0 0
  %2874 = vmatpush1.bf16.msra.mxu0 %v1741
  %2875 = vmatprep.subr.bf16.mxu0 0
  %2876 = vmatpush1.bf16.msra.mxu0 %v1742
  %2877 = vmatprep.subr.bf16.mxu0 0
  %2878 = vmatpush1.bf16.msra.mxu0 %v1743
  %2879 = vmatprep.subr.bf16.mxu0 0
  %2880 = vmatpush1.bf16.msra.mxu0 %v1744
  %2881 = vmatprep.subr.bf16.mxu0 0
  %2882 = vmatpush1.bf16.msra.mxu0 %v1745
  %2883 = vmatprep.subr.bf16.mxu0 0
  %2884 = vmatpush1.bf16.msra.mxu0 %v1746
  %2885 = vmatprep.subr.bf16.mxu0 0
  %2886 = vmatpush1.bf16.msra.mxu0 %v1747
  %2887 = vmatprep.subr.bf16.mxu0 0
  %2888 = vmatpush1.bf16.msra.mxu0 %v1748
  %2889 = vmatprep.subr.bf16.mxu0 0
  %2890 = vmatpush1.bf16.msra.mxu0 %v1749
  %2891 = vmatprep.subr.bf16.mxu0 0
  %2892 = vmatpush1.bf16.msra.mxu0 %v1750
  %2893 = vmatprep.subr.bf16.mxu0 0
  %2894 = vmatpush1.bf16.msra.mxu0 %v1751
  %2895 = vmatprep.subr.bf16.mxu0 0
  %2896 = vmatpush1.bf16.msra.mxu0 %v1752
  %2897 = vmatprep.subr.bf16.mxu0 0
  %2898 = vmatpush1.bf16.msra.mxu0 %v1753
  %2899 = vmatprep.mubr.bf16.mxu0 %v311
  %2900 = vmatmul.mubr.bf16.gmra.mrb[0].mxu0 %v310
  %v2901 = vpop.f32.mrb[0].mxu0
  %v2902 = vadd.f32 %v2805, %v2901
  %v2903 = vpop.f32.mrb[0].mxu0
  %v2904 = vpop.f32.mrb[0].mxu0
  %v2905 = vadd.f32 %v2808, %v2904
  %v2906 = vpop.f32.mrb[0].mxu0
  %2907 = vmatprep.mubr.bf16.mxu0 %v321
  %2908 = vmatmul.mubr.bf16.gmra.mrb[0].mxu0 %v320
  %v2909 = vpop.f32.mrb[0].mxu0
  %v2910 = vadd.f32 %v2813, %v2909
  %v2911 = vpop.f32.mrb[0].mxu0
  %v2912 = vpop.f32.mrb[0].mxu0
  %v2913 = vadd.f32 %v2816, %v2912
  %v2914 = vpop.f32.mrb[0].mxu0
  %2915 = vmatprep.mubr.bf16.mxu0 %v331
  %2916 = vmatmul.mubr.bf16.gmra.mrb[0].mxu0 %v330
  %v2917 = vpop.f32.mrb[0].mxu0
  %v2918 = vadd.f32 %v2821, %v2917
  %v2919 = vpop.f32.mrb[0].mxu0
  %v2920 = vpop.f32.mrb[0].mxu0
  %v2921 = vadd.f32 %v2824, %v2920
  %v2922 = vpop.f32.mrb[0].mxu0
  %2923 = vmatprep.mubr.bf16.mxu0 %v341
  %2924 = vmatmul.mubr.bf16.gmra.mrb[0].mxu0 %v340
  %v2925 = vpop.f32.mrb[0].mxu0
  %v2926 = vadd.f32 %v2829, %v2925
  %v2927 = vpop.f32.mrb[0].mxu0
  %v2928 = vpop.f32.mrb[0].mxu0
  %v2929 = vadd.f32 %v2832, %v2928
  %v2930 = vpop.f32.mrb[0].mxu0
  %2931 = vmatprep.mubr.bf16.mxu0 %v356
  %2932 = vmatmul.mubr.bf16.gmra.mrb[0].mxu0 %v355
  %v2933 = vpop.f32.mrb[0].mxu0
  %v2934 = vadd.f32 %v2837, %v2933
  %v2935 = vpop.f32.mrb[0].mxu0
  %v2936 = vpop.f32.mrb[0].mxu0
  %v2937 = vadd.f32 %v2840, %v2936
  %v2938 = vpop.f32.mrb[0].mxu0
  %2939 = vmatprep.mubr.bf16.mxu0 %v366
  %2940 = vmatmul.mubr.bf16.gmra.mrb[0].mxu0 %v365
  %v2941 = vpop.f32.mrb[0].mxu0
  %v2942 = vadd.f32 %v2845, %v2941
  %v2943 = vpop.f32.mrb[0].mxu0
  %v2944 = vpop.f32.mrb[0].mxu0
  %v2945 = vadd.f32 %v2848, %v2944
  %v2946 = vpop.f32.mrb[0].mxu0
  %2947 = vmatprep.mubr.bf16.mxu0 %v376
  %2948 = vmatmul.mubr.bf16.gmra.mrb[0].mxu0 %v375
  %v2949 = vpop.f32.mrb[0].mxu0
  %v2950 = vadd.f32 %v2853, %v2949
  %v2951 = vpop.f32.mrb[0].mxu0
  %v2952 = vpop.f32.mrb[0].mxu0
  %v2953 = vadd.f32 %v2856, %v2952
  %v2954 = vpop.f32.mrb[0].mxu0
  %2955 = vmatprep.mubr.bf16.mxu0 %v386
  %2956 = vmatmul.mubr.bf16.gmra.mrb[0].mxu0 %v385
  %v2957 = vpop.f32.mrb[0].mxu0
  %v2958 = vadd.f32 %v2861, %v2957
  %v2959 = vpop.f32.mrb[0].mxu0
  %v2960 = vpop.f32.mrb[0].mxu0
  %v2961 = vadd.f32 %v2864, %v2960
  %v2962 = vpop.f32.mrb[0].mxu0
  %2963 = vdwg.mxu0
  %2964 = vmatprep.subr.bf16.mxu0 0
  %2965 = vmatpush1.bf16.msra.mxu0 %v1754
  %2966 = vmatprep.subr.bf16.mxu0 0
  %2967 = vmatpush1.bf16.msra.mxu0 %v1755
  %2968 = vmatprep.subr.bf16.mxu0 0
  %2969 = vmatpush1.bf16.msra.mxu0 %v1756
  %2970 = vmatprep.subr.bf16.mxu0 0
  %2971 = vmatpush1.bf16.msra.mxu0 %v1757
  %2972 = vmatprep.subr.bf16.mxu0 0
  %2973 = vmatpush1.bf16.msra.mxu0 %v1758
  %2974 = vmatprep.subr.bf16.mxu0 0
  %2975 = vmatpush1.bf16.msra.mxu0 %v1759
  %2976 = vmatprep.subr.bf16.mxu0 0
  %2977 = vmatpush1.bf16.msra.mxu0 %v1760
  %2978 = vmatprep.subr.bf16.mxu0 0
  %2979 = vmatpush1.bf16.msra.mxu0 %v1761
  %2980 = vmatprep.subr.bf16.mxu0 0
  %2981 = vmatpush1.bf16.msra.mxu0 %v1762
  %2982 = vmatprep.subr.bf16.mxu0 0
  %2983 = vmatpush1.bf16.msra.mxu0 %v1763
  %2984 = vmatprep.subr.bf16.mxu0 0
  %2985 = vmatpush1.bf16.msra.mxu0 %v1764
  %2986 = vmatprep.subr.bf16.mxu0 0
  %2987 = vmatpush1.bf16.msra.mxu0 %v1765
  %2988 = vmatprep.subr.bf16.mxu0 0
  %2989 = vmatpush1.bf16.msra.mxu0 %v1766
  %2990 = vmatprep.subr.bf16.mxu0 0
  %2991 = vmatpush1.bf16.msra.mxu0 %v1767
  %2992 = vmatprep.subr.bf16.mxu0 0
  %2993 = vmatpush1.bf16.msra.mxu0 %v1768
  %2994 = vmatprep.subr.bf16.mxu0 0
  %2995 = vmatpush1.bf16.msra.mxu0 %v1769
  %2996 = vmatprep.mubr.bf16.mxu0 %v313
  %2997 = vmatmul.mubr.bf16.gmra.mrb[0].mxu0 %v312
  %v2998 = vpop.f32.mrb[0].mxu0
  %v2999 = vadd.f32 %v2902, %v2998
  %v3000 = vpop.f32.mrb[0].mxu0
  %v3001 = vpop.f32.mrb[0].mxu0
  %v3002 = vadd.f32 %v2905, %v3001
  %v3003 = vpop.f32.mrb[0].mxu0
  %3004 = vmatprep.mubr.bf16.mxu0 %v323
  %3005 = vmatmul.mubr.bf16.gmra.mrb[0].mxu0 %v322
  %v3006 = vpop.f32.mrb[0].mxu0
  %v3007 = vadd.f32 %v2910, %v3006
  %v3008 = vpop.f32.mrb[0].mxu0
  %v3009 = vpop.f32.mrb[0].mxu0
  %v3010 = vadd.f32 %v2913, %v3009
  %v3011 = vpop.f32.mrb[0].mxu0
  %3012 = vmatprep.mubr.bf16.mxu0 %v333
  %3013 = vmatmul.mubr.bf16.gmra.mrb[0].mxu0 %v332
  %v3014 = vpop.f32.mrb[0].mxu0
  %v3015 = vadd.f32 %v2918, %v3014
  %v3016 = vpop.f32.mrb[0].mxu0
  %v3017 = vpop.f32.mrb[0].mxu0
  %v3018 = vadd.f32 %v2921, %v3017
  %v3019 = vpop.f32.mrb[0].mxu0
  %3020 = vmatprep.mubr.bf16.mxu0 %v293
  %3021 = vmatmul.mubr.bf16.gmra.mrb[0].mxu0 %v292
  %v3022 = vpop.f32.mrb[0].mxu0
  %v3023 = vadd.f32 %v2926, %v3022
  %v3024 = vpop.f32.mrb[0].mxu0
  %v3025 = vpop.f32.mrb[0].mxu0
  %v3026 = vadd.f32 %v2929, %v3025
  %v3027 = vpop.f32.mrb[0].mxu0
  %3028 = vmatprep.mubr.bf16.mxu0 %v358
  %3029 = vmatmul.mubr.bf16.gmra.mrb[0].mxu0 %v357
  %v3030 = vpop.f32.mrb[0].mxu0
  %v3031 = vadd.f32 %v2934, %v3030
  %v3032 = vpop.f32.mrb[0].mxu0
  %v3033 = vpop.f32.mrb[0].mxu0
  %v3034 = vadd.f32 %v2937, %v3033
  %v3035 = vpop.f32.mrb[0].mxu0
  %3036 = vmatprep.mubr.bf16.mxu0 %v368
  %3037 = vmatmul.mubr.bf16.gmra.mrb[0].mxu0 %v367
  %v3038 = vpop.f32.mrb[0].mxu0
  %v3039 = vadd.f32 %v2942, %v3038
  %v3040 = vpop.f32.mrb[0].mxu0
  %v3041 = vpop.f32.mrb[0].mxu0
  %v3042 = vadd.f32 %v2945, %v3041
  %v3043 = vpop.f32.mrb[0].mxu0
  %3044 = vmatprep.mubr.bf16.mxu0 %v378
  %3045 = vmatmul.mubr.bf16.gmra.mrb[0].mxu0 %v377
  %v3046 = vpop.f32.mrb[0].mxu0
  %v3047 = vadd.f32 %v2950, %v3046
  %v3048 = vpop.f32.mrb[0].mxu0
  %v3049 = vpop.f32.mrb[0].mxu0
  %v3050 = vadd.f32 %v2953, %v3049
  %v3051 = vpop.f32.mrb[0].mxu0
  %3052 = vmatprep.mubr.bf16.mxu0 %v293
  %3053 = vmatmul.mubr.bf16.gmra.mrb[0].mxu0 %v292
  %v3054 = vpop.f32.mrb[0].mxu0
  %v3055 = vadd.f32 %v2958, %v3054
  %v3056 = vpop.f32.mrb[0].mxu0
  %v3057 = vpop.f32.mrb[0].mxu0
  %v3058 = vadd.f32 %v2961, %v3057
  %v3059 = vpop.f32.mrb[0].mxu0
  %3060 = vdwg.mxu0
  %3061 = vmatprep.subr.bf16.mxu0 0
  %3062 = vmatpush1.bf16.msra.mxu0 %v1770
  %3063 = vmatprep.subr.bf16.mxu0 0
  %3064 = vmatpush1.bf16.msra.mxu0 %v1771
  %3065 = vmatprep.subr.bf16.mxu0 0
  %3066 = vmatpush1.bf16.msra.mxu0 %v1772
  %3067 = vmatprep.subr.bf16.mxu0 0
  %3068 = vmatpush1.bf16.msra.mxu0 %v1773
  %3069 = vmatprep.subr.bf16.mxu0 0
  %3070 = vmatpush1.bf16.msra.mxu0 %v1774
  %3071 = vmatprep.subr.bf16.mxu0 0
  %3072 = vmatpush1.bf16.msra.mxu0 %v1775
  %3073 = vmatprep.subr.bf16.mxu0 0
  %3074 = vmatpush1.bf16.msra.mxu0 %v1776
  %3075 = vmatprep.subr.bf16.mxu0 0
  %3076 = vmatpush1.bf16.msra.mxu0 %v1777
  %3077 = vmatprep.subr.bf16.mxu0 0
  %3078 = vmatpush1.bf16.msra.mxu0 %v1778
  %3079 = vmatprep.subr.bf16.mxu0 0
  %3080 = vmatpush1.bf16.msra.mxu0 %v1779
  %3081 = vmatprep.subr.bf16.mxu0 0
  %3082 = vmatpush1.bf16.msra.mxu0 %v1780
  %3083 = vmatprep.subr.bf16.mxu0 0
  %3084 = vmatpush1.bf16.msra.mxu0 %v1781
  %3085 = vmatprep.subr.bf16.mxu0 0
  %3086 = vmatpush1.bf16.msra.mxu0 %v1782
  %3087 = vmatprep.subr.bf16.mxu0 0
  %3088 = vmatpush1.bf16.msra.mxu0 %v1783
  %3089 = vmatprep.subr.bf16.mxu0 0
  %3090 = vmatpush1.bf16.msra.mxu0 %v1784
  %3091 = vmatprep.subr.bf16.mxu0 0
  %3092 = vmatpush1.bf16.msra.mxu0 %v1785
  %3093 = vmatprep.mubr.bf16.mxu0 %v315
  %3094 = vmatmul.mubr.bf16.gmra.mrb[0].mxu0 %v314
  %v3095 = vpop.f32.mrb[0].mxu0
  %v3096 = vadd.f32 %v2999, %v3095
  %v3097 = vpop.f32.mrb[0].mxu0
  %v3098 = vpop.f32.mrb[0].mxu0
  %v3099 = vadd.f32 %v3002, %v3098
  %v3100 = vpop.f32.mrb[0].mxu0
  %3101 = vmatprep.mubr.bf16.mxu0 %v325
  %3102 = vmatmul.mubr.bf16.gmra.mrb[0].mxu0 %v324
  %v3103 = vpop.f32.mrb[0].mxu0
  %v3104 = vadd.f32 %v3007, %v3103
  %v3105 = vpop.f32.mrb[0].mxu0
  %v3106 = vpop.f32.mrb[0].mxu0
  %v3107 = vadd.f32 %v3010, %v3106
  %v3108 = vpop.f32.mrb[0].mxu0
  %3109 = vmatprep.mubr.bf16.mxu0 %v335
  %3110 = vmatmul.mubr.bf16.gmra.mrb[0].mxu0 %v334
  %v3111 = vpop.f32.mrb[0].mxu0
  %v3112 = vadd.f32 %v3015, %v3111
  %v3113 = vpop.f32.mrb[0].mxu0
  %v3114 = vpop.f32.mrb[0].mxu0
  %v3115 = vadd.f32 %v3018, %v3114
  %v3116 = vpop.f32.mrb[0].mxu0
  %3117 = vmatprep.mubr.bf16.mxu0 %v295
  %3118 = vmatmul.mubr.bf16.gmra.mrb[0].mxu0 %v294
  %v3119 = vpop.f32.mrb[0].mxu0
  %v3120 = vadd.f32 %v3023, %v3119
  %v3121 = vpop.f32.mrb[0].mxu0
  %v3122 = vpop.f32.mrb[0].mxu0
  %v3123 = vadd.f32 %v3026, %v3122
  %v3124 = vpop.f32.mrb[0].mxu0
  %3125 = vmatprep.mubr.bf16.mxu0 %v360
  %3126 = vmatmul.mubr.bf16.gmra.mrb[0].mxu0 %v359
  %v3127 = vpop.f32.mrb[0].mxu0
  %v3128 = vadd.f32 %v3031, %v3127
  %v3129 = vpop.f32.mrb[0].mxu0
  %v3130 = vpop.f32.mrb[0].mxu0
  %v3131 = vadd.f32 %v3034, %v3130
  %v3132 = vpop.f32.mrb[0].mxu0
  %3133 = vmatprep.mubr.bf16.mxu0 %v370
  %3134 = vmatmul.mubr.bf16.gmra.mrb[0].mxu0 %v369
  %v3135 = vpop.f32.mrb[0].mxu0
  %v3136 = vadd.f32 %v3039, %v3135
  %v3137 = vpop.f32.mrb[0].mxu0
  %v3138 = vpop.f32.mrb[0].mxu0
  %v3139 = vadd.f32 %v3042, %v3138
  %v3140 = vpop.f32.mrb[0].mxu0
  %3141 = vmatprep.mubr.bf16.mxu0 %v380
  %3142 = vmatmul.mubr.bf16.gmra.mrb[0].mxu0 %v379
  %v3143 = vpop.f32.mrb[0].mxu0
  %v3144 = vadd.f32 %v3047, %v3143
  %v3145 = vpop.f32.mrb[0].mxu0
  %v3146 = vpop.f32.mrb[0].mxu0
  %v3147 = vadd.f32 %v3050, %v3146
  %v3148 = vpop.f32.mrb[0].mxu0
  %3149 = vmatprep.mubr.bf16.mxu0 %v295
  %3150 = vmatmul.mubr.bf16.gmra.mrb[0].mxu0 %v294
  %v3151 = vpop.f32.mrb[0].mxu0
  %v3152 = vadd.f32 %v3055, %v3151
  %v3153 = vpop.f32.mrb[0].mxu0
  %v3154 = vpop.f32.mrb[0].mxu0
  %v3155 = vadd.f32 %v3058, %v3154
  %v3156 = vpop.f32.mrb[0].mxu0
  %3157 = vdwg.mxu0
  %3158 = vmatprep.subr.bf16.mxu0 0
  %3159 = vmatpush1.bf16.msra.mxu0 %v1786
  %3160 = vmatprep.subr.bf16.mxu0 0
  %3161 = vmatpush1.bf16.msra.mxu0 %v1787
  %3162 = vmatprep.subr.bf16.mxu0 0
  %3163 = vmatpush1.bf16.msra.mxu0 %v1788
  %3164 = vmatprep.subr.bf16.mxu0 0
  %3165 = vmatpush1.bf16.msra.mxu0 %v1789
  %3166 = vmatprep.subr.bf16.mxu0 0
  %3167 = vmatpush1.bf16.msra.mxu0 %v1790
  %3168 = vmatprep.subr.bf16.mxu0 0
  %3169 = vmatpush1.bf16.msra.mxu0 %v1791
  %3170 = vmatprep.subr.bf16.mxu0 0
  %3171 = vmatpush1.bf16.msra.mxu0 %v1792
  %3172 = vmatprep.subr.bf16.mxu0 0
  %3173 = vmatpush1.bf16.msra.mxu0 %v1793
  %3174 = vmatprep.subr.bf16.mxu0 0
  %3175 = vmatpush1.bf16.msra.mxu0 0
  %3176 = vmatprep.subr.bf16.mxu0 0
  %3177 = vmatpush1.bf16.msra.mxu0 0
  %3178 = vmatprep.subr.bf16.mxu0 0
  %3179 = vmatpush1.bf16.msra.mxu0 0
  %3180 = vmatprep.subr.bf16.mxu0 0
  %3181 = vmatpush1.bf16.msra.mxu0 0
  %3182 = vmatprep.subr.bf16.mxu0 0
  %3183 = vmatpush1.bf16.msra.mxu0 0
  %3184 = vmatprep.subr.bf16.mxu0 0
  %3185 = vmatpush1.bf16.msra.mxu0 0
  %3186 = vmatprep.subr.bf16.mxu0 0
  %3187 = vmatpush1.bf16.msra.mxu0 0
  %3188 = vmatprep.subr.bf16.mxu0 0
  %3189 = vmatpush1.bf16.msra.mxu0 0
  %3190 = vmatprep.mubr.bf16.mxu0 0
  %3191 = vmatmul.mubr.bf16.gmra.mrb[0].mxu0 %v316
  %v3192 = vpop.f32.mrb[0].mxu0
  %v3193 = vadd.f32 %v3096, %v3192
  %v3194 = vpop.f32.mrb[0].mxu0
  %v3195 = vpop.f32.mrb[0].mxu0
  %v3196 = vadd.f32 %v3099, %v3195
  %v3197 = vpop.f32.mrb[0].mxu0
  %3198 = vmatprep.mubr.bf16.mxu0 0
  %3199 = vmatmul.mubr.bf16.gmra.mrb[0].mxu0 %v326
  %v3200 = vpop.f32.mrb[0].mxu0
  %v3201 = vadd.f32 %v3104, %v3200
  %v3202 = vpop.f32.mrb[0].mxu0
  %v3203 = vpop.f32.mrb[0].mxu0
  %v3204 = vadd.f32 %v3107, %v3203
  %v3205 = vpop.f32.mrb[0].mxu0
  %3206 = vmatprep.mubr.bf16.mxu0 0
  %3207 = vmatmul.mubr.bf16.gmra.mrb[0].mxu0 %v336
  %v3208 = vpop.f32.mrb[0].mxu0
  %v3209 = vadd.f32 %v3112, %v3208
  %v3210 = vpop.f32.mrb[0].mxu0
  %v3211 = vpop.f32.mrb[0].mxu0
  %v3212 = vadd.f32 %v3115, %v3211
  %v3213 = vpop.f32.mrb[0].mxu0
  %3214 = vmatprep.mubr.bf16.mxu0 0
  %3215 = vmatmul.mubr.bf16.gmra.mrb[0].mxu0 %v296
  %v3216 = vpop.f32.mrb[0].mxu0
  %v3217 = vadd.f32 %v3120, %v3216
  %v3218 = vpop.f32.mrb[0].mxu0
  %v3219 = vpop.f32.mrb[0].mxu0
  %v3220 = vadd.f32 %v3123, %v3219
  %v3221 = vpop.f32.mrb[0].mxu0
  %3222 = vmatprep.mubr.bf16.mxu0 0
  %3223 = vmatmul.mubr.bf16.gmra.mrb[0].mxu0 %v361
  %v3224 = vpop.f32.mrb[0].mxu0
  %v3225 = vadd.f32 %v3128, %v3224
  %v3226 = vpop.f32.mrb[0].mxu0
  %v3227 = vpop.f32.mrb[0].mxu0
  %v3228 = vadd.f32 %v3131, %v3227
  %v3229 = vpop.f32.mrb[0].mxu0
  %3230 = vmatprep.mubr.bf16.mxu0 0
  %3231 = vmatmul.mubr.bf16.gmra.mrb[0].mxu0 %v371
  %v3232 = vpop.f32.mrb[0].mxu0
  %v3233 = vadd.f32 %v3136, %v3232
  %v3234 = vpop.f32.mrb[0].mxu0
  %v3235 = vpop.f32.mrb[0].mxu0
  %v3236 = vadd.f32 %v3139, %v3235
  %v3237 = vpop.f32.mrb[0].mxu0
  %3238 = vmatprep.mubr.bf16.mxu0 0
  %3239 = vmatmul.mubr.bf16.gmra.mrb[0].mxu0 %v381
  %v3240 = vpop.f32.mrb[0].mxu0
  %v3241 = vadd.f32 %v3144, %v3240
  %v3242 = vpop.f32.mrb[0].mxu0
  %v3243 = vpop.f32.mrb[0].mxu0
  %v3244 = vadd.f32 %v3147, %v3243
  %v3245 = vpop.f32.mrb[0].mxu0
  %3246 = vmatprep.mubr.bf16.mxu0 0
  %3247 = vmatmul.mubr.bf16.gmra.mrb[0].mxu0 %v296
  %v3248 = vpop.f32.mrb[0].mxu0
  %v3249 = vadd.f32 %v3152, %v3248
  %v3250 = vpop.f32.mrb[0].mxu0
  %v3251 = vpop.f32.mrb[0].mxu0
  %v3252 = vadd.f32 %v3155, %v3251
  %v3253 = vpop.f32.mrb[0].mxu0
  %3254 = vdwg.mxu0
  %v3255 = vmax.f32 %v3193, 0.0
  %v3256 = vmax.f32 %v3196, 0.0
  %v3257 = vmax.f32 %v3201, 0.0
  %v3258 = vmax.f32 %v3204, 0.0
  %v3259 = vmax.f32 %v3209, 0.0
  %v3260 = vmax.f32 %v3212, 0.0
  %v3261 = vmax.f32 %v3217, 0.0
  %v3262 = vmax.f32 %v3220, 0.0
  %v3263 = vmax.f32 %v3225, 0.0
  %v3264 = vmax.f32 %v3228, 0.0
  %v3265 = vmax.f32 %v3233, 0.0
  %v3266 = vmax.f32 %v3236, 0.0
  %v3267 = vmax.f32 %v3241, 0.0
  %v3268 = vmax.f32 %v3244, 0.0
  %v3269 = vmax.f32 %v3249, 0.0
  %v3270 = vmax.f32 %v3252, 0.0
  %v3285 = vrot.slane %v3255, 7
  %v3286 = vsel %vm120, %v121, %v3285
  %v3287 = vrot.slane %v3256, 7
  %v3288 = vsel %vm120, %v121, %v3287
  %v3289 = vrot.slane %v3257, 7
  %v3290 = vsel %vm120, %v121, %v3289
  %v3291 = vrot.slane %v3258, 7
  %v3292 = vsel %vm120, %v121, %v3291
  %v3293 = vrot.slane %v3259, 7
  %v3294 = vsel %vm120, %v121, %v3293
  %v3295 = vrot.slane %v3260, 7
  %v3296 = vsel %vm120, %v121, %v3295
  %v3297 = vrot.slane %v3261, 7
  %v3298 = vsel %vm120, %v121, %v3297
  %v3299 = vrot.slane %v3263, 7
  %v3300 = vsel %vm120, %v121, %v3299
  %v3301 = vrot.slane %v3264, 7
  %v3302 = vsel %vm120, %v121, %v3301
  %v3303 = vrot.slane %v3265, 7
  %v3304 = vsel %vm120, %v121, %v3303
  %v3305 = vrot.slane %v3266, 7
  %v3306 = vsel %vm120, %v121, %v3305
  %v3307 = vrot.slane %v3267, 7
  %v3308 = vsel %vm120, %v121, %v3307
  %v3309 = vrot.slane %v3268, 7
  %v3310 = vsel %vm120, %v121, %v3309
  %v3311 = vrot.slane %v3269, 7
  %v3312 = vsel %vm120, %v121, %v3311
  %v3327 = vrot.slane %v3255, 1
  %v3328 = vsel %vm160, %v3327, %v161
  %v3329 = vrot.slane %v3256, 1
  %v3330 = vsel %vm160, %v3329, %v161
  %v3331 = vrot.slane %v3257, 1
  %v3332 = vsel %vm160, %v3331, %v161
  %v3333 = vrot.slane %v3258, 1
  %v3334 = vsel %vm160, %v3333, %v161
  %v3335 = vrot.slane %v3259, 1
  %v3336 = vsel %vm160, %v3335, %v161
  %v3337 = vrot.slane %v3260, 1
  %v3338 = vsel %vm160, %v3337, %v161
  %v3339 = vrot.slane %v3261, 1
  %v3340 = vsel %vm160, %v3339, %v161
  %v3341 = vrot.slane %v3263, 1
  %v3342 = vsel %vm160, %v3341, %v161
  %v3343 = vrot.slane %v3264, 1
  %v3344 = vsel %vm160, %v3343, %v161
  %v3345 = vrot.slane %v3265, 1
  %v3346 = vsel %vm160, %v3345, %v161
  %v3347 = vrot.slane %v3266, 1
  %v3348 = vsel %vm160, %v3347, %v161
  %v3349 = vrot.slane %v3267, 1
  %v3350 = vsel %vm160, %v3349, %v161
  %v3351 = vrot.slane %v3268, 1
  %v3352 = vsel %vm160, %v3351, %v161
  %v3353 = vrot.slane %v3269, 1
  %v3354 = vsel %vm160, %v3353, %v161
  %v3371 = vrot.slane %v3262, 7
  %v3372 = vsel %vm120, %v121, %v3371
  %v3373 = vrot.slane %v3270, 7
  %v3374 = vsel %vm120, %v121, %v3373
  %v3377 = vrot.slane %v3262, 1
  %v3378 = vsel %vm160, %v3377, %v161
  %v3379 = vrot.slane %v3270, 1
  %v3380 = vsel %vm160, %v3379, %v161
  %v3383 = vpack.c.bf16 %v3286, %v122
  %v3384 = vpack.c.bf16 %v3255, 0.0
  %v3385 = vpack.c.bf16 %v3328, %v162
  %v3386 = vpack.c.bf16 %v3288, %v3286
  %v3387 = vpack.c.bf16 %v3256, %v3255
  %v3388 = vpack.c.bf16 %v3330, %v3328
  %v3389 = vpack.c.bf16 %v3290, %v3288
  %v3390 = vpack.c.bf16 %v3257, %v3256
  %v3391 = vpack.c.bf16 %v3332, %v3330
  %v3392 = vpack.c.bf16 %v3292, %v3290
  %v3393 = vpack.c.bf16 %v3258, %v3257
  %v3394 = vpack.c.bf16 %v3334, %v3332
  %v3395 = vpack.c.bf16 %v3294, %v3292
  %v3396 = vpack.c.bf16 %v3259, %v3258
  %v3397 = vpack.c.bf16 %v3336, %v3334
  %v3398 = vpack.c.bf16 %v3296, %v3294
  %v3399 = vpack.c.bf16 %v3260, %v3259
  %v3400 = vpack.c.bf16 %v3338, %v3336
  %v3401 = vpack.c.bf16 %v3298, %v3296
  %v3402 = vpack.c.bf16 %v3261, %v3260
  %v3403 = vpack.c.bf16 %v3340, %v3338
  %v3404 = vpack.c.bf16 %v3372, %v3298
  %v3405 = vpack.c.bf16 %v3262, %v3261
  %v3406 = vpack.c.bf16 %v3378, %v3340
  %v3407 = vpack.c.bf16 %v122, %v3372
  %v3408 = vpack.c.bf16 0.0, %v3262
  %v3409 = vpack.c.bf16 %v162, %v3378
  %v3410 = vpack.c.bf16 %v3300, %v122
  %v3411 = vpack.c.bf16 %v3263, 0.0
  %v3412 = vpack.c.bf16 %v3342, %v162
  %v3413 = vpack.c.bf16 %v3302, %v3300
  %v3414 = vpack.c.bf16 %v3264, %v3263
  %v3415 = vpack.c.bf16 %v3344, %v3342
  %v3416 = vpack.c.bf16 %v3304, %v3302
  %v3417 = vpack.c.bf16 %v3265, %v3264
  %v3418 = vpack.c.bf16 %v3346, %v3344
  %v3419 = vpack.c.bf16 %v3306, %v3304
  %v3420 = vpack.c.bf16 %v3266, %v3265
  %v3421 = vpack.c.bf16 %v3348, %v3346
  %v3422 = vpack.c.bf16 %v3308, %v3306
  %v3423 = vpack.c.bf16 %v3267, %v3266
  %v3424 = vpack.c.bf16 %v3350, %v3348
  %v3425 = vpack.c.bf16 %v3310, %v3308
  %v3426 = vpack.c.bf16 %v3268, %v3267
  %v3427 = vpack.c.bf16 %v3352, %v3350
  %v3428 = vpack.c.bf16 %v3312, %v3310
  %v3429 = vpack.c.bf16 %v3269, %v3268
  %v3430 = vpack.c.bf16 %v3354, %v3352
  %v3431 = vpack.c.bf16 %v3374, %v3312
  %v3432 = vpack.c.bf16 %v3270, %v3269
  %v3433 = vpack.c.bf16 %v3380, %v3354
  %v3434 = vpack.c.bf16 %v122, %v3374
  %v3435 = vpack.c.bf16 0.0, %v3270
  %v3436 = vpack.c.bf16 %v162, %v3380
  %v3437 = vld [vmem:[%s3] sm:$0xf]
  %v3438 = vld [vmem:[%s3 + $0x4] sm:$0xf]
  %v3439 = vld [vmem:[%s3 + $0x8] sm:$0xf]
  %v3440 = vld [vmem:[%s3 + $0xc] sm:$0xf]
  %v3441 = vld [vmem:[%s3 + $0x10] sm:$0xf]
  %v3442 = vld [vmem:[%s3 + $0x14] sm:$0xf]
  %v3443 = vld [vmem:[%s3 + $0x18] sm:$0xf]
  %v3444 = vld [vmem:[%s3 + $0x1c] sm:$0xf]
  %v3445 = vld [vmem:[%s3 + $0x20] sm:$0xf]
  %v3446 = vld [vmem:[%s3 + $0x24] sm:$0xf]
  %v3447 = vld [vmem:[%s3 + $0x28] sm:$0xf]
  %v3448 = vld [vmem:[%s3 + $0x2c] sm:$0xf]
  %v3449 = vld [vmem:[%s3 + $0x30] sm:$0xf]
  %v3450 = vld [vmem:[%s3 + $0x34] sm:$0xf]
  %v3451 = vld [vmem:[%s3 + $0x38] sm:$0xf]
  %v3452 = vld [vmem:[%s3 + $0x3c] sm:$0xf]
  %v3453 = vld [vmem:[%s3 + $0x40] sm:$0xf]
  %v3454 = vld [vmem:[%s3 + $0x44] sm:$0xf]
  %v3455 = vld [vmem:[%s3 + $0x48] sm:$0xf]
  %v3456 = vld [vmem:[%s3 + $0x4c] sm:$0xf]
  %v3457 = vld [vmem:[%s3 + $0x50] sm:$0xf]
  %v3458 = vld [vmem:[%s3 + $0x54] sm:$0xf]
  %v3459 = vld [vmem:[%s3 + $0x58] sm:$0xf]
  %v3460 = vld [vmem:[%s3 + $0x5c] sm:$0xf]
  %v3461 = vld [vmem:[%s3 + $0x60] sm:$0xf]
  %v3462 = vld [vmem:[%s3 + $0x64] sm:$0xf]
  %v3463 = vld [vmem:[%s3 + $0x68] sm:$0xf]
  %v3464 = vld [vmem:[%s3 + $0x6c] sm:$0xf]
  %v3465 = vld [vmem:[%s3 + $0x70] sm:$0xf]
  %v3466 = vld [vmem:[%s3 + $0x74] sm:$0xf]
  %v3467 = vld [vmem:[%s3 + $0x78] sm:$0xf]
  %v3468 = vld [vmem:[%s3 + $0x7c] sm:$0xf]
  %v3469 = vld [vmem:[%s3 + $0x80] sm:$0xf]
  %v3470 = vld [vmem:[%s3 + $0x84] sm:$0xf]
  %v3471 = vld [vmem:[%s3 + $0x88] sm:$0xf]
  %v3472 = vld [vmem:[%s3 + $0x8c] sm:$0xf]
  %v3473 = vld [vmem:[%s3 + $0x90] sm:$0xf]
  %v3474 = vld [vmem:[%s3 + $0x94] sm:$0xf]
  %v3475 = vld [vmem:[%s3 + $0x98] sm:$0xf]
  %v3476 = vld [vmem:[%s3 + $0x9c] sm:$0xf]
  %v3477 = vld [vmem:[%s3 + $0xa0] sm:$0xf]
  %v3478 = vld [vmem:[%s3 + $0xa4] sm:$0xf]
  %v3479 = vld [vmem:[%s3 + $0xa8] sm:$0xf]
  %v3480 = vld [vmem:[%s3 + $0xac] sm:$0xf]
  %v3481 = vld [vmem:[%s3 + $0xb0] sm:$0xf]
  %v3482 = vld [vmem:[%s3 + $0xb4] sm:$0xf]
  %v3483 = vld [vmem:[%s3 + $0xb8] sm:$0xf]
  %v3484 = vld [vmem:[%s3 + $0xbc] sm:$0xf]
  %v3485 = vld [vmem:[%s3 + $0xc0] sm:$0xf]
  %v3486 = vld [vmem:[%s3 + $0xc4] sm:$0xf]
  %v3487 = vld [vmem:[%s3 + $0xc8] sm:$0xf]
  %v3488 = vld [vmem:[%s3 + $0xcc] sm:$0xf]
  %v3489 = vld [vmem:[%s3 + $0xd0] sm:$0xf]
  %v3490 = vld [vmem:[%s3 + $0xd4] sm:$0xf]
  %v3491 = vld [vmem:[%s3 + $0xd8] sm:$0xf]
  %v3492 = vld [vmem:[%s3 + $0xdc] sm:$0xf]
  %v3493 = vld [vmem:[%s3 + $0xe0] sm:$0xf]
  %v3494 = vld [vmem:[%s3 + $0xe4] sm:$0xf]
  %v3495 = vld [vmem:[%s3 + $0xe8] sm:$0xf]
  %v3496 = vld [vmem:[%s3 + $0xec] sm:$0xf]
  %v3497 = vld [vmem:[%s3 + $0xf0] sm:$0xf]
  %v3498 = vld [vmem:[%s3 + $0xf4] sm:$0xf]
  %v3499 = vld [vmem:[%s3 + $0xf8] sm:$0xf]
  %v3500 = vld [vmem:[%s3 + $0xfc] sm:$0xf]
  %v3501 = vld [vmem:[%s3 + $0x100] sm:$0xf]
  %v3502 = vld [vmem:[%s3 + $0x104] sm:$0xf]
  %v3503 = vld [vmem:[%s3 + $0x108] sm:$0xf]
  %v3504 = vld [vmem:[%s3 + $0x10c] sm:$0xf]
  %v3505 = vld [vmem:[%s3 + $0x110] sm:$0xf]
  %v3506 = vld [vmem:[%s3 + $0x114] sm:$0xf]
  %v3507 = vld [vmem:[%s3 + $0x118] sm:$0xf]
  %v3508 = vld [vmem:[%s3 + $0x11c] sm:$0xf]
  %v3509 = vld [vmem:[%s3 + $0x120] sm:$0xf]
  %v3510 = vld [vmem:[%s3 + $0x124] sm:$0xf]
  %v3511 = vld [vmem:[%s3 + $0x128] sm:$0xf]
  %v3512 = vld [vmem:[%s3 + $0x12c] sm:$0xf]
  %v3513 = vld [vmem:[%s3 + $0x130] sm:$0xf]
  %v3514 = vld [vmem:[%s3 + $0x134] sm:$0xf]
  %v3515 = vld [vmem:[%s3 + $0x138] sm:$0xf]
  %v3516 = vld [vmem:[%s3 + $0x13c] sm:$0xf]
  %v3517 = vld [vmem:[%s3 + $0x140] sm:$0xf]
  %v3518 = vld [vmem:[%s3 + $0x144] sm:$0xf]
  %v3519 = vld [vmem:[%s3 + $0x148] sm:$0xf]
  %v3520 = vld [vmem:[%s3 + $0x14c] sm:$0xf]
  %v3521 = vld [vmem:[%s3 + $0x150] sm:$0xf]
  %v3522 = vld [vmem:[%s3 + $0x154] sm:$0xf]
  %v3523 = vld [vmem:[%s3 + $0x158] sm:$0xf]
  %v3524 = vld [vmem:[%s3 + $0x15c] sm:$0xf]
  %v3525 = vld [vmem:[%s3 + $0x160] sm:$0xf]
  %v3526 = vld [vmem:[%s3 + $0x164] sm:$0xf]
  %v3527 = vld [vmem:[%s3 + $0x168] sm:$0xf]
  %v3528 = vld [vmem:[%s3 + $0x16c] sm:$0xf]
  %v3529 = vld [vmem:[%s3 + $0x170] sm:$0xf]
  %v3530 = vld [vmem:[%s3 + $0x174] sm:$0xf]
  %v3531 = vld [vmem:[%s3 + $0x178] sm:$0xf]
  %v3532 = vld [vmem:[%s3 + $0x17c] sm:$0xf]
  %v3533 = vld [vmem:[%s3 + $0x180] sm:$0xf]
  %v3534 = vld [vmem:[%s3 + $0x184] sm:$0xf]
  %v3535 = vld [vmem:[%s3 + $0x188] sm:$0xf]
  %v3536 = vld [vmem:[%s3 + $0x18c] sm:$0xf]
  %v3537 = vld [vmem:[%s3 + $0x190] sm:$0xf]
  %v3538 = vld [vmem:[%s3 + $0x194] sm:$0xf]
  %v3539 = vld [vmem:[%s3 + $0x198] sm:$0xf]
  %v3540 = vld [vmem:[%s3 + $0x19c] sm:$0xf]
  %v3541 = vld [vmem:[%s3 + $0x1a0] sm:$0xf]
  %v3542 = vld [vmem:[%s3 + $0x1a4] sm:$0xf]
  %v3543 = vld [vmem:[%s3 + $0x1a8] sm:$0xf]
  %v3544 = vld [vmem:[%s3 + $0x1ac] sm:$0xf]
  %v3545 = vld [vmem:[%s3 + $0x1b0] sm:$0xf]
  %v3546 = vld [vmem:[%s3 + $0x1b4] sm:$0xf]
  %v3547 = vld [vmem:[%s3 + $0x1b8] sm:$0xf]
  %v3548 = vld [vmem:[%s3 + $0x1bc] sm:$0xf]
  %v3549 = vld [vmem:[%s3 + $0x1c0] sm:$0xf]
  %v3550 = vld [vmem:[%s3 + $0x1c4] sm:$0xf]
  %v3551 = vld [vmem:[%s3 + $0x1c8] sm:$0xf]
  %v3552 = vld [vmem:[%s3 + $0x1cc] sm:$0xf]
  %v3553 = vld [vmem:[%s3 + $0x1d0] sm:$0xf]
  %v3554 = vld [vmem:[%s3 + $0x1d4] sm:$0xf]
  %v3555 = vld [vmem:[%s3 + $0x1d8] sm:$0xf]
  %v3556 = vld [vmem:[%s3 + $0x1dc] sm:$0xf]
  %v3557 = vld [vmem:[%s3 + $0x1e0] sm:$0xf]
  %v3558 = vld [vmem:[%s3 + $0x1e4] sm:$0xf]
  %v3559 = vld [vmem:[%s3 + $0x1e8] sm:$0xf]
  %v3560 = vld [vmem:[%s3 + $0x1ec] sm:$0xf]
  %v3561 = vld [vmem:[%s3 + $0x1f0] sm:$0xf]
  %v3562 = vld [vmem:[%s3 + $0x1f4] sm:$0xf]
  %v3563 = vld [vmem:[%s3 + $0x1f8] sm:$0xf]
  %v3564 = vld [vmem:[%s3 + $0x1fc] sm:$0xf]
  %v3565 = vld [vmem:[%s3 + $0x200] sm:$0xf]
  %v3566 = vld [vmem:[%s3 + $0x204] sm:$0xf]
  %v3567 = vld [vmem:[%s3 + $0x208] sm:$0xf]
  %v3568 = vld [vmem:[%s3 + $0x20c] sm:$0xf]
  %v3569 = vld [vmem:[%s3 + $0x210] sm:$0xf]
  %v3570 = vld [vmem:[%s3 + $0x214] sm:$0xf]
  %v3571 = vld [vmem:[%s3 + $0x218] sm:$0xf]
  %v3572 = vld [vmem:[%s3 + $0x21c] sm:$0xf]
  %v3573 = vld [vmem:[%s3 + $0x220] sm:$0xf]
  %v3574 = vld [vmem:[%s3 + $0x224] sm:$0xf]
  %v3575 = vld [vmem:[%s3 + $0x228] sm:$0xf]
  %v3576 = vld [vmem:[%s3 + $0x22c] sm:$0xf]
  %v3577 = vld [vmem:[%s3 + $0x230] sm:$0xf]
  %v3578 = vld [vmem:[%s3 + $0x234] sm:$0xf]
  %v3579 = vld [vmem:[%s3 + $0x238] sm:$0xf]
  %v3580 = vld [vmem:[%s3 + $0x23c] sm:$0xf]
  %v3581 = vld [vmem:[%s4] sm:$0x1]
  %v3583 = vlaneseq
  %v3584 = vshrl.u32 %v3583, 7
  %v3585 = vsub.s32 0, %v3584
  %v3586 = vrot.slane %v3581, %v3585
  %v3732 = vunpack.c.l.b16 %v3437
  %v3733 = vunpack.c.l.b16 %v3438
  %v3734 = vunpack.c.l.b16 %v3439
  %v3735 = vunpack.c.l.b16 %v3440
  %v3736 = vunpack.c.l.b16 %v3441
  %v3737 = vunpack.c.l.b16 %v3442
  %v3738 = vunpack.c.l.b16 %v3443
  %v3739 = vunpack.c.l.b16 %v3444
  %v3740 = vunpack.c.l.b16 %v3445
  %v3741 = vunpack.c.l.b16 %v3446
  %v3742 = vunpack.c.l.b16 %v3447
  %v3743 = vunpack.c.l.b16 %v3448
  %v3744 = vunpack.c.l.b16 %v3449
  %v3745 = vunpack.c.l.b16 %v3450
  %v3746 = vunpack.c.l.b16 %v3451
  %v3747 = vunpack.c.l.b16 %v3452
  %v3748 = vunpack.c.l.b16 %v3453
  %v3749 = vunpack.c.l.b16 %v3454
  %v3750 = vunpack.c.l.b16 %v3455
  %v3751 = vunpack.c.l.b16 %v3456
  %v3752 = vunpack.c.l.b16 %v3457
  %v3753 = vunpack.c.l.b16 %v3458
  %v3754 = vunpack.c.l.b16 %v3459
  %v3755 = vunpack.c.l.b16 %v3460
  %v3756 = vunpack.c.l.b16 %v3461
  %v3757 = vunpack.c.l.b16 %v3462
  %v3758 = vunpack.c.l.b16 %v3463
  %v3759 = vunpack.c.l.b16 %v3464
  %v3760 = vunpack.c.l.b16 %v3465
  %v3761 = vunpack.c.l.b16 %v3466
  %v3762 = vunpack.c.l.b16 %v3467
  %v3763 = vunpack.c.l.b16 %v3468
  %v3764 = vunpack.c.l.b16 %v3469
  %v3765 = vunpack.c.l.b16 %v3470
  %v3766 = vunpack.c.l.b16 %v3471
  %v3767 = vunpack.c.l.b16 %v3472
  %v3768 = vunpack.c.l.b16 %v3473
  %v3769 = vunpack.c.l.b16 %v3474
  %v3770 = vunpack.c.l.b16 %v3475
  %v3771 = vunpack.c.l.b16 %v3476
  %v3772 = vunpack.c.l.b16 %v3477
  %v3773 = vunpack.c.l.b16 %v3478
  %v3774 = vunpack.c.l.b16 %v3479
  %v3775 = vunpack.c.l.b16 %v3480
  %v3776 = vunpack.c.l.b16 %v3481
  %v3777 = vunpack.c.l.b16 %v3482
  %v3778 = vunpack.c.l.b16 %v3483
  %v3779 = vunpack.c.l.b16 %v3484
  %v3780 = vunpack.c.l.b16 %v3485
  %v3781 = vunpack.c.l.b16 %v3486
  %v3782 = vunpack.c.l.b16 %v3487
  %v3783 = vunpack.c.l.b16 %v3488
  %v3784 = vunpack.c.l.b16 %v3489
  %v3785 = vunpack.c.l.b16 %v3490
  %v3786 = vunpack.c.l.b16 %v3491
  %v3787 = vunpack.c.l.b16 %v3492
  %v3788 = vunpack.c.l.b16 %v3493
  %v3789 = vunpack.c.l.b16 %v3494
  %v3790 = vunpack.c.l.b16 %v3495
  %v3791 = vunpack.c.l.b16 %v3496
  %v3792 = vunpack.c.l.b16 %v3497
  %v3793 = vunpack.c.l.b16 %v3498
  %v3794 = vunpack.c.l.b16 %v3499
  %v3795 = vunpack.c.l.b16 %v3500
  %v3796 = vunpack.c.l.b16 %v3501
  %v3797 = vunpack.c.l.b16 %v3502
  %v3798 = vunpack.c.l.b16 %v3503
  %v3799 = vunpack.c.l.b16 %v3504
  %v3800 = vunpack.c.l.b16 %v3505
  %v3801 = vunpack.c.l.b16 %v3506
  %v3802 = vunpack.c.l.b16 %v3507
  %v3803 = vunpack.c.l.b16 %v3508
  %v3804 = vunpack.c.l.b16 %v3509
  %v3805 = vunpack.c.l.b16 %v3510
  %v3806 = vunpack.c.l.b16 %v3511
  %v3807 = vunpack.c.l.b16 %v3512
  %v3808 = vunpack.c.l.b16 %v3513
  %v3809 = vunpack.c.l.b16 %v3514
  %v3810 = vunpack.c.l.b16 %v3515
  %v3811 = vunpack.c.l.b16 %v3516
  %v3812 = vunpack.c.l.b16 %v3517
  %v3813 = vunpack.c.l.b16 %v3518
  %v3814 = vunpack.c.l.b16 %v3519
  %v3815 = vunpack.c.l.b16 %v3520
  %v3816 = vunpack.c.l.b16 %v3521
  %v3817 = vunpack.c.l.b16 %v3522
  %v3818 = vunpack.c.l.b16 %v3523
  %v3819 = vunpack.c.l.b16 %v3524
  %v3820 = vunpack.c.l.b16 %v3525
  %v3821 = vunpack.c.l.b16 %v3526
  %v3822 = vunpack.c.l.b16 %v3527
  %v3823 = vunpack.c.l.b16 %v3528
  %v3824 = vunpack.c.l.b16 %v3529
  %v3825 = vunpack.c.l.b16 %v3530
  %v3826 = vunpack.c.l.b16 %v3531
  %v3827 = vunpack.c.l.b16 %v3532
  %v3828 = vunpack.c.l.b16 %v3533
  %v3829 = vunpack.c.l.b16 %v3534
  %v3830 = vunpack.c.l.b16 %v3535
  %v3831 = vunpack.c.l.b16 %v3536
  %v3832 = vunpack.c.l.b16 %v3537
  %v3833 = vunpack.c.l.b16 %v3538
  %v3834 = vunpack.c.l.b16 %v3539
  %v3835 = vunpack.c.l.b16 %v3540
  %v3836 = vunpack.c.l.b16 %v3541
  %v3837 = vunpack.c.l.b16 %v3542
  %v3838 = vunpack.c.l.b16 %v3543
  %v3839 = vunpack.c.l.b16 %v3544
  %v3840 = vunpack.c.l.b16 %v3545
  %v3841 = vunpack.c.l.b16 %v3546
  %v3842 = vunpack.c.l.b16 %v3547
  %v3843 = vunpack.c.l.b16 %v3548
  %v3844 = vunpack.c.l.b16 %v3549
  %v3845 = vunpack.c.l.b16 %v3550
  %v3846 = vunpack.c.l.b16 %v3551
  %v3847 = vunpack.c.l.b16 %v3552
  %v3848 = vunpack.c.l.b16 %v3553
  %v3849 = vunpack.c.l.b16 %v3554
  %v3850 = vunpack.c.l.b16 %v3555
  %v3851 = vunpack.c.l.b16 %v3556
  %v3852 = vunpack.c.l.b16 %v3557
  %v3853 = vunpack.c.l.b16 %v3558
  %v3854 = vunpack.c.l.b16 %v3559
  %v3855 = vunpack.c.l.b16 %v3560
  %v3856 = vunpack.c.l.b16 %v3561
  %v3857 = vunpack.c.l.b16 %v3562
  %v3858 = vunpack.c.l.b16 %v3563
  %v3859 = vunpack.c.l.b16 %v3564
  %v3860 = vunpack.c.l.b16 %v3565
  %v3861 = vunpack.c.l.b16 %v3566
  %v3862 = vunpack.c.l.b16 %v3567
  %v3863 = vunpack.c.l.b16 %v3568
  %v3864 = vunpack.c.l.b16 %v3569
  %v3865 = vunpack.c.l.b16 %v3570
  %v3866 = vunpack.c.l.b16 %v3571
  %v3867 = vunpack.c.l.b16 %v3572
  %v3868 = vunpack.c.l.b16 %v3573
  %v3869 = vunpack.c.l.b16 %v3574
  %v3870 = vunpack.c.l.b16 %v3575
  %v3871 = vunpack.c.l.b16 %v3576
  %v3872 = vunpack.c.l.b16 %v3577
  %v3873 = vunpack.c.l.b16 %v3578
  %v3874 = vunpack.c.l.b16 %v3579
  %v3875 = vunpack.c.l.b16 %v3580
  %v3876 = vpack.c.b16 %v3733, %v3732
  %v3877 = vpack.c.b16 %v3735, %v3734
  %v3878 = vpack.c.b16 %v3737, %v3736
  %v3879 = vpack.c.b16 %v3739, %v3738
  %v3880 = vpack.c.b16 %v3741, %v3740
  %v3881 = vpack.c.b16 %v3743, %v3742
  %v3882 = vpack.c.b16 %v3745, %v3744
  %v3883 = vpack.c.b16 %v3747, %v3746
  %v3884 = vpack.c.b16 %v3749, %v3748
  %v3885 = vpack.c.b16 %v3751, %v3750
  %v3886 = vpack.c.b16 %v3753, %v3752
  %v3887 = vpack.c.b16 %v3755, %v3754
  %v3888 = vpack.c.b16 %v3757, %v3756
  %v3889 = vpack.c.b16 %v3759, %v3758
  %v3890 = vpack.c.b16 %v3761, %v3760
  %v3891 = vpack.c.b16 %v3763, %v3762
  %v3892 = vpack.c.b16 %v3765, %v3764
  %v3893 = vpack.c.b16 %v3767, %v3766
  %v3894 = vpack.c.b16 %v3769, %v3768
  %v3895 = vpack.c.b16 %v3771, %v3770
  %v3896 = vpack.c.b16 %v3773, %v3772
  %v3897 = vpack.c.b16 %v3775, %v3774
  %v3898 = vpack.c.b16 %v3777, %v3776
  %v3899 = vpack.c.b16 %v3779, %v3778
  %v3900 = vpack.c.b16 %v3781, %v3780
  %v3901 = vpack.c.b16 %v3783, %v3782
  %v3902 = vpack.c.b16 %v3785, %v3784
  %v3903 = vpack.c.b16 %v3787, %v3786
  %v3904 = vpack.c.b16 %v3789, %v3788
  %v3905 = vpack.c.b16 %v3791, %v3790
  %v3906 = vpack.c.b16 %v3793, %v3792
  %v3907 = vpack.c.b16 %v3795, %v3794
  %v3908 = vpack.c.b16 %v3797, %v3796
  %v3909 = vpack.c.b16 %v3799, %v3798
  %v3910 = vpack.c.b16 %v3801, %v3800
  %v3911 = vpack.c.b16 %v3803, %v3802
  %v3912 = vpack.c.b16 %v3805, %v3804
  %v3913 = vpack.c.b16 %v3807, %v3806
  %v3914 = vpack.c.b16 %v3809, %v3808
  %v3915 = vpack.c.b16 %v3811, %v3810
  %v3916 = vpack.c.b16 %v3813, %v3812
  %v3917 = vpack.c.b16 %v3815, %v3814
  %v3918 = vpack.c.b16 %v3817, %v3816
  %v3919 = vpack.c.b16 %v3819, %v3818
  %v3920 = vpack.c.b16 %v3821, %v3820
  %v3921 = vpack.c.b16 %v3823, %v3822
  %v3922 = vpack.c.b16 %v3825, %v3824
  %v3923 = vpack.c.b16 %v3827, %v3826
  %v3924 = vpack.c.b16 %v3829, %v3828
  %v3925 = vpack.c.b16 %v3831, %v3830
  %v3926 = vpack.c.b16 %v3833, %v3832
  %v3927 = vpack.c.b16 %v3835, %v3834
  %v3928 = vpack.c.b16 %v3837, %v3836
  %v3929 = vpack.c.b16 %v3839, %v3838
  %v3930 = vpack.c.b16 %v3841, %v3840
  %v3931 = vpack.c.b16 %v3843, %v3842
  %v3932 = vpack.c.b16 %v3845, %v3844
  %v3933 = vpack.c.b16 %v3847, %v3846
  %v3934 = vpack.c.b16 %v3849, %v3848
  %v3935 = vpack.c.b16 %v3851, %v3850
  %v3936 = vpack.c.b16 %v3853, %v3852
  %v3937 = vpack.c.b16 %v3855, %v3854
  %v3938 = vpack.c.b16 %v3857, %v3856
  %v3939 = vpack.c.b16 %v3859, %v3858
  %v3940 = vpack.c.b16 %v3861, %v3860
  %v3941 = vpack.c.b16 %v3863, %v3862
  %v3942 = vpack.c.b16 %v3865, %v3864
  %v3943 = vpack.c.b16 %v3867, %v3866
  %v3944 = vpack.c.b16 %v3869, %v3868
  %v3945 = vpack.c.b16 %v3871, %v3870
  %v3946 = vpack.c.b16 %v3873, %v3872
  %v3947 = vpack.c.b16 %v3875, %v3874
  %4020 = vmatprep.subr.bf16.mxu0 0
  %4021 = vmatpush1.bf16.msra.mxu0 %v3876
  %4022 = vmatprep.subr.bf16.mxu0 0
  %4023 = vmatpush1.bf16.msra.mxu0 %v3877
  %4024 = vmatprep.subr.bf16.mxu0 0
  %4025 = vmatpush1.bf16.msra.mxu0 %v3878
  %4026 = vmatprep.subr.bf16.mxu0 0
  %4027 = vmatpush1.bf16.msra.mxu0 %v3879
  %4028 = vmatprep.subr.bf16.mxu0 0
  %4029 = vmatpush1.bf16.msra.mxu0 %v3880
  %4030 = vmatprep.subr.bf16.mxu0 0
  %4031 = vmatpush1.bf16.msra.mxu0 %v3881
  %4032 = vmatprep.subr.bf16.mxu0 0
  %4033 = vmatpush1.bf16.msra.mxu0 %v3882
  %4034 = vmatprep.subr.bf16.mxu0 0
  %4035 = vmatpush1.bf16.msra.mxu0 %v3883
  %4036 = vmatprep.subr.bf16.mxu0 0
  %4037 = vmatpush1.bf16.msra.mxu0 %v3884
  %4038 = vmatprep.subr.bf16.mxu0 0
  %4039 = vmatpush1.bf16.msra.mxu0 %v3885
  %4040 = vmatprep.subr.bf16.mxu0 0
  %4041 = vmatpush1.bf16.msra.mxu0 %v3886
  %4042 = vmatprep.subr.bf16.mxu0 0
  %4043 = vmatpush1.bf16.msra.mxu0 %v3887
  %4044 = vmatprep.subr.bf16.mxu0 0
  %4045 = vmatpush1.bf16.msra.mxu0 %v3888
  %4046 = vmatprep.subr.bf16.mxu0 0
  %4047 = vmatpush1.bf16.msra.mxu0 %v3889
  %4048 = vmatprep.subr.bf16.mxu0 0
  %4049 = vmatpush1.bf16.msra.mxu0 %v3890
  %4050 = vmatprep.subr.bf16.mxu0 0
  %4051 = vmatpush1.bf16.msra.mxu0 %v3891
  %4052 = vmatprep.mubr.bf16.mxu0 %v3384
  %4053 = vmatmul.mubr.bf16.gmra.mrb[0].mxu0 %v3383
  %v4054 = vpop.f32.mrb[0].mxu0
  %v4055 = vadd.f32 %v3586, %v4054
  %v4056 = vpop.f32.mrb[0].mxu0
  %v4057 = vpop.f32.mrb[0].mxu0
  %v4058 = vadd.f32 %v3586, %v4057
  %v4059 = vpop.f32.mrb[0].mxu0
  %4060 = vmatprep.mubr.bf16.mxu0 %v3390
  %4061 = vmatmul.mubr.bf16.gmra.mrb[0].mxu0 %v3389
  %v4062 = vpop.f32.mrb[0].mxu0
  %v4063 = vadd.f32 %v3586, %v4062
  %v4064 = vpop.f32.mrb[0].mxu0
  %v4065 = vpop.f32.mrb[0].mxu0
  %v4066 = vadd.f32 %v3586, %v4065
  %v4067 = vpop.f32.mrb[0].mxu0
  %4068 = vmatprep.mubr.bf16.mxu0 %v3396
  %4069 = vmatmul.mubr.bf16.gmra.mrb[0].mxu0 %v3395
  %v4070 = vpop.f32.mrb[0].mxu0
  %v4071 = vadd.f32 %v3586, %v4070
  %v4072 = vpop.f32.mrb[0].mxu0
  %v4073 = vpop.f32.mrb[0].mxu0
  %v4074 = vadd.f32 %v3586, %v4073
  %v4075 = vpop.f32.mrb[0].mxu0
  %4076 = vmatprep.mubr.bf16.mxu0 %v3402
  %4077 = vmatmul.mubr.bf16.gmra.mrb[0].mxu0 %v3401
  %v4078 = vpop.f32.mrb[0].mxu0
  %v4079 = vadd.f32 %v3586, %v4078
  %v4080 = vpop.f32.mrb[0].mxu0
  %v4081 = vpop.f32.mrb[0].mxu0
  %v4082 = vadd.f32 %v3586, %v4081
  %v4083 = vpop.f32.mrb[0].mxu0
  %4084 = vmatprep.mubr.bf16.mxu0 %v3411
  %4085 = vmatmul.mubr.bf16.gmra.mrb[0].mxu0 %v3410
  %v4086 = vpop.f32.mrb[0].mxu0
  %v4087 = vadd.f32 %v3586, %v4086
  %v4088 = vpop.f32.mrb[0].mxu0
  %v4089 = vpop.f32.mrb[0].mxu0
  %v4090 = vadd.f32 %v3586, %v4089
  %v4091 = vpop.f32.mrb[0].mxu0
  %4092 = vmatprep.mubr.bf16.mxu0 %v3417
  %4093 = vmatmul.mubr.bf16.gmra.mrb[0].mxu0 %v3416
  %v4094 = vpop.f32.mrb[0].mxu0
  %v4095 = vadd.f32 %v3586, %v4094
  %v4096 = vpop.f32.mrb[0].mxu0
  %v4097 = vpop.f32.mrb[0].mxu0
  %v4098 = vadd.f32 %v3586, %v4097
  %v4099 = vpop.f32.mrb[0].mxu0
  %4100 = vmatprep.mubr.bf16.mxu0 %v3423
  %4101 = vmatmul.mubr.bf16.gmra.mrb[0].mxu0 %v3422
  %v4102 = vpop.f32.mrb[0].mxu0
  %v4103 = vadd.f32 %v3586, %v4102
  %v4104 = vpop.f32.mrb[0].mxu0
  %v4105 = vpop.f32.mrb[0].mxu0
  %v4106 = vadd.f32 %v3586, %v4105
  %v4107 = vpop.f32.mrb[0].mxu0
  %4108 = vmatprep.mubr.bf16.mxu0 %v3429
  %4109 = vmatmul.mubr.bf16.gmra.mrb[0].mxu0 %v3428
  %v4110 = vpop.f32.mrb[0].mxu0
  %v4111 = vadd.f32 %v3586, %v4110
  %v4112 = vpop.f32.mrb[0].mxu0
  %v4113 = vpop.f32.mrb[0].mxu0
  %v4114 = vadd.f32 %v3586, %v4113
  %v4115 = vpop.f32.mrb[0].mxu0
  %4116 = vdwg.mxu0
  %4117 = vmatprep.subr.bf16.mxu0 0
  %4118 = vmatpush1.bf16.msra.mxu0 %v3892
  %4119 = vmatprep.subr.bf16.mxu0 0
  %4120 = vmatpush1.bf16.msra.mxu0 %v3893
  %4121 = vmatprep.subr.bf16.mxu0 0
  %4122 = vmatpush1.bf16.msra.mxu0 %v3894
  %4123 = vmatprep.subr.bf16.mxu0 0
  %4124 = vmatpush1.bf16.msra.mxu0 %v3895
  %4125 = vmatprep.subr.bf16.mxu0 0
  %4126 = vmatpush1.bf16.msra.mxu0 %v3896
  %4127 = vmatprep.subr.bf16.mxu0 0
  %4128 = vmatpush1.bf16.msra.mxu0 %v3897
  %4129 = vmatprep.subr.bf16.mxu0 0
  %4130 = vmatpush1.bf16.msra.mxu0 %v3898
  %4131 = vmatprep.subr.bf16.mxu0 0
  %4132 = vmatpush1.bf16.msra.mxu0 %v3899
  %4133 = vmatprep.subr.bf16.mxu0 0
  %4134 = vmatpush1.bf16.msra.mxu0 %v3900
  %4135 = vmatprep.subr.bf16.mxu0 0
  %4136 = vmatpush1.bf16.msra.mxu0 %v3901
  %4137 = vmatprep.subr.bf16.mxu0 0
  %4138 = vmatpush1.bf16.msra.mxu0 %v3902
  %4139 = vmatprep.subr.bf16.mxu0 0
  %4140 = vmatpush1.bf16.msra.mxu0 %v3903
  %4141 = vmatprep.subr.bf16.mxu0 0
  %4142 = vmatpush1.bf16.msra.mxu0 %v3904
  %4143 = vmatprep.subr.bf16.mxu0 0
  %4144 = vmatpush1.bf16.msra.mxu0 %v3905
  %4145 = vmatprep.subr.bf16.mxu0 0
  %4146 = vmatpush1.bf16.msra.mxu0 %v3906
  %4147 = vmatprep.subr.bf16.mxu0 0
  %4148 = vmatpush1.bf16.msra.mxu0 %v3907
  %4149 = vmatprep.mubr.bf16.mxu0 %v3386
  %4150 = vmatmul.mubr.bf16.gmra.mrb[0].mxu0 %v3385
  %v4151 = vpop.f32.mrb[0].mxu0
  %v4152 = vadd.f32 %v4055, %v4151
  %v4153 = vpop.f32.mrb[0].mxu0
  %v4154 = vpop.f32.mrb[0].mxu0
  %v4155 = vadd.f32 %v4058, %v4154
  %v4156 = vpop.f32.mrb[0].mxu0
  %4157 = vmatprep.mubr.bf16.mxu0 %v3392
  %4158 = vmatmul.mubr.bf16.gmra.mrb[0].mxu0 %v3391
  %v4159 = vpop.f32.mrb[0].mxu0
  %v4160 = vadd.f32 %v4063, %v4159
  %v4161 = vpop.f32.mrb[0].mxu0
  %v4162 = vpop.f32.mrb[0].mxu0
  %v4163 = vadd.f32 %v4066, %v4162
  %v4164 = vpop.f32.mrb[0].mxu0
  %4165 = vmatprep.mubr.bf16.mxu0 %v3398
  %4166 = vmatmul.mubr.bf16.gmra.mrb[0].mxu0 %v3397
  %v4167 = vpop.f32.mrb[0].mxu0
  %v4168 = vadd.f32 %v4071, %v4167
  %v4169 = vpop.f32.mrb[0].mxu0
  %v4170 = vpop.f32.mrb[0].mxu0
  %v4171 = vadd.f32 %v4074, %v4170
  %v4172 = vpop.f32.mrb[0].mxu0
  %4173 = vmatprep.mubr.bf16.mxu0 %v3404
  %4174 = vmatmul.mubr.bf16.gmra.mrb[0].mxu0 %v3403
  %v4175 = vpop.f32.mrb[0].mxu0
  %v4176 = vadd.f32 %v4079, %v4175
  %v4177 = vpop.f32.mrb[0].mxu0
  %v4178 = vpop.f32.mrb[0].mxu0
  %v4179 = vadd.f32 %v4082, %v4178
  %v4180 = vpop.f32.mrb[0].mxu0
  %4181 = vmatprep.mubr.bf16.mxu0 %v3413
  %4182 = vmatmul.mubr.bf16.gmra.mrb[0].mxu0 %v3412
  %v4183 = vpop.f32.mrb[0].mxu0
  %v4184 = vadd.f32 %v4087, %v4183
  %v4185 = vpop.f32.mrb[0].mxu0
  %v4186 = vpop.f32.mrb[0].mxu0
  %v4187 = vadd.f32 %v4090, %v4186
  %v4188 = vpop.f32.mrb[0].mxu0
  %4189 = vmatprep.mubr.bf16.mxu0 %v3419
  %4190 = vmatmul.mubr.bf16.gmra.mrb[0].mxu0 %v3418
  %v4191 = vpop.f32.mrb[0].mxu0
  %v4192 = vadd.f32 %v4095, %v4191
  %v4193 = vpop.f32.mrb[0].mxu0
  %v4194 = vpop.f32.mrb[0].mxu0
  %v4195 = vadd.f32 %v4098, %v4194
  %v4196 = vpop.f32.mrb[0].mxu0
  %4197 = vmatprep.mubr.bf16.mxu0 %v3425
  %4198 = vmatmul.mubr.bf16.gmra.mrb[0].mxu0 %v3424
  %v4199 = vpop.f32.mrb[0].mxu0
  %v4200 = vadd.f32 %v4103, %v4199
  %v4201 = vpop.f32.mrb[0].mxu0
  %v4202 = vpop.f32.mrb[0].mxu0
  %v4203 = vadd.f32 %v4106, %v4202
  %v4204 = vpop.f32.mrb[0].mxu0
  %4205 = vmatprep.mubr.bf16.mxu0 %v3431
  %4206 = vmatmul.mubr.bf16.gmra.mrb[0].mxu0 %v3430
  %v4207 = vpop.f32.mrb[0].mxu0
  %v4208 = vadd.f32 %v4111, %v4207
  %v4209 = vpop.f32.mrb[0].mxu0
  %v4210 = vpop.f32.mrb[0].mxu0
  %v4211 = vadd.f32 %v4114, %v4210
  %v4212 = vpop.f32.mrb[0].mxu0
  %4213 = vdwg.mxu0
  %4214 = vmatprep.subr.bf16.mxu0 0
  %4215 = vmatpush1.bf16.msra.mxu0 %v3908
  %4216 = vmatprep.subr.bf16.mxu0 0
  %4217 = vmatpush1.bf16.msra.mxu0 %v3909
  %4218 = vmatprep.subr.bf16.mxu0 0
  %4219 = vmatpush1.bf16.msra.mxu0 %v3910
  %4220 = vmatprep.subr.bf16.mxu0 0
  %4221 = vmatpush1.bf16.msra.mxu0 %v3911
  %4222 = vmatprep.subr.bf16.mxu0 0
  %4223 = vmatpush1.bf16.msra.mxu0 %v3912
  %4224 = vmatprep.subr.bf16.mxu0 0
  %4225 = vmatpush1.bf16.msra.mxu0 %v3913
  %4226 = vmatprep.subr.bf16.mxu0 0
  %4227 = vmatpush1.bf16.msra.mxu0 %v3914
  %4228 = vmatprep.subr.bf16.mxu0 0
  %4229 = vmatpush1.bf16.msra.mxu0 %v3915
  %4230 = vmatprep.subr.bf16.mxu0 0
  %4231 = vmatpush1.bf16.msra.mxu0 %v3916
  %4232 = vmatprep.subr.bf16.mxu0 0
  %4233 = vmatpush1.bf16.msra.mxu0 %v3917
  %4234 = vmatprep.subr.bf16.mxu0 0
  %4235 = vmatpush1.bf16.msra.mxu0 %v3918
  %4236 = vmatprep.subr.bf16.mxu0 0
  %4237 = vmatpush1.bf16.msra.mxu0 %v3919
  %4238 = vmatprep.subr.bf16.mxu0 0
  %4239 = vmatpush1.bf16.msra.mxu0 %v3920
  %4240 = vmatprep.subr.bf16.mxu0 0
  %4241 = vmatpush1.bf16.msra.mxu0 %v3921
  %4242 = vmatprep.subr.bf16.mxu0 0
  %4243 = vmatpush1.bf16.msra.mxu0 %v3922
  %4244 = vmatprep.subr.bf16.mxu0 0
  %4245 = vmatpush1.bf16.msra.mxu0 %v3923
  %4246 = vmatprep.mubr.bf16.mxu0 %v3388
  %4247 = vmatmul.mubr.bf16.gmra.mrb[0].mxu0 %v3387
  %v4248 = vpop.f32.mrb[0].mxu0
  %v4249 = vadd.f32 %v4152, %v4248
  %v4250 = vpop.f32.mrb[0].mxu0
  %v4251 = vpop.f32.mrb[0].mxu0
  %v4252 = vadd.f32 %v4155, %v4251
  %v4253 = vpop.f32.mrb[0].mxu0
  %4254 = vmatprep.mubr.bf16.mxu0 %v3394
  %4255 = vmatmul.mubr.bf16.gmra.mrb[0].mxu0 %v3393
  %v4256 = vpop.f32.mrb[0].mxu0
  %v4257 = vadd.f32 %v4160, %v4256
  %v4258 = vpop.f32.mrb[0].mxu0
  %v4259 = vpop.f32.mrb[0].mxu0
  %v4260 = vadd.f32 %v4163, %v4259
  %v4261 = vpop.f32.mrb[0].mxu0
  %4262 = vmatprep.mubr.bf16.mxu0 %v3400
  %4263 = vmatmul.mubr.bf16.gmra.mrb[0].mxu0 %v3399
  %v4264 = vpop.f32.mrb[0].mxu0
  %v4265 = vadd.f32 %v4168, %v4264
  %v4266 = vpop.f32.mrb[0].mxu0
  %v4267 = vpop.f32.mrb[0].mxu0
  %v4268 = vadd.f32 %v4171, %v4267
  %v4269 = vpop.f32.mrb[0].mxu0
  %4270 = vmatprep.mubr.bf16.mxu0 %v3406
  %4271 = vmatmul.mubr.bf16.gmra.mrb[0].mxu0 %v3405
  %v4272 = vpop.f32.mrb[0].mxu0
  %v4273 = vadd.f32 %v4176, %v4272
  %v4274 = vpop.f32.mrb[0].mxu0
  %v4275 = vpop.f32.mrb[0].mxu0
  %v4276 = vadd.f32 %v4179, %v4275
  %v4277 = vpop.f32.mrb[0].mxu0
  %4278 = vmatprep.mubr.bf16.mxu0 %v3415
  %4279 = vmatmul.mubr.bf16.gmra.mrb[0].mxu0 %v3414
  %v4280 = vpop.f32.mrb[0].mxu0
  %v4281 = vadd.f32 %v4184, %v4280
  %v4282 = vpop.f32.mrb[0].mxu0
  %v4283 = vpop.f32.mrb[0].mxu0
  %v4284 = vadd.f32 %v4187, %v4283
  %v4285 = vpop.f32.mrb[0].mxu0
  %4286 = vmatprep.mubr.bf16.mxu0 %v3421
  %4287 = vmatmul.mubr.bf16.gmra.mrb[0].mxu0 %v3420
  %v4288 = vpop.f32.mrb[0].mxu0
  %v4289 = vadd.f32 %v4192, %v4288
  %v4290 = vpop.f32.mrb[0].mxu0
  %v4291 = vpop.f32.mrb[0].mxu0
  %v4292 = vadd.f32 %v4195, %v4291
  %v4293 = vpop.f32.mrb[0].mxu0
  %4294 = vmatprep.mubr.bf16.mxu0 %v3427
  %4295 = vmatmul.mubr.bf16.gmra.mrb[0].mxu0 %v3426
  %v4296 = vpop.f32.mrb[0].mxu0
  %v4297 = vadd.f32 %v4200, %v4296
  %v4298 = vpop.f32.mrb[0].mxu0
  %v4299 = vpop.f32.mrb[0].mxu0
  %v4300 = vadd.f32 %v4203, %v4299
  %v4301 = vpop.f32.mrb[0].mxu0
  %4302 = vmatprep.mubr.bf16.mxu0 %v3433
  %4303 = vmatmul.mubr.bf16.gmra.mrb[0].mxu0 %v3432
  %v4304 = vpop.f32.mrb[0].mxu0
  %v4305 = vadd.f32 %v4208, %v4304
  %v4306 = vpop.f32.mrb[0].mxu0
  %v4307 = vpop.f32.mrb[0].mxu0
  %v4308 = vadd.f32 %v4211, %v4307
  %v4309 = vpop.f32.mrb[0].mxu0
  %4310 = vdwg.mxu0
  %4311 = vmatprep.subr.bf16.mxu0 0
  %4312 = vmatpush1.bf16.msra.mxu0 %v3924
  %4313 = vmatprep.subr.bf16.mxu0 0
  %4314 = vmatpush1.bf16.msra.mxu0 %v3925
  %4315 = vmatprep.subr.bf16.mxu0 0
  %4316 = vmatpush1.bf16.msra.mxu0 %v3926
  %4317 = vmatprep.subr.bf16.mxu0 0
  %4318 = vmatpush1.bf16.msra.mxu0 %v3927
  %4319 = vmatprep.subr.bf16.mxu0 0
  %4320 = vmatpush1.bf16.msra.mxu0 %v3928
  %4321 = vmatprep.subr.bf16.mxu0 0
  %4322 = vmatpush1.bf16.msra.mxu0 %v3929
  %4323 = vmatprep.subr.bf16.mxu0 0
  %4324 = vmatpush1.bf16.msra.mxu0 %v3930
  %4325 = vmatprep.subr.bf16.mxu0 0
  %4326 = vmatpush1.bf16.msra.mxu0 %v3931
  %4327 = vmatprep.subr.bf16.mxu0 0
  %4328 = vmatpush1.bf16.msra.mxu0 %v3932
  %4329 = vmatprep.subr.bf16.mxu0 0
  %4330 = vmatpush1.bf16.msra.mxu0 %v3933
  %4331 = vmatprep.subr.bf16.mxu0 0
  %4332 = vmatpush1.bf16.msra.mxu0 %v3934
  %4333 = vmatprep.subr.bf16.mxu0 0
  %4334 = vmatpush1.bf16.msra.mxu0 %v3935
  %4335 = vmatprep.subr.bf16.mxu0 0
  %4336 = vmatpush1.bf16.msra.mxu0 %v3936
  %4337 = vmatprep.subr.bf16.mxu0 0
  %4338 = vmatpush1.bf16.msra.mxu0 %v3937
  %4339 = vmatprep.subr.bf16.mxu0 0
  %4340 = vmatpush1.bf16.msra.mxu0 %v3938
  %4341 = vmatprep.subr.bf16.mxu0 0
  %4342 = vmatpush1.bf16.msra.mxu0 %v3939
  %4343 = vmatprep.mubr.bf16.mxu0 %v3390
  %4344 = vmatmul.mubr.bf16.gmra.mrb[0].mxu0 %v3389
  %v4345 = vpop.f32.mrb[0].mxu0
  %v4346 = vadd.f32 %v4249, %v4345
  %v4347 = vpop.f32.mrb[0].mxu0
  %v4348 = vpop.f32.mrb[0].mxu0
  %v4349 = vadd.f32 %v4252, %v4348
  %v4350 = vpop.f32.mrb[0].mxu0
  %4351 = vmatprep.mubr.bf16.mxu0 %v3396
  %4352 = vmatmul.mubr.bf16.gmra.mrb[0].mxu0 %v3395
  %v4353 = vpop.f32.mrb[0].mxu0
  %v4354 = vadd.f32 %v4257, %v4353
  %v4355 = vpop.f32.mrb[0].mxu0
  %v4356 = vpop.f32.mrb[0].mxu0
  %v4357 = vadd.f32 %v4260, %v4356
  %v4358 = vpop.f32.mrb[0].mxu0
  %4359 = vmatprep.mubr.bf16.mxu0 %v3402
  %4360 = vmatmul.mubr.bf16.gmra.mrb[0].mxu0 %v3401
  %v4361 = vpop.f32.mrb[0].mxu0
  %v4362 = vadd.f32 %v4265, %v4361
  %v4363 = vpop.f32.mrb[0].mxu0
  %v4364 = vpop.f32.mrb[0].mxu0
  %v4365 = vadd.f32 %v4268, %v4364
  %v4366 = vpop.f32.mrb[0].mxu0
  %4367 = vmatprep.mubr.bf16.mxu0 %v3408
  %4368 = vmatmul.mubr.bf16.gmra.mrb[0].mxu0 %v3407
  %v4369 = vpop.f32.mrb[0].mxu0
  %v4370 = vadd.f32 %v4273, %v4369
  %v4371 = vpop.f32.mrb[0].mxu0
  %v4372 = vpop.f32.mrb[0].mxu0
  %v4373 = vadd.f32 %v4276, %v4372
  %v4374 = vpop.f32.mrb[0].mxu0
  %4375 = vmatprep.mubr.bf16.mxu0 %v3417
  %4376 = vmatmul.mubr.bf16.gmra.mrb[0].mxu0 %v3416
  %v4377 = vpop.f32.mrb[0].mxu0
  %v4378 = vadd.f32 %v4281, %v4377
  %v4379 = vpop.f32.mrb[0].mxu0
  %v4380 = vpop.f32.mrb[0].mxu0
  %v4381 = vadd.f32 %v4284, %v4380
  %v4382 = vpop.f32.mrb[0].mxu0
  %4383 = vmatprep.mubr.bf16.mxu0 %v3423
  %4384 = vmatmul.mubr.bf16.gmra.mrb[0].mxu0 %v3422
  %v4385 = vpop.f32.mrb[0].mxu0
  %v4386 = vadd.f32 %v4289, %v4385
  %v4387 = vpop.f32.mrb[0].mxu0
  %v4388 = vpop.f32.mrb[0].mxu0
  %v4389 = vadd.f32 %v4292, %v4388
  %v4390 = vpop.f32.mrb[0].mxu0
  %4391 = vmatprep.mubr.bf16.mxu0 %v3429
  %4392 = vmatmul.mubr.bf16.gmra.mrb[0].mxu0 %v3428
  %v4393 = vpop.f32.mrb[0].mxu0
  %v4394 = vadd.f32 %v4297, %v4393
  %v4395 = vpop.f32.mrb[0].mxu0
  %v4396 = vpop.f32.mrb[0].mxu0
  %v4397 = vadd.f32 %v4300, %v4396
  %v4398 = vpop.f32.mrb[0].mxu0
  %4399 = vmatprep.mubr.bf16.mxu0 %v3435
  %4400 = vmatmul.mubr.bf16.gmra.mrb[0].mxu0 %v3434
  %v4401 = vpop.f32.mrb[0].mxu0
  %v4402 = vadd.f32 %v4305, %v4401
  %v4403 = vpop.f32.mrb[0].mxu0
  %v4404 = vpop.f32.mrb[0].mxu0
  %v4405 = vadd.f32 %v4308, %v4404
  %v4406 = vpop.f32.mrb[0].mxu0
  %4407 = vdwg.mxu0
  %4408 = vmatprep.subr.bf16.mxu0 0
  %4409 = vmatpush1.bf16.msra.mxu0 %v3940
  %4410 = vmatprep.subr.bf16.mxu0 0
  %4411 = vmatpush1.bf16.msra.mxu0 %v3941
  %4412 = vmatprep.subr.bf16.mxu0 0
  %4413 = vmatpush1.bf16.msra.mxu0 %v3942
  %4414 = vmatprep.subr.bf16.mxu0 0
  %4415 = vmatpush1.bf16.msra.mxu0 %v3943
  %4416 = vmatprep.subr.bf16.mxu0 0
  %4417 = vmatpush1.bf16.msra.mxu0 %v3944
  %4418 = vmatprep.subr.bf16.mxu0 0
  %4419 = vmatpush1.bf16.msra.mxu0 %v3945
  %4420 = vmatprep.subr.bf16.mxu0 0
  %4421 = vmatpush1.bf16.msra.mxu0 %v3946
  %4422 = vmatprep.subr.bf16.mxu0 0
  %4423 = vmatpush1.bf16.msra.mxu0 %v3947
  %4424 = vmatprep.subr.bf16.mxu0 0
  %4425 = vmatpush1.bf16.msra.mxu0 0
  %4426 = vmatprep.subr.bf16.mxu0 0
  %4427 = vmatpush1.bf16.msra.mxu0 0
  %4428 = vmatprep.subr.bf16.mxu0 0
  %4429 = vmatpush1.bf16.msra.mxu0 0
  %4430 = vmatprep.subr.bf16.mxu0 0
  %4431 = vmatpush1.bf16.msra.mxu0 0
  %4432 = vmatprep.subr.bf16.mxu0 0
  %4433 = vmatpush1.bf16.msra.mxu0 0
  %4434 = vmatprep.subr.bf16.mxu0 0
  %4435 = vmatpush1.bf16.msra.mxu0 0
  %4436 = vmatprep.subr.bf16.mxu0 0
  %4437 = vmatpush1.bf16.msra.mxu0 0
  %4438 = vmatprep.subr.bf16.mxu0 0
  %4439 = vmatpush1.bf16.msra.mxu0 0
  %4440 = vmatprep.mubr.bf16.mxu0 0
  %4441 = vmatmul.mubr.bf16.gmra.mrb[0].mxu0 %v3391
  %v4442 = vpop.f32.mrb[0].mxu0
  %v4443 = vadd.f32 %v4346, %v4442
  %v4444 = vpop.f32.mrb[0].mxu0
  %v4445 = vpop.f32.mrb[0].mxu0
  %v4446 = vadd.f32 %v4349, %v4445
  %v4447 = vpop.f32.mrb[0].mxu0
  %4448 = vmatprep.mubr.bf16.mxu0 0
  %4449 = vmatmul.mubr.bf16.gmra.mrb[0].mxu0 %v3397
  %v4450 = vpop.f32.mrb[0].mxu0
  %v4451 = vadd.f32 %v4354, %v4450
  %v4452 = vpop.f32.mrb[0].mxu0
  %v4453 = vpop.f32.mrb[0].mxu0
  %v4454 = vadd.f32 %v4357, %v4453
  %v4455 = vpop.f32.mrb[0].mxu0
  %4456 = vmatprep.mubr.bf16.mxu0 0
  %4457 = vmatmul.mubr.bf16.gmra.mrb[0].mxu0 %v3403
  %v4458 = vpop.f32.mrb[0].mxu0
  %v4459 = vadd.f32 %v4362, %v4458
  %v4460 = vpop.f32.mrb[0].mxu0
  %v4461 = vpop.f32.mrb[0].mxu0
  %v4462 = vadd.f32 %v4365, %v4461
  %v4463 = vpop.f32.mrb[0].mxu0
  %4464 = vmatprep.mubr.bf16.mxu0 0
  %4465 = vmatmul.mubr.bf16.gmra.mrb[0].mxu0 %v3409
  %v4466 = vpop.f32.mrb[0].mxu0
  %v4467 = vadd.f32 %v4370, %v4466
  %v4468 = vpop.f32.mrb[0].mxu0
  %v4469 = vpop.f32.mrb[0].mxu0
  %v4470 = vadd.f32 %v4373, %v4469
  %v4471 = vpop.f32.mrb[0].mxu0
  %4472 = vmatprep.mubr.bf16.mxu0 0
  %4473 = vmatmul.mubr.bf16.gmra.mrb[0].mxu0 %v3418
  %v4474 = vpop.f32.mrb[0].mxu0
  %v4475 = vadd.f32 %v4378, %v4474
  %v4476 = vpop.f32.mrb[0].mxu0
  %v4477 = vpop.f32.mrb[0].mxu0
  %v4478 = vadd.f32 %v4381, %v4477
  %v4479 = vpop.f32.mrb[0].mxu0
  %4480 = vmatprep.mubr.bf16.mxu0 0
  %4481 = vmatmul.mubr.bf16.gmra.mrb[0].mxu0 %v3424
  %v4482 = vpop.f32.mrb[0].mxu0
  %v4483 = vadd.f32 %v4386, %v4482
  %v4484 = vpop.f32.mrb[0].mxu0
  %v4485 = vpop.f32.mrb[0].mxu0
  %v4486 = vadd.f32 %v4389, %v4485
  %v4487 = vpop.f32.mrb[0].mxu0
  %4488 = vmatprep.mubr.bf16.mxu0 0
  %4489 = vmatmul.mubr.bf16.gmra.mrb[0].mxu0 %v3430
  %v4490 = vpop.f32.mrb[0].mxu0
  %v4491 = vadd.f32 %v4394, %v4490
  %v4492 = vpop.f32.mrb[0].mxu0
  %v4493 = vpop.f32.mrb[0].mxu0
  %v4494 = vadd.f32 %v4397, %v4493
  %v4495 = vpop.f32.mrb[0].mxu0
  %4496 = vmatprep.mubr.bf16.mxu0 0
  %4497 = vmatmul.mubr.bf16.gmra.mrb[0].mxu0 %v3436
  %v4498 = vpop.f32.mrb[0].mxu0
  %v4499 = vadd.f32 %v4402, %v4498
  %v4500 = vpop.f32.mrb[0].mxu0
  %v4501 = vpop.f32.mrb[0].mxu0
  %v4502 = vadd.f32 %v4405, %v4501
  %v4503 = vpop.f32.mrb[0].mxu0
  %4504 = vdwg.mxu0
  %v4505 = vmax.f32 %v4443, 0.0
  %v4506 = vmax.f32 %v4446, 0.0
  %v4507 = vmax.f32 %v4451, 0.0
  %v4508 = vmax.f32 %v4454, 0.0
  %v4509 = vmax.f32 %v4459, 0.0
  %v4510 = vmax.f32 %v4462, 0.0
  %v4511 = vmax.f32 %v4467, 0.0
  %v4512 = vmax.f32 %v4470, 0.0
  %v4513 = vmax.f32 %v4475, 0.0
  %v4514 = vmax.f32 %v4478, 0.0
  %v4515 = vmax.f32 %v4483, 0.0
  %v4516 = vmax.f32 %v4486, 0.0
  %v4517 = vmax.f32 %v4491, 0.0
  %v4518 = vmax.f32 %v4494, 0.0
  %v4519 = vmax.f32 %v4499, 0.0
  %v4520 = vmax.f32 %v4502, 0.0
  %v4535 = vrot.slane %v4505, 7
  %v4536 = vsel %vm120, %v121, %v4535
  %v4537 = vrot.slane %v4506, 7
  %v4538 = vsel %vm120, %v121, %v4537
  %v4539 = vrot.slane %v4507, 7
  %v4540 = vsel %vm120, %v121, %v4539
  %v4541 = vrot.slane %v4508, 7
  %v4542 = vsel %vm120, %v121, %v4541
  %v4543 = vrot.slane %v4509, 7
  %v4544 = vsel %vm120, %v121, %v4543
  %v4545 = vrot.slane %v4510, 7
  %v4546 = vsel %vm120, %v121, %v4545
  %v4547 = vrot.slane %v4511, 7
  %v4548 = vsel %vm120, %v121, %v4547
  %v4549 = vrot.slane %v4513, 7
  %v4550 = vsel %vm120, %v121, %v4549
  %v4551 = vrot.slane %v4514, 7
  %v4552 = vsel %vm120, %v121, %v4551
  %v4553 = vrot.slane %v4515, 7
  %v4554 = vsel %vm120, %v121, %v4553
  %v4555 = vrot.slane %v4516, 7
  %v4556 = vsel %vm120, %v121, %v4555
  %v4557 = vrot.slane %v4517, 7
  %v4558 = vsel %vm120, %v121, %v4557
  %v4559 = vrot.slane %v4518, 7
  %v4560 = vsel %vm120, %v121, %v4559
  %v4561 = vrot.slane %v4519, 7
  %v4562 = vsel %vm120, %v121, %v4561
  %v4577 = vrot.slane %v4505, 1
  %v4578 = vsel %vm160, %v4577, %v161
  %v4579 = vrot.slane %v4506, 1
  %v4580 = vsel %vm160, %v4579, %v161
  %v4581 = vrot.slane %v4507, 1
  %v4582 = vsel %vm160, %v4581, %v161
  %v4583 = vrot.slane %v4508, 1
  %v4584 = vsel %vm160, %v4583, %v161
  %v4585 = vrot.slane %v4509, 1
  %v4586 = vsel %vm160, %v4585, %v161
  %v4587 = vrot.slane %v4510, 1
  %v4588 = vsel %vm160, %v4587, %v161
  %v4589 = vrot.slane %v4511, 1
  %v4590 = vsel %vm160, %v4589, %v161
  %v4591 = vrot.slane %v4513, 1
  %v4592 = vsel %vm160, %v4591, %v161
  %v4593 = vrot.slane %v4514, 1
  %v4594 = vsel %vm160, %v4593, %v161
  %v4595 = vrot.slane %v4515, 1
  %v4596 = vsel %vm160, %v4595, %v161
  %v4597 = vrot.slane %v4516, 1
  %v4598 = vsel %vm160, %v4597, %v161
  %v4599 = vrot.slane %v4517, 1
  %v4600 = vsel %vm160, %v4599, %v161
  %v4601 = vrot.slane %v4518, 1
  %v4602 = vsel %vm160, %v4601, %v161
  %v4603 = vrot.slane %v4519, 1
  %v4604 = vsel %vm160, %v4603, %v161
  %v4621 = vrot.slane %v4512, 7
  %v4622 = vsel %vm120, %v121, %v4621
  %v4623 = vrot.slane %v4520, 7
  %v4624 = vsel %vm120, %v121, %v4623
  %v4627 = vrot.slane %v4512, 1
  %v4628 = vsel %vm160, %v4627, %v161
  %v4629 = vrot.slane %v4520, 1
  %v4630 = vsel %vm160, %v4629, %v161
  %v4633 = vpack.c.bf16 %v4536, %v122
  %v4634 = vpack.c.bf16 %v4505, 0.0
  %v4635 = vpack.c.bf16 %v4578, %v162
  %v4636 = vpack.c.bf16 %v4538, %v4536
  %v4637 = vpack.c.bf16 %v4506, %v4505
  %v4638 = vpack.c.bf16 %v4580, %v4578
  %v4639 = vpack.c.bf16 %v4540, %v4538
  %v4640 = vpack.c.bf16 %v4507, %v4506
  %v4641 = vpack.c.bf16 %v4582, %v4580
  %v4642 = vpack.c.bf16 %v4542, %v4540
  %v4643 = vpack.c.bf16 %v4508, %v4507
  %v4644 = vpack.c.bf16 %v4584, %v4582
  %v4645 = vpack.c.bf16 %v4544, %v4542
  %v4646 = vpack.c.bf16 %v4509, %v4508
  %v4647 = vpack.c.bf16 %v4586, %v4584
  %v4648 = vpack.c.bf16 %v4546, %v4544
  %v4649 = vpack.c.bf16 %v4510, %v4509
  %v4650 = vpack.c.bf16 %v4588, %v4586
  %v4651 = vpack.c.bf16 %v4548, %v4546
  %v4652 = vpack.c.bf16 %v4511, %v4510
  %v4653 = vpack.c.bf16 %v4590, %v4588
  %v4654 = vpack.c.bf16 %v4622, %v4548
  %v4655 = vpack.c.bf16 %v4512, %v4511
  %v4656 = vpack.c.bf16 %v4628, %v4590
  %v4657 = vpack.c.bf16 %v122, %v4622
  %v4658 = vpack.c.bf16 0.0, %v4512
  %v4659 = vpack.c.bf16 %v162, %v4628
  %v4660 = vpack.c.bf16 %v4550, %v122
  %v4661 = vpack.c.bf16 %v4513, 0.0
  %v4662 = vpack.c.bf16 %v4592, %v162
  %v4663 = vpack.c.bf16 %v4552, %v4550
  %v4664 = vpack.c.bf16 %v4514, %v4513
  %v4665 = vpack.c.bf16 %v4594, %v4592
  %v4666 = vpack.c.bf16 %v4554, %v4552
  %v4667 = vpack.c.bf16 %v4515, %v4514
  %v4668 = vpack.c.bf16 %v4596, %v4594
  %v4669 = vpack.c.bf16 %v4556, %v4554
  %v4670 = vpack.c.bf16 %v4516, %v4515
  %v4671 = vpack.c.bf16 %v4598, %v4596
  %v4672 = vpack.c.bf16 %v4558, %v4556
  %v4673 = vpack.c.bf16 %v4517, %v4516
  %v4674 = vpack.c.bf16 %v4600, %v4598
  %v4675 = vpack.c.bf16 %v4560, %v4558
  %v4676 = vpack.c.bf16 %v4518, %v4517
  %v4677 = vpack.c.bf16 %v4602, %v4600
  %v4678 = vpack.c.bf16 %v4562, %v4560
  %v4679 = vpack.c.bf16 %v4519, %v4518
  %v4680 = vpack.c.bf16 %v4604, %v4602
  %v4681 = vpack.c.bf16 %v4624, %v4562
  %v4682 = vpack.c.bf16 %v4520, %v4519
  %v4683 = vpack.c.bf16 %v4630, %v4604
  %v4684 = vpack.c.bf16 %v122, %v4624
  %v4685 = vpack.c.bf16 0.0, %v4520
  %v4686 = vpack.c.bf16 %v162, %v4630
  %4687 = vmatprep.subr.bf16.mxu0 0
  %4688 = vmatpush1.bf16.msra.mxu0 %v3876
  %4689 = vmatprep.subr.bf16.mxu0 0
  %4690 = vmatpush1.bf16.msra.mxu0 %v3877
  %4691 = vmatprep.subr.bf16.mxu0 0
  %4692 = vmatpush1.bf16.msra.mxu0 %v3878
  %4693 = vmatprep.subr.bf16.mxu0 0
  %4694 = vmatpush1.bf16.msra.mxu0 %v3879
  %4695 = vmatprep.subr.bf16.mxu0 0
  %4696 = vmatpush1.bf16.msra.mxu0 %v3880
  %4697 = vmatprep.subr.bf16.mxu0 0
  %4698 = vmatpush1.bf16.msra.mxu0 %v3881
  %4699 = vmatprep.subr.bf16.mxu0 0
  %4700 = vmatpush1.bf16.msra.mxu0 %v3882
  %4701 = vmatprep.subr.bf16.mxu0 0
  %4702 = vmatpush1.bf16.msra.mxu0 %v3883
  %4703 = vmatprep.subr.bf16.mxu0 0
  %4704 = vmatpush1.bf16.msra.mxu0 %v3884
  %4705 = vmatprep.subr.bf16.mxu0 0
  %4706 = vmatpush1.bf16.msra.mxu0 %v3885
  %4707 = vmatprep.subr.bf16.mxu0 0
  %4708 = vmatpush1.bf16.msra.mxu0 %v3886
  %4709 = vmatprep.subr.bf16.mxu0 0
  %4710 = vmatpush1.bf16.msra.mxu0 %v3887
  %4711 = vmatprep.subr.bf16.mxu0 0
  %4712 = vmatpush1.bf16.msra.mxu0 %v3888
  %4713 = vmatprep.subr.bf16.mxu0 0
  %4714 = vmatpush1.bf16.msra.mxu0 %v3889
  %4715 = vmatprep.subr.bf16.mxu0 0
  %4716 = vmatpush1.bf16.msra.mxu0 %v3890
  %4717 = vmatprep.subr.bf16.mxu0 0
  %4718 = vmatpush1.bf16.msra.mxu0 %v3891
  %4719 = vmatprep.mubr.bf16.mxu0 %v4634
  %4720 = vmatmul.mubr.bf16.gmra.mrb[0].mxu0 %v4633
  %v4721 = vpop.f32.mrb[0].mxu0
  %v4722 = vadd.f32 %v3586, %v4721
  %v4723 = vpop.f32.mrb[0].mxu0
  %v4724 = vpop.f32.mrb[0].mxu0
  %v4725 = vadd.f32 %v3586, %v4724
  %v4726 = vpop.f32.mrb[0].mxu0
  %4727 = vmatprep.mubr.bf16.mxu0 %v4640
  %4728 = vmatmul.mubr.bf16.gmra.mrb[0].mxu0 %v4639
  %v4729 = vpop.f32.mrb[0].mxu0
  %v4730 = vadd.f32 %v3586, %v4729
  %v4731 = vpop.f32.mrb[0].mxu0
  %v4732 = vpop.f32.mrb[0].mxu0
  %v4733 = vadd.f32 %v3586, %v4732
  %v4734 = vpop.f32.mrb[0].mxu0
  %4735 = vmatprep.mubr.bf16.mxu0 %v4646
  %4736 = vmatmul.mubr.bf16.gmra.mrb[0].mxu0 %v4645
  %v4737 = vpop.f32.mrb[0].mxu0
  %v4738 = vadd.f32 %v3586, %v4737
  %v4739 = vpop.f32.mrb[0].mxu0
  %v4740 = vpop.f32.mrb[0].mxu0
  %v4741 = vadd.f32 %v3586, %v4740
  %v4742 = vpop.f32.mrb[0].mxu0
  %4743 = vmatprep.mubr.bf16.mxu0 %v4652
  %4744 = vmatmul.mubr.bf16.gmra.mrb[0].mxu0 %v4651
  %v4745 = vpop.f32.mrb[0].mxu0
  %v4746 = vadd.f32 %v3586, %v4745
  %v4747 = vpop.f32.mrb[0].mxu0
  %v4748 = vpop.f32.mrb[0].mxu0
  %v4749 = vadd.f32 %v3586, %v4748
  %v4750 = vpop.f32.mrb[0].mxu0
  %4751 = vmatprep.mubr.bf16.mxu0 %v4661
  %4752 = vmatmul.mubr.bf16.gmra.mrb[0].mxu0 %v4660
  %v4753 = vpop.f32.mrb[0].mxu0
  %v4754 = vadd.f32 %v3586, %v4753
  %v4755 = vpop.f32.mrb[0].mxu0
  %v4756 = vpop.f32.mrb[0].mxu0
  %v4757 = vadd.f32 %v3586, %v4756
  %v4758 = vpop.f32.mrb[0].mxu0
  %4759 = vmatprep.mubr.bf16.mxu0 %v4667
  %4760 = vmatmul.mubr.bf16.gmra.mrb[0].mxu0 %v4666
  %v4761 = vpop.f32.mrb[0].mxu0
  %v4762 = vadd.f32 %v3586, %v4761
  %v4763 = vpop.f32.mrb[0].mxu0
  %v4764 = vpop.f32.mrb[0].mxu0
  %v4765 = vadd.f32 %v3586, %v4764
  %v4766 = vpop.f32.mrb[0].mxu0
  %4767 = vmatprep.mubr.bf16.mxu0 %v4673
  %4768 = vmatmul.mubr.bf16.gmra.mrb[0].mxu0 %v4672
  %v4769 = vpop.f32.mrb[0].mxu0
  %v4770 = vadd.f32 %v3586, %v4769
  %v4771 = vpop.f32.mrb[0].mxu0
  %v4772 = vpop.f32.mrb[0].mxu0
  %v4773 = vadd.f32 %v3586, %v4772
  %v4774 = vpop.f32.mrb[0].mxu0
  %4775 = vmatprep.mubr.bf16.mxu0 %v4679
  %4776 = vmatmul.mubr.bf16.gmra.mrb[0].mxu0 %v4678
  %v4777 = vpop.f32.mrb[0].mxu0
  %v4778 = vadd.f32 %v3586, %v4777
  %v4779 = vpop.f32.mrb[0].mxu0
  %v4780 = vpop.f32.mrb[0].mxu0
  %v4781 = vadd.f32 %v3586, %v4780
  %v4782 = vpop.f32.mrb[0].mxu0
  %4783 = vdwg.mxu0
  %4784 = vmatprep.subr.bf16.mxu0 0
  %4785 = vmatpush1.bf16.msra.mxu0 %v3892
  %4786 = vmatprep.subr.bf16.mxu0 0
  %4787 = vmatpush1.bf16.msra.mxu0 %v3893
  %4788 = vmatprep.subr.bf16.mxu0 0
  %4789 = vmatpush1.bf16.msra.mxu0 %v3894
  %4790 = vmatprep.subr.bf16.mxu0 0
  %4791 = vmatpush1.bf16.msra.mxu0 %v3895
  %4792 = vmatprep.subr.bf16.mxu0 0
  %4793 = vmatpush1.bf16.msra.mxu0 %v3896
  %4794 = vmatprep.subr.bf16.mxu0 0
  %4795 = vmatpush1.bf16.msra.mxu0 %v3897
  %4796 = vmatprep.subr.bf16.mxu0 0
  %4797 = vmatpush1.bf16.msra.mxu0 %v3898
  %4798 = vmatprep.subr.bf16.mxu0 0
  %4799 = vmatpush1.bf16.msra.mxu0 %v3899
  %4800 = vmatprep.subr.bf16.mxu0 0
  %4801 = vmatpush1.bf16.msra.mxu0 %v3900
  %4802 = vmatprep.subr.bf16.mxu0 0
  %4803 = vmatpush1.bf16.msra.mxu0 %v3901
  %4804 = vmatprep.subr.bf16.mxu0 0
  %4805 = vmatpush1.bf16.msra.mxu0 %v3902
  %4806 = vmatprep.subr.bf16.mxu0 0
  %4807 = vmatpush1.bf16.msra.mxu0 %v3903
  %4808 = vmatprep.subr.bf16.mxu0 0
  %4809 = vmatpush1.bf16.msra.mxu0 %v3904
  %4810 = vmatprep.subr.bf16.mxu0 0
  %4811 = vmatpush1.bf16.msra.mxu0 %v3905
  %4812 = vmatprep.subr.bf16.mxu0 0
  %4813 = vmatpush1.bf16.msra.mxu0 %v3906
  %4814 = vmatprep.subr.bf16.mxu0 0
  %4815 = vmatpush1.bf16.msra.mxu0 %v3907
  %4816 = vmatprep.mubr.bf16.mxu0 %v4636
  %4817 = vmatmul.mubr.bf16.gmra.mrb[0].mxu0 %v4635
  %v4818 = vpop.f32.mrb[0].mxu0
  %v4819 = vadd.f32 %v4722, %v4818
  %v4820 = vpop.f32.mrb[0].mxu0
  %v4821 = vpop.f32.mrb[0].mxu0
  %v4822 = vadd.f32 %v4725, %v4821
  %v4823 = vpop.f32.mrb[0].mxu0
  %4824 = vmatprep.mubr.bf16.mxu0 %v4642
  %4825 = vmatmul.mubr.bf16.gmra.mrb[0].mxu0 %v4641
  %v4826 = vpop.f32.mrb[0].mxu0
  %v4827 = vadd.f32 %v4730, %v4826
  %v4828 = vpop.f32.mrb[0].mxu0
  %v4829 = vpop.f32.mrb[0].mxu0
  %v4830 = vadd.f32 %v4733, %v4829
  %v4831 = vpop.f32.mrb[0].mxu0
  %4832 = vmatprep.mubr.bf16.mxu0 %v4648
  %4833 = vmatmul.mubr.bf16.gmra.mrb[0].mxu0 %v4647
  %v4834 = vpop.f32.mrb[0].mxu0
  %v4835 = vadd.f32 %v4738, %v4834
  %v4836 = vpop.f32.mrb[0].mxu0
  %v4837 = vpop.f32.mrb[0].mxu0
  %v4838 = vadd.f32 %v4741, %v4837
  %v4839 = vpop.f32.mrb[0].mxu0
  %4840 = vmatprep.mubr.bf16.mxu0 %v4654
  %4841 = vmatmul.mubr.bf16.gmra.mrb[0].mxu0 %v4653
  %v4842 = vpop.f32.mrb[0].mxu0
  %v4843 = vadd.f32 %v4746, %v4842
  %v4844 = vpop.f32.mrb[0].mxu0
  %v4845 = vpop.f32.mrb[0].mxu0
  %v4846 = vadd.f32 %v4749, %v4845
  %v4847 = vpop.f32.mrb[0].mxu0
  %4848 = vmatprep.mubr.bf16.mxu0 %v4663
  %4849 = vmatmul.mubr.bf16.gmra.mrb[0].mxu0 %v4662
  %v4850 = vpop.f32.mrb[0].mxu0
  %v4851 = vadd.f32 %v4754, %v4850
  %v4852 = vpop.f32.mrb[0].mxu0
  %v4853 = vpop.f32.mrb[0].mxu0
  %v4854 = vadd.f32 %v4757, %v4853
  %v4855 = vpop.f32.mrb[0].mxu0
  %4856 = vmatprep.mubr.bf16.mxu0 %v4669
  %4857 = vmatmul.mubr.bf16.gmra.mrb[0].mxu0 %v4668
  %v4858 = vpop.f32.mrb[0].mxu0
  %v4859 = vadd.f32 %v4762, %v4858
  %v4860 = vpop.f32.mrb[0].mxu0
  %v4861 = vpop.f32.mrb[0].mxu0
  %v4862 = vadd.f32 %v4765, %v4861
  %v4863 = vpop.f32.mrb[0].mxu0
  %4864 = vmatprep.mubr.bf16.mxu0 %v4675
  %4865 = vmatmul.mubr.bf16.gmra.mrb[0].mxu0 %v4674
  %v4866 = vpop.f32.mrb[0].mxu0
  %v4867 = vadd.f32 %v4770, %v4866
  %v4868 = vpop.f32.mrb[0].mxu0
  %v4869 = vpop.f32.mrb[0].mxu0
  %v4870 = vadd.f32 %v4773, %v4869
  %v4871 = vpop.f32.mrb[0].mxu0
  %4872 = vmatprep.mubr.bf16.mxu0 %v4681
  %4873 = vmatmul.mubr.bf16.gmra.mrb[0].mxu0 %v4680
  %v4874 = vpop.f32.mrb[0].mxu0
  %v4875 = vadd.f32 %v4778, %v4874
  %v4876 = vpop.f32.mrb[0].mxu0
  %v4877 = vpop.f32.mrb[0].mxu0
  %v4878 = vadd.f32 %v4781, %v4877
  %v4879 = vpop.f32.mrb[0].mxu0
  %4880 = vdwg.mxu0
  %4881 = vmatprep.subr.bf16.mxu0 0
  %4882 = vmatpush1.bf16.msra.mxu0 %v3908
  %4883 = vmatprep.subr.bf16.mxu0 0
  %4884 = vmatpush1.bf16.msra.mxu0 %v3909
  %4885 = vmatprep.subr.bf16.mxu0 0
  %4886 = vmatpush1.bf16.msra.mxu0 %v3910
  %4887 = vmatprep.subr.bf16.mxu0 0
  %4888 = vmatpush1.bf16.msra.mxu0 %v3911
  %4889 = vmatprep.subr.bf16.mxu0 0
  %4890 = vmatpush1.bf16.msra.mxu0 %v3912
  %4891 = vmatprep.subr.bf16.mxu0 0
  %4892 = vmatpush1.bf16.msra.mxu0 %v3913
  %4893 = vmatprep.subr.bf16.mxu0 0
  %4894 = vmatpush1.bf16.msra.mxu0 %v3914
  %4895 = vmatprep.subr.bf16.mxu0 0
  %4896 = vmatpush1.bf16.msra.mxu0 %v3915
  %4897 = vmatprep.subr.bf16.mxu0 0
  %4898 = vmatpush1.bf16.msra.mxu0 %v3916
  %4899 = vmatprep.subr.bf16.mxu0 0
  %4900 = vmatpush1.bf16.msra.mxu0 %v3917
  %4901 = vmatprep.subr.bf16.mxu0 0
  %4902 = vmatpush1.bf16.msra.mxu0 %v3918
  %4903 = vmatprep.subr.bf16.mxu0 0
  %4904 = vmatpush1.bf16.msra.mxu0 %v3919
  %4905 = vmatprep.subr.bf16.mxu0 0
  %4906 = vmatpush1.bf16.msra.mxu0 %v3920
  %4907 = vmatprep.subr.bf16.mxu0 0
  %4908 = vmatpush1.bf16.msra.mxu0 %v3921
  %4909 = vmatprep.subr.bf16.mxu0 0
  %4910 = vmatpush1.bf16.msra.mxu0 %v3922
  %4911 = vmatprep.subr.bf16.mxu0 0
  %4912 = vmatpush1.bf16.msra.mxu0 %v3923
  %4913 = vmatprep.mubr.bf16.mxu0 %v4638
  %4914 = vmatmul.mubr.bf16.gmra.mrb[0].mxu0 %v4637
  %v4915 = vpop.f32.mrb[0].mxu0
  %v4916 = vadd.f32 %v4819, %v4915
  %v4917 = vpop.f32.mrb[0].mxu0
  %v4918 = vpop.f32.mrb[0].mxu0
  %v4919 = vadd.f32 %v4822, %v4918
  %v4920 = vpop.f32.mrb[0].mxu0
  %4921 = vmatprep.mubr.bf16.mxu0 %v4644
  %4922 = vmatmul.mubr.bf16.gmra.mrb[0].mxu0 %v4643
  %v4923 = vpop.f32.mrb[0].mxu0
  %v4924 = vadd.f32 %v4827, %v4923
  %v4925 = vpop.f32.mrb[0].mxu0
  %v4926 = vpop.f32.mrb[0].mxu0
  %v4927 = vadd.f32 %v4830, %v4926
  %v4928 = vpop.f32.mrb[0].mxu0
  %4929 = vmatprep.mubr.bf16.mxu0 %v4650
  %4930 = vmatmul.mubr.bf16.gmra.mrb[0].mxu0 %v4649
  %v4931 = vpop.f32.mrb[0].mxu0
  %v4932 = vadd.f32 %v4835, %v4931
  %v4933 = vpop.f32.mrb[0].mxu0
  %v4934 = vpop.f32.mrb[0].mxu0
  %v4935 = vadd.f32 %v4838, %v4934
  %v4936 = vpop.f32.mrb[0].mxu0
  %4937 = vmatprep.mubr.bf16.mxu0 %v4656
  %4938 = vmatmul.mubr.bf16.gmra.mrb[0].mxu0 %v4655
  %v4939 = vpop.f32.mrb[0].mxu0
  %v4940 = vadd.f32 %v4843, %v4939
  %v4941 = vpop.f32.mrb[0].mxu0
  %v4942 = vpop.f32.mrb[0].mxu0
  %v4943 = vadd.f32 %v4846, %v4942
  %v4944 = vpop.f32.mrb[0].mxu0
  %4945 = vmatprep.mubr.bf16.mxu0 %v4665
  %4946 = vmatmul.mubr.bf16.gmra.mrb[0].mxu0 %v4664
  %v4947 = vpop.f32.mrb[0].mxu0
  %v4948 = vadd.f32 %v4851, %v4947
  %v4949 = vpop.f32.mrb[0].mxu0
  %v4950 = vpop.f32.mrb[0].mxu0
  %v4951 = vadd.f32 %v4854, %v4950
  %v4952 = vpop.f32.mrb[0].mxu0
  %4953 = vmatprep.mubr.bf16.mxu0 %v4671
  %4954 = vmatmul.mubr.bf16.gmra.mrb[0].mxu0 %v4670
  %v4955 = vpop.f32.mrb[0].mxu0
  %v4956 = vadd.f32 %v4859, %v4955
  %v4957 = vpop.f32.mrb[0].mxu0
  %v4958 = vpop.f32.mrb[0].mxu0
  %v4959 = vadd.f32 %v4862, %v4958
  %v4960 = vpop.f32.mrb[0].mxu0
  %4961 = vmatprep.mubr.bf16.mxu0 %v4677
  %4962 = vmatmul.mubr.bf16.gmra.mrb[0].mxu0 %v4676
  %v4963 = vpop.f32.mrb[0].mxu0
  %v4964 = vadd.f32 %v4867, %v4963
  %v4965 = vpop.f32.mrb[0].mxu0
  %v4966 = vpop.f32.mrb[0].mxu0
  %v4967 = vadd.f32 %v4870, %v4966
  %v4968 = vpop.f32.mrb[0].mxu0
  %4969 = vmatprep.mubr.bf16.mxu0 %v4683
  %4970 = vmatmul.mubr.bf16.gmra.mrb[0].mxu0 %v4682
  %v4971 = vpop.f32.mrb[0].mxu0
  %v4972 = vadd.f32 %v4875, %v4971
  %v4973 = vpop.f32.mrb[0].mxu0
  %v4974 = vpop.f32.mrb[0].mxu0
  %v4975 = vadd.f32 %v4878, %v4974
  %v4976 = vpop.f32.mrb[0].mxu0
  %4977 = vdwg.mxu0
  %4978 = vmatprep.subr.bf16.mxu0 0
  %4979 = vmatpush1.bf16.msra.mxu0 %v3924
  %4980 = vmatprep.subr.bf16.mxu0 0
  %4981 = vmatpush1.bf16.msra.mxu0 %v3925
  %4982 = vmatprep.subr.bf16.mxu0 0
  %4983 = vmatpush1.bf16.msra.mxu0 %v3926
  %4984 = vmatprep.subr.bf16.mxu0 0
  %4985 = vmatpush1.bf16.msra.mxu0 %v3927
  %4986 = vmatprep.subr.bf16.mxu0 0
  %4987 = vmatpush1.bf16.msra.mxu0 %v3928
  %4988 = vmatprep.subr.bf16.mxu0 0
  %4989 = vmatpush1.bf16.msra.mxu0 %v3929
  %4990 = vmatprep.subr.bf16.mxu0 0
  %4991 = vmatpush1.bf16.msra.mxu0 %v3930
  %4992 = vmatprep.subr.bf16.mxu0 0
  %4993 = vmatpush1.bf16.msra.mxu0 %v3931
  %4994 = vmatprep.subr.bf16.mxu0 0
  %4995 = vmatpush1.bf16.msra.mxu0 %v3932
  %4996 = vmatprep.subr.bf16.mxu0 0
  %4997 = vmatpush1.bf16.msra.mxu0 %v3933
  %4998 = vmatprep.subr.bf16.mxu0 0
  %4999 = vmatpush1.bf16.msra.mxu0 %v3934
  %5000 = vmatprep.subr.bf16.mxu0 0
  %5001 = vmatpush1.bf16.msra.mxu0 %v3935
  %5002 = vmatprep.subr.bf16.mxu0 0
  %5003 = vmatpush1.bf16.msra.mxu0 %v3936
  %5004 = vmatprep.subr.bf16.mxu0 0
  %5005 = vmatpush1.bf16.msra.mxu0 %v3937
  %5006 = vmatprep.subr.bf16.mxu0 0
  %5007 = vmatpush1.bf16.msra.mxu0 %v3938
  %5008 = vmatprep.subr.bf16.mxu0 0
  %5009 = vmatpush1.bf16.msra.mxu0 %v3939
  %5010 = vmatprep.mubr.bf16.mxu0 %v4640
  %5011 = vmatmul.mubr.bf16.gmra.mrb[0].mxu0 %v4639
  %v5012 = vpop.f32.mrb[0].mxu0
  %v5013 = vadd.f32 %v4916, %v5012
  %v5014 = vpop.f32.mrb[0].mxu0
  %v5015 = vpop.f32.mrb[0].mxu0
  %v5016 = vadd.f32 %v4919, %v5015
  %v5017 = vpop.f32.mrb[0].mxu0
  %5018 = vmatprep.mubr.bf16.mxu0 %v4646
  %5019 = vmatmul.mubr.bf16.gmra.mrb[0].mxu0 %v4645
  %v5020 = vpop.f32.mrb[0].mxu0
  %v5021 = vadd.f32 %v4924, %v5020
  %v5022 = vpop.f32.mrb[0].mxu0
  %v5023 = vpop.f32.mrb[0].mxu0
  %v5024 = vadd.f32 %v4927, %v5023
  %v5025 = vpop.f32.mrb[0].mxu0
  %5026 = vmatprep.mubr.bf16.mxu0 %v4652
  %5027 = vmatmul.mubr.bf16.gmra.mrb[0].mxu0 %v4651
  %v5028 = vpop.f32.mrb[0].mxu0
  %v5029 = vadd.f32 %v4932, %v5028
  %v5030 = vpop.f32.mrb[0].mxu0
  %v5031 = vpop.f32.mrb[0].mxu0
  %v5032 = vadd.f32 %v4935, %v5031
  %v5033 = vpop.f32.mrb[0].mxu0
  %5034 = vmatprep.mubr.bf16.mxu0 %v4658
  %5035 = vmatmul.mubr.bf16.gmra.mrb[0].mxu0 %v4657
  %v5036 = vpop.f32.mrb[0].mxu0
  %v5037 = vadd.f32 %v4940, %v5036
  %v5038 = vpop.f32.mrb[0].mxu0
  %v5039 = vpop.f32.mrb[0].mxu0
  %v5040 = vadd.f32 %v4943, %v5039
  %v5041 = vpop.f32.mrb[0].mxu0
  %5042 = vmatprep.mubr.bf16.mxu0 %v4667
  %5043 = vmatmul.mubr.bf16.gmra.mrb[0].mxu0 %v4666
  %v5044 = vpop.f32.mrb[0].mxu0
  %v5045 = vadd.f32 %v4948, %v5044
  %v5046 = vpop.f32.mrb[0].mxu0
  %v5047 = vpop.f32.mrb[0].mxu0
  %v5048 = vadd.f32 %v4951, %v5047
  %v5049 = vpop.f32.mrb[0].mxu0
  %5050 = vmatprep.mubr.bf16.mxu0 %v4673
  %5051 = vmatmul.mubr.bf16.gmra.mrb[0].mxu0 %v4672
  %v5052 = vpop.f32.mrb[0].mxu0
  %v5053 = vadd.f32 %v4956, %v5052
  %v5054 = vpop.f32.mrb[0].mxu0
  %v5055 = vpop.f32.mrb[0].mxu0
  %v5056 = vadd.f32 %v4959, %v5055
  %v5057 = vpop.f32.mrb[0].mxu0
  %5058 = vmatprep.mubr.bf16.mxu0 %v4679
  %5059 = vmatmul.mubr.bf16.gmra.mrb[0].mxu0 %v4678
  %v5060 = vpop.f32.mrb[0].mxu0
  %v5061 = vadd.f32 %v4964, %v5060
  %v5062 = vpop.f32.mrb[0].mxu0
  %v5063 = vpop.f32.mrb[0].mxu0
  %v5064 = vadd.f32 %v4967, %v5063
  %v5065 = vpop.f32.mrb[0].mxu0
  %5066 = vmatprep.mubr.bf16.mxu0 %v4685
  %5067 = vmatmul.mubr.bf16.gmra.mrb[0].mxu0 %v4684
  %v5068 = vpop.f32.mrb[0].mxu0
  %v5069 = vadd.f32 %v4972, %v5068
  %v5070 = vpop.f32.mrb[0].mxu0
  %v5071 = vpop.f32.mrb[0].mxu0
  %v5072 = vadd.f32 %v4975, %v5071
  %v5073 = vpop.f32.mrb[0].mxu0
  %5074 = vdwg.mxu0
  %5075 = vmatprep.subr.bf16.mxu0 0
  %5076 = vmatpush1.bf16.msra.mxu0 %v3940
  %5077 = vmatprep.subr.bf16.mxu0 0
  %5078 = vmatpush1.bf16.msra.mxu0 %v3941
  %5079 = vmatprep.subr.bf16.mxu0 0
  %5080 = vmatpush1.bf16.msra.mxu0 %v3942
  %5081 = vmatprep.subr.bf16.mxu0 0
  %5082 = vmatpush1.bf16.msra.mxu0 %v3943
  %5083 = vmatprep.subr.bf16.mxu0 0
  %5084 = vmatpush1.bf16.msra.mxu0 %v3944
  %5085 = vmatprep.subr.bf16.mxu0 0
  %5086 = vmatpush1.bf16.msra.mxu0 %v3945
  %5087 = vmatprep.subr.bf16.mxu0 0
  %5088 = vmatpush1.bf16.msra.mxu0 %v3946
  %5089 = vmatprep.subr.bf16.mxu0 0
  %5090 = vmatpush1.bf16.msra.mxu0 %v3947
  %5091 = vmatprep.subr.bf16.mxu0 0
  %5092 = vmatpush1.bf16.msra.mxu0 0
  %5093 = vmatprep.subr.bf16.mxu0 0
  %5094 = vmatpush1.bf16.msra.mxu0 0
  %5095 = vmatprep.subr.bf16.mxu0 0
  %5096 = vmatpush1.bf16.msra.mxu0 0
  %5097 = vmatprep.subr.bf16.mxu0 0
  %5098 = vmatpush1.bf16.msra.mxu0 0
  %5099 = vmatprep.subr.bf16.mxu0 0
  %5100 = vmatpush1.bf16.msra.mxu0 0
  %5101 = vmatprep.subr.bf16.mxu0 0
  %5102 = vmatpush1.bf16.msra.mxu0 0
  %5103 = vmatprep.subr.bf16.mxu0 0
  %5104 = vmatpush1.bf16.msra.mxu0 0
  %5105 = vmatprep.subr.bf16.mxu0 0
  %5106 = vmatpush1.bf16.msra.mxu0 0
  %5107 = vmatprep.mubr.bf16.mxu0 0
  %5108 = vmatmul.mubr.bf16.gmra.mrb[0].mxu0 %v4641
  %v5109 = vpop.f32.mrb[0].mxu0
  %v5110 = vadd.f32 %v5013, %v5109
  %v5111 = vpop.f32.mrb[0].mxu0
  %v5112 = vpop.f32.mrb[0].mxu0
  %v5113 = vadd.f32 %v5016, %v5112
  %v5114 = vpop.f32.mrb[0].mxu0
  %5115 = vmatprep.mubr.bf16.mxu0 0
  %5116 = vmatmul.mubr.bf16.gmra.mrb[0].mxu0 %v4647
  %v5117 = vpop.f32.mrb[0].mxu0
  %v5118 = vadd.f32 %v5021, %v5117
  %v5119 = vpop.f32.mrb[0].mxu0
  %v5120 = vpop.f32.mrb[0].mxu0
  %v5121 = vadd.f32 %v5024, %v5120
  %v5122 = vpop.f32.mrb[0].mxu0
  %5123 = vmatprep.mubr.bf16.mxu0 0
  %5124 = vmatmul.mubr.bf16.gmra.mrb[0].mxu0 %v4653
  %v5125 = vpop.f32.mrb[0].mxu0
  %v5126 = vadd.f32 %v5029, %v5125
  %v5127 = vpop.f32.mrb[0].mxu0
  %v5128 = vpop.f32.mrb[0].mxu0
  %v5129 = vadd.f32 %v5032, %v5128
  %v5130 = vpop.f32.mrb[0].mxu0
  %5131 = vmatprep.mubr.bf16.mxu0 0
  %5132 = vmatmul.mubr.bf16.gmra.mrb[0].mxu0 %v4659
  %v5133 = vpop.f32.mrb[0].mxu0
  %v5134 = vadd.f32 %v5037, %v5133
  %v5135 = vpop.f32.mrb[0].mxu0
  %v5136 = vpop.f32.mrb[0].mxu0
  %v5137 = vadd.f32 %v5040, %v5136
  %v5138 = vpop.f32.mrb[0].mxu0
  %5139 = vmatprep.mubr.bf16.mxu0 0
  %5140 = vmatmul.mubr.bf16.gmra.mrb[0].mxu0 %v4668
  %v5141 = vpop.f32.mrb[0].mxu0
  %v5142 = vadd.f32 %v5045, %v5141
  %v5143 = vpop.f32.mrb[0].mxu0
  %v5144 = vpop.f32.mrb[0].mxu0
  %v5145 = vadd.f32 %v5048, %v5144
  %v5146 = vpop.f32.mrb[0].mxu0
  %5147 = vmatprep.mubr.bf16.mxu0 0
  %5148 = vmatmul.mubr.bf16.gmra.mrb[0].mxu0 %v4674
  %v5149 = vpop.f32.mrb[0].mxu0
  %v5150 = vadd.f32 %v5053, %v5149
  %v5151 = vpop.f32.mrb[0].mxu0
  %v5152 = vpop.f32.mrb[0].mxu0
  %v5153 = vadd.f32 %v5056, %v5152
  %v5154 = vpop.f32.mrb[0].mxu0
  %5155 = vmatprep.mubr.bf16.mxu0 0
  %5156 = vmatmul.mubr.bf16.gmra.mrb[0].mxu0 %v4680
  %v5157 = vpop.f32.mrb[0].mxu0
  %v5158 = vadd.f32 %v5061, %v5157
  %v5159 = vpop.f32.mrb[0].mxu0
  %v5160 = vpop.f32.mrb[0].mxu0
  %v5161 = vadd.f32 %v5064, %v5160
  %v5162 = vpop.f32.mrb[0].mxu0
  %5163 = vmatprep.mubr.bf16.mxu0 0
  %5164 = vmatmul.mubr.bf16.gmra.mrb[0].mxu0 %v4686
  %v5165 = vpop.f32.mrb[0].mxu0
  %v5166 = vadd.f32 %v5069, %v5165
  %v5167 = vpop.f32.mrb[0].mxu0
  %v5168 = vpop.f32.mrb[0].mxu0
  %v5169 = vadd.f32 %v5072, %v5168
  %v5170 = vpop.f32.mrb[0].mxu0
  %5171 = vdwg.mxu0
  %v5172 = vmax.f32 %v5110, 0.0
  %v5173 = vmax.f32 %v5113, 0.0
  %v5174 = vmax.f32 %v5118, 0.0
  %v5175 = vmax.f32 %v5121, 0.0
  %v5176 = vmax.f32 %v5126, 0.0
  %v5177 = vmax.f32 %v5129, 0.0
  %v5178 = vmax.f32 %v5134, 0.0
  %v5179 = vmax.f32 %v5137, 0.0
  %v5180 = vmax.f32 %v5142, 0.0
  %v5181 = vmax.f32 %v5145, 0.0
  %v5182 = vmax.f32 %v5150, 0.0
  %v5183 = vmax.f32 %v5153, 0.0
  %v5184 = vmax.f32 %v5158, 0.0
  %v5185 = vmax.f32 %v5161, 0.0
  %v5186 = vmax.f32 %v5166, 0.0
  %v5187 = vmax.f32 %v5169, 0.0
  %v5202 = vrot.slane %v5172, 7
  %v5203 = vsel %vm120, %v121, %v5202
  %v5204 = vrot.slane %v5173, 7
  %v5205 = vsel %vm120, %v121, %v5204
  %v5206 = vrot.slane %v5174, 7
  %v5207 = vsel %vm120, %v121, %v5206
  %v5208 = vrot.slane %v5175, 7
  %v5209 = vsel %vm120, %v121, %v5208
  %v5210 = vrot.slane %v5176, 7
  %v5211 = vsel %vm120, %v121, %v5210
  %v5212 = vrot.slane %v5177, 7
  %v5213 = vsel %vm120, %v121, %v5212
  %v5214 = vrot.slane %v5178, 7
  %v5215 = vsel %vm120, %v121, %v5214
  %v5216 = vrot.slane %v5180, 7
  %v5217 = vsel %vm120, %v121, %v5216
  %v5218 = vrot.slane %v5181, 7
  %v5219 = vsel %vm120, %v121, %v5218
  %v5220 = vrot.slane %v5182, 7
  %v5221 = vsel %vm120, %v121, %v5220
  %v5222 = vrot.slane %v5183, 7
  %v5223 = vsel %vm120, %v121, %v5222
  %v5224 = vrot.slane %v5184, 7
  %v5225 = vsel %vm120, %v121, %v5224
  %v5226 = vrot.slane %v5185, 7
  %v5227 = vsel %vm120, %v121, %v5226
  %v5228 = vrot.slane %v5186, 7
  %v5229 = vsel %vm120, %v121, %v5228
  %v5244 = vrot.slane %v5172, 1
  %v5245 = vsel %vm160, %v5244, %v161
  %v5246 = vrot.slane %v5173, 1
  %v5247 = vsel %vm160, %v5246, %v161
  %v5248 = vrot.slane %v5174, 1
  %v5249 = vsel %vm160, %v5248, %v161
  %v5250 = vrot.slane %v5175, 1
  %v5251 = vsel %vm160, %v5250, %v161
  %v5252 = vrot.slane %v5176, 1
  %v5253 = vsel %vm160, %v5252, %v161
  %v5254 = vrot.slane %v5177, 1
  %v5255 = vsel %vm160, %v5254, %v161
  %v5256 = vrot.slane %v5178, 1
  %v5257 = vsel %vm160, %v5256, %v161
  %v5258 = vrot.slane %v5180, 1
  %v5259 = vsel %vm160, %v5258, %v161
  %v5260 = vrot.slane %v5181, 1
  %v5261 = vsel %vm160, %v5260, %v161
  %v5262 = vrot.slane %v5182, 1
  %v5263 = vsel %vm160, %v5262, %v161
  %v5264 = vrot.slane %v5183, 1
  %v5265 = vsel %vm160, %v5264, %v161
  %v5266 = vrot.slane %v5184, 1
  %v5267 = vsel %vm160, %v5266, %v161
  %v5268 = vrot.slane %v5185, 1
  %v5269 = vsel %vm160, %v5268, %v161
  %v5270 = vrot.slane %v5186, 1
  %v5271 = vsel %vm160, %v5270, %v161
  %v5288 = vrot.slane %v5179, 7
  %v5289 = vsel %vm120, %v121, %v5288
  %v5290 = vrot.slane %v5187, 7
  %v5291 = vsel %vm120, %v121, %v5290
  %v5294 = vrot.slane %v5179, 1
  %v5295 = vsel %vm160, %v5294, %v161
  %v5296 = vrot.slane %v5187, 1
  %v5297 = vsel %vm160, %v5296, %v161
  %v5300 = vpack.c.bf16 %v5203, %v122
  %v5301 = vpack.c.bf16 %v5172, 0.0
  %v5302 = vpack.c.bf16 %v5245, %v162
  %v5303 = vpack.c.bf16 %v5205, %v5203
  %v5304 = vpack.c.bf16 %v5173, %v5172
  %v5305 = vpack.c.bf16 %v5247, %v5245
  %v5306 = vpack.c.bf16 %v5207, %v5205
  %v5307 = vpack.c.bf16 %v5174, %v5173
  %v5308 = vpack.c.bf16 %v5249, %v5247
  %v5309 = vpack.c.bf16 %v5209, %v5207
  %v5310 = vpack.c.bf16 %v5175, %v5174
  %v5311 = vpack.c.bf16 %v5251, %v5249
  %v5312 = vpack.c.bf16 %v5211, %v5209
  %v5313 = vpack.c.bf16 %v5176, %v5175
  %v5314 = vpack.c.bf16 %v5253, %v5251
  %v5315 = vpack.c.bf16 %v5213, %v5211
  %v5316 = vpack.c.bf16 %v5177, %v5176
  %v5317 = vpack.c.bf16 %v5255, %v5253
  %v5318 = vpack.c.bf16 %v5215, %v5213
  %v5319 = vpack.c.bf16 %v5178, %v5177
  %v5320 = vpack.c.bf16 %v5257, %v5255
  %v5321 = vpack.c.bf16 %v5289, %v5215
  %v5322 = vpack.c.bf16 %v5179, %v5178
  %v5323 = vpack.c.bf16 %v5295, %v5257
  %v5324 = vpack.c.bf16 %v122, %v5289
  %v5325 = vpack.c.bf16 0.0, %v5179
  %v5326 = vpack.c.bf16 %v162, %v5295
  %v5327 = vpack.c.bf16 %v5217, %v122
  %v5328 = vpack.c.bf16 %v5180, 0.0
  %v5329 = vpack.c.bf16 %v5259, %v162
  %v5330 = vpack.c.bf16 %v5219, %v5217
  %v5331 = vpack.c.bf16 %v5181, %v5180
  %v5332 = vpack.c.bf16 %v5261, %v5259
  %v5333 = vpack.c.bf16 %v5221, %v5219
  %v5334 = vpack.c.bf16 %v5182, %v5181
  %v5335 = vpack.c.bf16 %v5263, %v5261
  %v5336 = vpack.c.bf16 %v5223, %v5221
  %v5337 = vpack.c.bf16 %v5183, %v5182
  %v5338 = vpack.c.bf16 %v5265, %v5263
  %v5339 = vpack.c.bf16 %v5225, %v5223
  %v5340 = vpack.c.bf16 %v5184, %v5183
  %v5341 = vpack.c.bf16 %v5267, %v5265
  %v5342 = vpack.c.bf16 %v5227, %v5225
  %v5343 = vpack.c.bf16 %v5185, %v5184
  %v5344 = vpack.c.bf16 %v5269, %v5267
  %v5345 = vpack.c.bf16 %v5229, %v5227
  %v5346 = vpack.c.bf16 %v5186, %v5185
  %v5347 = vpack.c.bf16 %v5271, %v5269
  %v5348 = vpack.c.bf16 %v5291, %v5229
  %v5349 = vpack.c.bf16 %v5187, %v5186
  %v5350 = vpack.c.bf16 %v5297, %v5271
  %v5351 = vpack.c.bf16 %v122, %v5291
  %v5352 = vpack.c.bf16 0.0, %v5187
  %v5353 = vpack.c.bf16 %v162, %v5297
  %5354 = vmatprep.subr.bf16.mxu0 0
  %5355 = vmatpush1.bf16.msra.mxu0 %v3876
  %5356 = vmatprep.subr.bf16.mxu0 0
  %5357 = vmatpush1.bf16.msra.mxu0 %v3877
  %5358 = vmatprep.subr.bf16.mxu0 0
  %5359 = vmatpush1.bf16.msra.mxu0 %v3878
  %5360 = vmatprep.subr.bf16.mxu0 0
  %5361 = vmatpush1.bf16.msra.mxu0 %v3879
  %5362 = vmatprep.subr.bf16.mxu0 0
  %5363 = vmatpush1.bf16.msra.mxu0 %v3880
  %5364 = vmatprep.subr.bf16.mxu0 0
  %5365 = vmatpush1.bf16.msra.mxu0 %v3881
  %5366 = vmatprep.subr.bf16.mxu0 0
  %5367 = vmatpush1.bf16.msra.mxu0 %v3882
  %5368 = vmatprep.subr.bf16.mxu0 0
  %5369 = vmatpush1.bf16.msra.mxu0 %v3883
  %5370 = vmatprep.subr.bf16.mxu0 0
  %5371 = vmatpush1.bf16.msra.mxu0 %v3884
  %5372 = vmatprep.subr.bf16.mxu0 0
  %5373 = vmatpush1.bf16.msra.mxu0 %v3885
  %5374 = vmatprep.subr.bf16.mxu0 0
  %5375 = vmatpush1.bf16.msra.mxu0 %v3886
  %5376 = vmatprep.subr.bf16.mxu0 0
  %5377 = vmatpush1.bf16.msra.mxu0 %v3887
  %5378 = vmatprep.subr.bf16.mxu0 0
  %5379 = vmatpush1.bf16.msra.mxu0 %v3888
  %5380 = vmatprep.subr.bf16.mxu0 0
  %5381 = vmatpush1.bf16.msra.mxu0 %v3889
  %5382 = vmatprep.subr.bf16.mxu0 0
  %5383 = vmatpush1.bf16.msra.mxu0 %v3890
  %5384 = vmatprep.subr.bf16.mxu0 0
  %5385 = vmatpush1.bf16.msra.mxu0 %v3891
  %5386 = vmatprep.mubr.bf16.mxu0 %v5301
  %5387 = vmatmul.mubr.bf16.gmra.mrb[0].mxu0 %v5300
  %v5388 = vpop.f32.mrb[0].mxu0
  %v5389 = vadd.f32 %v3586, %v5388
  %v5390 = vpop.f32.mrb[0].mxu0
  %v5391 = vpop.f32.mrb[0].mxu0
  %v5392 = vadd.f32 %v3586, %v5391
  %v5393 = vpop.f32.mrb[0].mxu0
  %5394 = vmatprep.mubr.bf16.mxu0 %v5307
  %5395 = vmatmul.mubr.bf16.gmra.mrb[0].mxu0 %v5306
  %v5396 = vpop.f32.mrb[0].mxu0
  %v5397 = vadd.f32 %v3586, %v5396
  %v5398 = vpop.f32.mrb[0].mxu0
  %v5399 = vpop.f32.mrb[0].mxu0
  %v5400 = vadd.f32 %v3586, %v5399
  %v5401 = vpop.f32.mrb[0].mxu0
  %5402 = vmatprep.mubr.bf16.mxu0 %v5313
  %5403 = vmatmul.mubr.bf16.gmra.mrb[0].mxu0 %v5312
  %v5404 = vpop.f32.mrb[0].mxu0
  %v5405 = vadd.f32 %v3586, %v5404
  %v5406 = vpop.f32.mrb[0].mxu0
  %v5407 = vpop.f32.mrb[0].mxu0
  %v5408 = vadd.f32 %v3586, %v5407
  %v5409 = vpop.f32.mrb[0].mxu0
  %5410 = vmatprep.mubr.bf16.mxu0 %v5319
  %5411 = vmatmul.mubr.bf16.gmra.mrb[0].mxu0 %v5318
  %v5412 = vpop.f32.mrb[0].mxu0
  %v5413 = vadd.f32 %v3586, %v5412
  %v5414 = vpop.f32.mrb[0].mxu0
  %v5415 = vpop.f32.mrb[0].mxu0
  %v5416 = vadd.f32 %v3586, %v5415
  %v5417 = vpop.f32.mrb[0].mxu0
  %5418 = vmatprep.mubr.bf16.mxu0 %v5328
  %5419 = vmatmul.mubr.bf16.gmra.mrb[0].mxu0 %v5327
  %v5420 = vpop.f32.mrb[0].mxu0
  %v5421 = vadd.f32 %v3586, %v5420
  %v5422 = vpop.f32.mrb[0].mxu0
  %v5423 = vpop.f32.mrb[0].mxu0
  %v5424 = vadd.f32 %v3586, %v5423
  %v5425 = vpop.f32.mrb[0].mxu0
  %5426 = vmatprep.mubr.bf16.mxu0 %v5334
  %5427 = vmatmul.mubr.bf16.gmra.mrb[0].mxu0 %v5333
  %v5428 = vpop.f32.mrb[0].mxu0
  %v5429 = vadd.f32 %v3586, %v5428
  %v5430 = vpop.f32.mrb[0].mxu0
  %v5431 = vpop.f32.mrb[0].mxu0
  %v5432 = vadd.f32 %v3586, %v5431
  %v5433 = vpop.f32.mrb[0].mxu0
  %5434 = vmatprep.mubr.bf16.mxu0 %v5340
  %5435 = vmatmul.mubr.bf16.gmra.mrb[0].mxu0 %v5339
  %v5436 = vpop.f32.mrb[0].mxu0
  %v5437 = vadd.f32 %v3586, %v5436
  %v5438 = vpop.f32.mrb[0].mxu0
  %v5439 = vpop.f32.mrb[0].mxu0
  %v5440 = vadd.f32 %v3586, %v5439
  %v5441 = vpop.f32.mrb[0].mxu0
  %5442 = vmatprep.mubr.bf16.mxu0 %v5346
  %5443 = vmatmul.mubr.bf16.gmra.mrb[0].mxu0 %v5345
  %v5444 = vpop.f32.mrb[0].mxu0
  %v5445 = vadd.f32 %v3586, %v5444
  %v5446 = vpop.f32.mrb[0].mxu0
  %v5447 = vpop.f32.mrb[0].mxu0
  %v5448 = vadd.f32 %v3586, %v5447
  %v5449 = vpop.f32.mrb[0].mxu0
  %5450 = vdwg.mxu0
  %5451 = vmatprep.subr.bf16.mxu0 0
  %5452 = vmatpush1.bf16.msra.mxu0 %v3892
  %5453 = vmatprep.subr.bf16.mxu0 0
  %5454 = vmatpush1.bf16.msra.mxu0 %v3893
  %5455 = vmatprep.subr.bf16.mxu0 0
  %5456 = vmatpush1.bf16.msra.mxu0 %v3894
  %5457 = vmatprep.subr.bf16.mxu0 0
  %5458 = vmatpush1.bf16.msra.mxu0 %v3895
  %5459 = vmatprep.subr.bf16.mxu0 0
  %5460 = vmatpush1.bf16.msra.mxu0 %v3896
  %5461 = vmatprep.subr.bf16.mxu0 0
  %5462 = vmatpush1.bf16.msra.mxu0 %v3897
  %5463 = vmatprep.subr.bf16.mxu0 0
  %5464 = vmatpush1.bf16.msra.mxu0 %v3898
  %5465 = vmatprep.subr.bf16.mxu0 0
  %5466 = vmatpush1.bf16.msra.mxu0 %v3899
  %5467 = vmatprep.subr.bf16.mxu0 0
  %5468 = vmatpush1.bf16.msra.mxu0 %v3900
  %5469 = vmatprep.subr.bf16.mxu0 0
  %5470 = vmatpush1.bf16.msra.mxu0 %v3901
  %5471 = vmatprep.subr.bf16.mxu0 0
  %5472 = vmatpush1.bf16.msra.mxu0 %v3902
  %5473 = vmatprep.subr.bf16.mxu0 0
  %5474 = vmatpush1.bf16.msra.mxu0 %v3903
  %5475 = vmatprep.subr.bf16.mxu0 0
  %5476 = vmatpush1.bf16.msra.mxu0 %v3904
  %5477 = vmatprep.subr.bf16.mxu0 0
  %5478 = vmatpush1.bf16.msra.mxu0 %v3905
  %5479 = vmatprep.subr.bf16.mxu0 0
  %5480 = vmatpush1.bf16.msra.mxu0 %v3906
  %5481 = vmatprep.subr.bf16.mxu0 0
  %5482 = vmatpush1.bf16.msra.mxu0 %v3907
  %5483 = vmatprep.mubr.bf16.mxu0 %v5303
  %5484 = vmatmul.mubr.bf16.gmra.mrb[0].mxu0 %v5302
  %v5485 = vpop.f32.mrb[0].mxu0
  %v5486 = vadd.f32 %v5389, %v5485
  %v5487 = vpop.f32.mrb[0].mxu0
  %v5488 = vpop.f32.mrb[0].mxu0
  %v5489 = vadd.f32 %v5392, %v5488
  %v5490 = vpop.f32.mrb[0].mxu0
  %5491 = vmatprep.mubr.bf16.mxu0 %v5309
  %5492 = vmatmul.mubr.bf16.gmra.mrb[0].mxu0 %v5308
  %v5493 = vpop.f32.mrb[0].mxu0
  %v5494 = vadd.f32 %v5397, %v5493
  %v5495 = vpop.f32.mrb[0].mxu0
  %v5496 = vpop.f32.mrb[0].mxu0
  %v5497 = vadd.f32 %v5400, %v5496
  %v5498 = vpop.f32.mrb[0].mxu0
  %5499 = vmatprep.mubr.bf16.mxu0 %v5315
  %5500 = vmatmul.mubr.bf16.gmra.mrb[0].mxu0 %v5314
  %v5501 = vpop.f32.mrb[0].mxu0
  %v5502 = vadd.f32 %v5405, %v5501
  %v5503 = vpop.f32.mrb[0].mxu0
  %v5504 = vpop.f32.mrb[0].mxu0
  %v5505 = vadd.f32 %v5408, %v5504
  %v5506 = vpop.f32.mrb[0].mxu0
  %5507 = vmatprep.mubr.bf16.mxu0 %v5321
  %5508 = vmatmul.mubr.bf16.gmra.mrb[0].mxu0 %v5320
  %v5509 = vpop.f32.mrb[0].mxu0
  %v5510 = vadd.f32 %v5413, %v5509
  %v5511 = vpop.f32.mrb[0].mxu0
  %v5512 = vpop.f32.mrb[0].mxu0
  %v5513 = vadd.f32 %v5416, %v5512
  %v5514 = vpop.f32.mrb[0].mxu0
  %5515 = vmatprep.mubr.bf16.mxu0 %v5330
  %5516 = vmatmul.mubr.bf16.gmra.mrb[0].mxu0 %v5329
  %v5517 = vpop.f32.mrb[0].mxu0
  %v5518 = vadd.f32 %v5421, %v5517
  %v5519 = vpop.f32.mrb[0].mxu0
  %v5520 = vpop.f32.mrb[0].mxu0
  %v5521 = vadd.f32 %v5424, %v5520
  %v5522 = vpop.f32.mrb[0].mxu0
  %5523 = vmatprep.mubr.bf16.mxu0 %v5336
  %5524 = vmatmul.mubr.bf16.gmra.mrb[0].mxu0 %v5335
  %v5525 = vpop.f32.mrb[0].mxu0
  %v5526 = vadd.f32 %v5429, %v5525
  %v5527 = vpop.f32.mrb[0].mxu0
  %v5528 = vpop.f32.mrb[0].mxu0
  %v5529 = vadd.f32 %v5432, %v5528
  %v5530 = vpop.f32.mrb[0].mxu0
  %5531 = vmatprep.mubr.bf16.mxu0 %v5342
  %5532 = vmatmul.mubr.bf16.gmra.mrb[0].mxu0 %v5341
  %v5533 = vpop.f32.mrb[0].mxu0
  %v5534 = vadd.f32 %v5437, %v5533
  %v5535 = vpop.f32.mrb[0].mxu0
  %v5536 = vpop.f32.mrb[0].mxu0
  %v5537 = vadd.f32 %v5440, %v5536
  %v5538 = vpop.f32.mrb[0].mxu0
  %5539 = vmatprep.mubr.bf16.mxu0 %v5348
  %5540 = vmatmul.mubr.bf16.gmra.mrb[0].mxu0 %v5347
  %v5541 = vpop.f32.mrb[0].mxu0
  %v5542 = vadd.f32 %v5445, %v5541
  %v5543 = vpop.f32.mrb[0].mxu0
  %v5544 = vpop.f32.mrb[0].mxu0
  %v5545 = vadd.f32 %v5448, %v5544
  %v5546 = vpop.f32.mrb[0].mxu0
  %5547 = vdwg.mxu0
  %5548 = vmatprep.subr.bf16.mxu0 0
  %5549 = vmatpush1.bf16.msra.mxu0 %v3908
  %5550 = vmatprep.subr.bf16.mxu0 0
  %5551 = vmatpush1.bf16.msra.mxu0 %v3909
  %5552 = vmatprep.subr.bf16.mxu0 0
  %5553 = vmatpush1.bf16.msra.mxu0 %v3910
  %5554 = vmatprep.subr.bf16.mxu0 0
  %5555 = vmatpush1.bf16.msra.mxu0 %v3911
  %5556 = vmatprep.subr.bf16.mxu0 0
  %5557 = vmatpush1.bf16.msra.mxu0 %v3912
  %5558 = vmatprep.subr.bf16.mxu0 0
  %5559 = vmatpush1.bf16.msra.mxu0 %v3913
  %5560 = vmatprep.subr.bf16.mxu0 0
  %5561 = vmatpush1.bf16.msra.mxu0 %v3914
  %5562 = vmatprep.subr.bf16.mxu0 0
  %5563 = vmatpush1.bf16.msra.mxu0 %v3915
  %5564 = vmatprep.subr.bf16.mxu0 0
  %5565 = vmatpush1.bf16.msra.mxu0 %v3916
  %5566 = vmatprep.subr.bf16.mxu0 0
  %5567 = vmatpush1.bf16.msra.mxu0 %v3917
  %5568 = vmatprep.subr.bf16.mxu0 0
  %5569 = vmatpush1.bf16.msra.mxu0 %v3918
  %5570 = vmatprep.subr.bf16.mxu0 0
  %5571 = vmatpush1.bf16.msra.mxu0 %v3919
  %5572 = vmatprep.subr.bf16.mxu0 0
  %5573 = vmatpush1.bf16.msra.mxu0 %v3920
  %5574 = vmatprep.subr.bf16.mxu0 0
  %5575 = vmatpush1.bf16.msra.mxu0 %v3921
  %5576 = vmatprep.subr.bf16.mxu0 0
  %5577 = vmatpush1.bf16.msra.mxu0 %v3922
  %5578 = vmatprep.subr.bf16.mxu0 0
  %5579 = vmatpush1.bf16.msra.mxu0 %v3923
  %5580 = vmatprep.mubr.bf16.mxu0 %v5305
  %5581 = vmatmul.mubr.bf16.gmra.mrb[0].mxu0 %v5304
  %v5582 = vpop.f32.mrb[0].mxu0
  %v5583 = vadd.f32 %v5486, %v5582
  %v5584 = vpop.f32.mrb[0].mxu0
  %v5585 = vpop.f32.mrb[0].mxu0
  %v5586 = vadd.f32 %v5489, %v5585
  %v5587 = vpop.f32.mrb[0].mxu0
  %5588 = vmatprep.mubr.bf16.mxu0 %v5311
  %5589 = vmatmul.mubr.bf16.gmra.mrb[0].mxu0 %v5310
  %v5590 = vpop.f32.mrb[0].mxu0
  %v5591 = vadd.f32 %v5494, %v5590
  %v5592 = vpop.f32.mrb[0].mxu0
  %v5593 = vpop.f32.mrb[0].mxu0
  %v5594 = vadd.f32 %v5497, %v5593
  %v5595 = vpop.f32.mrb[0].mxu0
  %5596 = vmatprep.mubr.bf16.mxu0 %v5317
  %5597 = vmatmul.mubr.bf16.gmra.mrb[0].mxu0 %v5316
  %v5598 = vpop.f32.mrb[0].mxu0
  %v5599 = vadd.f32 %v5502, %v5598
  %v5600 = vpop.f32.mrb[0].mxu0
  %v5601 = vpop.f32.mrb[0].mxu0
  %v5602 = vadd.f32 %v5505, %v5601
  %v5603 = vpop.f32.mrb[0].mxu0
  %5604 = vmatprep.mubr.bf16.mxu0 %v5323
  %5605 = vmatmul.mubr.bf16.gmra.mrb[0].mxu0 %v5322
  %v5606 = vpop.f32.mrb[0].mxu0
  %v5607 = vadd.f32 %v5510, %v5606
  %v5608 = vpop.f32.mrb[0].mxu0
  %v5609 = vpop.f32.mrb[0].mxu0
  %v5610 = vadd.f32 %v5513, %v5609
  %v5611 = vpop.f32.mrb[0].mxu0
  %5612 = vmatprep.mubr.bf16.mxu0 %v5332
  %5613 = vmatmul.mubr.bf16.gmra.mrb[0].mxu0 %v5331
  %v5614 = vpop.f32.mrb[0].mxu0
  %v5615 = vadd.f32 %v5518, %v5614
  %v5616 = vpop.f32.mrb[0].mxu0
  %v5617 = vpop.f32.mrb[0].mxu0
  %v5618 = vadd.f32 %v5521, %v5617
  %v5619 = vpop.f32.mrb[0].mxu0
  %5620 = vmatprep.mubr.bf16.mxu0 %v5338
  %5621 = vmatmul.mubr.bf16.gmra.mrb[0].mxu0 %v5337
  %v5622 = vpop.f32.mrb[0].mxu0
  %v5623 = vadd.f32 %v5526, %v5622
  %v5624 = vpop.f32.mrb[0].mxu0
  %v5625 = vpop.f32.mrb[0].mxu0
  %v5626 = vadd.f32 %v5529, %v5625
  %v5627 = vpop.f32.mrb[0].mxu0
  %5628 = vmatprep.mubr.bf16.mxu0 %v5344
  %5629 = vmatmul.mubr.bf16.gmra.mrb[0].mxu0 %v5343
  %v5630 = vpop.f32.mrb[0].mxu0
  %v5631 = vadd.f32 %v5534, %v5630
  %v5632 = vpop.f32.mrb[0].mxu0
  %v5633 = vpop.f32.mrb[0].mxu0
  %v5634 = vadd.f32 %v5537, %v5633
  %v5635 = vpop.f32.mrb[0].mxu0
  %5636 = vmatprep.mubr.bf16.mxu0 %v5350
  %5637 = vmatmul.mubr.bf16.gmra.mrb[0].mxu0 %v5349
  %v5638 = vpop.f32.mrb[0].mxu0
  %v5639 = vadd.f32 %v5542, %v5638
  %v5640 = vpop.f32.mrb[0].mxu0
  %v5641 = vpop.f32.mrb[0].mxu0
  %v5642 = vadd.f32 %v5545, %v5641
  %v5643 = vpop.f32.mrb[0].mxu0
  %5644 = vdwg.mxu0
  %5645 = vmatprep.subr.bf16.mxu0 0
  %5646 = vmatpush1.bf16.msra.mxu0 %v3924
  %5647 = vmatprep.subr.bf16.mxu0 0
  %5648 = vmatpush1.bf16.msra.mxu0 %v3925
  %5649 = vmatprep.subr.bf16.mxu0 0
  %5650 = vmatpush1.bf16.msra.mxu0 %v3926
  %5651 = vmatprep.subr.bf16.mxu0 0
  %5652 = vmatpush1.bf16.msra.mxu0 %v3927
  %5653 = vmatprep.subr.bf16.mxu0 0
  %5654 = vmatpush1.bf16.msra.mxu0 %v3928
  %5655 = vmatprep.subr.bf16.mxu0 0
  %5656 = vmatpush1.bf16.msra.mxu0 %v3929
  %5657 = vmatprep.subr.bf16.mxu0 0
  %5658 = vmatpush1.bf16.msra.mxu0 %v3930
  %5659 = vmatprep.subr.bf16.mxu0 0
  %5660 = vmatpush1.bf16.msra.mxu0 %v3931
  %5661 = vmatprep.subr.bf16.mxu0 0
  %5662 = vmatpush1.bf16.msra.mxu0 %v3932
  %5663 = vmatprep.subr.bf16.mxu0 0
  %5664 = vmatpush1.bf16.msra.mxu0 %v3933
  %5665 = vmatprep.subr.bf16.mxu0 0
  %5666 = vmatpush1.bf16.msra.mxu0 %v3934
  %5667 = vmatprep.subr.bf16.mxu0 0
  %5668 = vmatpush1.bf16.msra.mxu0 %v3935
  %5669 = vmatprep.subr.bf16.mxu0 0
  %5670 = vmatpush1.bf16.msra.mxu0 %v3936
  %5671 = vmatprep.subr.bf16.mxu0 0
  %5672 = vmatpush1.bf16.msra.mxu0 %v3937
  %5673 = vmatprep.subr.bf16.mxu0 0
  %5674 = vmatpush1.bf16.msra.mxu0 %v3938
  %5675 = vmatprep.subr.bf16.mxu0 0
  %5676 = vmatpush1.bf16.msra.mxu0 %v3939
  %5677 = vmatprep.mubr.bf16.mxu0 %v5307
  %5678 = vmatmul.mubr.bf16.gmra.mrb[0].mxu0 %v5306
  %v5679 = vpop.f32.mrb[0].mxu0
  %v5680 = vadd.f32 %v5583, %v5679
  %v5681 = vpop.f32.mrb[0].mxu0
  %v5682 = vpop.f32.mrb[0].mxu0
  %v5683 = vadd.f32 %v5586, %v5682
  %v5684 = vpop.f32.mrb[0].mxu0
  %5685 = vmatprep.mubr.bf16.mxu0 %v5313
  %5686 = vmatmul.mubr.bf16.gmra.mrb[0].mxu0 %v5312
  %v5687 = vpop.f32.mrb[0].mxu0
  %v5688 = vadd.f32 %v5591, %v5687
  %v5689 = vpop.f32.mrb[0].mxu0
  %v5690 = vpop.f32.mrb[0].mxu0
  %v5691 = vadd.f32 %v5594, %v5690
  %v5692 = vpop.f32.mrb[0].mxu0
  %5693 = vmatprep.mubr.bf16.mxu0 %v5319
  %5694 = vmatmul.mubr.bf16.gmra.mrb[0].mxu0 %v5318
  %v5695 = vpop.f32.mrb[0].mxu0
  %v5696 = vadd.f32 %v5599, %v5695
  %v5697 = vpop.f32.mrb[0].mxu0
  %v5698 = vpop.f32.mrb[0].mxu0
  %v5699 = vadd.f32 %v5602, %v5698
  %v5700 = vpop.f32.mrb[0].mxu0
  %5701 = vmatprep.mubr.bf16.mxu0 %v5325
  %5702 = vmatmul.mubr.bf16.gmra.mrb[0].mxu0 %v5324
  %v5703 = vpop.f32.mrb[0].mxu0
  %v5704 = vadd.f32 %v5607, %v5703
  %v5705 = vpop.f32.mrb[0].mxu0
  %v5706 = vpop.f32.mrb[0].mxu0
  %v5707 = vadd.f32 %v5610, %v5706
  %v5708 = vpop.f32.mrb[0].mxu0
  %5709 = vmatprep.mubr.bf16.mxu0 %v5334
  %5710 = vmatmul.mubr.bf16.gmra.mrb[0].mxu0 %v5333
  %v5711 = vpop.f32.mrb[0].mxu0
  %v5712 = vadd.f32 %v5615, %v5711
  %v5713 = vpop.f32.mrb[0].mxu0
  %v5714 = vpop.f32.mrb[0].mxu0
  %v5715 = vadd.f32 %v5618, %v5714
  %v5716 = vpop.f32.mrb[0].mxu0
  %5717 = vmatprep.mubr.bf16.mxu0 %v5340
  %5718 = vmatmul.mubr.bf16.gmra.mrb[0].mxu0 %v5339
  %v5719 = vpop.f32.mrb[0].mxu0
  %v5720 = vadd.f32 %v5623, %v5719
  %v5721 = vpop.f32.mrb[0].mxu0
  %v5722 = vpop.f32.mrb[0].mxu0
  %v5723 = vadd.f32 %v5626, %v5722
  %v5724 = vpop.f32.mrb[0].mxu0
  %5725 = vmatprep.mubr.bf16.mxu0 %v5346
  %5726 = vmatmul.mubr.bf16.gmra.mrb[0].mxu0 %v5345
  %v5727 = vpop.f32.mrb[0].mxu0
  %v5728 = vadd.f32 %v5631, %v5727
  %v5729 = vpop.f32.mrb[0].mxu0
  %v5730 = vpop.f32.mrb[0].mxu0
  %v5731 = vadd.f32 %v5634, %v5730
  %v5732 = vpop.f32.mrb[0].mxu0
  %5733 = vmatprep.mubr.bf16.mxu0 %v5352
  %5734 = vmatmul.mubr.bf16.gmra.mrb[0].mxu0 %v5351
  %v5735 = vpop.f32.mrb[0].mxu0
  %v5736 = vadd.f32 %v5639, %v5735
  %v5737 = vpop.f32.mrb[0].mxu0
  %v5738 = vpop.f32.mrb[0].mxu0
  %v5739 = vadd.f32 %v5642, %v5738
  %v5740 = vpop.f32.mrb[0].mxu0
  %5741 = vdwg.mxu0
  %5742 = vmatprep.subr.bf16.mxu0 0
  %5743 = vmatpush1.bf16.msra.mxu0 %v3940
  %5744 = vmatprep.subr.bf16.mxu0 0
  %5745 = vmatpush1.bf16.msra.mxu0 %v3941
  %5746 = vmatprep.subr.bf16.mxu0 0
  %5747 = vmatpush1.bf16.msra.mxu0 %v3942
  %5748 = vmatprep.subr.bf16.mxu0 0
  %5749 = vmatpush1.bf16.msra.mxu0 %v3943
  %5750 = vmatprep.subr.bf16.mxu0 0
  %5751 = vmatpush1.bf16.msra.mxu0 %v3944
  %5752 = vmatprep.subr.bf16.mxu0 0
  %5753 = vmatpush1.bf16.msra.mxu0 %v3945
  %5754 = vmatprep.subr.bf16.mxu0 0
  %5755 = vmatpush1.bf16.msra.mxu0 %v3946
  %5756 = vmatprep.subr.bf16.mxu0 0
  %5757 = vmatpush1.bf16.msra.mxu0 %v3947
  %5758 = vmatprep.subr.bf16.mxu0 0
  %5759 = vmatpush1.bf16.msra.mxu0 0
  %5760 = vmatprep.subr.bf16.mxu0 0
  %5761 = vmatpush1.bf16.msra.mxu0 0
  %5762 = vmatprep.subr.bf16.mxu0 0
  %5763 = vmatpush1.bf16.msra.mxu0 0
  %5764 = vmatprep.subr.bf16.mxu0 0
  %5765 = vmatpush1.bf16.msra.mxu0 0
  %5766 = vmatprep.subr.bf16.mxu0 0
  %5767 = vmatpush1.bf16.msra.mxu0 0
  %5768 = vmatprep.subr.bf16.mxu0 0
  %5769 = vmatpush1.bf16.msra.mxu0 0
  %5770 = vmatprep.subr.bf16.mxu0 0
  %5771 = vmatpush1.bf16.msra.mxu0 0
  %5772 = vmatprep.subr.bf16.mxu0 0
  %5773 = vmatpush1.bf16.msra.mxu0 0
  %5774 = vmatprep.mubr.bf16.mxu0 0
  %5775 = vmatmul.mubr.bf16.gmra.mrb[0].mxu0 %v5308
  %v5776 = vpop.f32.mrb[0].mxu0
  %v5777 = vadd.f32 %v5680, %v5776
  %v5778 = vpop.f32.mrb[0].mxu0
  %v5779 = vpop.f32.mrb[0].mxu0
  %v5780 = vadd.f32 %v5683, %v5779
  %v5781 = vpop.f32.mrb[0].mxu0
  %5782 = vmatprep.mubr.bf16.mxu0 0
  %5783 = vmatmul.mubr.bf16.gmra.mrb[0].mxu0 %v5314
  %v5784 = vpop.f32.mrb[0].mxu0
  %v5785 = vadd.f32 %v5688, %v5784
  %v5786 = vpop.f32.mrb[0].mxu0
  %v5787 = vpop.f32.mrb[0].mxu0
  %v5788 = vadd.f32 %v5691, %v5787
  %v5789 = vpop.f32.mrb[0].mxu0
  %5790 = vmatprep.mubr.bf16.mxu0 0
  %5791 = vmatmul.mubr.bf16.gmra.mrb[0].mxu0 %v5320
  %v5792 = vpop.f32.mrb[0].mxu0
  %v5793 = vadd.f32 %v5696, %v5792
  %v5794 = vpop.f32.mrb[0].mxu0
  %v5795 = vpop.f32.mrb[0].mxu0
  %v5796 = vadd.f32 %v5699, %v5795
  %v5797 = vpop.f32.mrb[0].mxu0
  %5798 = vmatprep.mubr.bf16.mxu0 0
  %5799 = vmatmul.mubr.bf16.gmra.mrb[0].mxu0 %v5326
  %v5800 = vpop.f32.mrb[0].mxu0
  %v5801 = vadd.f32 %v5704, %v5800
  %v5802 = vpop.f32.mrb[0].mxu0
  %v5803 = vpop.f32.mrb[0].mxu0
  %v5804 = vadd.f32 %v5707, %v5803
  %v5805 = vpop.f32.mrb[0].mxu0
  %5806 = vmatprep.mubr.bf16.mxu0 0
  %5807 = vmatmul.mubr.bf16.gmra.mrb[0].mxu0 %v5335
  %v5808 = vpop.f32.mrb[0].mxu0
  %v5809 = vadd.f32 %v5712, %v5808
  %v5810 = vpop.f32.mrb[0].mxu0
  %v5811 = vpop.f32.mrb[0].mxu0
  %v5812 = vadd.f32 %v5715, %v5811
  %v5813 = vpop.f32.mrb[0].mxu0
  %5814 = vmatprep.mubr.bf16.mxu0 0
  %5815 = vmatmul.mubr.bf16.gmra.mrb[0].mxu0 %v5341
  %v5816 = vpop.f32.mrb[0].mxu0
  %v5817 = vadd.f32 %v5720, %v5816
  %v5818 = vpop.f32.mrb[0].mxu0
  %v5819 = vpop.f32.mrb[0].mxu0
  %v5820 = vadd.f32 %v5723, %v5819
  %v5821 = vpop.f32.mrb[0].mxu0
  %5822 = vmatprep.mubr.bf16.mxu0 0
  %5823 = vmatmul.mubr.bf16.gmra.mrb[0].mxu0 %v5347
  %v5824 = vpop.f32.mrb[0].mxu0
  %v5825 = vadd.f32 %v5728, %v5824
  %v5826 = vpop.f32.mrb[0].mxu0
  %v5827 = vpop.f32.mrb[0].mxu0
  %v5828 = vadd.f32 %v5731, %v5827
  %v5829 = vpop.f32.mrb[0].mxu0
  %5830 = vmatprep.mubr.bf16.mxu0 0
  %5831 = vmatmul.mubr.bf16.gmra.mrb[0].mxu0 %v5353
  %v5832 = vpop.f32.mrb[0].mxu0
  %v5833 = vadd.f32 %v5736, %v5832
  %v5834 = vpop.f32.mrb[0].mxu0
  %v5835 = vpop.f32.mrb[0].mxu0
  %v5836 = vadd.f32 %v5739, %v5835
  %v5837 = vpop.f32.mrb[0].mxu0
  %5838 = vdwg.mxu0
  %v5839 = vmax.f32 %v5777, 0.0
  %v5840 = vmax.f32 %v5780, 0.0
  %v5841 = vmax.f32 %v5785, 0.0
  %v5842 = vmax.f32 %v5788, 0.0
  %v5843 = vmax.f32 %v5793, 0.0
  %v5844 = vmax.f32 %v5796, 0.0
  %v5845 = vmax.f32 %v5801, 0.0
  %v5846 = vmax.f32 %v5804, 0.0
  %v5847 = vmax.f32 %v5809, 0.0
  %v5848 = vmax.f32 %v5812, 0.0
  %v5849 = vmax.f32 %v5817, 0.0
  %v5850 = vmax.f32 %v5820, 0.0
  %v5851 = vmax.f32 %v5825, 0.0
  %v5852 = vmax.f32 %v5828, 0.0
  %v5853 = vmax.f32 %v5833, 0.0
  %v5854 = vmax.f32 %v5836, 0.0
  %v5869 = vrot.slane %v5839, 7
  %v5870 = vsel %vm120, %v121, %v5869
  %v5871 = vrot.slane %v5840, 7
  %v5872 = vsel %vm120, %v121, %v5871
  %v5873 = vrot.slane %v5841, 7
  %v5874 = vsel %vm120, %v121, %v5873
  %v5875 = vrot.slane %v5842, 7
  %v5876 = vsel %vm120, %v121, %v5875
  %v5877 = vrot.slane %v5843, 7
  %v5878 = vsel %vm120, %v121, %v5877
  %v5879 = vrot.slane %v5844, 7
  %v5880 = vsel %vm120, %v121, %v5879
  %v5881 = vrot.slane %v5845, 7
  %v5882 = vsel %vm120, %v121, %v5881
  %v5883 = vrot.slane %v5847, 7
  %v5884 = vsel %vm120, %v121, %v5883
  %v5885 = vrot.slane %v5848, 7
  %v5886 = vsel %vm120, %v121, %v5885
  %v5887 = vrot.slane %v5849, 7
  %v5888 = vsel %vm120, %v121, %v5887
  %v5889 = vrot.slane %v5850, 7
  %v5890 = vsel %vm120, %v121, %v5889
  %v5891 = vrot.slane %v5851, 7
  %v5892 = vsel %vm120, %v121, %v5891
  %v5893 = vrot.slane %v5852, 7
  %v5894 = vsel %vm120, %v121, %v5893
  %v5895 = vrot.slane %v5853, 7
  %v5896 = vsel %vm120, %v121, %v5895
  %v5911 = vrot.slane %v5839, 1
  %v5912 = vsel %vm160, %v5911, %v161
  %v5913 = vrot.slane %v5840, 1
  %v5914 = vsel %vm160, %v5913, %v161
  %v5915 = vrot.slane %v5841, 1
  %v5916 = vsel %vm160, %v5915, %v161
  %v5917 = vrot.slane %v5842, 1
  %v5918 = vsel %vm160, %v5917, %v161
  %v5919 = vrot.slane %v5843, 1
  %v5920 = vsel %vm160, %v5919, %v161
  %v5921 = vrot.slane %v5844, 1
  %v5922 = vsel %vm160, %v5921, %v161
  %v5923 = vrot.slane %v5845, 1
  %v5924 = vsel %vm160, %v5923, %v161
  %v5925 = vrot.slane %v5847, 1
  %v5926 = vsel %vm160, %v5925, %v161
  %v5927 = vrot.slane %v5848, 1
  %v5928 = vsel %vm160, %v5927, %v161
  %v5929 = vrot.slane %v5849, 1
  %v5930 = vsel %vm160, %v5929, %v161
  %v5931 = vrot.slane %v5850, 1
  %v5932 = vsel %vm160, %v5931, %v161
  %v5933 = vrot.slane %v5851, 1
  %v5934 = vsel %vm160, %v5933, %v161
  %v5935 = vrot.slane %v5852, 1
  %v5936 = vsel %vm160, %v5935, %v161
  %v5937 = vrot.slane %v5853, 1
  %v5938 = vsel %vm160, %v5937, %v161
  %v5955 = vrot.slane %v5846, 7
  %v5956 = vsel %vm120, %v121, %v5955
  %v5957 = vrot.slane %v5854, 7
  %v5958 = vsel %vm120, %v121, %v5957
  %v5961 = vrot.slane %v5846, 1
  %v5962 = vsel %vm160, %v5961, %v161
  %v5963 = vrot.slane %v5854, 1
  %v5964 = vsel %vm160, %v5963, %v161
  %v5967 = vpack.c.bf16 %v5870, %v122
  %v5968 = vpack.c.bf16 %v5839, 0.0
  %v5969 = vpack.c.bf16 %v5912, %v162
  %v5970 = vpack.c.bf16 %v5872, %v5870
  %v5971 = vpack.c.bf16 %v5840, %v5839
  %v5972 = vpack.c.bf16 %v5914, %v5912
  %v5973 = vpack.c.bf16 %v5874, %v5872
  %v5974 = vpack.c.bf16 %v5841, %v5840
  %v5975 = vpack.c.bf16 %v5916, %v5914
  %v5976 = vpack.c.bf16 %v5876, %v5874
  %v5977 = vpack.c.bf16 %v5842, %v5841
  %v5978 = vpack.c.bf16 %v5918, %v5916
  %v5979 = vpack.c.bf16 %v5878, %v5876
  %v5980 = vpack.c.bf16 %v5843, %v5842
  %v5981 = vpack.c.bf16 %v5920, %v5918
  %v5982 = vpack.c.bf16 %v5880, %v5878
  %v5983 = vpack.c.bf16 %v5844, %v5843
  %v5984 = vpack.c.bf16 %v5922, %v5920
  %v5985 = vpack.c.bf16 %v5882, %v5880
  %v5986 = vpack.c.bf16 %v5845, %v5844
  %v5987 = vpack.c.bf16 %v5924, %v5922
  %v5988 = vpack.c.bf16 %v5956, %v5882
  %v5989 = vpack.c.bf16 %v5846, %v5845
  %v5990 = vpack.c.bf16 %v5962, %v5924
  %v5991 = vpack.c.bf16 %v122, %v5956
  %v5992 = vpack.c.bf16 0.0, %v5846
  %v5993 = vpack.c.bf16 %v162, %v5962
  %v5994 = vpack.c.bf16 %v5884, %v122
  %v5995 = vpack.c.bf16 %v5847, 0.0
  %v5996 = vpack.c.bf16 %v5926, %v162
  %v5997 = vpack.c.bf16 %v5886, %v5884
  %v5998 = vpack.c.bf16 %v5848, %v5847
  %v5999 = vpack.c.bf16 %v5928, %v5926
  %v6000 = vpack.c.bf16 %v5888, %v5886
  %v6001 = vpack.c.bf16 %v5849, %v5848
  %v6002 = vpack.c.bf16 %v5930, %v5928
  %v6003 = vpack.c.bf16 %v5890, %v5888
  %v6004 = vpack.c.bf16 %v5850, %v5849
  %v6005 = vpack.c.bf16 %v5932, %v5930
  %v6006 = vpack.c.bf16 %v5892, %v5890
  %v6007 = vpack.c.bf16 %v5851, %v5850
  %v6008 = vpack.c.bf16 %v5934, %v5932
  %v6009 = vpack.c.bf16 %v5894, %v5892
  %v6010 = vpack.c.bf16 %v5852, %v5851
  %v6011 = vpack.c.bf16 %v5936, %v5934
  %v6012 = vpack.c.bf16 %v5896, %v5894
  %v6013 = vpack.c.bf16 %v5853, %v5852
  %v6014 = vpack.c.bf16 %v5938, %v5936
  %v6015 = vpack.c.bf16 %v5958, %v5896
  %v6016 = vpack.c.bf16 %v5854, %v5853
  %v6017 = vpack.c.bf16 %v5964, %v5938
  %v6018 = vpack.c.bf16 %v122, %v5958
  %v6019 = vpack.c.bf16 0.0, %v5854
  %v6020 = vpack.c.bf16 %v162, %v5964
  %6021 = vmatprep.subr.bf16.mxu0 0
  %6022 = vmatpush1.bf16.msra.mxu0 %v3876
  %6023 = vmatprep.subr.bf16.mxu0 0
  %6024 = vmatpush1.bf16.msra.mxu0 %v3877
  %6025 = vmatprep.subr.bf16.mxu0 0
  %6026 = vmatpush1.bf16.msra.mxu0 %v3878
  %6027 = vmatprep.subr.bf16.mxu0 0
  %6028 = vmatpush1.bf16.msra.mxu0 %v3879
  %6029 = vmatprep.subr.bf16.mxu0 0
  %6030 = vmatpush1.bf16.msra.mxu0 %v3880
  %6031 = vmatprep.subr.bf16.mxu0 0
  %6032 = vmatpush1.bf16.msra.mxu0 %v3881
  %6033 = vmatprep.subr.bf16.mxu0 0
  %6034 = vmatpush1.bf16.msra.mxu0 %v3882
  %6035 = vmatprep.subr.bf16.mxu0 0
  %6036 = vmatpush1.bf16.msra.mxu0 %v3883
  %6037 = vmatprep.subr.bf16.mxu0 0
  %6038 = vmatpush1.bf16.msra.mxu0 %v3884
  %6039 = vmatprep.subr.bf16.mxu0 0
  %6040 = vmatpush1.bf16.msra.mxu0 %v3885
  %6041 = vmatprep.subr.bf16.mxu0 0
  %6042 = vmatpush1.bf16.msra.mxu0 %v3886
  %6043 = vmatprep.subr.bf16.mxu0 0
  %6044 = vmatpush1.bf16.msra.mxu0 %v3887
  %6045 = vmatprep.subr.bf16.mxu0 0
  %6046 = vmatpush1.bf16.msra.mxu0 %v3888
  %6047 = vmatprep.subr.bf16.mxu0 0
  %6048 = vmatpush1.bf16.msra.mxu0 %v3889
  %6049 = vmatprep.subr.bf16.mxu0 0
  %6050 = vmatpush1.bf16.msra.mxu0 %v3890
  %6051 = vmatprep.subr.bf16.mxu0 0
  %6052 = vmatpush1.bf16.msra.mxu0 %v3891
  %6053 = vmatprep.mubr.bf16.mxu0 %v5968
  %6054 = vmatmul.mubr.bf16.gmra.mrb[0].mxu0 %v5967
  %v6055 = vpop.f32.mrb[0].mxu0
  %v6056 = vadd.f32 %v3586, %v6055
  %v6057 = vpop.f32.mrb[0].mxu0
  %v6058 = vpop.f32.mrb[0].mxu0
  %v6059 = vadd.f32 %v3586, %v6058
  %v6060 = vpop.f32.mrb[0].mxu0
  %6061 = vmatprep.mubr.bf16.mxu0 %v5974
  %6062 = vmatmul.mubr.bf16.gmra.mrb[0].mxu0 %v5973
  %v6063 = vpop.f32.mrb[0].mxu0
  %v6064 = vadd.f32 %v3586, %v6063
  %v6065 = vpop.f32.mrb[0].mxu0
  %v6066 = vpop.f32.mrb[0].mxu0
  %v6067 = vadd.f32 %v3586, %v6066
  %v6068 = vpop.f32.mrb[0].mxu0
  %6069 = vmatprep.mubr.bf16.mxu0 %v5980
  %6070 = vmatmul.mubr.bf16.gmra.mrb[0].mxu0 %v5979
  %v6071 = vpop.f32.mrb[0].mxu0
  %v6072 = vadd.f32 %v3586, %v6071
  %v6073 = vpop.f32.mrb[0].mxu0
  %v6074 = vpop.f32.mrb[0].mxu0
  %v6075 = vadd.f32 %v3586, %v6074
  %v6076 = vpop.f32.mrb[0].mxu0
  %6077 = vmatprep.mubr.bf16.mxu0 %v5986
  %6078 = vmatmul.mubr.bf16.gmra.mrb[0].mxu0 %v5985
  %v6079 = vpop.f32.mrb[0].mxu0
  %v6080 = vadd.f32 %v3586, %v6079
  %v6081 = vpop.f32.mrb[0].mxu0
  %v6082 = vpop.f32.mrb[0].mxu0
  %v6083 = vadd.f32 %v3586, %v6082
  %v6084 = vpop.f32.mrb[0].mxu0
  %6085 = vmatprep.mubr.bf16.mxu0 %v5995
  %6086 = vmatmul.mubr.bf16.gmra.mrb[0].mxu0 %v5994
  %v6087 = vpop.f32.mrb[0].mxu0
  %v6088 = vadd.f32 %v3586, %v6087
  %v6089 = vpop.f32.mrb[0].mxu0
  %v6090 = vpop.f32.mrb[0].mxu0
  %v6091 = vadd.f32 %v3586, %v6090
  %v6092 = vpop.f32.mrb[0].mxu0
  %6093 = vmatprep.mubr.bf16.mxu0 %v6001
  %6094 = vmatmul.mubr.bf16.gmra.mrb[0].mxu0 %v6000
  %v6095 = vpop.f32.mrb[0].mxu0
  %v6096 = vadd.f32 %v3586, %v6095
  %v6097 = vpop.f32.mrb[0].mxu0
  %v6098 = vpop.f32.mrb[0].mxu0
  %v6099 = vadd.f32 %v3586, %v6098
  %v6100 = vpop.f32.mrb[0].mxu0
  %6101 = vmatprep.mubr.bf16.mxu0 %v6007
  %6102 = vmatmul.mubr.bf16.gmra.mrb[0].mxu0 %v6006
  %v6103 = vpop.f32.mrb[0].mxu0
  %v6104 = vadd.f32 %v3586, %v6103
  %v6105 = vpop.f32.mrb[0].mxu0
  %v6106 = vpop.f32.mrb[0].mxu0
  %v6107 = vadd.f32 %v3586, %v6106
  %v6108 = vpop.f32.mrb[0].mxu0
  %6109 = vmatprep.mubr.bf16.mxu0 %v6013
  %6110 = vmatmul.mubr.bf16.gmra.mrb[0].mxu0 %v6012
  %v6111 = vpop.f32.mrb[0].mxu0
  %v6112 = vadd.f32 %v3586, %v6111
  %v6113 = vpop.f32.mrb[0].mxu0
  %v6114 = vpop.f32.mrb[0].mxu0
  %v6115 = vadd.f32 %v3586, %v6114
  %v6116 = vpop.f32.mrb[0].mxu0
  %6117 = vdwg.mxu0
  %6118 = vmatprep.subr.bf16.mxu0 0
  %6119 = vmatpush1.bf16.msra.mxu0 %v3892
  %6120 = vmatprep.subr.bf16.mxu0 0
  %6121 = vmatpush1.bf16.msra.mxu0 %v3893
  %6122 = vmatprep.subr.bf16.mxu0 0
  %6123 = vmatpush1.bf16.msra.mxu0 %v3894
  %6124 = vmatprep.subr.bf16.mxu0 0
  %6125 = vmatpush1.bf16.msra.mxu0 %v3895
  %6126 = vmatprep.subr.bf16.mxu0 0
  %6127 = vmatpush1.bf16.msra.mxu0 %v3896
  %6128 = vmatprep.subr.bf16.mxu0 0
  %6129 = vmatpush1.bf16.msra.mxu0 %v3897
  %6130 = vmatprep.subr.bf16.mxu0 0
  %6131 = vmatpush1.bf16.msra.mxu0 %v3898
  %6132 = vmatprep.subr.bf16.mxu0 0
  %6133 = vmatpush1.bf16.msra.mxu0 %v3899
  %6134 = vmatprep.subr.bf16.mxu0 0
  %6135 = vmatpush1.bf16.msra.mxu0 %v3900
  %6136 = vmatprep.subr.bf16.mxu0 0
  %6137 = vmatpush1.bf16.msra.mxu0 %v3901
  %6138 = vmatprep.subr.bf16.mxu0 0
  %6139 = vmatpush1.bf16.msra.mxu0 %v3902
  %6140 = vmatprep.subr.bf16.mxu0 0
  %6141 = vmatpush1.bf16.msra.mxu0 %v3903
  %6142 = vmatprep.subr.bf16.mxu0 0
  %6143 = vmatpush1.bf16.msra.mxu0 %v3904
  %6144 = vmatprep.subr.bf16.mxu0 0
  %6145 = vmatpush1.bf16.msra.mxu0 %v3905
  %6146 = vmatprep.subr.bf16.mxu0 0
  %6147 = vmatpush1.bf16.msra.mxu0 %v3906
  %6148 = vmatprep.subr.bf16.mxu0 0
  %6149 = vmatpush1.bf16.msra.mxu0 %v3907
  %6150 = vmatprep.mubr.bf16.mxu0 %v5970
  %6151 = vmatmul.mubr.bf16.gmra.mrb[0].mxu0 %v5969
  %v6152 = vpop.f32.mrb[0].mxu0
  %v6153 = vadd.f32 %v6056, %v6152
  %v6154 = vpop.f32.mrb[0].mxu0
  %v6155 = vpop.f32.mrb[0].mxu0
  %v6156 = vadd.f32 %v6059, %v6155
  %v6157 = vpop.f32.mrb[0].mxu0
  %6158 = vmatprep.mubr.bf16.mxu0 %v5976
  %6159 = vmatmul.mubr.bf16.gmra.mrb[0].mxu0 %v5975
  %v6160 = vpop.f32.mrb[0].mxu0
  %v6161 = vadd.f32 %v6064, %v6160
  %v6162 = vpop.f32.mrb[0].mxu0
  %v6163 = vpop.f32.mrb[0].mxu0
  %v6164 = vadd.f32 %v6067, %v6163
  %v6165 = vpop.f32.mrb[0].mxu0
  %6166 = vmatprep.mubr.bf16.mxu0 %v5982
  %6167 = vmatmul.mubr.bf16.gmra.mrb[0].mxu0 %v5981
  %v6168 = vpop.f32.mrb[0].mxu0
  %v6169 = vadd.f32 %v6072, %v6168
  %v6170 = vpop.f32.mrb[0].mxu0
  %v6171 = vpop.f32.mrb[0].mxu0
  %v6172 = vadd.f32 %v6075, %v6171
  %v6173 = vpop.f32.mrb[0].mxu0
  %6174 = vmatprep.mubr.bf16.mxu0 %v5988
  %6175 = vmatmul.mubr.bf16.gmra.mrb[0].mxu0 %v5987
  %v6176 = vpop.f32.mrb[0].mxu0
  %v6177 = vadd.f32 %v6080, %v6176
  %v6178 = vpop.f32.mrb[0].mxu0
  %v6179 = vpop.f32.mrb[0].mxu0
  %v6180 = vadd.f32 %v6083, %v6179
  %v6181 = vpop.f32.mrb[0].mxu0
  %6182 = vmatprep.mubr.bf16.mxu0 %v5997
  %6183 = vmatmul.mubr.bf16.gmra.mrb[0].mxu0 %v5996
  %v6184 = vpop.f32.mrb[0].mxu0
  %v6185 = vadd.f32 %v6088, %v6184
  %v6186 = vpop.f32.mrb[0].mxu0
  %v6187 = vpop.f32.mrb[0].mxu0
  %v6188 = vadd.f32 %v6091, %v6187
  %v6189 = vpop.f32.mrb[0].mxu0
  %6190 = vmatprep.mubr.bf16.mxu0 %v6003
  %6191 = vmatmul.mubr.bf16.gmra.mrb[0].mxu0 %v6002
  %v6192 = vpop.f32.mrb[0].mxu0
  %v6193 = vadd.f32 %v6096, %v6192
  %v6194 = vpop.f32.mrb[0].mxu0
  %v6195 = vpop.f32.mrb[0].mxu0
  %v6196 = vadd.f32 %v6099, %v6195
  %v6197 = vpop.f32.mrb[0].mxu0
  %6198 = vmatprep.mubr.bf16.mxu0 %v6009
  %6199 = vmatmul.mubr.bf16.gmra.mrb[0].mxu0 %v6008
  %v6200 = vpop.f32.mrb[0].mxu0
  %v6201 = vadd.f32 %v6104, %v6200
  %v6202 = vpop.f32.mrb[0].mxu0
  %v6203 = vpop.f32.mrb[0].mxu0
  %v6204 = vadd.f32 %v6107, %v6203
  %v6205 = vpop.f32.mrb[0].mxu0
  %6206 = vmatprep.mubr.bf16.mxu0 %v6015
  %6207 = vmatmul.mubr.bf16.gmra.mrb[0].mxu0 %v6014
  %v6208 = vpop.f32.mrb[0].mxu0
  %v6209 = vadd.f32 %v6112, %v6208
  %v6210 = vpop.f32.mrb[0].mxu0
  %v6211 = vpop.f32.mrb[0].mxu0
  %v6212 = vadd.f32 %v6115, %v6211
  %v6213 = vpop.f32.mrb[0].mxu0
  %6214 = vdwg.mxu0
  %6215 = vmatprep.subr.bf16.mxu0 0
  %6216 = vmatpush1.bf16.msra.mxu0 %v3908
  %6217 = vmatprep.subr.bf16.mxu0 0
  %6218 = vmatpush1.bf16.msra.mxu0 %v3909
  %6219 = vmatprep.subr.bf16.mxu0 0
  %6220 = vmatpush1.bf16.msra.mxu0 %v3910
  %6221 = vmatprep.subr.bf16.mxu0 0
  %6222 = vmatpush1.bf16.msra.mxu0 %v3911
  %6223 = vmatprep.subr.bf16.mxu0 0
  %6224 = vmatpush1.bf16.msra.mxu0 %v3912
  %6225 = vmatprep.subr.bf16.mxu0 0
  %6226 = vmatpush1.bf16.msra.mxu0 %v3913
  %6227 = vmatprep.subr.bf16.mxu0 0
  %6228 = vmatpush1.bf16.msra.mxu0 %v3914
  %6229 = vmatprep.subr.bf16.mxu0 0
  %6230 = vmatpush1.bf16.msra.mxu0 %v3915
  %6231 = vmatprep.subr.bf16.mxu0 0
  %6232 = vmatpush1.bf16.msra.mxu0 %v3916
  %6233 = vmatprep.subr.bf16.mxu0 0
  %6234 = vmatpush1.bf16.msra.mxu0 %v3917
  %6235 = vmatprep.subr.bf16.mxu0 0
  %6236 = vmatpush1.bf16.msra.mxu0 %v3918
  %6237 = vmatprep.subr.bf16.mxu0 0
  %6238 = vmatpush1.bf16.msra.mxu0 %v3919
  %6239 = vmatprep.subr.bf16.mxu0 0
  %6240 = vmatpush1.bf16.msra.mxu0 %v3920
  %6241 = vmatprep.subr.bf16.mxu0 0
  %6242 = vmatpush1.bf16.msra.mxu0 %v3921
  %6243 = vmatprep.subr.bf16.mxu0 0
  %6244 = vmatpush1.bf16.msra.mxu0 %v3922
  %6245 = vmatprep.subr.bf16.mxu0 0
  %6246 = vmatpush1.bf16.msra.mxu0 %v3923
  %6247 = vmatprep.mubr.bf16.mxu0 %v5972
  %6248 = vmatmul.mubr.bf16.gmra.mrb[0].mxu0 %v5971
  %v6249 = vpop.f32.mrb[0].mxu0
  %v6250 = vadd.f32 %v6153, %v6249
  %v6251 = vpop.f32.mrb[0].mxu0
  %v6252 = vpop.f32.mrb[0].mxu0
  %v6253 = vadd.f32 %v6156, %v6252
  %v6254 = vpop.f32.mrb[0].mxu0
  %6255 = vmatprep.mubr.bf16.mxu0 %v5978
  %6256 = vmatmul.mubr.bf16.gmra.mrb[0].mxu0 %v5977
  %v6257 = vpop.f32.mrb[0].mxu0
  %v6258 = vadd.f32 %v6161, %v6257
  %v6259 = vpop.f32.mrb[0].mxu0
  %v6260 = vpop.f32.mrb[0].mxu0
  %v6261 = vadd.f32 %v6164, %v6260
  %v6262 = vpop.f32.mrb[0].mxu0
  %6263 = vmatprep.mubr.bf16.mxu0 %v5984
  %6264 = vmatmul.mubr.bf16.gmra.mrb[0].mxu0 %v5983
  %v6265 = vpop.f32.mrb[0].mxu0
  %v6266 = vadd.f32 %v6169, %v6265
  %v6267 = vpop.f32.mrb[0].mxu0
  %v6268 = vpop.f32.mrb[0].mxu0
  %v6269 = vadd.f32 %v6172, %v6268
  %v6270 = vpop.f32.mrb[0].mxu0
  %6271 = vmatprep.mubr.bf16.mxu0 %v5990
  %6272 = vmatmul.mubr.bf16.gmra.mrb[0].mxu0 %v5989
  %v6273 = vpop.f32.mrb[0].mxu0
  %v6274 = vadd.f32 %v6177, %v6273
  %v6275 = vpop.f32.mrb[0].mxu0
  %v6276 = vpop.f32.mrb[0].mxu0
  %v6277 = vadd.f32 %v6180, %v6276
  %v6278 = vpop.f32.mrb[0].mxu0
  %6279 = vmatprep.mubr.bf16.mxu0 %v5999
  %6280 = vmatmul.mubr.bf16.gmra.mrb[0].mxu0 %v5998
  %v6281 = vpop.f32.mrb[0].mxu0
  %v6282 = vadd.f32 %v6185, %v6281
  %v6283 = vpop.f32.mrb[0].mxu0
  %v6284 = vpop.f32.mrb[0].mxu0
  %v6285 = vadd.f32 %v6188, %v6284
  %v6286 = vpop.f32.mrb[0].mxu0
  %6287 = vmatprep.mubr.bf16.mxu0 %v6005
  %6288 = vmatmul.mubr.bf16.gmra.mrb[0].mxu0 %v6004
  %v6289 = vpop.f32.mrb[0].mxu0
  %v6290 = vadd.f32 %v6193, %v6289
  %v6291 = vpop.f32.mrb[0].mxu0
  %v6292 = vpop.f32.mrb[0].mxu0
  %v6293 = vadd.f32 %v6196, %v6292
  %v6294 = vpop.f32.mrb[0].mxu0
  %6295 = vmatprep.mubr.bf16.mxu0 %v6011
  %6296 = vmatmul.mubr.bf16.gmra.mrb[0].mxu0 %v6010
  %v6297 = vpop.f32.mrb[0].mxu0
  %v6298 = vadd.f32 %v6201, %v6297
  %v6299 = vpop.f32.mrb[0].mxu0
  %v6300 = vpop.f32.mrb[0].mxu0
  %v6301 = vadd.f32 %v6204, %v6300
  %v6302 = vpop.f32.mrb[0].mxu0
  %6303 = vmatprep.mubr.bf16.mxu0 %v6017
  %6304 = vmatmul.mubr.bf16.gmra.mrb[0].mxu0 %v6016
  %v6305 = vpop.f32.mrb[0].mxu0
  %v6306 = vadd.f32 %v6209, %v6305
  %v6307 = vpop.f32.mrb[0].mxu0
  %v6308 = vpop.f32.mrb[0].mxu0
  %v6309 = vadd.f32 %v6212, %v6308
  %v6310 = vpop.f32.mrb[0].mxu0
  %6311 = vdwg.mxu0
  %6312 = vmatprep.subr.bf16.mxu0 0
  %6313 = vmatpush1.bf16.msra.mxu0 %v3924
  %6314 = vmatprep.subr.bf16.mxu0 0
  %6315 = vmatpush1.bf16.msra.mxu0 %v3925
  %6316 = vmatprep.subr.bf16.mxu0 0
  %6317 = vmatpush1.bf16.msra.mxu0 %v3926
  %6318 = vmatprep.subr.bf16.mxu0 0
  %6319 = vmatpush1.bf16.msra.mxu0 %v3927
  %6320 = vmatprep.subr.bf16.mxu0 0
  %6321 = vmatpush1.bf16.msra.mxu0 %v3928
  %6322 = vmatprep.subr.bf16.mxu0 0
  %6323 = vmatpush1.bf16.msra.mxu0 %v3929
  %6324 = vmatprep.subr.bf16.mxu0 0
  %6325 = vmatpush1.bf16.msra.mxu0 %v3930
  %6326 = vmatprep.subr.bf16.mxu0 0
  %6327 = vmatpush1.bf16.msra.mxu0 %v3931
  %6328 = vmatprep.subr.bf16.mxu0 0
  %6329 = vmatpush1.bf16.msra.mxu0 %v3932
  %6330 = vmatprep.subr.bf16.mxu0 0
  %6331 = vmatpush1.bf16.msra.mxu0 %v3933
  %6332 = vmatprep.subr.bf16.mxu0 0
  %6333 = vmatpush1.bf16.msra.mxu0 %v3934
  %6334 = vmatprep.subr.bf16.mxu0 0
  %6335 = vmatpush1.bf16.msra.mxu0 %v3935
  %6336 = vmatprep.subr.bf16.mxu0 0
  %6337 = vmatpush1.bf16.msra.mxu0 %v3936
  %6338 = vmatprep.subr.bf16.mxu0 0
  %6339 = vmatpush1.bf16.msra.mxu0 %v3937
  %6340 = vmatprep.subr.bf16.mxu0 0
  %6341 = vmatpush1.bf16.msra.mxu0 %v3938
  %6342 = vmatprep.subr.bf16.mxu0 0
  %6343 = vmatpush1.bf16.msra.mxu0 %v3939
  %6344 = vmatprep.mubr.bf16.mxu0 %v5974
  %6345 = vmatmul.mubr.bf16.gmra.mrb[0].mxu0 %v5973
  %v6346 = vpop.f32.mrb[0].mxu0
  %v6347 = vadd.f32 %v6250, %v6346
  %v6348 = vpop.f32.mrb[0].mxu0
  %v6349 = vpop.f32.mrb[0].mxu0
  %v6350 = vadd.f32 %v6253, %v6349
  %v6351 = vpop.f32.mrb[0].mxu0
  %6352 = vmatprep.mubr.bf16.mxu0 %v5980
  %6353 = vmatmul.mubr.bf16.gmra.mrb[0].mxu0 %v5979
  %v6354 = vpop.f32.mrb[0].mxu0
  %v6355 = vadd.f32 %v6258, %v6354
  %v6356 = vpop.f32.mrb[0].mxu0
  %v6357 = vpop.f32.mrb[0].mxu0
  %v6358 = vadd.f32 %v6261, %v6357
  %v6359 = vpop.f32.mrb[0].mxu0
  %6360 = vmatprep.mubr.bf16.mxu0 %v5986
  %6361 = vmatmul.mubr.bf16.gmra.mrb[0].mxu0 %v5985
  %v6362 = vpop.f32.mrb[0].mxu0
  %v6363 = vadd.f32 %v6266, %v6362
  %v6364 = vpop.f32.mrb[0].mxu0
  %v6365 = vpop.f32.mrb[0].mxu0
  %v6366 = vadd.f32 %v6269, %v6365
  %v6367 = vpop.f32.mrb[0].mxu0
  %6368 = vmatprep.mubr.bf16.mxu0 %v5992
  %6369 = vmatmul.mubr.bf16.gmra.mrb[0].mxu0 %v5991
  %v6370 = vpop.f32.mrb[0].mxu0
  %v6371 = vadd.f32 %v6274, %v6370
  %v6372 = vpop.f32.mrb[0].mxu0
  %v6373 = vpop.f32.mrb[0].mxu0
  %v6374 = vadd.f32 %v6277, %v6373
  %v6375 = vpop.f32.mrb[0].mxu0
  %6376 = vmatprep.mubr.bf16.mxu0 %v6001
  %6377 = vmatmul.mubr.bf16.gmra.mrb[0].mxu0 %v6000
  %v6378 = vpop.f32.mrb[0].mxu0
  %v6379 = vadd.f32 %v6282, %v6378
  %v6380 = vpop.f32.mrb[0].mxu0
  %v6381 = vpop.f32.mrb[0].mxu0
  %v6382 = vadd.f32 %v6285, %v6381
  %v6383 = vpop.f32.mrb[0].mxu0
  %6384 = vmatprep.mubr.bf16.mxu0 %v6007
  %6385 = vmatmul.mubr.bf16.gmra.mrb[0].mxu0 %v6006
  %v6386 = vpop.f32.mrb[0].mxu0
  %v6387 = vadd.f32 %v6290, %v6386
  %v6388 = vpop.f32.mrb[0].mxu0
  %v6389 = vpop.f32.mrb[0].mxu0
  %v6390 = vadd.f32 %v6293, %v6389
  %v6391 = vpop.f32.mrb[0].mxu0
  %6392 = vmatprep.mubr.bf16.mxu0 %v6013
  %6393 = vmatmul.mubr.bf16.gmra.mrb[0].mxu0 %v6012
  %v6394 = vpop.f32.mrb[0].mxu0
  %v6395 = vadd.f32 %v6298, %v6394
  %v6396 = vpop.f32.mrb[0].mxu0
  %v6397 = vpop.f32.mrb[0].mxu0
  %v6398 = vadd.f32 %v6301, %v6397
  %v6399 = vpop.f32.mrb[0].mxu0
  %6400 = vmatprep.mubr.bf16.mxu0 %v6019
  %6401 = vmatmul.mubr.bf16.gmra.mrb[0].mxu0 %v6018
  %v6402 = vpop.f32.mrb[0].mxu0
  %v6403 = vadd.f32 %v6306, %v6402
  %v6404 = vpop.f32.mrb[0].mxu0
  %v6405 = vpop.f32.mrb[0].mxu0
  %v6406 = vadd.f32 %v6309, %v6405
  %v6407 = vpop.f32.mrb[0].mxu0
  %6408 = vdwg.mxu0
  %6409 = vmatprep.subr.bf16.mxu0 0
  %6410 = vmatpush1.bf16.msra.mxu0 %v3940
  %6411 = vmatprep.subr.bf16.mxu0 0
  %6412 = vmatpush1.bf16.msra.mxu0 %v3941
  %6413 = vmatprep.subr.bf16.mxu0 0
  %6414 = vmatpush1.bf16.msra.mxu0 %v3942
  %6415 = vmatprep.subr.bf16.mxu0 0
  %6416 = vmatpush1.bf16.msra.mxu0 %v3943
  %6417 = vmatprep.subr.bf16.mxu0 0
  %6418 = vmatpush1.bf16.msra.mxu0 %v3944
  %6419 = vmatprep.subr.bf16.mxu0 0
  %6420 = vmatpush1.bf16.msra.mxu0 %v3945
  %6421 = vmatprep.subr.bf16.mxu0 0
  %6422 = vmatpush1.bf16.msra.mxu0 %v3946
  %6423 = vmatprep.subr.bf16.mxu0 0
  %6424 = vmatpush1.bf16.msra.mxu0 %v3947
  %6425 = vmatprep.subr.bf16.mxu0 0
  %6426 = vmatpush1.bf16.msra.mxu0 0
  %6427 = vmatprep.subr.bf16.mxu0 0
  %6428 = vmatpush1.bf16.msra.mxu0 0
  %6429 = vmatprep.subr.bf16.mxu0 0
  %6430 = vmatpush1.bf16.msra.mxu0 0
  %6431 = vmatprep.subr.bf16.mxu0 0
  %6432 = vmatpush1.bf16.msra.mxu0 0
  %6433 = vmatprep.subr.bf16.mxu0 0
  %6434 = vmatpush1.bf16.msra.mxu0 0
  %6435 = vmatprep.subr.bf16.mxu0 0
  %6436 = vmatpush1.bf16.msra.mxu0 0
  %6437 = vmatprep.subr.bf16.mxu0 0
  %6438 = vmatpush1.bf16.msra.mxu0 0
  %6439 = vmatprep.subr.bf16.mxu0 0
  %6440 = vmatpush1.bf16.msra.mxu0 0
  %6441 = vmatprep.mubr.bf16.mxu0 0
  %6442 = vmatmul.mubr.bf16.gmra.mrb[0].mxu0 %v5975
  %v6443 = vpop.f32.mrb[0].mxu0
  %v6444 = vadd.f32 %v6347, %v6443
  %v6445 = vpop.f32.mrb[0].mxu0
  %v6446 = vpop.f32.mrb[0].mxu0
  %v6447 = vadd.f32 %v6350, %v6446
  %v6448 = vpop.f32.mrb[0].mxu0
  %6449 = vmatprep.mubr.bf16.mxu0 0
  %6450 = vmatmul.mubr.bf16.gmra.mrb[0].mxu0 %v5981
  %v6451 = vpop.f32.mrb[0].mxu0
  %v6452 = vadd.f32 %v6355, %v6451
  %v6453 = vpop.f32.mrb[0].mxu0
  %v6454 = vpop.f32.mrb[0].mxu0
  %v6455 = vadd.f32 %v6358, %v6454
  %v6456 = vpop.f32.mrb[0].mxu0
  %6457 = vmatprep.mubr.bf16.mxu0 0
  %6458 = vmatmul.mubr.bf16.gmra.mrb[0].mxu0 %v5987
  %v6459 = vpop.f32.mrb[0].mxu0
  %v6460 = vadd.f32 %v6363, %v6459
  %v6461 = vpop.f32.mrb[0].mxu0
  %v6462 = vpop.f32.mrb[0].mxu0
  %v6463 = vadd.f32 %v6366, %v6462
  %v6464 = vpop.f32.mrb[0].mxu0
  %6465 = vmatprep.mubr.bf16.mxu0 0
  %6466 = vmatmul.mubr.bf16.gmra.mrb[0].mxu0 %v5993
  %v6467 = vpop.f32.mrb[0].mxu0
  %v6468 = vadd.f32 %v6371, %v6467
  %v6469 = vpop.f32.mrb[0].mxu0
  %v6470 = vpop.f32.mrb[0].mxu0
  %v6471 = vadd.f32 %v6374, %v6470
  %v6472 = vpop.f32.mrb[0].mxu0
  %6473 = vmatprep.mubr.bf16.mxu0 0
  %6474 = vmatmul.mubr.bf16.gmra.mrb[0].mxu0 %v6002
  %v6475 = vpop.f32.mrb[0].mxu0
  %v6476 = vadd.f32 %v6379, %v6475
  %v6477 = vpop.f32.mrb[0].mxu0
  %v6478 = vpop.f32.mrb[0].mxu0
  %v6479 = vadd.f32 %v6382, %v6478
  %v6480 = vpop.f32.mrb[0].mxu0
  %6481 = vmatprep.mubr.bf16.mxu0 0
  %6482 = vmatmul.mubr.bf16.gmra.mrb[0].mxu0 %v6008
  %v6483 = vpop.f32.mrb[0].mxu0
  %v6484 = vadd.f32 %v6387, %v6483
  %v6485 = vpop.f32.mrb[0].mxu0
  %v6486 = vpop.f32.mrb[0].mxu0
  %v6487 = vadd.f32 %v6390, %v6486
  %v6488 = vpop.f32.mrb[0].mxu0
  %6489 = vmatprep.mubr.bf16.mxu0 0
  %6490 = vmatmul.mubr.bf16.gmra.mrb[0].mxu0 %v6014
  %v6491 = vpop.f32.mrb[0].mxu0
  %v6492 = vadd.f32 %v6395, %v6491
  %v6493 = vpop.f32.mrb[0].mxu0
  %v6494 = vpop.f32.mrb[0].mxu0
  %v6495 = vadd.f32 %v6398, %v6494
  %v6496 = vpop.f32.mrb[0].mxu0
  %6497 = vmatprep.mubr.bf16.mxu0 0
  %6498 = vmatmul.mubr.bf16.gmra.mrb[0].mxu0 %v6020
  %v6499 = vpop.f32.mrb[0].mxu0
  %v6500 = vadd.f32 %v6403, %v6499
  %v6501 = vpop.f32.mrb[0].mxu0
  %v6502 = vpop.f32.mrb[0].mxu0
  %v6503 = vadd.f32 %v6406, %v6502
  %v6504 = vpop.f32.mrb[0].mxu0
  %6505 = vdwg.mxu0
  %v6506 = vmax.f32 %v6444, 0.0
  %v6507 = vmax.f32 %v6447, 0.0
  %v6508 = vmax.f32 %v6452, 0.0
  %v6509 = vmax.f32 %v6455, 0.0
  %v6510 = vmax.f32 %v6460, 0.0
  %v6511 = vmax.f32 %v6463, 0.0
  %v6512 = vmax.f32 %v6468, 0.0
  %v6513 = vmax.f32 %v6471, 0.0
  %v6514 = vmax.f32 %v6476, 0.0
  %v6515 = vmax.f32 %v6479, 0.0
  %v6516 = vmax.f32 %v6484, 0.0
  %v6517 = vmax.f32 %v6487, 0.0
  %v6518 = vmax.f32 %v6492, 0.0
  %v6519 = vmax.f32 %v6495, 0.0
  %v6520 = vmax.f32 %v6500, 0.0
  %v6521 = vmax.f32 %v6503, 0.0
  %v6536 = vrot.slane %v6506, 7
  %v6537 = vsel %vm120, %v121, %v6536
  %v6538 = vrot.slane %v6507, 7
  %v6539 = vsel %vm120, %v121, %v6538
  %v6540 = vrot.slane %v6508, 7
  %v6541 = vsel %vm120, %v121, %v6540
  %v6542 = vrot.slane %v6509, 7
  %v6543 = vsel %vm120, %v121, %v6542
  %v6544 = vrot.slane %v6510, 7
  %v6545 = vsel %vm120, %v121, %v6544
  %v6546 = vrot.slane %v6511, 7
  %v6547 = vsel %vm120, %v121, %v6546
  %v6548 = vrot.slane %v6512, 7
  %v6549 = vsel %vm120, %v121, %v6548
  %v6550 = vrot.slane %v6514, 7
  %v6551 = vsel %vm120, %v121, %v6550
  %v6552 = vrot.slane %v6515, 7
  %v6553 = vsel %vm120, %v121, %v6552
  %v6554 = vrot.slane %v6516, 7
  %v6555 = vsel %vm120, %v121, %v6554
  %v6556 = vrot.slane %v6517, 7
  %v6557 = vsel %vm120, %v121, %v6556
  %v6558 = vrot.slane %v6518, 7
  %v6559 = vsel %vm120, %v121, %v6558
  %v6560 = vrot.slane %v6519, 7
  %v6561 = vsel %vm120, %v121, %v6560
  %v6562 = vrot.slane %v6520, 7
  %v6563 = vsel %vm120, %v121, %v6562
  %v6578 = vrot.slane %v6506, 1
  %v6579 = vsel %vm160, %v6578, %v161
  %v6580 = vrot.slane %v6507, 1
  %v6581 = vsel %vm160, %v6580, %v161
  %v6582 = vrot.slane %v6508, 1
  %v6583 = vsel %vm160, %v6582, %v161
  %v6584 = vrot.slane %v6509, 1
  %v6585 = vsel %vm160, %v6584, %v161
  %v6586 = vrot.slane %v6510, 1
  %v6587 = vsel %vm160, %v6586, %v161
  %v6588 = vrot.slane %v6511, 1
  %v6589 = vsel %vm160, %v6588, %v161
  %v6590 = vrot.slane %v6512, 1
  %v6591 = vsel %vm160, %v6590, %v161
  %v6592 = vrot.slane %v6514, 1
  %v6593 = vsel %vm160, %v6592, %v161
  %v6594 = vrot.slane %v6515, 1
  %v6595 = vsel %vm160, %v6594, %v161
  %v6596 = vrot.slane %v6516, 1
  %v6597 = vsel %vm160, %v6596, %v161
  %v6598 = vrot.slane %v6517, 1
  %v6599 = vsel %vm160, %v6598, %v161
  %v6600 = vrot.slane %v6518, 1
  %v6601 = vsel %vm160, %v6600, %v161
  %v6602 = vrot.slane %v6519, 1
  %v6603 = vsel %vm160, %v6602, %v161
  %v6604 = vrot.slane %v6520, 1
  %v6605 = vsel %vm160, %v6604, %v161
  %v6622 = vrot.slane %v6513, 7
  %v6623 = vsel %vm120, %v121, %v6622
  %v6624 = vrot.slane %v6521, 7
  %v6625 = vsel %vm120, %v121, %v6624
  %v6628 = vrot.slane %v6513, 1
  %v6629 = vsel %vm160, %v6628, %v161
  %v6630 = vrot.slane %v6521, 1
  %v6631 = vsel %vm160, %v6630, %v161
  %v6634 = vpack.c.bf16 %v6537, %v122
  %v6635 = vpack.c.bf16 %v6506, 0.0
  %v6636 = vpack.c.bf16 %v6579, %v162
  %v6637 = vpack.c.bf16 %v6539, %v6537
  %v6638 = vpack.c.bf16 %v6507, %v6506
  %v6639 = vpack.c.bf16 %v6581, %v6579
  %v6640 = vpack.c.bf16 %v6541, %v6539
  %v6641 = vpack.c.bf16 %v6508, %v6507
  %v6642 = vpack.c.bf16 %v6583, %v6581
  %v6643 = vpack.c.bf16 %v6543, %v6541
  %v6644 = vpack.c.bf16 %v6509, %v6508
  %v6645 = vpack.c.bf16 %v6585, %v6583
  %v6646 = vpack.c.bf16 %v6545, %v6543
  %v6647 = vpack.c.bf16 %v6510, %v6509
  %v6648 = vpack.c.bf16 %v6587, %v6585
  %v6649 = vpack.c.bf16 %v6547, %v6545
  %v6650 = vpack.c.bf16 %v6511, %v6510
  %v6651 = vpack.c.bf16 %v6589, %v6587
  %v6652 = vpack.c.bf16 %v6549, %v6547
  %v6653 = vpack.c.bf16 %v6512, %v6511
  %v6654 = vpack.c.bf16 %v6591, %v6589
  %v6655 = vpack.c.bf16 %v6623, %v6549
  %v6656 = vpack.c.bf16 %v6513, %v6512
  %v6657 = vpack.c.bf16 %v6629, %v6591
  %v6658 = vpack.c.bf16 %v122, %v6623
  %v6659 = vpack.c.bf16 0.0, %v6513
  %v6660 = vpack.c.bf16 %v162, %v6629
  %v6661 = vpack.c.bf16 %v6551, %v122
  %v6662 = vpack.c.bf16 %v6514, 0.0
  %v6663 = vpack.c.bf16 %v6593, %v162
  %v6664 = vpack.c.bf16 %v6553, %v6551
  %v6665 = vpack.c.bf16 %v6515, %v6514
  %v6666 = vpack.c.bf16 %v6595, %v6593
  %v6667 = vpack.c.bf16 %v6555, %v6553
  %v6668 = vpack.c.bf16 %v6516, %v6515
  %v6669 = vpack.c.bf16 %v6597, %v6595
  %v6670 = vpack.c.bf16 %v6557, %v6555
  %v6671 = vpack.c.bf16 %v6517, %v6516
  %v6672 = vpack.c.bf16 %v6599, %v6597
  %v6673 = vpack.c.bf16 %v6559, %v6557
  %v6674 = vpack.c.bf16 %v6518, %v6517
  %v6675 = vpack.c.bf16 %v6601, %v6599
  %v6676 = vpack.c.bf16 %v6561, %v6559
  %v6677 = vpack.c.bf16 %v6519, %v6518
  %v6678 = vpack.c.bf16 %v6603, %v6601
  %v6679 = vpack.c.bf16 %v6563, %v6561
  %v6680 = vpack.c.bf16 %v6520, %v6519
  %v6681 = vpack.c.bf16 %v6605, %v6603
  %v6682 = vpack.c.bf16 %v6625, %v6563
  %v6683 = vpack.c.bf16 %v6521, %v6520
  %v6684 = vpack.c.bf16 %v6631, %v6605
  %v6685 = vpack.c.bf16 %v122, %v6625
  %v6686 = vpack.c.bf16 0.0, %v6521
  %v6687 = vpack.c.bf16 %v162, %v6631
  %6688 = vmatprep.subr.bf16.mxu0 0
  %6689 = vmatpush1.bf16.msra.mxu0 %v3876
  %6690 = vmatprep.subr.bf16.mxu0 0
  %6691 = vmatpush1.bf16.msra.mxu0 %v3877
  %6692 = vmatprep.subr.bf16.mxu0 0
  %6693 = vmatpush1.bf16.msra.mxu0 %v3878
  %6694 = vmatprep.subr.bf16.mxu0 0
  %6695 = vmatpush1.bf16.msra.mxu0 %v3879
  %6696 = vmatprep.subr.bf16.mxu0 0
  %6697 = vmatpush1.bf16.msra.mxu0 %v3880
  %6698 = vmatprep.subr.bf16.mxu0 0
  %6699 = vmatpush1.bf16.msra.mxu0 %v3881
  %6700 = vmatprep.subr.bf16.mxu0 0
  %6701 = vmatpush1.bf16.msra.mxu0 %v3882
  %6702 = vmatprep.subr.bf16.mxu0 0
  %6703 = vmatpush1.bf16.msra.mxu0 %v3883
  %6704 = vmatprep.subr.bf16.mxu0 0
  %6705 = vmatpush1.bf16.msra.mxu0 %v3884
  %6706 = vmatprep.subr.bf16.mxu0 0
  %6707 = vmatpush1.bf16.msra.mxu0 %v3885
  %6708 = vmatprep.subr.bf16.mxu0 0
  %6709 = vmatpush1.bf16.msra.mxu0 %v3886
  %6710 = vmatprep.subr.bf16.mxu0 0
  %6711 = vmatpush1.bf16.msra.mxu0 %v3887
  %6712 = vmatprep.subr.bf16.mxu0 0
  %6713 = vmatpush1.bf16.msra.mxu0 %v3888
  %6714 = vmatprep.subr.bf16.mxu0 0
  %6715 = vmatpush1.bf16.msra.mxu0 %v3889
  %6716 = vmatprep.subr.bf16.mxu0 0
  %6717 = vmatpush1.bf16.msra.mxu0 %v3890
  %6718 = vmatprep.subr.bf16.mxu0 0
  %6719 = vmatpush1.bf16.msra.mxu0 %v3891
  %6720 = vmatprep.mubr.bf16.mxu0 %v6635
  %6721 = vmatmul.mubr.bf16.gmra.mrb[0].mxu0 %v6634
  %v6722 = vpop.f32.mrb[0].mxu0
  %v6723 = vadd.f32 %v3586, %v6722
  %v6724 = vpop.f32.mrb[0].mxu0
  %v6725 = vpop.f32.mrb[0].mxu0
  %v6726 = vadd.f32 %v3586, %v6725
  %v6727 = vpop.f32.mrb[0].mxu0
  %6728 = vmatprep.mubr.bf16.mxu0 %v6641
  %6729 = vmatmul.mubr.bf16.gmra.mrb[0].mxu0 %v6640
  %v6730 = vpop.f32.mrb[0].mxu0
  %v6731 = vadd.f32 %v3586, %v6730
  %v6732 = vpop.f32.mrb[0].mxu0
  %v6733 = vpop.f32.mrb[0].mxu0
  %v6734 = vadd.f32 %v3586, %v6733
  %v6735 = vpop.f32.mrb[0].mxu0
  %6736 = vmatprep.mubr.bf16.mxu0 %v6647
  %6737 = vmatmul.mubr.bf16.gmra.mrb[0].mxu0 %v6646
  %v6738 = vpop.f32.mrb[0].mxu0
  %v6739 = vadd.f32 %v3586, %v6738
  %v6740 = vpop.f32.mrb[0].mxu0
  %v6741 = vpop.f32.mrb[0].mxu0
  %v6742 = vadd.f32 %v3586, %v6741
  %v6743 = vpop.f32.mrb[0].mxu0
  %6744 = vmatprep.mubr.bf16.mxu0 %v6653
  %6745 = vmatmul.mubr.bf16.gmra.mrb[0].mxu0 %v6652
  %v6746 = vpop.f32.mrb[0].mxu0
  %v6747 = vadd.f32 %v3586, %v6746
  %v6748 = vpop.f32.mrb[0].mxu0
  %v6749 = vpop.f32.mrb[0].mxu0
  %v6750 = vadd.f32 %v3586, %v6749
  %v6751 = vpop.f32.mrb[0].mxu0
  %6752 = vmatprep.mubr.bf16.mxu0 %v6662
  %6753 = vmatmul.mubr.bf16.gmra.mrb[0].mxu0 %v6661
  %v6754 = vpop.f32.mrb[0].mxu0
  %v6755 = vadd.f32 %v3586, %v6754
  %v6756 = vpop.f32.mrb[0].mxu0
  %v6757 = vpop.f32.mrb[0].mxu0
  %v6758 = vadd.f32 %v3586, %v6757
  %v6759 = vpop.f32.mrb[0].mxu0
  %6760 = vmatprep.mubr.bf16.mxu0 %v6668
  %6761 = vmatmul.mubr.bf16.gmra.mrb[0].mxu0 %v6667
  %v6762 = vpop.f32.mrb[0].mxu0
  %v6763 = vadd.f32 %v3586, %v6762
  %v6764 = vpop.f32.mrb[0].mxu0
  %v6765 = vpop.f32.mrb[0].mxu0
  %v6766 = vadd.f32 %v3586, %v6765
  %v6767 = vpop.f32.mrb[0].mxu0
  %6768 = vmatprep.mubr.bf16.mxu0 %v6674
  %6769 = vmatmul.mubr.bf16.gmra.mrb[0].mxu0 %v6673
  %v6770 = vpop.f32.mrb[0].mxu0
  %v6771 = vadd.f32 %v3586, %v6770
  %v6772 = vpop.f32.mrb[0].mxu0
  %v6773 = vpop.f32.mrb[0].mxu0
  %v6774 = vadd.f32 %v3586, %v6773
  %v6775 = vpop.f32.mrb[0].mxu0
  %6776 = vmatprep.mubr.bf16.mxu0 %v6680
  %6777 = vmatmul.mubr.bf16.gmra.mrb[0].mxu0 %v6679
  %v6778 = vpop.f32.mrb[0].mxu0
  %v6779 = vadd.f32 %v3586, %v6778
  %v6780 = vpop.f32.mrb[0].mxu0
  %v6781 = vpop.f32.mrb[0].mxu0
  %v6782 = vadd.f32 %v3586, %v6781
  %v6783 = vpop.f32.mrb[0].mxu0
  %6784 = vdwg.mxu0
  %6785 = vmatprep.subr.bf16.mxu0 0
  %6786 = vmatpush1.bf16.msra.mxu0 %v3892
  %6787 = vmatprep.subr.bf16.mxu0 0
  %6788 = vmatpush1.bf16.msra.mxu0 %v3893
  %6789 = vmatprep.subr.bf16.mxu0 0
  %6790 = vmatpush1.bf16.msra.mxu0 %v3894
  %6791 = vmatprep.subr.bf16.mxu0 0
  %6792 = vmatpush1.bf16.msra.mxu0 %v3895
  %6793 = vmatprep.subr.bf16.mxu0 0
  %6794 = vmatpush1.bf16.msra.mxu0 %v3896
  %6795 = vmatprep.subr.bf16.mxu0 0
  %6796 = vmatpush1.bf16.msra.mxu0 %v3897
  %6797 = vmatprep.subr.bf16.mxu0 0
  %6798 = vmatpush1.bf16.msra.mxu0 %v3898
  %6799 = vmatprep.subr.bf16.mxu0 0
  %6800 = vmatpush1.bf16.msra.mxu0 %v3899
  %6801 = vmatprep.subr.bf16.mxu0 0
  %6802 = vmatpush1.bf16.msra.mxu0 %v3900
  %6803 = vmatprep.subr.bf16.mxu0 0
  %6804 = vmatpush1.bf16.msra.mxu0 %v3901
  %6805 = vmatprep.subr.bf16.mxu0 0
  %6806 = vmatpush1.bf16.msra.mxu0 %v3902
  %6807 = vmatprep.subr.bf16.mxu0 0
  %6808 = vmatpush1.bf16.msra.mxu0 %v3903
  %6809 = vmatprep.subr.bf16.mxu0 0
  %6810 = vmatpush1.bf16.msra.mxu0 %v3904
  %6811 = vmatprep.subr.bf16.mxu0 0
  %6812 = vmatpush1.bf16.msra.mxu0 %v3905
  %6813 = vmatprep.subr.bf16.mxu0 0
  %6814 = vmatpush1.bf16.msra.mxu0 %v3906
  %6815 = vmatprep.subr.bf16.mxu0 0
  %6816 = vmatpush1.bf16.msra.mxu0 %v3907
  %6817 = vmatprep.mubr.bf16.mxu0 %v6637
  %6818 = vmatmul.mubr.bf16.gmra.mrb[0].mxu0 %v6636
  %v6819 = vpop.f32.mrb[0].mxu0
  %v6820 = vadd.f32 %v6723, %v6819
  %v6821 = vpop.f32.mrb[0].mxu0
  %v6822 = vpop.f32.mrb[0].mxu0
  %v6823 = vadd.f32 %v6726, %v6822
  %v6824 = vpop.f32.mrb[0].mxu0
  %6825 = vmatprep.mubr.bf16.mxu0 %v6643
  %6826 = vmatmul.mubr.bf16.gmra.mrb[0].mxu0 %v6642
  %v6827 = vpop.f32.mrb[0].mxu0
  %v6828 = vadd.f32 %v6731, %v6827
  %v6829 = vpop.f32.mrb[0].mxu0
  %v6830 = vpop.f32.mrb[0].mxu0
  %v6831 = vadd.f32 %v6734, %v6830
  %v6832 = vpop.f32.mrb[0].mxu0
  %6833 = vmatprep.mubr.bf16.mxu0 %v6649
  %6834 = vmatmul.mubr.bf16.gmra.mrb[0].mxu0 %v6648
  %v6835 = vpop.f32.mrb[0].mxu0
  %v6836 = vadd.f32 %v6739, %v6835
  %v6837 = vpop.f32.mrb[0].mxu0
  %v6838 = vpop.f32.mrb[0].mxu0
  %v6839 = vadd.f32 %v6742, %v6838
  %v6840 = vpop.f32.mrb[0].mxu0
  %6841 = vmatprep.mubr.bf16.mxu0 %v6655
  %6842 = vmatmul.mubr.bf16.gmra.mrb[0].mxu0 %v6654
  %v6843 = vpop.f32.mrb[0].mxu0
  %v6844 = vadd.f32 %v6747, %v6843
  %v6845 = vpop.f32.mrb[0].mxu0
  %v6846 = vpop.f32.mrb[0].mxu0
  %v6847 = vadd.f32 %v6750, %v6846
  %v6848 = vpop.f32.mrb[0].mxu0
  %6849 = vmatprep.mubr.bf16.mxu0 %v6664
  %6850 = vmatmul.mubr.bf16.gmra.mrb[0].mxu0 %v6663
  %v6851 = vpop.f32.mrb[0].mxu0
  %v6852 = vadd.f32 %v6755, %v6851
  %v6853 = vpop.f32.mrb[0].mxu0
  %v6854 = vpop.f32.mrb[0].mxu0
  %v6855 = vadd.f32 %v6758, %v6854
  %v6856 = vpop.f32.mrb[0].mxu0
  %6857 = vmatprep.mubr.bf16.mxu0 %v6670
  %6858 = vmatmul.mubr.bf16.gmra.mrb[0].mxu0 %v6669
  %v6859 = vpop.f32.mrb[0].mxu0
  %v6860 = vadd.f32 %v6763, %v6859
  %v6861 = vpop.f32.mrb[0].mxu0
  %v6862 = vpop.f32.mrb[0].mxu0
  %v6863 = vadd.f32 %v6766, %v6862
  %v6864 = vpop.f32.mrb[0].mxu0
  %6865 = vmatprep.mubr.bf16.mxu0 %v6676
  %6866 = vmatmul.mubr.bf16.gmra.mrb[0].mxu0 %v6675
  %v6867 = vpop.f32.mrb[0].mxu0
  %v6868 = vadd.f32 %v6771, %v6867
  %v6869 = vpop.f32.mrb[0].mxu0
  %v6870 = vpop.f32.mrb[0].mxu0
  %v6871 = vadd.f32 %v6774, %v6870
  %v6872 = vpop.f32.mrb[0].mxu0
  %6873 = vmatprep.mubr.bf16.mxu0 %v6682
  %6874 = vmatmul.mubr.bf16.gmra.mrb[0].mxu0 %v6681
  %v6875 = vpop.f32.mrb[0].mxu0
  %v6876 = vadd.f32 %v6779, %v6875
  %v6877 = vpop.f32.mrb[0].mxu0
  %v6878 = vpop.f32.mrb[0].mxu0
  %v6879 = vadd.f32 %v6782, %v6878
  %v6880 = vpop.f32.mrb[0].mxu0
  %6881 = vdwg.mxu0
  %6882 = vmatprep.subr.bf16.mxu0 0
  %6883 = vmatpush1.bf16.msra.mxu0 %v3908
  %6884 = vmatprep.subr.bf16.mxu0 0
  %6885 = vmatpush1.bf16.msra.mxu0 %v3909
  %6886 = vmatprep.subr.bf16.mxu0 0
  %6887 = vmatpush1.bf16.msra.mxu0 %v3910
  %6888 = vmatprep.subr.bf16.mxu0 0
  %6889 = vmatpush1.bf16.msra.mxu0 %v3911
  %6890 = vmatprep.subr.bf16.mxu0 0
  %6891 = vmatpush1.bf16.msra.mxu0 %v3912
  %6892 = vmatprep.subr.bf16.mxu0 0
  %6893 = vmatpush1.bf16.msra.mxu0 %v3913
  %6894 = vmatprep.subr.bf16.mxu0 0
  %6895 = vmatpush1.bf16.msra.mxu0 %v3914
  %6896 = vmatprep.subr.bf16.mxu0 0
  %6897 = vmatpush1.bf16.msra.mxu0 %v3915
  %6898 = vmatprep.subr.bf16.mxu0 0
  %6899 = vmatpush1.bf16.msra.mxu0 %v3916
  %6900 = vmatprep.subr.bf16.mxu0 0
  %6901 = vmatpush1.bf16.msra.mxu0 %v3917
  %6902 = vmatprep.subr.bf16.mxu0 0
  %6903 = vmatpush1.bf16.msra.mxu0 %v3918
  %6904 = vmatprep.subr.bf16.mxu0 0
  %6905 = vmatpush1.bf16.msra.mxu0 %v3919
  %6906 = vmatprep.subr.bf16.mxu0 0
  %6907 = vmatpush1.bf16.msra.mxu0 %v3920
  %6908 = vmatprep.subr.bf16.mxu0 0
  %6909 = vmatpush1.bf16.msra.mxu0 %v3921
  %6910 = vmatprep.subr.bf16.mxu0 0
  %6911 = vmatpush1.bf16.msra.mxu0 %v3922
  %6912 = vmatprep.subr.bf16.mxu0 0
  %6913 = vmatpush1.bf16.msra.mxu0 %v3923
  %6914 = vmatprep.mubr.bf16.mxu0 %v6639
  %6915 = vmatmul.mubr.bf16.gmra.mrb[0].mxu0 %v6638
  %v6916 = vpop.f32.mrb[0].mxu0
  %v6917 = vadd.f32 %v6820, %v6916
  %v6918 = vpop.f32.mrb[0].mxu0
  %v6919 = vpop.f32.mrb[0].mxu0
  %v6920 = vadd.f32 %v6823, %v6919
  %v6921 = vpop.f32.mrb[0].mxu0
  %6922 = vmatprep.mubr.bf16.mxu0 %v6645
  %6923 = vmatmul.mubr.bf16.gmra.mrb[0].mxu0 %v6644
  %v6924 = vpop.f32.mrb[0].mxu0
  %v6925 = vadd.f32 %v6828, %v6924
  %v6926 = vpop.f32.mrb[0].mxu0
  %v6927 = vpop.f32.mrb[0].mxu0
  %v6928 = vadd.f32 %v6831, %v6927
  %v6929 = vpop.f32.mrb[0].mxu0
  %6930 = vmatprep.mubr.bf16.mxu0 %v6651
  %6931 = vmatmul.mubr.bf16.gmra.mrb[0].mxu0 %v6650
  %v6932 = vpop.f32.mrb[0].mxu0
  %v6933 = vadd.f32 %v6836, %v6932
  %v6934 = vpop.f32.mrb[0].mxu0
  %v6935 = vpop.f32.mrb[0].mxu0
  %v6936 = vadd.f32 %v6839, %v6935
  %v6937 = vpop.f32.mrb[0].mxu0
  %6938 = vmatprep.mubr.bf16.mxu0 %v6657
  %6939 = vmatmul.mubr.bf16.gmra.mrb[0].mxu0 %v6656
  %v6940 = vpop.f32.mrb[0].mxu0
  %v6941 = vadd.f32 %v6844, %v6940
  %v6942 = vpop.f32.mrb[0].mxu0
  %v6943 = vpop.f32.mrb[0].mxu0
  %v6944 = vadd.f32 %v6847, %v6943
  %v6945 = vpop.f32.mrb[0].mxu0
  %6946 = vmatprep.mubr.bf16.mxu0 %v6666
  %6947 = vmatmul.mubr.bf16.gmra.mrb[0].mxu0 %v6665
  %v6948 = vpop.f32.mrb[0].mxu0
  %v6949 = vadd.f32 %v6852, %v6948
  %v6950 = vpop.f32.mrb[0].mxu0
  %v6951 = vpop.f32.mrb[0].mxu0
  %v6952 = vadd.f32 %v6855, %v6951
  %v6953 = vpop.f32.mrb[0].mxu0
  %6954 = vmatprep.mubr.bf16.mxu0 %v6672
  %6955 = vmatmul.mubr.bf16.gmra.mrb[0].mxu0 %v6671
  %v6956 = vpop.f32.mrb[0].mxu0
  %v6957 = vadd.f32 %v6860, %v6956
  %v6958 = vpop.f32.mrb[0].mxu0
  %v6959 = vpop.f32.mrb[0].mxu0
  %v6960 = vadd.f32 %v6863, %v6959
  %v6961 = vpop.f32.mrb[0].mxu0
  %6962 = vmatprep.mubr.bf16.mxu0 %v6678
  %6963 = vmatmul.mubr.bf16.gmra.mrb[0].mxu0 %v6677
  %v6964 = vpop.f32.mrb[0].mxu0
  %v6965 = vadd.f32 %v6868, %v6964
  %v6966 = vpop.f32.mrb[0].mxu0
  %v6967 = vpop.f32.mrb[0].mxu0
  %v6968 = vadd.f32 %v6871, %v6967
  %v6969 = vpop.f32.mrb[0].mxu0
  %6970 = vmatprep.mubr.bf16.mxu0 %v6684
  %6971 = vmatmul.mubr.bf16.gmra.mrb[0].mxu0 %v6683
  %v6972 = vpop.f32.mrb[0].mxu0
  %v6973 = vadd.f32 %v6876, %v6972
  %v6974 = vpop.f32.mrb[0].mxu0
  %v6975 = vpop.f32.mrb[0].mxu0
  %v6976 = vadd.f32 %v6879, %v6975
  %v6977 = vpop.f32.mrb[0].mxu0
  %6978 = vdwg.mxu0
  %6979 = vmatprep.subr.bf16.mxu0 0
  %6980 = vmatpush1.bf16.msra.mxu0 %v3924
  %6981 = vmatprep.subr.bf16.mxu0 0
  %6982 = vmatpush1.bf16.msra.mxu0 %v3925
  %6983 = vmatprep.subr.bf16.mxu0 0
  %6984 = vmatpush1.bf16.msra.mxu0 %v3926
  %6985 = vmatprep.subr.bf16.mxu0 0
  %6986 = vmatpush1.bf16.msra.mxu0 %v3927
  %6987 = vmatprep.subr.bf16.mxu0 0
  %6988 = vmatpush1.bf16.msra.mxu0 %v3928
  %6989 = vmatprep.subr.bf16.mxu0 0
  %6990 = vmatpush1.bf16.msra.mxu0 %v3929
  %6991 = vmatprep.subr.bf16.mxu0 0
  %6992 = vmatpush1.bf16.msra.mxu0 %v3930
  %6993 = vmatprep.subr.bf16.mxu0 0
  %6994 = vmatpush1.bf16.msra.mxu0 %v3931
  %6995 = vmatprep.subr.bf16.mxu0 0
  %6996 = vmatpush1.bf16.msra.mxu0 %v3932
  %6997 = vmatprep.subr.bf16.mxu0 0
  %6998 = vmatpush1.bf16.msra.mxu0 %v3933
  %6999 = vmatprep.subr.bf16.mxu0 0
  %7000 = vmatpush1.bf16.msra.mxu0 %v3934
  %7001 = vmatprep.subr.bf16.mxu0 0
  %7002 = vmatpush1.bf16.msra.mxu0 %v3935
  %7003 = vmatprep.subr.bf16.mxu0 0
  %7004 = vmatpush1.bf16.msra.mxu0 %v3936
  %7005 = vmatprep.subr.bf16.mxu0 0
  %7006 = vmatpush1.bf16.msra.mxu0 %v3937
  %7007 = vmatprep.subr.bf16.mxu0 0
  %7008 = vmatpush1.bf16.msra.mxu0 %v3938
  %7009 = vmatprep.subr.bf16.mxu0 0
  %7010 = vmatpush1.bf16.msra.mxu0 %v3939
  %7011 = vmatprep.mubr.bf16.mxu0 %v6641
  %7012 = vmatmul.mubr.bf16.gmra.mrb[0].mxu0 %v6640
  %v7013 = vpop.f32.mrb[0].mxu0
  %v7014 = vadd.f32 %v6917, %v7013
  %v7015 = vpop.f32.mrb[0].mxu0
  %v7016 = vpop.f32.mrb[0].mxu0
  %v7017 = vadd.f32 %v6920, %v7016
  %v7018 = vpop.f32.mrb[0].mxu0
  %7019 = vmatprep.mubr.bf16.mxu0 %v6647
  %7020 = vmatmul.mubr.bf16.gmra.mrb[0].mxu0 %v6646
  %v7021 = vpop.f32.mrb[0].mxu0
  %v7022 = vadd.f32 %v6925, %v7021
  %v7023 = vpop.f32.mrb[0].mxu0
  %v7024 = vpop.f32.mrb[0].mxu0
  %v7025 = vadd.f32 %v6928, %v7024
  %v7026 = vpop.f32.mrb[0].mxu0
  %7027 = vmatprep.mubr.bf16.mxu0 %v6653
  %7028 = vmatmul.mubr.bf16.gmra.mrb[0].mxu0 %v6652
  %v7029 = vpop.f32.mrb[0].mxu0
  %v7030 = vadd.f32 %v6933, %v7029
  %v7031 = vpop.f32.mrb[0].mxu0
  %v7032 = vpop.f32.mrb[0].mxu0
  %v7033 = vadd.f32 %v6936, %v7032
  %v7034 = vpop.f32.mrb[0].mxu0
  %7035 = vmatprep.mubr.bf16.mxu0 %v6659
  %7036 = vmatmul.mubr.bf16.gmra.mrb[0].mxu0 %v6658
  %v7037 = vpop.f32.mrb[0].mxu0
  %v7038 = vadd.f32 %v6941, %v7037
  %v7039 = vpop.f32.mrb[0].mxu0
  %v7040 = vpop.f32.mrb[0].mxu0
  %v7041 = vadd.f32 %v6944, %v7040
  %v7042 = vpop.f32.mrb[0].mxu0
  %7043 = vmatprep.mubr.bf16.mxu0 %v6668
  %7044 = vmatmul.mubr.bf16.gmra.mrb[0].mxu0 %v6667
  %v7045 = vpop.f32.mrb[0].mxu0
  %v7046 = vadd.f32 %v6949, %v7045
  %v7047 = vpop.f32.mrb[0].mxu0
  %v7048 = vpop.f32.mrb[0].mxu0
  %v7049 = vadd.f32 %v6952, %v7048
  %v7050 = vpop.f32.mrb[0].mxu0
  %7051 = vmatprep.mubr.bf16.mxu0 %v6674
  %7052 = vmatmul.mubr.bf16.gmra.mrb[0].mxu0 %v6673
  %v7053 = vpop.f32.mrb[0].mxu0
  %v7054 = vadd.f32 %v6957, %v7053
  %v7055 = vpop.f32.mrb[0].mxu0
  %v7056 = vpop.f32.mrb[0].mxu0
  %v7057 = vadd.f32 %v6960, %v7056
  %v7058 = vpop.f32.mrb[0].mxu0
  %7059 = vmatprep.mubr.bf16.mxu0 %v6680
  %7060 = vmatmul.mubr.bf16.gmra.mrb[0].mxu0 %v6679
  %v7061 = vpop.f32.mrb[0].mxu0
  %v7062 = vadd.f32 %v6965, %v7061
  %v7063 = vpop.f32.mrb[0].mxu0
  %v7064 = vpop.f32.mrb[0].mxu0
  %v7065 = vadd.f32 %v6968, %v7064
  %v7066 = vpop.f32.mrb[0].mxu0
  %7067 = vmatprep.mubr.bf16.mxu0 %v6686
  %7068 = vmatmul.mubr.bf16.gmra.mrb[0].mxu0 %v6685
  %v7069 = vpop.f32.mrb[0].mxu0
  %v7070 = vadd.f32 %v6973, %v7069
  %v7071 = vpop.f32.mrb[0].mxu0
  %v7072 = vpop.f32.mrb[0].mxu0
  %v7073 = vadd.f32 %v6976, %v7072
  %v7074 = vpop.f32.mrb[0].mxu0
  %7075 = vdwg.mxu0
  %7076 = vmatprep.subr.bf16.mxu0 0
  %7077 = vmatpush1.bf16.msra.mxu0 %v3940
  %7078 = vmatprep.subr.bf16.mxu0 0
  %7079 = vmatpush1.bf16.msra.mxu0 %v3941
  %7080 = vmatprep.subr.bf16.mxu0 0
  %7081 = vmatpush1.bf16.msra.mxu0 %v3942
  %7082 = vmatprep.subr.bf16.mxu0 0
  %7083 = vmatpush1.bf16.msra.mxu0 %v3943
  %7084 = vmatprep.subr.bf16.mxu0 0
  %7085 = vmatpush1.bf16.msra.mxu0 %v3944
  %7086 = vmatprep.subr.bf16.mxu0 0
  %7087 = vmatpush1.bf16.msra.mxu0 %v3945
  %7088 = vmatprep.subr.bf16.mxu0 0
  %7089 = vmatpush1.bf16.msra.mxu0 %v3946
  %7090 = vmatprep.subr.bf16.mxu0 0
  %7091 = vmatpush1.bf16.msra.mxu0 %v3947
  %7092 = vmatprep.subr.bf16.mxu0 0
  %7093 = vmatpush1.bf16.msra.mxu0 0
  %7094 = vmatprep.subr.bf16.mxu0 0
  %7095 = vmatpush1.bf16.msra.mxu0 0
  %7096 = vmatprep.subr.bf16.mxu0 0
  %7097 = vmatpush1.bf16.msra.mxu0 0
  %7098 = vmatprep.subr.bf16.mxu0 0
  %7099 = vmatpush1.bf16.msra.mxu0 0
  %7100 = vmatprep.subr.bf16.mxu0 0
  %7101 = vmatpush1.bf16.msra.mxu0 0
  %7102 = vmatprep.subr.bf16.mxu0 0
  %7103 = vmatpush1.bf16.msra.mxu0 0
  %7104 = vmatprep.subr.bf16.mxu0 0
  %7105 = vmatpush1.bf16.msra.mxu0 0
  %7106 = vmatprep.subr.bf16.mxu0 0
  %7107 = vmatpush1.bf16.msra.mxu0 0
  %7108 = vmatprep.mubr.bf16.mxu0 0
  %7109 = vmatmul.mubr.bf16.gmra.mrb[0].mxu0 %v6642
  %v7110 = vpop.f32.mrb[0].mxu0
  %v7111 = vadd.f32 %v7014, %v7110
  %v7112 = vpop.f32.mrb[0].mxu0
  %v7113 = vpop.f32.mrb[0].mxu0
  %v7114 = vadd.f32 %v7017, %v7113
  %v7115 = vpop.f32.mrb[0].mxu0
  %7116 = vmatprep.mubr.bf16.mxu0 0
  %7117 = vmatmul.mubr.bf16.gmra.mrb[0].mxu0 %v6648
  %v7118 = vpop.f32.mrb[0].mxu0
  %v7119 = vadd.f32 %v7022, %v7118
  %v7120 = vpop.f32.mrb[0].mxu0
  %v7121 = vpop.f32.mrb[0].mxu0
  %v7122 = vadd.f32 %v7025, %v7121
  %v7123 = vpop.f32.mrb[0].mxu0
  %7124 = vmatprep.mubr.bf16.mxu0 0
  %7125 = vmatmul.mubr.bf16.gmra.mrb[0].mxu0 %v6654
  %v7126 = vpop.f32.mrb[0].mxu0
  %v7127 = vadd.f32 %v7030, %v7126
  %v7128 = vpop.f32.mrb[0].mxu0
  %v7129 = vpop.f32.mrb[0].mxu0
  %v7130 = vadd.f32 %v7033, %v7129
  %v7131 = vpop.f32.mrb[0].mxu0
  %7132 = vmatprep.mubr.bf16.mxu0 0
  %7133 = vmatmul.mubr.bf16.gmra.mrb[0].mxu0 %v6660
  %v7134 = vpop.f32.mrb[0].mxu0
  %v7135 = vadd.f32 %v7038, %v7134
  %v7136 = vpop.f32.mrb[0].mxu0
  %v7137 = vpop.f32.mrb[0].mxu0
  %v7138 = vadd.f32 %v7041, %v7137
  %v7139 = vpop.f32.mrb[0].mxu0
  %7140 = vmatprep.mubr.bf16.mxu0 0
  %7141 = vmatmul.mubr.bf16.gmra.mrb[0].mxu0 %v6669
  %v7142 = vpop.f32.mrb[0].mxu0
  %v7143 = vadd.f32 %v7046, %v7142
  %v7144 = vpop.f32.mrb[0].mxu0
  %v7145 = vpop.f32.mrb[0].mxu0
  %v7146 = vadd.f32 %v7049, %v7145
  %v7147 = vpop.f32.mrb[0].mxu0
  %7148 = vmatprep.mubr.bf16.mxu0 0
  %7149 = vmatmul.mubr.bf16.gmra.mrb[0].mxu0 %v6675
  %v7150 = vpop.f32.mrb[0].mxu0
  %v7151 = vadd.f32 %v7054, %v7150
  %v7152 = vpop.f32.mrb[0].mxu0
  %v7153 = vpop.f32.mrb[0].mxu0
  %v7154 = vadd.f32 %v7057, %v7153
  %v7155 = vpop.f32.mrb[0].mxu0
  %7156 = vmatprep.mubr.bf16.mxu0 0
  %7157 = vmatmul.mubr.bf16.gmra.mrb[0].mxu0 %v6681
  %v7158 = vpop.f32.mrb[0].mxu0
  %v7159 = vadd.f32 %v7062, %v7158
  %v7160 = vpop.f32.mrb[0].mxu0
  %v7161 = vpop.f32.mrb[0].mxu0
  %v7162 = vadd.f32 %v7065, %v7161
  %v7163 = vpop.f32.mrb[0].mxu0
  %7164 = vmatprep.mubr.bf16.mxu0 0
  %7165 = vmatmul.mubr.bf16.gmra.mrb[0].mxu0 %v6687
  %v7166 = vpop.f32.mrb[0].mxu0
  %v7167 = vadd.f32 %v7070, %v7166
  %v7168 = vpop.f32.mrb[0].mxu0
  %v7169 = vpop.f32.mrb[0].mxu0
  %v7170 = vadd.f32 %v7073, %v7169
  %v7171 = vpop.f32.mrb[0].mxu0
  %7172 = vdwg.mxu0
  %v7173 = vmax.f32 %v7111, 0.0
  %v7174 = vmax.f32 %v7114, 0.0
  %v7175 = vmax.f32 %v7119, 0.0
  %v7176 = vmax.f32 %v7122, 0.0
  %v7177 = vmax.f32 %v7127, 0.0
  %v7178 = vmax.f32 %v7130, 0.0
  %v7179 = vmax.f32 %v7135, 0.0
  %v7180 = vmax.f32 %v7138, 0.0
  %v7181 = vmax.f32 %v7143, 0.0
  %v7182 = vmax.f32 %v7146, 0.0
  %v7183 = vmax.f32 %v7151, 0.0
  %v7184 = vmax.f32 %v7154, 0.0
  %v7185 = vmax.f32 %v7159, 0.0
  %v7186 = vmax.f32 %v7162, 0.0
  %v7187 = vmax.f32 %v7167, 0.0
  %v7188 = vmax.f32 %v7170, 0.0
  %v7203 = vrot.slane %v7173, 7
  %v7204 = vsel %vm120, %v121, %v7203
  %v7205 = vrot.slane %v7174, 7
  %v7206 = vsel %vm120, %v121, %v7205
  %v7207 = vrot.slane %v7175, 7
  %v7208 = vsel %vm120, %v121, %v7207
  %v7209 = vrot.slane %v7176, 7
  %v7210 = vsel %vm120, %v121, %v7209
  %v7211 = vrot.slane %v7177, 7
  %v7212 = vsel %vm120, %v121, %v7211
  %v7213 = vrot.slane %v7178, 7
  %v7214 = vsel %vm120, %v121, %v7213
  %v7215 = vrot.slane %v7179, 7
  %v7216 = vsel %vm120, %v121, %v7215
  %v7217 = vrot.slane %v7181, 7
  %v7218 = vsel %vm120, %v121, %v7217
  %v7219 = vrot.slane %v7182, 7
  %v7220 = vsel %vm120, %v121, %v7219
  %v7221 = vrot.slane %v7183, 7
  %v7222 = vsel %vm120, %v121, %v7221
  %v7223 = vrot.slane %v7184, 7
  %v7224 = vsel %vm120, %v121, %v7223
  %v7225 = vrot.slane %v7185, 7
  %v7226 = vsel %vm120, %v121, %v7225
  %v7227 = vrot.slane %v7186, 7
  %v7228 = vsel %vm120, %v121, %v7227
  %v7229 = vrot.slane %v7187, 7
  %v7230 = vsel %vm120, %v121, %v7229
  %v7245 = vrot.slane %v7173, 1
  %v7246 = vsel %vm160, %v7245, %v161
  %v7247 = vrot.slane %v7174, 1
  %v7248 = vsel %vm160, %v7247, %v161
  %v7249 = vrot.slane %v7175, 1
  %v7250 = vsel %vm160, %v7249, %v161
  %v7251 = vrot.slane %v7176, 1
  %v7252 = vsel %vm160, %v7251, %v161
  %v7253 = vrot.slane %v7177, 1
  %v7254 = vsel %vm160, %v7253, %v161
  %v7255 = vrot.slane %v7178, 1
  %v7256 = vsel %vm160, %v7255, %v161
  %v7257 = vrot.slane %v7179, 1
  %v7258 = vsel %vm160, %v7257, %v161
  %v7259 = vrot.slane %v7181, 1
  %v7260 = vsel %vm160, %v7259, %v161
  %v7261 = vrot.slane %v7182, 1
  %v7262 = vsel %vm160, %v7261, %v161
  %v7263 = vrot.slane %v7183, 1
  %v7264 = vsel %vm160, %v7263, %v161
  %v7265 = vrot.slane %v7184, 1
  %v7266 = vsel %vm160, %v7265, %v161
  %v7267 = vrot.slane %v7185, 1
  %v7268 = vsel %vm160, %v7267, %v161
  %v7269 = vrot.slane %v7186, 1
  %v7270 = vsel %vm160, %v7269, %v161
  %v7271 = vrot.slane %v7187, 1
  %v7272 = vsel %vm160, %v7271, %v161
  %v7289 = vrot.slane %v7180, 7
  %v7290 = vsel %vm120, %v121, %v7289
  %v7291 = vrot.slane %v7188, 7
  %v7292 = vsel %vm120, %v121, %v7291
  %v7295 = vrot.slane %v7180, 1
  %v7296 = vsel %vm160, %v7295, %v161
  %v7297 = vrot.slane %v7188, 1
  %v7298 = vsel %vm160, %v7297, %v161
  %v7301 = vpack.c.bf16 %v7204, %v122
  %v7302 = vpack.c.bf16 %v7173, 0.0
  %v7303 = vpack.c.bf16 %v7246, %v162
  %v7304 = vpack.c.bf16 %v7206, %v7204
  %v7305 = vpack.c.bf16 %v7174, %v7173
  %v7306 = vpack.c.bf16 %v7248, %v7246
  %v7307 = vpack.c.bf16 %v7208, %v7206
  %v7308 = vpack.c.bf16 %v7175, %v7174
  %v7309 = vpack.c.bf16 %v7250, %v7248
  %v7310 = vpack.c.bf16 %v7210, %v7208
  %v7311 = vpack.c.bf16 %v7176, %v7175
  %v7312 = vpack.c.bf16 %v7252, %v7250
  %v7313 = vpack.c.bf16 %v7212, %v7210
  %v7314 = vpack.c.bf16 %v7177, %v7176
  %v7315 = vpack.c.bf16 %v7254, %v7252
  %v7316 = vpack.c.bf16 %v7214, %v7212
  %v7317 = vpack.c.bf16 %v7178, %v7177
  %v7318 = vpack.c.bf16 %v7256, %v7254
  %v7319 = vpack.c.bf16 %v7216, %v7214
  %v7320 = vpack.c.bf16 %v7179, %v7178
  %v7321 = vpack.c.bf16 %v7258, %v7256
  %v7322 = vpack.c.bf16 %v7290, %v7216
  %v7323 = vpack.c.bf16 %v7180, %v7179
  %v7324 = vpack.c.bf16 %v7296, %v7258
  %v7325 = vpack.c.bf16 %v122, %v7290
  %v7326 = vpack.c.bf16 0.0, %v7180
  %v7327 = vpack.c.bf16 %v162, %v7296
  %v7328 = vpack.c.bf16 %v7218, %v122
  %v7329 = vpack.c.bf16 %v7181, 0.0
  %v7330 = vpack.c.bf16 %v7260, %v162
  %v7331 = vpack.c.bf16 %v7220, %v7218
  %v7332 = vpack.c.bf16 %v7182, %v7181
  %v7333 = vpack.c.bf16 %v7262, %v7260
  %v7334 = vpack.c.bf16 %v7222, %v7220
  %v7335 = vpack.c.bf16 %v7183, %v7182
  %v7336 = vpack.c.bf16 %v7264, %v7262
  %v7337 = vpack.c.bf16 %v7224, %v7222
  %v7338 = vpack.c.bf16 %v7184, %v7183
  %v7339 = vpack.c.bf16 %v7266, %v7264
  %v7340 = vpack.c.bf16 %v7226, %v7224
  %v7341 = vpack.c.bf16 %v7185, %v7184
  %v7342 = vpack.c.bf16 %v7268, %v7266
  %v7343 = vpack.c.bf16 %v7228, %v7226
  %v7344 = vpack.c.bf16 %v7186, %v7185
  %v7345 = vpack.c.bf16 %v7270, %v7268
  %v7346 = vpack.c.bf16 %v7230, %v7228
  %v7347 = vpack.c.bf16 %v7187, %v7186
  %v7348 = vpack.c.bf16 %v7272, %v7270
  %v7349 = vpack.c.bf16 %v7292, %v7230
  %v7350 = vpack.c.bf16 %v7188, %v7187
  %v7351 = vpack.c.bf16 %v7298, %v7272
  %v7352 = vpack.c.bf16 %v122, %v7292
  %v7353 = vpack.c.bf16 0.0, %v7188
  %v7354 = vpack.c.bf16 %v162, %v7298
  %7355 = vmatprep.subr.bf16.mxu0 0
  %7356 = vmatpush1.bf16.msra.mxu0 %v3876
  %7357 = vmatprep.subr.bf16.mxu0 0
  %7358 = vmatpush1.bf16.msra.mxu0 %v3877
  %7359 = vmatprep.subr.bf16.mxu0 0
  %7360 = vmatpush1.bf16.msra.mxu0 %v3878
  %7361 = vmatprep.subr.bf16.mxu0 0
  %7362 = vmatpush1.bf16.msra.mxu0 %v3879
  %7363 = vmatprep.subr.bf16.mxu0 0
  %7364 = vmatpush1.bf16.msra.mxu0 %v3880
  %7365 = vmatprep.subr.bf16.mxu0 0
  %7366 = vmatpush1.bf16.msra.mxu0 %v3881
  %7367 = vmatprep.subr.bf16.mxu0 0
  %7368 = vmatpush1.bf16.msra.mxu0 %v3882
  %7369 = vmatprep.subr.bf16.mxu0 0
  %7370 = vmatpush1.bf16.msra.mxu0 %v3883
  %7371 = vmatprep.subr.bf16.mxu0 0
  %7372 = vmatpush1.bf16.msra.mxu0 %v3884
  %7373 = vmatprep.subr.bf16.mxu0 0
  %7374 = vmatpush1.bf16.msra.mxu0 %v3885
  %7375 = vmatprep.subr.bf16.mxu0 0
  %7376 = vmatpush1.bf16.msra.mxu0 %v3886
  %7377 = vmatprep.subr.bf16.mxu0 0
  %7378 = vmatpush1.bf16.msra.mxu0 %v3887
  %7379 = vmatprep.subr.bf16.mxu0 0
  %7380 = vmatpush1.bf16.msra.mxu0 %v3888
  %7381 = vmatprep.subr.bf16.mxu0 0
  %7382 = vmatpush1.bf16.msra.mxu0 %v3889
  %7383 = vmatprep.subr.bf16.mxu0 0
  %7384 = vmatpush1.bf16.msra.mxu0 %v3890
  %7385 = vmatprep.subr.bf16.mxu0 0
  %7386 = vmatpush1.bf16.msra.mxu0 %v3891
  %7387 = vmatprep.mubr.bf16.mxu0 %v7302
  %7388 = vmatmul.mubr.bf16.gmra.mrb[0].mxu0 %v7301
  %v7389 = vpop.f32.mrb[0].mxu0
  %v7390 = vadd.f32 %v3586, %v7389
  %v7391 = vpop.f32.mrb[0].mxu0
  %v7392 = vpop.f32.mrb[0].mxu0
  %v7393 = vadd.f32 %v3586, %v7392
  %v7394 = vpop.f32.mrb[0].mxu0
  %7395 = vmatprep.mubr.bf16.mxu0 %v7308
  %7396 = vmatmul.mubr.bf16.gmra.mrb[0].mxu0 %v7307
  %v7397 = vpop.f32.mrb[0].mxu0
  %v7398 = vadd.f32 %v3586, %v7397
  %v7399 = vpop.f32.mrb[0].mxu0
  %v7400 = vpop.f32.mrb[0].mxu0
  %v7401 = vadd.f32 %v3586, %v7400
  %v7402 = vpop.f32.mrb[0].mxu0
  %7403 = vmatprep.mubr.bf16.mxu0 %v7314
  %7404 = vmatmul.mubr.bf16.gmra.mrb[0].mxu0 %v7313
  %v7405 = vpop.f32.mrb[0].mxu0
  %v7406 = vadd.f32 %v3586, %v7405
  %v7407 = vpop.f32.mrb[0].mxu0
  %v7408 = vpop.f32.mrb[0].mxu0
  %v7409 = vadd.f32 %v3586, %v7408
  %v7410 = vpop.f32.mrb[0].mxu0
  %7411 = vmatprep.mubr.bf16.mxu0 %v7320
  %7412 = vmatmul.mubr.bf16.gmra.mrb[0].mxu0 %v7319
  %v7413 = vpop.f32.mrb[0].mxu0
  %v7414 = vadd.f32 %v3586, %v7413
  %v7415 = vpop.f32.mrb[0].mxu0
  %v7416 = vpop.f32.mrb[0].mxu0
  %v7417 = vadd.f32 %v3586, %v7416
  %v7418 = vpop.f32.mrb[0].mxu0
  %7419 = vmatprep.mubr.bf16.mxu0 %v7329
  %7420 = vmatmul.mubr.bf16.gmra.mrb[0].mxu0 %v7328
  %v7421 = vpop.f32.mrb[0].mxu0
  %v7422 = vadd.f32 %v3586, %v7421
  %v7423 = vpop.f32.mrb[0].mxu0
  %v7424 = vpop.f32.mrb[0].mxu0
  %v7425 = vadd.f32 %v3586, %v7424
  %v7426 = vpop.f32.mrb[0].mxu0
  %7427 = vmatprep.mubr.bf16.mxu0 %v7335
  %7428 = vmatmul.mubr.bf16.gmra.mrb[0].mxu0 %v7334
  %v7429 = vpop.f32.mrb[0].mxu0
  %v7430 = vadd.f32 %v3586, %v7429
  %v7431 = vpop.f32.mrb[0].mxu0
  %v7432 = vpop.f32.mrb[0].mxu0
  %v7433 = vadd.f32 %v3586, %v7432
  %v7434 = vpop.f32.mrb[0].mxu0
  %7435 = vmatprep.mubr.bf16.mxu0 %v7341
  %7436 = vmatmul.mubr.bf16.gmra.mrb[0].mxu0 %v7340
  %v7437 = vpop.f32.mrb[0].mxu0
  %v7438 = vadd.f32 %v3586, %v7437
  %v7439 = vpop.f32.mrb[0].mxu0
  %v7440 = vpop.f32.mrb[0].mxu0
  %v7441 = vadd.f32 %v3586, %v7440
  %v7442 = vpop.f32.mrb[0].mxu0
  %7443 = vmatprep.mubr.bf16.mxu0 %v7347
  %7444 = vmatmul.mubr.bf16.gmra.mrb[0].mxu0 %v7346
  %v7445 = vpop.f32.mrb[0].mxu0
  %v7446 = vadd.f32 %v3586, %v7445
  %v7447 = vpop.f32.mrb[0].mxu0
  %v7448 = vpop.f32.mrb[0].mxu0
  %v7449 = vadd.f32 %v3586, %v7448
  %v7450 = vpop.f32.mrb[0].mxu0
  %7451 = vdwg.mxu0
  %7452 = vmatprep.subr.bf16.mxu0 0
  %7453 = vmatpush1.bf16.msra.mxu0 %v3892
  %7454 = vmatprep.subr.bf16.mxu0 0
  %7455 = vmatpush1.bf16.msra.mxu0 %v3893
  %7456 = vmatprep.subr.bf16.mxu0 0
  %7457 = vmatpush1.bf16.msra.mxu0 %v3894
  %7458 = vmatprep.subr.bf16.mxu0 0
  %7459 = vmatpush1.bf16.msra.mxu0 %v3895
  %7460 = vmatprep.subr.bf16.mxu0 0
  %7461 = vmatpush1.bf16.msra.mxu0 %v3896
  %7462 = vmatprep.subr.bf16.mxu0 0
  %7463 = vmatpush1.bf16.msra.mxu0 %v3897
  %7464 = vmatprep.subr.bf16.mxu0 0
  %7465 = vmatpush1.bf16.msra.mxu0 %v3898
  %7466 = vmatprep.subr.bf16.mxu0 0
  %7467 = vmatpush1.bf16.msra.mxu0 %v3899
  %7468 = vmatprep.subr.bf16.mxu0 0
  %7469 = vmatpush1.bf16.msra.mxu0 %v3900
  %7470 = vmatprep.subr.bf16.mxu0 0
  %7471 = vmatpush1.bf16.msra.mxu0 %v3901
  %7472 = vmatprep.subr.bf16.mxu0 0
  %7473 = vmatpush1.bf16.msra.mxu0 %v3902
  %7474 = vmatprep.subr.bf16.mxu0 0
  %7475 = vmatpush1.bf16.msra.mxu0 %v3903
  %7476 = vmatprep.subr.bf16.mxu0 0
  %7477 = vmatpush1.bf16.msra.mxu0 %v3904
  %7478 = vmatprep.subr.bf16.mxu0 0
  %7479 = vmatpush1.bf16.msra.mxu0 %v3905
  %7480 = vmatprep.subr.bf16.mxu0 0
  %7481 = vmatpush1.bf16.msra.mxu0 %v3906
  %7482 = vmatprep.subr.bf16.mxu0 0
  %7483 = vmatpush1.bf16.msra.mxu0 %v3907
  %7484 = vmatprep.mubr.bf16.mxu0 %v7304
  %7485 = vmatmul.mubr.bf16.gmra.mrb[0].mxu0 %v7303
  %v7486 = vpop.f32.mrb[0].mxu0
  %v7487 = vadd.f32 %v7390, %v7486
  %v7488 = vpop.f32.mrb[0].mxu0
  %v7489 = vpop.f32.mrb[0].mxu0
  %v7490 = vadd.f32 %v7393, %v7489
  %v7491 = vpop.f32.mrb[0].mxu0
  %7492 = vmatprep.mubr.bf16.mxu0 %v7310
  %7493 = vmatmul.mubr.bf16.gmra.mrb[0].mxu0 %v7309
  %v7494 = vpop.f32.mrb[0].mxu0
  %v7495 = vadd.f32 %v7398, %v7494
  %v7496 = vpop.f32.mrb[0].mxu0
  %v7497 = vpop.f32.mrb[0].mxu0
  %v7498 = vadd.f32 %v7401, %v7497
  %v7499 = vpop.f32.mrb[0].mxu0
  %7500 = vmatprep.mubr.bf16.mxu0 %v7316
  %7501 = vmatmul.mubr.bf16.gmra.mrb[0].mxu0 %v7315
  %v7502 = vpop.f32.mrb[0].mxu0
  %v7503 = vadd.f32 %v7406, %v7502
  %v7504 = vpop.f32.mrb[0].mxu0
  %v7505 = vpop.f32.mrb[0].mxu0
  %v7506 = vadd.f32 %v7409, %v7505
  %v7507 = vpop.f32.mrb[0].mxu0
  %7508 = vmatprep.mubr.bf16.mxu0 %v7322
  %7509 = vmatmul.mubr.bf16.gmra.mrb[0].mxu0 %v7321
  %v7510 = vpop.f32.mrb[0].mxu0
  %v7511 = vadd.f32 %v7414, %v7510
  %v7512 = vpop.f32.mrb[0].mxu0
  %v7513 = vpop.f32.mrb[0].mxu0
  %v7514 = vadd.f32 %v7417, %v7513
  %v7515 = vpop.f32.mrb[0].mxu0
  %7516 = vmatprep.mubr.bf16.mxu0 %v7331
  %7517 = vmatmul.mubr.bf16.gmra.mrb[0].mxu0 %v7330
  %v7518 = vpop.f32.mrb[0].mxu0
  %v7519 = vadd.f32 %v7422, %v7518
  %v7520 = vpop.f32.mrb[0].mxu0
  %v7521 = vpop.f32.mrb[0].mxu0
  %v7522 = vadd.f32 %v7425, %v7521
  %v7523 = vpop.f32.mrb[0].mxu0
  %7524 = vmatprep.mubr.bf16.mxu0 %v7337
  %7525 = vmatmul.mubr.bf16.gmra.mrb[0].mxu0 %v7336
  %v7526 = vpop.f32.mrb[0].mxu0
  %v7527 = vadd.f32 %v7430, %v7526
  %v7528 = vpop.f32.mrb[0].mxu0
  %v7529 = vpop.f32.mrb[0].mxu0
  %v7530 = vadd.f32 %v7433, %v7529
  %v7531 = vpop.f32.mrb[0].mxu0
  %7532 = vmatprep.mubr.bf16.mxu0 %v7343
  %7533 = vmatmul.mubr.bf16.gmra.mrb[0].mxu0 %v7342
  %v7534 = vpop.f32.mrb[0].mxu0
  %v7535 = vadd.f32 %v7438, %v7534
  %v7536 = vpop.f32.mrb[0].mxu0
  %v7537 = vpop.f32.mrb[0].mxu0
  %v7538 = vadd.f32 %v7441, %v7537
  %v7539 = vpop.f32.mrb[0].mxu0
  %7540 = vmatprep.mubr.bf16.mxu0 %v7349
  %7541 = vmatmul.mubr.bf16.gmra.mrb[0].mxu0 %v7348
  %v7542 = vpop.f32.mrb[0].mxu0
  %v7543 = vadd.f32 %v7446, %v7542
  %v7544 = vpop.f32.mrb[0].mxu0
  %v7545 = vpop.f32.mrb[0].mxu0
  %v7546 = vadd.f32 %v7449, %v7545
  %v7547 = vpop.f32.mrb[0].mxu0
  %7548 = vdwg.mxu0
  %7549 = vmatprep.subr.bf16.mxu0 0
  %7550 = vmatpush1.bf16.msra.mxu0 %v3908
  %7551 = vmatprep.subr.bf16.mxu0 0
  %7552 = vmatpush1.bf16.msra.mxu0 %v3909
  %7553 = vmatprep.subr.bf16.mxu0 0
  %7554 = vmatpush1.bf16.msra.mxu0 %v3910
  %7555 = vmatprep.subr.bf16.mxu0 0
  %7556 = vmatpush1.bf16.msra.mxu0 %v3911
  %7557 = vmatprep.subr.bf16.mxu0 0
  %7558 = vmatpush1.bf16.msra.mxu0 %v3912
  %7559 = vmatprep.subr.bf16.mxu0 0
  %7560 = vmatpush1.bf16.msra.mxu0 %v3913
  %7561 = vmatprep.subr.bf16.mxu0 0
  %7562 = vmatpush1.bf16.msra.mxu0 %v3914
  %7563 = vmatprep.subr.bf16.mxu0 0
  %7564 = vmatpush1.bf16.msra.mxu0 %v3915
  %7565 = vmatprep.subr.bf16.mxu0 0
  %7566 = vmatpush1.bf16.msra.mxu0 %v3916
  %7567 = vmatprep.subr.bf16.mxu0 0
  %7568 = vmatpush1.bf16.msra.mxu0 %v3917
  %7569 = vmatprep.subr.bf16.mxu0 0
  %7570 = vmatpush1.bf16.msra.mxu0 %v3918
  %7571 = vmatprep.subr.bf16.mxu0 0
  %7572 = vmatpush1.bf16.msra.mxu0 %v3919
  %7573 = vmatprep.subr.bf16.mxu0 0
  %7574 = vmatpush1.bf16.msra.mxu0 %v3920
  %7575 = vmatprep.subr.bf16.mxu0 0
  %7576 = vmatpush1.bf16.msra.mxu0 %v3921
  %7577 = vmatprep.subr.bf16.mxu0 0
  %7578 = vmatpush1.bf16.msra.mxu0 %v3922
  %7579 = vmatprep.subr.bf16.mxu0 0
  %7580 = vmatpush1.bf16.msra.mxu0 %v3923
  %7581 = vmatprep.mubr.bf16.mxu0 %v7306
  %7582 = vmatmul.mubr.bf16.gmra.mrb[0].mxu0 %v7305
  %v7583 = vpop.f32.mrb[0].mxu0
  %v7584 = vadd.f32 %v7487, %v7583
  %v7585 = vpop.f32.mrb[0].mxu0
  %v7586 = vpop.f32.mrb[0].mxu0
  %v7587 = vadd.f32 %v7490, %v7586
  %v7588 = vpop.f32.mrb[0].mxu0
  %7589 = vmatprep.mubr.bf16.mxu0 %v7312
  %7590 = vmatmul.mubr.bf16.gmra.mrb[0].mxu0 %v7311
  %v7591 = vpop.f32.mrb[0].mxu0
  %v7592 = vadd.f32 %v7495, %v7591
  %v7593 = vpop.f32.mrb[0].mxu0
  %v7594 = vpop.f32.mrb[0].mxu0
  %v7595 = vadd.f32 %v7498, %v7594
  %v7596 = vpop.f32.mrb[0].mxu0
  %7597 = vmatprep.mubr.bf16.mxu0 %v7318
  %7598 = vmatmul.mubr.bf16.gmra.mrb[0].mxu0 %v7317
  %v7599 = vpop.f32.mrb[0].mxu0
  %v7600 = vadd.f32 %v7503, %v7599
  %v7601 = vpop.f32.mrb[0].mxu0
  %v7602 = vpop.f32.mrb[0].mxu0
  %v7603 = vadd.f32 %v7506, %v7602
  %v7604 = vpop.f32.mrb[0].mxu0
  %7605 = vmatprep.mubr.bf16.mxu0 %v7324
  %7606 = vmatmul.mubr.bf16.gmra.mrb[0].mxu0 %v7323
  %v7607 = vpop.f32.mrb[0].mxu0
  %v7608 = vadd.f32 %v7511, %v7607
  %v7609 = vpop.f32.mrb[0].mxu0
  %v7610 = vpop.f32.mrb[0].mxu0
  %v7611 = vadd.f32 %v7514, %v7610
  %v7612 = vpop.f32.mrb[0].mxu0
  %7613 = vmatprep.mubr.bf16.mxu0 %v7333
  %7614 = vmatmul.mubr.bf16.gmra.mrb[0].mxu0 %v7332
  %v7615 = vpop.f32.mrb[0].mxu0
  %v7616 = vadd.f32 %v7519, %v7615
  %v7617 = vpop.f32.mrb[0].mxu0
  %v7618 = vpop.f32.mrb[0].mxu0
  %v7619 = vadd.f32 %v7522, %v7618
  %v7620 = vpop.f32.mrb[0].mxu0
  %7621 = vmatprep.mubr.bf16.mxu0 %v7339
  %7622 = vmatmul.mubr.bf16.gmra.mrb[0].mxu0 %v7338
  %v7623 = vpop.f32.mrb[0].mxu0
  %v7624 = vadd.f32 %v7527, %v7623
  %v7625 = vpop.f32.mrb[0].mxu0
  %v7626 = vpop.f32.mrb[0].mxu0
  %v7627 = vadd.f32 %v7530, %v7626
  %v7628 = vpop.f32.mrb[0].mxu0
  %7629 = vmatprep.mubr.bf16.mxu0 %v7345
  %7630 = vmatmul.mubr.bf16.gmra.mrb[0].mxu0 %v7344
  %v7631 = vpop.f32.mrb[0].mxu0
  %v7632 = vadd.f32 %v7535, %v7631
  %v7633 = vpop.f32.mrb[0].mxu0
  %v7634 = vpop.f32.mrb[0].mxu0
  %v7635 = vadd.f32 %v7538, %v7634
  %v7636 = vpop.f32.mrb[0].mxu0
  %7637 = vmatprep.mubr.bf16.mxu0 %v7351
  %7638 = vmatmul.mubr.bf16.gmra.mrb[0].mxu0 %v7350
  %v7639 = vpop.f32.mrb[0].mxu0
  %v7640 = vadd.f32 %v7543, %v7639
  %v7641 = vpop.f32.mrb[0].mxu0
  %v7642 = vpop.f32.mrb[0].mxu0
  %v7643 = vadd.f32 %v7546, %v7642
  %v7644 = vpop.f32.mrb[0].mxu0
  %7645 = vdwg.mxu0
  %7646 = vmatprep.subr.bf16.mxu0 0
  %7647 = vmatpush1.bf16.msra.mxu0 %v3924
  %7648 = vmatprep.subr.bf16.mxu0 0
  %7649 = vmatpush1.bf16.msra.mxu0 %v3925
  %7650 = vmatprep.subr.bf16.mxu0 0
  %7651 = vmatpush1.bf16.msra.mxu0 %v3926
  %7652 = vmatprep.subr.bf16.mxu0 0
  %7653 = vmatpush1.bf16.msra.mxu0 %v3927
  %7654 = vmatprep.subr.bf16.mxu0 0
  %7655 = vmatpush1.bf16.msra.mxu0 %v3928
  %7656 = vmatprep.subr.bf16.mxu0 0
  %7657 = vmatpush1.bf16.msra.mxu0 %v3929
  %7658 = vmatprep.subr.bf16.mxu0 0
  %7659 = vmatpush1.bf16.msra.mxu0 %v3930
  %7660 = vmatprep.subr.bf16.mxu0 0
  %7661 = vmatpush1.bf16.msra.mxu0 %v3931
  %7662 = vmatprep.subr.bf16.mxu0 0
  %7663 = vmatpush1.bf16.msra.mxu0 %v3932
  %7664 = vmatprep.subr.bf16.mxu0 0
  %7665 = vmatpush1.bf16.msra.mxu0 %v3933
  %7666 = vmatprep.subr.bf16.mxu0 0
  %7667 = vmatpush1.bf16.msra.mxu0 %v3934
  %7668 = vmatprep.subr.bf16.mxu0 0
  %7669 = vmatpush1.bf16.msra.mxu0 %v3935
  %7670 = vmatprep.subr.bf16.mxu0 0
  %7671 = vmatpush1.bf16.msra.mxu0 %v3936
  %7672 = vmatprep.subr.bf16.mxu0 0
  %7673 = vmatpush1.bf16.msra.mxu0 %v3937
  %7674 = vmatprep.subr.bf16.mxu0 0
  %7675 = vmatpush1.bf16.msra.mxu0 %v3938
  %7676 = vmatprep.subr.bf16.mxu0 0
  %7677 = vmatpush1.bf16.msra.mxu0 %v3939
  %7678 = vmatprep.mubr.bf16.mxu0 %v7308
  %7679 = vmatmul.mubr.bf16.gmra.mrb[0].mxu0 %v7307
  %v7680 = vpop.f32.mrb[0].mxu0
  %v7681 = vadd.f32 %v7584, %v7680
  %v7682 = vpop.f32.mrb[0].mxu0
  %v7683 = vpop.f32.mrb[0].mxu0
  %v7684 = vadd.f32 %v7587, %v7683
  %v7685 = vpop.f32.mrb[0].mxu0
  %7686 = vmatprep.mubr.bf16.mxu0 %v7314
  %7687 = vmatmul.mubr.bf16.gmra.mrb[0].mxu0 %v7313
  %v7688 = vpop.f32.mrb[0].mxu0
  %v7689 = vadd.f32 %v7592, %v7688
  %v7690 = vpop.f32.mrb[0].mxu0
  %v7691 = vpop.f32.mrb[0].mxu0
  %v7692 = vadd.f32 %v7595, %v7691
  %v7693 = vpop.f32.mrb[0].mxu0
  %7694 = vmatprep.mubr.bf16.mxu0 %v7320
  %7695 = vmatmul.mubr.bf16.gmra.mrb[0].mxu0 %v7319
  %v7696 = vpop.f32.mrb[0].mxu0
  %v7697 = vadd.f32 %v7600, %v7696
  %v7698 = vpop.f32.mrb[0].mxu0
  %v7699 = vpop.f32.mrb[0].mxu0
  %v7700 = vadd.f32 %v7603, %v7699
  %v7701 = vpop.f32.mrb[0].mxu0
  %7702 = vmatprep.mubr.bf16.mxu0 %v7326
  %7703 = vmatmul.mubr.bf16.gmra.mrb[0].mxu0 %v7325
  %v7704 = vpop.f32.mrb[0].mxu0
  %v7705 = vadd.f32 %v7608, %v7704
  %v7706 = vpop.f32.mrb[0].mxu0
  %v7707 = vpop.f32.mrb[0].mxu0
  %v7708 = vadd.f32 %v7611, %v7707
  %v7709 = vpop.f32.mrb[0].mxu0
  %7710 = vmatprep.mubr.bf16.mxu0 %v7335
  %7711 = vmatmul.mubr.bf16.gmra.mrb[0].mxu0 %v7334
  %v7712 = vpop.f32.mrb[0].mxu0
  %v7713 = vadd.f32 %v7616, %v7712
  %v7714 = vpop.f32.mrb[0].mxu0
  %v7715 = vpop.f32.mrb[0].mxu0
  %v7716 = vadd.f32 %v7619, %v7715
  %v7717 = vpop.f32.mrb[0].mxu0
  %7718 = vmatprep.mubr.bf16.mxu0 %v7341
  %7719 = vmatmul.mubr.bf16.gmra.mrb[0].mxu0 %v7340
  %v7720 = vpop.f32.mrb[0].mxu0
  %v7721 = vadd.f32 %v7624, %v7720
  %v7722 = vpop.f32.mrb[0].mxu0
  %v7723 = vpop.f32.mrb[0].mxu0
  %v7724 = vadd.f32 %v7627, %v7723
  %v7725 = vpop.f32.mrb[0].mxu0
  %7726 = vmatprep.mubr.bf16.mxu0 %v7347
  %7727 = vmatmul.mubr.bf16.gmra.mrb[0].mxu0 %v7346
  %v7728 = vpop.f32.mrb[0].mxu0
  %v7729 = vadd.f32 %v7632, %v7728
  %v7730 = vpop.f32.mrb[0].mxu0
  %v7731 = vpop.f32.mrb[0].mxu0
  %v7732 = vadd.f32 %v7635, %v7731
  %v7733 = vpop.f32.mrb[0].mxu0
  %7734 = vmatprep.mubr.bf16.mxu0 %v7353
  %7735 = vmatmul.mubr.bf16.gmra.mrb[0].mxu0 %v7352
  %v7736 = vpop.f32.mrb[0].mxu0
  %v7737 = vadd.f32 %v7640, %v7736
  %v7738 = vpop.f32.mrb[0].mxu0
  %v7739 = vpop.f32.mrb[0].mxu0
  %v7740 = vadd.f32 %v7643, %v7739
  %v7741 = vpop.f32.mrb[0].mxu0
  %7742 = vdwg.mxu0
  %7743 = vmatprep.subr.bf16.mxu0 0
  %7744 = vmatpush1.bf16.msra.mxu0 %v3940
  %7745 = vmatprep.subr.bf16.mxu0 0
  %7746 = vmatpush1.bf16.msra.mxu0 %v3941
  %7747 = vmatprep.subr.bf16.mxu0 0
  %7748 = vmatpush1.bf16.msra.mxu0 %v3942
  %7749 = vmatprep.subr.bf16.mxu0 0
  %7750 = vmatpush1.bf16.msra.mxu0 %v3943
  %7751 = vmatprep.subr.bf16.mxu0 0
  %7752 = vmatpush1.bf16.msra.mxu0 %v3944
  %7753 = vmatprep.subr.bf16.mxu0 0
  %7754 = vmatpush1.bf16.msra.mxu0 %v3945
  %7755 = vmatprep.subr.bf16.mxu0 0
  %7756 = vmatpush1.bf16.msra.mxu0 %v3946
  %7757 = vmatprep.subr.bf16.mxu0 0
  %7758 = vmatpush1.bf16.msra.mxu0 %v3947
  %7759 = vmatprep.subr.bf16.mxu0 0
  %7760 = vmatpush1.bf16.msra.mxu0 0
  %7761 = vmatprep.subr.bf16.mxu0 0
  %7762 = vmatpush1.bf16.msra.mxu0 0
  %7763 = vmatprep.subr.bf16.mxu0 0
  %7764 = vmatpush1.bf16.msra.mxu0 0
  %7765 = vmatprep.subr.bf16.mxu0 0
  %7766 = vmatpush1.bf16.msra.mxu0 0
  %7767 = vmatprep.subr.bf16.mxu0 0
  %7768 = vmatpush1.bf16.msra.mxu0 0
  %7769 = vmatprep.subr.bf16.mxu0 0
  %7770 = vmatpush1.bf16.msra.mxu0 0
  %7771 = vmatprep.subr.bf16.mxu0 0
  %7772 = vmatpush1.bf16.msra.mxu0 0
  %7773 = vmatprep.subr.bf16.mxu0 0
  %7774 = vmatpush1.bf16.msra.mxu0 0
  %7775 = vmatprep.mubr.bf16.mxu0 0
  %7776 = vmatmul.mubr.bf16.gmra.mrb[0].mxu0 %v7309
  %v7777 = vpop.f32.mrb[0].mxu0
  %v7778 = vadd.f32 %v7681, %v7777
  %v7779 = vpop.f32.mrb[0].mxu0
  %v7780 = vpop.f32.mrb[0].mxu0
  %v7781 = vadd.f32 %v7684, %v7780
  %v7782 = vpop.f32.mrb[0].mxu0
  %7783 = vmatprep.mubr.bf16.mxu0 0
  %7784 = vmatmul.mubr.bf16.gmra.mrb[0].mxu0 %v7315
  %v7785 = vpop.f32.mrb[0].mxu0
  %v7786 = vadd.f32 %v7689, %v7785
  %v7787 = vpop.f32.mrb[0].mxu0
  %v7788 = vpop.f32.mrb[0].mxu0
  %v7789 = vadd.f32 %v7692, %v7788
  %v7790 = vpop.f32.mrb[0].mxu0
  %7791 = vmatprep.mubr.bf16.mxu0 0
  %7792 = vmatmul.mubr.bf16.gmra.mrb[0].mxu0 %v7321
  %v7793 = vpop.f32.mrb[0].mxu0
  %v7794 = vadd.f32 %v7697, %v7793
  %v7795 = vpop.f32.mrb[0].mxu0
  %v7796 = vpop.f32.mrb[0].mxu0
  %v7797 = vadd.f32 %v7700, %v7796
  %v7798 = vpop.f32.mrb[0].mxu0
  %7799 = vmatprep.mubr.bf16.mxu0 0
  %7800 = vmatmul.mubr.bf16.gmra.mrb[0].mxu0 %v7327
  %v7801 = vpop.f32.mrb[0].mxu0
  %v7802 = vadd.f32 %v7705, %v7801
  %v7803 = vpop.f32.mrb[0].mxu0
  %v7804 = vpop.f32.mrb[0].mxu0
  %v7805 = vadd.f32 %v7708, %v7804
  %v7806 = vpop.f32.mrb[0].mxu0
  %7807 = vmatprep.mubr.bf16.mxu0 0
  %7808 = vmatmul.mubr.bf16.gmra.mrb[0].mxu0 %v7336
  %v7809 = vpop.f32.mrb[0].mxu0
  %v7810 = vadd.f32 %v7713, %v7809
  %v7811 = vpop.f32.mrb[0].mxu0
  %v7812 = vpop.f32.mrb[0].mxu0
  %v7813 = vadd.f32 %v7716, %v7812
  %v7814 = vpop.f32.mrb[0].mxu0
  %7815 = vmatprep.mubr.bf16.mxu0 0
  %7816 = vmatmul.mubr.bf16.gmra.mrb[0].mxu0 %v7342
  %v7817 = vpop.f32.mrb[0].mxu0
  %v7818 = vadd.f32 %v7721, %v7817
  %v7819 = vpop.f32.mrb[0].mxu0
  %v7820 = vpop.f32.mrb[0].mxu0
  %v7821 = vadd.f32 %v7724, %v7820
  %v7822 = vpop.f32.mrb[0].mxu0
  %7823 = vmatprep.mubr.bf16.mxu0 0
  %7824 = vmatmul.mubr.bf16.gmra.mrb[0].mxu0 %v7348
  %v7825 = vpop.f32.mrb[0].mxu0
  %v7826 = vadd.f32 %v7729, %v7825
  %v7827 = vpop.f32.mrb[0].mxu0
  %v7828 = vpop.f32.mrb[0].mxu0
  %v7829 = vadd.f32 %v7732, %v7828
  %v7830 = vpop.f32.mrb[0].mxu0
  %7831 = vmatprep.mubr.bf16.mxu0 0
  %7832 = vmatmul.mubr.bf16.gmra.mrb[0].mxu0 %v7354
  %v7833 = vpop.f32.mrb[0].mxu0
  %v7834 = vadd.f32 %v7737, %v7833
  %v7835 = vpop.f32.mrb[0].mxu0
  %v7836 = vpop.f32.mrb[0].mxu0
  %v7837 = vadd.f32 %v7740, %v7836
  %v7838 = vpop.f32.mrb[0].mxu0
  %7839 = vdwg.mxu0
  %v7840 = vmax.f32 %v7778, 0.0
  %v7841 = vmax.f32 %v7781, 0.0
  %v7842 = vmax.f32 %v7786, 0.0
  %v7843 = vmax.f32 %v7789, 0.0
  %v7844 = vmax.f32 %v7794, 0.0
  %v7845 = vmax.f32 %v7797, 0.0
  %v7846 = vmax.f32 %v7802, 0.0
  %v7847 = vmax.f32 %v7805, 0.0
  %v7848 = vmax.f32 %v7810, 0.0
  %v7849 = vmax.f32 %v7813, 0.0
  %v7850 = vmax.f32 %v7818, 0.0
  %v7851 = vmax.f32 %v7821, 0.0
  %v7852 = vmax.f32 %v7826, 0.0
  %v7853 = vmax.f32 %v7829, 0.0
  %v7854 = vmax.f32 %v7834, 0.0
  %v7855 = vmax.f32 %v7837, 0.0
  %v7870 = vrot.slane %v7840, 7
  %v7871 = vsel %vm120, %v121, %v7870
  %v7872 = vrot.slane %v7841, 7
  %v7873 = vsel %vm120, %v121, %v7872
  %v7874 = vrot.slane %v7842, 7
  %v7875 = vsel %vm120, %v121, %v7874
  %v7876 = vrot.slane %v7843, 7
  %v7877 = vsel %vm120, %v121, %v7876
  %v7878 = vrot.slane %v7844, 7
  %v7879 = vsel %vm120, %v121, %v7878
  %v7880 = vrot.slane %v7845, 7
  %v7881 = vsel %vm120, %v121, %v7880
  %v7882 = vrot.slane %v7846, 7
  %v7883 = vsel %vm120, %v121, %v7882
  %v7884 = vrot.slane %v7848, 7
  %v7885 = vsel %vm120, %v121, %v7884
  %v7886 = vrot.slane %v7849, 7
  %v7887 = vsel %vm120, %v121, %v7886
  %v7888 = vrot.slane %v7850, 7
  %v7889 = vsel %vm120, %v121, %v7888
  %v7890 = vrot.slane %v7851, 7
  %v7891 = vsel %vm120, %v121, %v7890
  %v7892 = vrot.slane %v7852, 7
  %v7893 = vsel %vm120, %v121, %v7892
  %v7894 = vrot.slane %v7853, 7
  %v7895 = vsel %vm120, %v121, %v7894
  %v7896 = vrot.slane %v7854, 7
  %v7897 = vsel %vm120, %v121, %v7896
  %v7912 = vrot.slane %v7840, 1
  %v7913 = vsel %vm160, %v7912, %v161
  %v7914 = vrot.slane %v7841, 1
  %v7915 = vsel %vm160, %v7914, %v161
  %v7916 = vrot.slane %v7842, 1
  %v7917 = vsel %vm160, %v7916, %v161
  %v7918 = vrot.slane %v7843, 1
  %v7919 = vsel %vm160, %v7918, %v161
  %v7920 = vrot.slane %v7844, 1
  %v7921 = vsel %vm160, %v7920, %v161
  %v7922 = vrot.slane %v7845, 1
  %v7923 = vsel %vm160, %v7922, %v161
  %v7924 = vrot.slane %v7846, 1
  %v7925 = vsel %vm160, %v7924, %v161
  %v7926 = vrot.slane %v7848, 1
  %v7927 = vsel %vm160, %v7926, %v161
  %v7928 = vrot.slane %v7849, 1
  %v7929 = vsel %vm160, %v7928, %v161
  %v7930 = vrot.slane %v7850, 1
  %v7931 = vsel %vm160, %v7930, %v161
  %v7932 = vrot.slane %v7851, 1
  %v7933 = vsel %vm160, %v7932, %v161
  %v7934 = vrot.slane %v7852, 1
  %v7935 = vsel %vm160, %v7934, %v161
  %v7936 = vrot.slane %v7853, 1
  %v7937 = vsel %vm160, %v7936, %v161
  %v7938 = vrot.slane %v7854, 1
  %v7939 = vsel %vm160, %v7938, %v161
  %v7956 = vrot.slane %v7847, 7
  %v7957 = vsel %vm120, %v121, %v7956
  %v7958 = vrot.slane %v7855, 7
  %v7959 = vsel %vm120, %v121, %v7958
  %v7962 = vrot.slane %v7847, 1
  %v7963 = vsel %vm160, %v7962, %v161
  %v7964 = vrot.slane %v7855, 1
  %v7965 = vsel %vm160, %v7964, %v161
  %v7968 = vpack.c.bf16 %v7871, %v122
  %v7969 = vpack.c.bf16 %v7840, 0.0
  %v7970 = vpack.c.bf16 %v7913, %v162
  %v7971 = vpack.c.bf16 %v7873, %v7871
  %v7972 = vpack.c.bf16 %v7841, %v7840
  %v7973 = vpack.c.bf16 %v7915, %v7913
  %v7974 = vpack.c.bf16 %v7875, %v7873
  %v7975 = vpack.c.bf16 %v7842, %v7841
  %v7976 = vpack.c.bf16 %v7917, %v7915
  %v7977 = vpack.c.bf16 %v7877, %v7875
  %v7978 = vpack.c.bf16 %v7843, %v7842
  %v7979 = vpack.c.bf16 %v7919, %v7917
  %v7980 = vpack.c.bf16 %v7879, %v7877
  %v7981 = vpack.c.bf16 %v7844, %v7843
  %v7982 = vpack.c.bf16 %v7921, %v7919
  %v7983 = vpack.c.bf16 %v7881, %v7879
  %v7984 = vpack.c.bf16 %v7845, %v7844
  %v7985 = vpack.c.bf16 %v7923, %v7921
  %v7986 = vpack.c.bf16 %v7883, %v7881
  %v7987 = vpack.c.bf16 %v7846, %v7845
  %v7988 = vpack.c.bf16 %v7925, %v7923
  %v7989 = vpack.c.bf16 %v7957, %v7883
  %v7990 = vpack.c.bf16 %v7847, %v7846
  %v7991 = vpack.c.bf16 %v7963, %v7925
  %v7992 = vpack.c.bf16 %v122, %v7957
  %v7993 = vpack.c.bf16 0.0, %v7847
  %v7994 = vpack.c.bf16 %v162, %v7963
  %v7995 = vpack.c.bf16 %v7885, %v122
  %v7996 = vpack.c.bf16 %v7848, 0.0
  %v7997 = vpack.c.bf16 %v7927, %v162
  %v7998 = vpack.c.bf16 %v7887, %v7885
  %v7999 = vpack.c.bf16 %v7849, %v7848
  %v8000 = vpack.c.bf16 %v7929, %v7927
  %v8001 = vpack.c.bf16 %v7889, %v7887
  %v8002 = vpack.c.bf16 %v7850, %v7849
  %v8003 = vpack.c.bf16 %v7931, %v7929
  %v8004 = vpack.c.bf16 %v7891, %v7889
  %v8005 = vpack.c.bf16 %v7851, %v7850
  %v8006 = vpack.c.bf16 %v7933, %v7931
  %v8007 = vpack.c.bf16 %v7893, %v7891
  %v8008 = vpack.c.bf16 %v7852, %v7851
  %v8009 = vpack.c.bf16 %v7935, %v7933
  %v8010 = vpack.c.bf16 %v7895, %v7893
  %v8011 = vpack.c.bf16 %v7853, %v7852
  %v8012 = vpack.c.bf16 %v7937, %v7935
  %v8013 = vpack.c.bf16 %v7897, %v7895
  %v8014 = vpack.c.bf16 %v7854, %v7853
  %v8015 = vpack.c.bf16 %v7939, %v7937
  %v8016 = vpack.c.bf16 %v7959, %v7897
  %v8017 = vpack.c.bf16 %v7855, %v7854
  %v8018 = vpack.c.bf16 %v7965, %v7939
  %v8019 = vpack.c.bf16 %v122, %v7959
  %v8020 = vpack.c.bf16 0.0, %v7855
  %v8021 = vpack.c.bf16 %v162, %v7965
  %8022 = vmatprep.subr.bf16.mxu0 0
  %8023 = vmatpush1.bf16.msra.mxu0 %v3876
  %8024 = vmatprep.subr.bf16.mxu0 0
  %8025 = vmatpush1.bf16.msra.mxu0 %v3877
  %8026 = vmatprep.subr.bf16.mxu0 0
  %8027 = vmatpush1.bf16.msra.mxu0 %v3878
  %8028 = vmatprep.subr.bf16.mxu0 0
  %8029 = vmatpush1.bf16.msra.mxu0 %v3879
  %8030 = vmatprep.subr.bf16.mxu0 0
  %8031 = vmatpush1.bf16.msra.mxu0 %v3880
  %8032 = vmatprep.subr.bf16.mxu0 0
  %8033 = vmatpush1.bf16.msra.mxu0 %v3881
  %8034 = vmatprep.subr.bf16.mxu0 0
  %8035 = vmatpush1.bf16.msra.mxu0 %v3882
  %8036 = vmatprep.subr.bf16.mxu0 0
  %8037 = vmatpush1.bf16.msra.mxu0 %v3883
  %8038 = vmatprep.subr.bf16.mxu0 0
  %8039 = vmatpush1.bf16.msra.mxu0 %v3884
  %8040 = vmatprep.subr.bf16.mxu0 0
  %8041 = vmatpush1.bf16.msra.mxu0 %v3885
  %8042 = vmatprep.subr.bf16.mxu0 0
  %8043 = vmatpush1.bf16.msra.mxu0 %v3886
  %8044 = vmatprep.subr.bf16.mxu0 0
  %8045 = vmatpush1.bf16.msra.mxu0 %v3887
  %8046 = vmatprep.subr.bf16.mxu0 0
  %8047 = vmatpush1.bf16.msra.mxu0 %v3888
  %8048 = vmatprep.subr.bf16.mxu0 0
  %8049 = vmatpush1.bf16.msra.mxu0 %v3889
  %8050 = vmatprep.subr.bf16.mxu0 0
  %8051 = vmatpush1.bf16.msra.mxu0 %v3890
  %8052 = vmatprep.subr.bf16.mxu0 0
  %8053 = vmatpush1.bf16.msra.mxu0 %v3891
  %8054 = vmatprep.mubr.bf16.mxu0 %v7969
  %8055 = vmatmul.mubr.bf16.gmra.mrb[0].mxu0 %v7968
  %v8056 = vpop.f32.mrb[0].mxu0
  %v8057 = vadd.f32 %v3586, %v8056
  %v8058 = vpop.f32.mrb[0].mxu0
  %v8059 = vpop.f32.mrb[0].mxu0
  %v8060 = vadd.f32 %v3586, %v8059
  %v8061 = vpop.f32.mrb[0].mxu0
  %8062 = vmatprep.mubr.bf16.mxu0 %v7975
  %8063 = vmatmul.mubr.bf16.gmra.mrb[0].mxu0 %v7974
  %v8064 = vpop.f32.mrb[0].mxu0
  %v8065 = vadd.f32 %v3586, %v8064
  %v8066 = vpop.f32.mrb[0].mxu0
  %v8067 = vpop.f32.mrb[0].mxu0
  %v8068 = vadd.f32 %v3586, %v8067
  %v8069 = vpop.f32.mrb[0].mxu0
  %8070 = vmatprep.mubr.bf16.mxu0 %v7981
  %8071 = vmatmul.mubr.bf16.gmra.mrb[0].mxu0 %v7980
  %v8072 = vpop.f32.mrb[0].mxu0
  %v8073 = vadd.f32 %v3586, %v8072
  %v8074 = vpop.f32.mrb[0].mxu0
  %v8075 = vpop.f32.mrb[0].mxu0
  %v8076 = vadd.f32 %v3586, %v8075
  %v8077 = vpop.f32.mrb[0].mxu0
  %8078 = vmatprep.mubr.bf16.mxu0 %v7987
  %8079 = vmatmul.mubr.bf16.gmra.mrb[0].mxu0 %v7986
  %v8080 = vpop.f32.mrb[0].mxu0
  %v8081 = vadd.f32 %v3586, %v8080
  %v8082 = vpop.f32.mrb[0].mxu0
  %v8083 = vpop.f32.mrb[0].mxu0
  %v8084 = vadd.f32 %v3586, %v8083
  %v8085 = vpop.f32.mrb[0].mxu0
  %8086 = vmatprep.mubr.bf16.mxu0 %v7996
  %8087 = vmatmul.mubr.bf16.gmra.mrb[0].mxu0 %v7995
  %v8088 = vpop.f32.mrb[0].mxu0
  %v8089 = vadd.f32 %v3586, %v8088
  %v8090 = vpop.f32.mrb[0].mxu0
  %v8091 = vpop.f32.mrb[0].mxu0
  %v8092 = vadd.f32 %v3586, %v8091
  %v8093 = vpop.f32.mrb[0].mxu0
  %8094 = vmatprep.mubr.bf16.mxu0 %v8002
  %8095 = vmatmul.mubr.bf16.gmra.mrb[0].mxu0 %v8001
  %v8096 = vpop.f32.mrb[0].mxu0
  %v8097 = vadd.f32 %v3586, %v8096
  %v8098 = vpop.f32.mrb[0].mxu0
  %v8099 = vpop.f32.mrb[0].mxu0
  %v8100 = vadd.f32 %v3586, %v8099
  %v8101 = vpop.f32.mrb[0].mxu0
  %8102 = vmatprep.mubr.bf16.mxu0 %v8008
  %8103 = vmatmul.mubr.bf16.gmra.mrb[0].mxu0 %v8007
  %v8104 = vpop.f32.mrb[0].mxu0
  %v8105 = vadd.f32 %v3586, %v8104
  %v8106 = vpop.f32.mrb[0].mxu0
  %v8107 = vpop.f32.mrb[0].mxu0
  %v8108 = vadd.f32 %v3586, %v8107
  %v8109 = vpop.f32.mrb[0].mxu0
  %8110 = vmatprep.mubr.bf16.mxu0 %v8014
  %8111 = vmatmul.mubr.bf16.gmra.mrb[0].mxu0 %v8013
  %v8112 = vpop.f32.mrb[0].mxu0
  %v8113 = vadd.f32 %v3586, %v8112
  %v8114 = vpop.f32.mrb[0].mxu0
  %v8115 = vpop.f32.mrb[0].mxu0
  %v8116 = vadd.f32 %v3586, %v8115
  %v8117 = vpop.f32.mrb[0].mxu0
  %8118 = vdwg.mxu0
  %8119 = vmatprep.subr.bf16.mxu0 0
  %8120 = vmatpush1.bf16.msra.mxu0 %v3892
  %8121 = vmatprep.subr.bf16.mxu0 0
  %8122 = vmatpush1.bf16.msra.mxu0 %v3893
  %8123 = vmatprep.subr.bf16.mxu0 0
  %8124 = vmatpush1.bf16.msra.mxu0 %v3894
  %8125 = vmatprep.subr.bf16.mxu0 0
  %8126 = vmatpush1.bf16.msra.mxu0 %v3895
  %8127 = vmatprep.subr.bf16.mxu0 0
  %8128 = vmatpush1.bf16.msra.mxu0 %v3896
  %8129 = vmatprep.subr.bf16.mxu0 0
  %8130 = vmatpush1.bf16.msra.mxu0 %v3897
  %8131 = vmatprep.subr.bf16.mxu0 0
  %8132 = vmatpush1.bf16.msra.mxu0 %v3898
  %8133 = vmatprep.subr.bf16.mxu0 0
  %8134 = vmatpush1.bf16.msra.mxu0 %v3899
  %8135 = vmatprep.subr.bf16.mxu0 0
  %8136 = vmatpush1.bf16.msra.mxu0 %v3900
  %8137 = vmatprep.subr.bf16.mxu0 0
  %8138 = vmatpush1.bf16.msra.mxu0 %v3901
  %8139 = vmatprep.subr.bf16.mxu0 0
  %8140 = vmatpush1.bf16.msra.mxu0 %v3902
  %8141 = vmatprep.subr.bf16.mxu0 0
  %8142 = vmatpush1.bf16.msra.mxu0 %v3903
  %8143 = vmatprep.subr.bf16.mxu0 0
  %8144 = vmatpush1.bf16.msra.mxu0 %v3904
  %8145 = vmatprep.subr.bf16.mxu0 0
  %8146 = vmatpush1.bf16.msra.mxu0 %v3905
  %8147 = vmatprep.subr.bf16.mxu0 0
  %8148 = vmatpush1.bf16.msra.mxu0 %v3906
  %8149 = vmatprep.subr.bf16.mxu0 0
  %8150 = vmatpush1.bf16.msra.mxu0 %v3907
  %8151 = vmatprep.mubr.bf16.mxu0 %v7971
  %8152 = vmatmul.mubr.bf16.gmra.mrb[0].mxu0 %v7970
  %v8153 = vpop.f32.mrb[0].mxu0
  %v8154 = vadd.f32 %v8057, %v8153
  %v8155 = vpop.f32.mrb[0].mxu0
  %v8156 = vpop.f32.mrb[0].mxu0
  %v8157 = vadd.f32 %v8060, %v8156
  %v8158 = vpop.f32.mrb[0].mxu0
  %8159 = vmatprep.mubr.bf16.mxu0 %v7977
  %8160 = vmatmul.mubr.bf16.gmra.mrb[0].mxu0 %v7976
  %v8161 = vpop.f32.mrb[0].mxu0
  %v8162 = vadd.f32 %v8065, %v8161
  %v8163 = vpop.f32.mrb[0].mxu0
  %v8164 = vpop.f32.mrb[0].mxu0
  %v8165 = vadd.f32 %v8068, %v8164
  %v8166 = vpop.f32.mrb[0].mxu0
  %8167 = vmatprep.mubr.bf16.mxu0 %v7983
  %8168 = vmatmul.mubr.bf16.gmra.mrb[0].mxu0 %v7982
  %v8169 = vpop.f32.mrb[0].mxu0
  %v8170 = vadd.f32 %v8073, %v8169
  %v8171 = vpop.f32.mrb[0].mxu0
  %v8172 = vpop.f32.mrb[0].mxu0
  %v8173 = vadd.f32 %v8076, %v8172
  %v8174 = vpop.f32.mrb[0].mxu0
  %8175 = vmatprep.mubr.bf16.mxu0 %v7989
  %8176 = vmatmul.mubr.bf16.gmra.mrb[0].mxu0 %v7988
  %v8177 = vpop.f32.mrb[0].mxu0
  %v8178 = vadd.f32 %v8081, %v8177
  %v8179 = vpop.f32.mrb[0].mxu0
  %v8180 = vpop.f32.mrb[0].mxu0
  %v8181 = vadd.f32 %v8084, %v8180
  %v8182 = vpop.f32.mrb[0].mxu0
  %8183 = vmatprep.mubr.bf16.mxu0 %v7998
  %8184 = vmatmul.mubr.bf16.gmra.mrb[0].mxu0 %v7997
  %v8185 = vpop.f32.mrb[0].mxu0
  %v8186 = vadd.f32 %v8089, %v8185
  %v8187 = vpop.f32.mrb[0].mxu0
  %v8188 = vpop.f32.mrb[0].mxu0
  %v8189 = vadd.f32 %v8092, %v8188
  %v8190 = vpop.f32.mrb[0].mxu0
  %8191 = vmatprep.mubr.bf16.mxu0 %v8004
  %8192 = vmatmul.mubr.bf16.gmra.mrb[0].mxu0 %v8003
  %v8193 = vpop.f32.mrb[0].mxu0
  %v8194 = vadd.f32 %v8097, %v8193
  %v8195 = vpop.f32.mrb[0].mxu0
  %v8196 = vpop.f32.mrb[0].mxu0
  %v8197 = vadd.f32 %v8100, %v8196
  %v8198 = vpop.f32.mrb[0].mxu0
  %8199 = vmatprep.mubr.bf16.mxu0 %v8010
  %8200 = vmatmul.mubr.bf16.gmra.mrb[0].mxu0 %v8009
  %v8201 = vpop.f32.mrb[0].mxu0
  %v8202 = vadd.f32 %v8105, %v8201
  %v8203 = vpop.f32.mrb[0].mxu0
  %v8204 = vpop.f32.mrb[0].mxu0
  %v8205 = vadd.f32 %v8108, %v8204
  %v8206 = vpop.f32.mrb[0].mxu0
  %8207 = vmatprep.mubr.bf16.mxu0 %v8016
  %8208 = vmatmul.mubr.bf16.gmra.mrb[0].mxu0 %v8015
  %v8209 = vpop.f32.mrb[0].mxu0
  %v8210 = vadd.f32 %v8113, %v8209
  %v8211 = vpop.f32.mrb[0].mxu0
  %v8212 = vpop.f32.mrb[0].mxu0
  %v8213 = vadd.f32 %v8116, %v8212
  %v8214 = vpop.f32.mrb[0].mxu0
  %8215 = vdwg.mxu0
  %8216 = vmatprep.subr.bf16.mxu0 0
  %8217 = vmatpush1.bf16.msra.mxu0 %v3908
  %8218 = vmatprep.subr.bf16.mxu0 0
  %8219 = vmatpush1.bf16.msra.mxu0 %v3909
  %8220 = vmatprep.subr.bf16.mxu0 0
  %8221 = vmatpush1.bf16.msra.mxu0 %v3910
  %8222 = vmatprep.subr.bf16.mxu0 0
  %8223 = vmatpush1.bf16.msra.mxu0 %v3911
  %8224 = vmatprep.subr.bf16.mxu0 0
  %8225 = vmatpush1.bf16.msra.mxu0 %v3912
  %8226 = vmatprep.subr.bf16.mxu0 0
  %8227 = vmatpush1.bf16.msra.mxu0 %v3913
  %8228 = vmatprep.subr.bf16.mxu0 0
  %8229 = vmatpush1.bf16.msra.mxu0 %v3914
  %8230 = vmatprep.subr.bf16.mxu0 0
  %8231 = vmatpush1.bf16.msra.mxu0 %v3915
  %8232 = vmatprep.subr.bf16.mxu0 0
  %8233 = vmatpush1.bf16.msra.mxu0 %v3916
  %8234 = vmatprep.subr.bf16.mxu0 0
  %8235 = vmatpush1.bf16.msra.mxu0 %v3917
  %8236 = vmatprep.subr.bf16.mxu0 0
  %8237 = vmatpush1.bf16.msra.mxu0 %v3918
  %8238 = vmatprep.subr.bf16.mxu0 0
  %8239 = vmatpush1.bf16.msra.mxu0 %v3919
  %8240 = vmatprep.subr.bf16.mxu0 0
  %8241 = vmatpush1.bf16.msra.mxu0 %v3920
  %8242 = vmatprep.subr.bf16.mxu0 0
  %8243 = vmatpush1.bf16.msra.mxu0 %v3921
  %8244 = vmatprep.subr.bf16.mxu0 0
  %8245 = vmatpush1.bf16.msra.mxu0 %v3922
  %8246 = vmatprep.subr.bf16.mxu0 0
  %8247 = vmatpush1.bf16.msra.mxu0 %v3923
  %8248 = vmatprep.mubr.bf16.mxu0 %v7973
  %8249 = vmatmul.mubr.bf16.gmra.mrb[0].mxu0 %v7972
  %v8250 = vpop.f32.mrb[0].mxu0
  %v8251 = vadd.f32 %v8154, %v8250
  %v8252 = vpop.f32.mrb[0].mxu0
  %v8253 = vpop.f32.mrb[0].mxu0
  %v8254 = vadd.f32 %v8157, %v8253
  %v8255 = vpop.f32.mrb[0].mxu0
  %8256 = vmatprep.mubr.bf16.mxu0 %v7979
  %8257 = vmatmul.mubr.bf16.gmra.mrb[0].mxu0 %v7978
  %v8258 = vpop.f32.mrb[0].mxu0
  %v8259 = vadd.f32 %v8162, %v8258
  %v8260 = vpop.f32.mrb[0].mxu0
  %v8261 = vpop.f32.mrb[0].mxu0
  %v8262 = vadd.f32 %v8165, %v8261
  %v8263 = vpop.f32.mrb[0].mxu0
  %8264 = vmatprep.mubr.bf16.mxu0 %v7985
  %8265 = vmatmul.mubr.bf16.gmra.mrb[0].mxu0 %v7984
  %v8266 = vpop.f32.mrb[0].mxu0
  %v8267 = vadd.f32 %v8170, %v8266
  %v8268 = vpop.f32.mrb[0].mxu0
  %v8269 = vpop.f32.mrb[0].mxu0
  %v8270 = vadd.f32 %v8173, %v8269
  %v8271 = vpop.f32.mrb[0].mxu0
  %8272 = vmatprep.mubr.bf16.mxu0 %v7991
  %8273 = vmatmul.mubr.bf16.gmra.mrb[0].mxu0 %v7990
  %v8274 = vpop.f32.mrb[0].mxu0
  %v8275 = vadd.f32 %v8178, %v8274
  %v8276 = vpop.f32.mrb[0].mxu0
  %v8277 = vpop.f32.mrb[0].mxu0
  %v8278 = vadd.f32 %v8181, %v8277
  %v8279 = vpop.f32.mrb[0].mxu0
  %8280 = vmatprep.mubr.bf16.mxu0 %v8000
  %8281 = vmatmul.mubr.bf16.gmra.mrb[0].mxu0 %v7999
  %v8282 = vpop.f32.mrb[0].mxu0
  %v8283 = vadd.f32 %v8186, %v8282
  %v8284 = vpop.f32.mrb[0].mxu0
  %v8285 = vpop.f32.mrb[0].mxu0
  %v8286 = vadd.f32 %v8189, %v8285
  %v8287 = vpop.f32.mrb[0].mxu0
  %8288 = vmatprep.mubr.bf16.mxu0 %v8006
  %8289 = vmatmul.mubr.bf16.gmra.mrb[0].mxu0 %v8005
  %v8290 = vpop.f32.mrb[0].mxu0
  %v8291 = vadd.f32 %v8194, %v8290
  %v8292 = vpop.f32.mrb[0].mxu0
  %v8293 = vpop.f32.mrb[0].mxu0
  %v8294 = vadd.f32 %v8197, %v8293
  %v8295 = vpop.f32.mrb[0].mxu0
  %8296 = vmatprep.mubr.bf16.mxu0 %v8012
  %8297 = vmatmul.mubr.bf16.gmra.mrb[0].mxu0 %v8011
  %v8298 = vpop.f32.mrb[0].mxu0
  %v8299 = vadd.f32 %v8202, %v8298
  %v8300 = vpop.f32.mrb[0].mxu0
  %v8301 = vpop.f32.mrb[0].mxu0
  %v8302 = vadd.f32 %v8205, %v8301
  %v8303 = vpop.f32.mrb[0].mxu0
  %8304 = vmatprep.mubr.bf16.mxu0 %v8018
  %8305 = vmatmul.mubr.bf16.gmra.mrb[0].mxu0 %v8017
  %v8306 = vpop.f32.mrb[0].mxu0
  %v8307 = vadd.f32 %v8210, %v8306
  %v8308 = vpop.f32.mrb[0].mxu0
  %v8309 = vpop.f32.mrb[0].mxu0
  %v8310 = vadd.f32 %v8213, %v8309
  %v8311 = vpop.f32.mrb[0].mxu0
  %8312 = vdwg.mxu0
  %8313 = vmatprep.subr.bf16.mxu0 0
  %8314 = vmatpush1.bf16.msra.mxu0 %v3924
  %8315 = vmatprep.subr.bf16.mxu0 0
  %8316 = vmatpush1.bf16.msra.mxu0 %v3925
  %8317 = vmatprep.subr.bf16.mxu0 0
  %8318 = vmatpush1.bf16.msra.mxu0 %v3926
  %8319 = vmatprep.subr.bf16.mxu0 0
  %8320 = vmatpush1.bf16.msra.mxu0 %v3927
  %8321 = vmatprep.subr.bf16.mxu0 0
  %8322 = vmatpush1.bf16.msra.mxu0 %v3928
  %8323 = vmatprep.subr.bf16.mxu0 0
  %8324 = vmatpush1.bf16.msra.mxu0 %v3929
  %8325 = vmatprep.subr.bf16.mxu0 0
  %8326 = vmatpush1.bf16.msra.mxu0 %v3930
  %8327 = vmatprep.subr.bf16.mxu0 0
  %8328 = vmatpush1.bf16.msra.mxu0 %v3931
  %8329 = vmatprep.subr.bf16.mxu0 0
  %8330 = vmatpush1.bf16.msra.mxu0 %v3932
  %8331 = vmatprep.subr.bf16.mxu0 0
  %8332 = vmatpush1.bf16.msra.mxu0 %v3933
  %8333 = vmatprep.subr.bf16.mxu0 0
  %8334 = vmatpush1.bf16.msra.mxu0 %v3934
  %8335 = vmatprep.subr.bf16.mxu0 0
  %8336 = vmatpush1.bf16.msra.mxu0 %v3935
  %8337 = vmatprep.subr.bf16.mxu0 0
  %8338 = vmatpush1.bf16.msra.mxu0 %v3936
  %8339 = vmatprep.subr.bf16.mxu0 0
  %8340 = vmatpush1.bf16.msra.mxu0 %v3937
  %8341 = vmatprep.subr.bf16.mxu0 0
  %8342 = vmatpush1.bf16.msra.mxu0 %v3938
  %8343 = vmatprep.subr.bf16.mxu0 0
  %8344 = vmatpush1.bf16.msra.mxu0 %v3939
  %8345 = vmatprep.mubr.bf16.mxu0 %v7975
  %8346 = vmatmul.mubr.bf16.gmra.mrb[0].mxu0 %v7974
  %v8347 = vpop.f32.mrb[0].mxu0
  %v8348 = vadd.f32 %v8251, %v8347
  %v8349 = vpop.f32.mrb[0].mxu0
  %v8350 = vpop.f32.mrb[0].mxu0
  %v8351 = vadd.f32 %v8254, %v8350
  %v8352 = vpop.f32.mrb[0].mxu0
  %8353 = vmatprep.mubr.bf16.mxu0 %v7981
  %8354 = vmatmul.mubr.bf16.gmra.mrb[0].mxu0 %v7980
  %v8355 = vpop.f32.mrb[0].mxu0
  %v8356 = vadd.f32 %v8259, %v8355
  %v8357 = vpop.f32.mrb[0].mxu0
  %v8358 = vpop.f32.mrb[0].mxu0
  %v8359 = vadd.f32 %v8262, %v8358
  %v8360 = vpop.f32.mrb[0].mxu0
  %8361 = vmatprep.mubr.bf16.mxu0 %v7987
  %8362 = vmatmul.mubr.bf16.gmra.mrb[0].mxu0 %v7986
  %v8363 = vpop.f32.mrb[0].mxu0
  %v8364 = vadd.f32 %v8267, %v8363
  %v8365 = vpop.f32.mrb[0].mxu0
  %v8366 = vpop.f32.mrb[0].mxu0
  %v8367 = vadd.f32 %v8270, %v8366
  %v8368 = vpop.f32.mrb[0].mxu0
  %8369 = vmatprep.mubr.bf16.mxu0 %v7993
  %8370 = vmatmul.mubr.bf16.gmra.mrb[0].mxu0 %v7992
  %v8371 = vpop.f32.mrb[0].mxu0
  %v8372 = vadd.f32 %v8275, %v8371
  %v8373 = vpop.f32.mrb[0].mxu0
  %v8374 = vpop.f32.mrb[0].mxu0
  %v8375 = vadd.f32 %v8278, %v8374
  %v8376 = vpop.f32.mrb[0].mxu0
  %8377 = vmatprep.mubr.bf16.mxu0 %v8002
  %8378 = vmatmul.mubr.bf16.gmra.mrb[0].mxu0 %v8001
  %v8379 = vpop.f32.mrb[0].mxu0
  %v8380 = vadd.f32 %v8283, %v8379
  %v8381 = vpop.f32.mrb[0].mxu0
  %v8382 = vpop.f32.mrb[0].mxu0
  %v8383 = vadd.f32 %v8286, %v8382
  %v8384 = vpop.f32.mrb[0].mxu0
  %8385 = vmatprep.mubr.bf16.mxu0 %v8008
  %8386 = vmatmul.mubr.bf16.gmra.mrb[0].mxu0 %v8007
  %v8387 = vpop.f32.mrb[0].mxu0
  %v8388 = vadd.f32 %v8291, %v8387
  %v8389 = vpop.f32.mrb[0].mxu0
  %v8390 = vpop.f32.mrb[0].mxu0
  %v8391 = vadd.f32 %v8294, %v8390
  %v8392 = vpop.f32.mrb[0].mxu0
  %8393 = vmatprep.mubr.bf16.mxu0 %v8014
  %8394 = vmatmul.mubr.bf16.gmra.mrb[0].mxu0 %v8013
  %v8395 = vpop.f32.mrb[0].mxu0
  %v8396 = vadd.f32 %v8299, %v8395
  %v8397 = vpop.f32.mrb[0].mxu0
  %v8398 = vpop.f32.mrb[0].mxu0
  %v8399 = vadd.f32 %v8302, %v8398
  %v8400 = vpop.f32.mrb[0].mxu0
  %8401 = vmatprep.mubr.bf16.mxu0 %v8020
  %8402 = vmatmul.mubr.bf16.gmra.mrb[0].mxu0 %v8019
  %v8403 = vpop.f32.mrb[0].mxu0
  %v8404 = vadd.f32 %v8307, %v8403
  %v8405 = vpop.f32.mrb[0].mxu0
  %v8406 = vpop.f32.mrb[0].mxu0
  %v8407 = vadd.f32 %v8310, %v8406
  %v8408 = vpop.f32.mrb[0].mxu0
  %8409 = vdwg.mxu0
  %8410 = vmatprep.subr.bf16.mxu0 0
  %8411 = vmatpush1.bf16.msra.mxu0 %v3940
  %8412 = vmatprep.subr.bf16.mxu0 0
  %8413 = vmatpush1.bf16.msra.mxu0 %v3941
  %8414 = vmatprep.subr.bf16.mxu0 0
  %8415 = vmatpush1.bf16.msra.mxu0 %v3942
  %8416 = vmatprep.subr.bf16.mxu0 0
  %8417 = vmatpush1.bf16.msra.mxu0 %v3943
  %8418 = vmatprep.subr.bf16.mxu0 0
  %8419 = vmatpush1.bf16.msra.mxu0 %v3944
  %8420 = vmatprep.subr.bf16.mxu0 0
  %8421 = vmatpush1.bf16.msra.mxu0 %v3945
  %8422 = vmatprep.subr.bf16.mxu0 0
  %8423 = vmatpush1.bf16.msra.mxu0 %v3946
  %8424 = vmatprep.subr.bf16.mxu0 0
  %8425 = vmatpush1.bf16.msra.mxu0 %v3947
  %8426 = vmatprep.subr.bf16.mxu0 0
  %8427 = vmatpush1.bf16.msra.mxu0 0
  %8428 = vmatprep.subr.bf16.mxu0 0
  %8429 = vmatpush1.bf16.msra.mxu0 0
  %8430 = vmatprep.subr.bf16.mxu0 0
  %8431 = vmatpush1.bf16.msra.mxu0 0
  %8432 = vmatprep.subr.bf16.mxu0 0
  %8433 = vmatpush1.bf16.msra.mxu0 0
  %8434 = vmatprep.subr.bf16.mxu0 0
  %8435 = vmatpush1.bf16.msra.mxu0 0
  %8436 = vmatprep.subr.bf16.mxu0 0
  %8437 = vmatpush1.bf16.msra.mxu0 0
  %8438 = vmatprep.subr.bf16.mxu0 0
  %8439 = vmatpush1.bf16.msra.mxu0 0
  %8440 = vmatprep.subr.bf16.mxu0 0
  %8441 = vmatpush1.bf16.msra.mxu0 0
  %8442 = vmatprep.mubr.bf16.mxu0 0
  %8443 = vmatmul.mubr.bf16.gmra.mrb[0].mxu0 %v7976
  %v8444 = vpop.f32.mrb[0].mxu0
  %v8445 = vadd.f32 %v8348, %v8444
  %v8446 = vpop.f32.mrb[0].mxu0
  %v8447 = vpop.f32.mrb[0].mxu0
  %v8448 = vadd.f32 %v8351, %v8447
  %v8449 = vpop.f32.mrb[0].mxu0
  %8450 = vmatprep.mubr.bf16.mxu0 0
  %8451 = vmatmul.mubr.bf16.gmra.mrb[0].mxu0 %v7982
  %v8452 = vpop.f32.mrb[0].mxu0
  %v8453 = vadd.f32 %v8356, %v8452
  %v8454 = vpop.f32.mrb[0].mxu0
  %v8455 = vpop.f32.mrb[0].mxu0
  %v8456 = vadd.f32 %v8359, %v8455
  %v8457 = vpop.f32.mrb[0].mxu0
  %8458 = vmatprep.mubr.bf16.mxu0 0
  %8459 = vmatmul.mubr.bf16.gmra.mrb[0].mxu0 %v7988
  %v8460 = vpop.f32.mrb[0].mxu0
  %v8461 = vadd.f32 %v8364, %v8460
  %v8462 = vpop.f32.mrb[0].mxu0
  %v8463 = vpop.f32.mrb[0].mxu0
  %v8464 = vadd.f32 %v8367, %v8463
  %v8465 = vpop.f32.mrb[0].mxu0
  %8466 = vmatprep.mubr.bf16.mxu0 0
  %8467 = vmatmul.mubr.bf16.gmra.mrb[0].mxu0 %v7994
  %v8468 = vpop.f32.mrb[0].mxu0
  %v8469 = vadd.f32 %v8372, %v8468
  %v8470 = vpop.f32.mrb[0].mxu0
  %v8471 = vpop.f32.mrb[0].mxu0
  %v8472 = vadd.f32 %v8375, %v8471
  %v8473 = vpop.f32.mrb[0].mxu0
  %8474 = vmatprep.mubr.bf16.mxu0 0
  %8475 = vmatmul.mubr.bf16.gmra.mrb[0].mxu0 %v8003
  %v8476 = vpop.f32.mrb[0].mxu0
  %v8477 = vadd.f32 %v8380, %v8476
  %v8478 = vpop.f32.mrb[0].mxu0
  %v8479 = vpop.f32.mrb[0].mxu0
  %v8480 = vadd.f32 %v8383, %v8479
  %v8481 = vpop.f32.mrb[0].mxu0
  %8482 = vmatprep.mubr.bf16.mxu0 0
  %8483 = vmatmul.mubr.bf16.gmra.mrb[0].mxu0 %v8009
  %v8484 = vpop.f32.mrb[0].mxu0
  %v8485 = vadd.f32 %v8388, %v8484
  %v8486 = vpop.f32.mrb[0].mxu0
  %v8487 = vpop.f32.mrb[0].mxu0
  %v8488 = vadd.f32 %v8391, %v8487
  %v8489 = vpop.f32.mrb[0].mxu0
  %8490 = vmatprep.mubr.bf16.mxu0 0
  %8491 = vmatmul.mubr.bf16.gmra.mrb[0].mxu0 %v8015
  %v8492 = vpop.f32.mrb[0].mxu0
  %v8493 = vadd.f32 %v8396, %v8492
  %v8494 = vpop.f32.mrb[0].mxu0
  %v8495 = vpop.f32.mrb[0].mxu0
  %v8496 = vadd.f32 %v8399, %v8495
  %v8497 = vpop.f32.mrb[0].mxu0
  %8498 = vmatprep.mubr.bf16.mxu0 0
  %8499 = vmatmul.mubr.bf16.gmra.mrb[0].mxu0 %v8021
  %v8500 = vpop.f32.mrb[0].mxu0
  %v8501 = vadd.f32 %v8404, %v8500
  %v8502 = vpop.f32.mrb[0].mxu0
  %v8503 = vpop.f32.mrb[0].mxu0
  %v8504 = vadd.f32 %v8407, %v8503
  %v8505 = vpop.f32.mrb[0].mxu0
  %8506 = vdwg.mxu0
  %v8507 = vmax.f32 %v8445, 0.0
  %v8508 = vmax.f32 %v8448, 0.0
  %v8509 = vmax.f32 %v8453, 0.0
  %v8510 = vmax.f32 %v8456, 0.0
  %v8511 = vmax.f32 %v8461, 0.0
  %v8512 = vmax.f32 %v8464, 0.0
  %v8513 = vmax.f32 %v8469, 0.0
  %v8514 = vmax.f32 %v8472, 0.0
  %v8515 = vmax.f32 %v8477, 0.0
  %v8516 = vmax.f32 %v8480, 0.0
  %v8517 = vmax.f32 %v8485, 0.0
  %v8518 = vmax.f32 %v8488, 0.0
  %v8519 = vmax.f32 %v8493, 0.0
  %v8520 = vmax.f32 %v8496, 0.0
  %v8521 = vmax.f32 %v8501, 0.0
  %v8522 = vmax.f32 %v8504, 0.0
  %v8537 = vrot.slane %v8507, 7
  %v8538 = vsel %vm120, %v121, %v8537
  %v8539 = vrot.slane %v8508, 7
  %v8540 = vsel %vm120, %v121, %v8539
  %v8541 = vrot.slane %v8509, 7
  %v8542 = vsel %vm120, %v121, %v8541
  %v8543 = vrot.slane %v8510, 7
  %v8544 = vsel %vm120, %v121, %v8543
  %v8545 = vrot.slane %v8511, 7
  %v8546 = vsel %vm120, %v121, %v8545
  %v8547 = vrot.slane %v8512, 7
  %v8548 = vsel %vm120, %v121, %v8547
  %v8549 = vrot.slane %v8513, 7
  %v8550 = vsel %vm120, %v121, %v8549
  %v8551 = vrot.slane %v8515, 7
  %v8552 = vsel %vm120, %v121, %v8551
  %v8553 = vrot.slane %v8516, 7
  %v8554 = vsel %vm120, %v121, %v8553
  %v8555 = vrot.slane %v8517, 7
  %v8556 = vsel %vm120, %v121, %v8555
  %v8557 = vrot.slane %v8518, 7
  %v8558 = vsel %vm120, %v121, %v8557
  %v8559 = vrot.slane %v8519, 7
  %v8560 = vsel %vm120, %v121, %v8559
  %v8561 = vrot.slane %v8520, 7
  %v8562 = vsel %vm120, %v121, %v8561
  %v8563 = vrot.slane %v8521, 7
  %v8564 = vsel %vm120, %v121, %v8563
  %v8579 = vrot.slane %v8507, 1
  %v8580 = vsel %vm160, %v8579, %v161
  %v8581 = vrot.slane %v8508, 1
  %v8582 = vsel %vm160, %v8581, %v161
  %v8583 = vrot.slane %v8509, 1
  %v8584 = vsel %vm160, %v8583, %v161
  %v8585 = vrot.slane %v8510, 1
  %v8586 = vsel %vm160, %v8585, %v161
  %v8587 = vrot.slane %v8511, 1
  %v8588 = vsel %vm160, %v8587, %v161
  %v8589 = vrot.slane %v8512, 1
  %v8590 = vsel %vm160, %v8589, %v161
  %v8591 = vrot.slane %v8513, 1
  %v8592 = vsel %vm160, %v8591, %v161
  %v8593 = vrot.slane %v8515, 1
  %v8594 = vsel %vm160, %v8593, %v161
  %v8595 = vrot.slane %v8516, 1
  %v8596 = vsel %vm160, %v8595, %v161
  %v8597 = vrot.slane %v8517, 1
  %v8598 = vsel %vm160, %v8597, %v161
  %v8599 = vrot.slane %v8518, 1
  %v8600 = vsel %vm160, %v8599, %v161
  %v8601 = vrot.slane %v8519, 1
  %v8602 = vsel %vm160, %v8601, %v161
  %v8603 = vrot.slane %v8520, 1
  %v8604 = vsel %vm160, %v8603, %v161
  %v8605 = vrot.slane %v8521, 1
  %v8606 = vsel %vm160, %v8605, %v161
  %v8623 = vrot.slane %v8514, 7
  %v8624 = vsel %vm120, %v121, %v8623
  %v8625 = vrot.slane %v8522, 7
  %v8626 = vsel %vm120, %v121, %v8625
  %v8629 = vrot.slane %v8514, 1
  %v8630 = vsel %vm160, %v8629, %v161
  %v8631 = vrot.slane %v8522, 1
  %v8632 = vsel %vm160, %v8631, %v161
  %v8635 = vpack.c.bf16 %v8538, %v122
  %v8636 = vpack.c.bf16 %v8507, 0.0
  %v8637 = vpack.c.bf16 %v8580, %v162
  %v8638 = vpack.c.bf16 %v8540, %v8538
  %v8639 = vpack.c.bf16 %v8508, %v8507
  %v8640 = vpack.c.bf16 %v8582, %v8580
  %v8641 = vpack.c.bf16 %v8542, %v8540
  %v8642 = vpack.c.bf16 %v8509, %v8508
  %v8643 = vpack.c.bf16 %v8584, %v8582
  %v8644 = vpack.c.bf16 %v8544, %v8542
  %v8645 = vpack.c.bf16 %v8510, %v8509
  %v8646 = vpack.c.bf16 %v8586, %v8584
  %v8647 = vpack.c.bf16 %v8546, %v8544
  %v8648 = vpack.c.bf16 %v8511, %v8510
  %v8649 = vpack.c.bf16 %v8588, %v8586
  %v8650 = vpack.c.bf16 %v8548, %v8546
  %v8651 = vpack.c.bf16 %v8512, %v8511
  %v8652 = vpack.c.bf16 %v8590, %v8588
  %v8653 = vpack.c.bf16 %v8550, %v8548
  %v8654 = vpack.c.bf16 %v8513, %v8512
  %v8655 = vpack.c.bf16 %v8592, %v8590
  %v8656 = vpack.c.bf16 %v8624, %v8550
  %v8657 = vpack.c.bf16 %v8514, %v8513
  %v8658 = vpack.c.bf16 %v8630, %v8592
  %v8659 = vpack.c.bf16 %v122, %v8624
  %v8660 = vpack.c.bf16 0.0, %v8514
  %v8661 = vpack.c.bf16 %v162, %v8630
  %v8662 = vpack.c.bf16 %v8552, %v122
  %v8663 = vpack.c.bf16 %v8515, 0.0
  %v8664 = vpack.c.bf16 %v8594, %v162
  %v8665 = vpack.c.bf16 %v8554, %v8552
  %v8666 = vpack.c.bf16 %v8516, %v8515
  %v8667 = vpack.c.bf16 %v8596, %v8594
  %v8668 = vpack.c.bf16 %v8556, %v8554
  %v8669 = vpack.c.bf16 %v8517, %v8516
  %v8670 = vpack.c.bf16 %v8598, %v8596
  %v8671 = vpack.c.bf16 %v8558, %v8556
  %v8672 = vpack.c.bf16 %v8518, %v8517
  %v8673 = vpack.c.bf16 %v8600, %v8598
  %v8674 = vpack.c.bf16 %v8560, %v8558
  %v8675 = vpack.c.bf16 %v8519, %v8518
  %v8676 = vpack.c.bf16 %v8602, %v8600
  %v8677 = vpack.c.bf16 %v8562, %v8560
  %v8678 = vpack.c.bf16 %v8520, %v8519
  %v8679 = vpack.c.bf16 %v8604, %v8602
  %v8680 = vpack.c.bf16 %v8564, %v8562
  %v8681 = vpack.c.bf16 %v8521, %v8520
  %v8682 = vpack.c.bf16 %v8606, %v8604
  %v8683 = vpack.c.bf16 %v8626, %v8564
  %v8684 = vpack.c.bf16 %v8522, %v8521
  %v8685 = vpack.c.bf16 %v8632, %v8606
  %v8686 = vpack.c.bf16 %v122, %v8626
  %v8687 = vpack.c.bf16 0.0, %v8522
  %v8688 = vpack.c.bf16 %v162, %v8632
  %v8689 = vld [vmem:[%s5] sm:$0xff]
  %v8690 = vld [vmem:[%s5 + $0x8] sm:$0xff]
  %v8691 = vld [vmem:[%s5 + $0x10] sm:$0xff]
  %v8692 = vld [vmem:[%s5 + $0x18] sm:$0xff]
  %v8693 = vld [vmem:[%s5 + $0x20] sm:$0xff]
  %v8694 = vld [vmem:[%s5 + $0x28] sm:$0xff]
  %v8695 = vld [vmem:[%s5 + $0x30] sm:$0xff]
  %v8696 = vld [vmem:[%s5 + $0x38] sm:$0xff]
  %v8697 = vld [vmem:[%s5 + $0x40] sm:$0xff]
  %v8698 = vld [vmem:[%s5 + $0x48] sm:$0xff]
  %v8699 = vld [vmem:[%s5 + $0x50] sm:$0xff]
  %v8700 = vld [vmem:[%s5 + $0x58] sm:$0xff]
  %v8701 = vld [vmem:[%s5 + $0x60] sm:$0xff]
  %v8702 = vld [vmem:[%s5 + $0x68] sm:$0xff]
  %v8703 = vld [vmem:[%s5 + $0x70] sm:$0xff]
  %v8704 = vld [vmem:[%s5 + $0x78] sm:$0xff]
  %v8705 = vld [vmem:[%s5 + $0x80] sm:$0xff]
  %v8706 = vld [vmem:[%s5 + $0x88] sm:$0xff]
  %v8707 = vld [vmem:[%s5 + $0x90] sm:$0xff]
  %v8708 = vld [vmem:[%s5 + $0x98] sm:$0xff]
  %v8709 = vld [vmem:[%s5 + $0xa0] sm:$0xff]
  %v8710 = vld [vmem:[%s5 + $0xa8] sm:$0xff]
  %v8711 = vld [vmem:[%s5 + $0xb0] sm:$0xff]
  %v8712 = vld [vmem:[%s5 + $0xb8] sm:$0xff]
  %v8713 = vld [vmem:[%s5 + $0xc0] sm:$0xff]
  %v8714 = vld [vmem:[%s5 + $0xc8] sm:$0xff]
  %v8715 = vld [vmem:[%s5 + $0xd0] sm:$0xff]
  %v8716 = vld [vmem:[%s5 + $0xd8] sm:$0xff]
  %v8717 = vld [vmem:[%s5 + $0xe0] sm:$0xff]
  %v8718 = vld [vmem:[%s5 + $0xe8] sm:$0xff]
  %v8719 = vld [vmem:[%s5 + $0xf0] sm:$0xff]
  %v8720 = vld [vmem:[%s5 + $0xf8] sm:$0xff]
  %v8721 = vld [vmem:[%s5 + $0x100] sm:$0xff]
  %v8722 = vld [vmem:[%s5 + $0x108] sm:$0xff]
  %v8723 = vld [vmem:[%s5 + $0x110] sm:$0xff]
  %v8724 = vld [vmem:[%s5 + $0x118] sm:$0xff]
  %v8725 = vld [vmem:[%s5 + $0x120] sm:$0xff]
  %v8726 = vld [vmem:[%s5 + $0x128] sm:$0xff]
  %v8727 = vld [vmem:[%s5 + $0x130] sm:$0xff]
  %v8728 = vld [vmem:[%s5 + $0x138] sm:$0xff]
  %v8729 = vld [vmem:[%s5 + $0x140] sm:$0xff]
  %v8730 = vld [vmem:[%s5 + $0x148] sm:$0xff]
  %v8731 = vld [vmem:[%s5 + $0x150] sm:$0xff]
  %v8732 = vld [vmem:[%s5 + $0x158] sm:$0xff]
  %v8733 = vld [vmem:[%s5 + $0x160] sm:$0xff]
  %v8734 = vld [vmem:[%s5 + $0x168] sm:$0xff]
  %v8735 = vld [vmem:[%s5 + $0x170] sm:$0xff]
  %v8736 = vld [vmem:[%s5 + $0x178] sm:$0xff]
  %v8737 = vld [vmem:[%s5 + $0x180] sm:$0xff]
  %v8738 = vld [vmem:[%s5 + $0x188] sm:$0xff]
  %v8739 = vld [vmem:[%s5 + $0x190] sm:$0xff]
  %v8740 = vld [vmem:[%s5 + $0x198] sm:$0xff]
  %v8741 = vld [vmem:[%s5 + $0x1a0] sm:$0xff]
  %v8742 = vld [vmem:[%s5 + $0x1a8] sm:$0xff]
  %v8743 = vld [vmem:[%s5 + $0x1b0] sm:$0xff]
  %v8744 = vld [vmem:[%s5 + $0x1b8] sm:$0xff]
  %v8745 = vld [vmem:[%s5 + $0x1c0] sm:$0xff]
  %v8746 = vld [vmem:[%s5 + $0x1c8] sm:$0xff]
  %v8747 = vld [vmem:[%s5 + $0x1d0] sm:$0xff]
  %v8748 = vld [vmem:[%s5 + $0x1d8] sm:$0xff]
  %v8749 = vld [vmem:[%s5 + $0x1e0] sm:$0xff]
  %v8750 = vld [vmem:[%s5 + $0x1e8] sm:$0xff]
  %v8751 = vld [vmem:[%s5 + $0x1f0] sm:$0xff]
  %v8752 = vld [vmem:[%s5 + $0x1f8] sm:$0xff]
  %v8753 = vld [vmem:[%s5 + $0x200] sm:$0xff]
  %v8754 = vld [vmem:[%s5 + $0x208] sm:$0xff]
  %v8755 = vld [vmem:[%s5 + $0x210] sm:$0xff]
  %v8756 = vld [vmem:[%s5 + $0x218] sm:$0xff]
  %v8757 = vld [vmem:[%s5 + $0x220] sm:$0xff]
  %v8758 = vld [vmem:[%s5 + $0x228] sm:$0xff]
  %v8759 = vld [vmem:[%s5 + $0x230] sm:$0xff]
  %v8760 = vld [vmem:[%s5 + $0x238] sm:$0xff]
  %v8761 = vld [vmem:[%s5 + $0x240] sm:$0xff]
  %v8762 = vld [vmem:[%s5 + $0x248] sm:$0xff]
  %v8763 = vld [vmem:[%s5 + $0x250] sm:$0xff]
  %v8764 = vld [vmem:[%s5 + $0x258] sm:$0xff]
  %v8765 = vld [vmem:[%s5 + $0x260] sm:$0xff]
  %v8766 = vld [vmem:[%s5 + $0x268] sm:$0xff]
  %v8767 = vld [vmem:[%s5 + $0x270] sm:$0xff]
  %v8768 = vld [vmem:[%s5 + $0x278] sm:$0xff]
  %v8769 = vld [vmem:[%s5 + $0x280] sm:$0xff]
  %v8770 = vld [vmem:[%s5 + $0x288] sm:$0xff]
  %v8771 = vld [vmem:[%s5 + $0x290] sm:$0xff]
  %v8772 = vld [vmem:[%s5 + $0x298] sm:$0xff]
  %v8773 = vld [vmem:[%s5 + $0x2a0] sm:$0xff]
  %v8774 = vld [vmem:[%s5 + $0x2a8] sm:$0xff]
  %v8775 = vld [vmem:[%s5 + $0x2b0] sm:$0xff]
  %v8776 = vld [vmem:[%s5 + $0x2b8] sm:$0xff]
  %v8777 = vld [vmem:[%s5 + $0x2c0] sm:$0xff]
  %v8778 = vld [vmem:[%s5 + $0x2c8] sm:$0xff]
  %v8779 = vld [vmem:[%s5 + $0x2d0] sm:$0xff]
  %v8780 = vld [vmem:[%s5 + $0x2d8] sm:$0xff]
  %v8781 = vld [vmem:[%s5 + $0x2e0] sm:$0xff]
  %v8782 = vld [vmem:[%s5 + $0x2e8] sm:$0xff]
  %v8783 = vld [vmem:[%s5 + $0x2f0] sm:$0xff]
  %v8784 = vld [vmem:[%s5 + $0x2f8] sm:$0xff]
  %v8785 = vld [vmem:[%s5 + $0x300] sm:$0xff]
  %v8786 = vld [vmem:[%s5 + $0x308] sm:$0xff]
  %v8787 = vld [vmem:[%s5 + $0x310] sm:$0xff]
  %v8788 = vld [vmem:[%s5 + $0x318] sm:$0xff]
  %v8789 = vld [vmem:[%s5 + $0x320] sm:$0xff]
  %v8790 = vld [vmem:[%s5 + $0x328] sm:$0xff]
  %v8791 = vld [vmem:[%s5 + $0x330] sm:$0xff]
  %v8792 = vld [vmem:[%s5 + $0x338] sm:$0xff]
  %v8793 = vld [vmem:[%s5 + $0x340] sm:$0xff]
  %v8794 = vld [vmem:[%s5 + $0x348] sm:$0xff]
  %v8795 = vld [vmem:[%s5 + $0x350] sm:$0xff]
  %v8796 = vld [vmem:[%s5 + $0x358] sm:$0xff]
  %v8797 = vld [vmem:[%s5 + $0x360] sm:$0xff]
  %v8798 = vld [vmem:[%s5 + $0x368] sm:$0xff]
  %v8799 = vld [vmem:[%s5 + $0x370] sm:$0xff]
  %v8800 = vld [vmem:[%s5 + $0x378] sm:$0xff]
  %v8801 = vld [vmem:[%s5 + $0x380] sm:$0xff]
  %v8802 = vld [vmem:[%s5 + $0x388] sm:$0xff]
  %v8803 = vld [vmem:[%s5 + $0x390] sm:$0xff]
  %v8804 = vld [vmem:[%s5 + $0x398] sm:$0xff]
  %v8805 = vld [vmem:[%s5 + $0x3a0] sm:$0xff]
  %v8806 = vld [vmem:[%s5 + $0x3a8] sm:$0xff]
  %v8807 = vld [vmem:[%s5 + $0x3b0] sm:$0xff]
  %v8808 = vld [vmem:[%s5 + $0x3b8] sm:$0xff]
  %v8809 = vld [vmem:[%s5 + $0x3c0] sm:$0xff]
  %v8810 = vld [vmem:[%s5 + $0x3c8] sm:$0xff]
  %v8811 = vld [vmem:[%s5 + $0x3d0] sm:$0xff]
  %v8812 = vld [vmem:[%s5 + $0x3d8] sm:$0xff]
  %v8813 = vld [vmem:[%s5 + $0x3e0] sm:$0xff]
  %v8814 = vld [vmem:[%s5 + $0x3e8] sm:$0xff]
  %v8815 = vld [vmem:[%s5 + $0x3f0] sm:$0xff]
  %v8816 = vld [vmem:[%s5 + $0x3f8] sm:$0xff]
  %v8817 = vld [vmem:[%s5 + $0x400] sm:$0xff]
  %v8818 = vld [vmem:[%s5 + $0x408] sm:$0xff]
  %v8819 = vld [vmem:[%s5 + $0x410] sm:$0xff]
  %v8820 = vld [vmem:[%s5 + $0x418] sm:$0xff]
  %v8821 = vld [vmem:[%s5 + $0x420] sm:$0xff]
  %v8822 = vld [vmem:[%s5 + $0x428] sm:$0xff]
  %v8823 = vld [vmem:[%s5 + $0x430] sm:$0xff]
  %v8824 = vld [vmem:[%s5 + $0x438] sm:$0xff]
  %v8825 = vld [vmem:[%s5 + $0x440] sm:$0xff]
  %v8826 = vld [vmem:[%s5 + $0x448] sm:$0xff]
  %v8827 = vld [vmem:[%s5 + $0x450] sm:$0xff]
  %v8828 = vld [vmem:[%s5 + $0x458] sm:$0xff]
  %v8829 = vld [vmem:[%s5 + $0x460] sm:$0xff]
  %v8830 = vld [vmem:[%s5 + $0x468] sm:$0xff]
  %v8831 = vld [vmem:[%s5 + $0x470] sm:$0xff]
  %v8832 = vld [vmem:[%s5 + $0x478] sm:$0xff]
  %v8833 = vld [vmem:[%s6] sm:$0x3]
  %v8835 = vlaneseq
  %v8836 = vshrl.u32 %v8835, 7
  %v8837 = vsub.s32 0, %v8836
  %v8838 = vrot.slane %v8833, %v8837
  %v8839 = vlaneseq
  %v8840 = vshrl.u32 %v8839, 7
  %v8841 = vsub.s32 1, %v8840
  %v8842 = vrot.slane %v8833, %v8841
  %v8989 = vunpack.c.l.b16 %v8689
  %v8990 = vunpack.c.h.b16 %v8689
  %v8991 = vunpack.c.l.b16 %v8690
  %v8992 = vunpack.c.h.b16 %v8690
  %v8993 = vunpack.c.l.b16 %v8691
  %v8994 = vunpack.c.h.b16 %v8691
  %v8995 = vunpack.c.l.b16 %v8692
  %v8996 = vunpack.c.h.b16 %v8692
  %v8997 = vunpack.c.l.b16 %v8693
  %v8998 = vunpack.c.h.b16 %v8693
  %v8999 = vunpack.c.l.b16 %v8694
  %v9000 = vunpack.c.h.b16 %v8694
  %v9001 = vunpack.c.l.b16 %v8695
  %v9002 = vunpack.c.h.b16 %v8695
  %v9003 = vunpack.c.l.b16 %v8696
  %v9004 = vunpack.c.h.b16 %v8696
  %v9005 = vunpack.c.l.b16 %v8697
  %v9006 = vunpack.c.h.b16 %v8697
  %v9007 = vunpack.c.l.b16 %v8698
  %v9008 = vunpack.c.h.b16 %v8698
  %v9009 = vunpack.c.l.b16 %v8699
  %v9010 = vunpack.c.h.b16 %v8699
  %v9011 = vunpack.c.l.b16 %v8700
  %v9012 = vunpack.c.h.b16 %v8700
  %v9013 = vunpack.c.l.b16 %v8701
  %v9014 = vunpack.c.h.b16 %v8701
  %v9015 = vunpack.c.l.b16 %v8702
  %v9016 = vunpack.c.h.b16 %v8702
  %v9017 = vunpack.c.l.b16 %v8703
  %v9018 = vunpack.c.h.b16 %v8703
  %v9019 = vunpack.c.l.b16 %v8704
  %v9020 = vunpack.c.h.b16 %v8704
  %v9021 = vunpack.c.l.b16 %v8705
  %v9022 = vunpack.c.h.b16 %v8705
  %v9023 = vunpack.c.l.b16 %v8706
  %v9024 = vunpack.c.h.b16 %v8706
  %v9025 = vunpack.c.l.b16 %v8707
  %v9026 = vunpack.c.h.b16 %v8707
  %v9027 = vunpack.c.l.b16 %v8708
  %v9028 = vunpack.c.h.b16 %v8708
  %v9029 = vunpack.c.l.b16 %v8709
  %v9030 = vunpack.c.h.b16 %v8709
  %v9031 = vunpack.c.l.b16 %v8710
  %v9032 = vunpack.c.h.b16 %v8710
  %v9033 = vunpack.c.l.b16 %v8711
  %v9034 = vunpack.c.h.b16 %v8711
  %v9035 = vunpack.c.l.b16 %v8712
  %v9036 = vunpack.c.h.b16 %v8712
  %v9037 = vunpack.c.l.b16 %v8713
  %v9038 = vunpack.c.h.b16 %v8713
  %v9039 = vunpack.c.l.b16 %v8714
  %v9040 = vunpack.c.h.b16 %v8714
  %v9041 = vunpack.c.l.b16 %v8715
  %v9042 = vunpack.c.h.b16 %v8715
  %v9043 = vunpack.c.l.b16 %v8716
  %v9044 = vunpack.c.h.b16 %v8716
  %v9045 = vunpack.c.l.b16 %v8717
  %v9046 = vunpack.c.h.b16 %v8717
  %v9047 = vunpack.c.l.b16 %v8718
  %v9048 = vunpack.c.h.b16 %v8718
  %v9049 = vunpack.c.l.b16 %v8719
  %v9050 = vunpack.c.h.b16 %v8719
  %v9051 = vunpack.c.l.b16 %v8720
  %v9052 = vunpack.c.h.b16 %v8720
  %v9053 = vunpack.c.l.b16 %v8721
  %v9054 = vunpack.c.h.b16 %v8721
  %v9055 = vunpack.c.l.b16 %v8722
  %v9056 = vunpack.c.h.b16 %v8722
  %v9057 = vunpack.c.l.b16 %v8723
  %v9058 = vunpack.c.h.b16 %v8723
  %v9059 = vunpack.c.l.b16 %v8724
  %v9060 = vunpack.c.h.b16 %v8724
  %v9061 = vunpack.c.l.b16 %v8725
  %v9062 = vunpack.c.h.b16 %v8725
  %v9063 = vunpack.c.l.b16 %v8726
  %v9064 = vunpack.c.h.b16 %v8726
  %v9065 = vunpack.c.l.b16 %v8727
  %v9066 = vunpack.c.h.b16 %v8727
  %v9067 = vunpack.c.l.b16 %v8728
  %v9068 = vunpack.c.h.b16 %v8728
  %v9069 = vunpack.c.l.b16 %v8729
  %v9070 = vunpack.c.h.b16 %v8729
  %v9071 = vunpack.c.l.b16 %v8730
  %v9072 = vunpack.c.h.b16 %v8730
  %v9073 = vunpack.c.l.b16 %v8731
  %v9074 = vunpack.c.h.b16 %v8731
  %v9075 = vunpack.c.l.b16 %v8732
  %v9076 = vunpack.c.h.b16 %v8732
  %v9077 = vunpack.c.l.b16 %v8733
  %v9078 = vunpack.c.h.b16 %v8733
  %v9079 = vunpack.c.l.b16 %v8734
  %v9080 = vunpack.c.h.b16 %v8734
  %v9081 = vunpack.c.l.b16 %v8735
  %v9082 = vunpack.c.h.b16 %v8735
  %v9083 = vunpack.c.l.b16 %v8736
  %v9084 = vunpack.c.h.b16 %v8736
  %v9085 = vunpack.c.l.b16 %v8737
  %v9086 = vunpack.c.h.b16 %v8737
  %v9087 = vunpack.c.l.b16 %v8738
  %v9088 = vunpack.c.h.b16 %v8738
  %v9089 = vunpack.c.l.b16 %v8739
  %v9090 = vunpack.c.h.b16 %v8739
  %v9091 = vunpack.c.l.b16 %v8740
  %v9092 = vunpack.c.h.b16 %v8740
  %v9093 = vunpack.c.l.b16 %v8741
  %v9094 = vunpack.c.h.b16 %v8741
  %v9095 = vunpack.c.l.b16 %v8742
  %v9096 = vunpack.c.h.b16 %v8742
  %v9097 = vunpack.c.l.b16 %v8743
  %v9098 = vunpack.c.h.b16 %v8743
  %v9099 = vunpack.c.l.b16 %v8744
  %v9100 = vunpack.c.h.b16 %v8744
  %v9101 = vunpack.c.l.b16 %v8745
  %v9102 = vunpack.c.h.b16 %v8745
  %v9103 = vunpack.c.l.b16 %v8746
  %v9104 = vunpack.c.h.b16 %v8746
  %v9105 = vunpack.c.l.b16 %v8747
  %v9106 = vunpack.c.h.b16 %v8747
  %v9107 = vunpack.c.l.b16 %v8748
  %v9108 = vunpack.c.h.b16 %v8748
  %v9109 = vunpack.c.l.b16 %v8749
  %v9110 = vunpack.c.h.b16 %v8749
  %v9111 = vunpack.c.l.b16 %v8750
  %v9112 = vunpack.c.h.b16 %v8750
  %v9113 = vunpack.c.l.b16 %v8751
  %v9114 = vunpack.c.h.b16 %v8751
  %v9115 = vunpack.c.l.b16 %v8752
  %v9116 = vunpack.c.h.b16 %v8752
  %v9117 = vunpack.c.l.b16 %v8753
  %v9118 = vunpack.c.h.b16 %v8753
  %v9119 = vunpack.c.l.b16 %v8754
  %v9120 = vunpack.c.h.b16 %v8754
  %v9121 = vunpack.c.l.b16 %v8755
  %v9122 = vunpack.c.h.b16 %v8755
  %v9123 = vunpack.c.l.b16 %v8756
  %v9124 = vunpack.c.h.b16 %v8756
  %v9125 = vunpack.c.l.b16 %v8757
  %v9126 = vunpack.c.h.b16 %v8757
  %v9127 = vunpack.c.l.b16 %v8758
  %v9128 = vunpack.c.h.b16 %v8758
  %v9129 = vunpack.c.l.b16 %v8759
  %v9130 = vunpack.c.h.b16 %v8759
  %v9131 = vunpack.c.l.b16 %v8760
  %v9132 = vunpack.c.h.b16 %v8760
  %v9133 = vunpack.c.l.b16 %v8761
  %v9134 = vunpack.c.h.b16 %v8761
  %v9135 = vunpack.c.l.b16 %v8762
  %v9136 = vunpack.c.h.b16 %v8762
  %v9137 = vunpack.c.l.b16 %v8763
  %v9138 = vunpack.c.h.b16 %v8763
  %v9139 = vunpack.c.l.b16 %v8764
  %v9140 = vunpack.c.h.b16 %v8764
  %v9141 = vunpack.c.l.b16 %v8765
  %v9142 = vunpack.c.h.b16 %v8765
  %v9143 = vunpack.c.l.b16 %v8766
  %v9144 = vunpack.c.h.b16 %v8766
  %v9145 = vunpack.c.l.b16 %v8767
  %v9146 = vunpack.c.h.b16 %v8767
  %v9147 = vunpack.c.l.b16 %v8768
  %v9148 = vunpack.c.h.b16 %v8768
  %v9149 = vunpack.c.l.b16 %v8769
  %v9150 = vunpack.c.h.b16 %v8769
  %v9151 = vunpack.c.l.b16 %v8770
  %v9152 = vunpack.c.h.b16 %v8770
  %v9153 = vunpack.c.l.b16 %v8771
  %v9154 = vunpack.c.h.b16 %v8771
  %v9155 = vunpack.c.l.b16 %v8772
  %v9156 = vunpack.c.h.b16 %v8772
  %v9157 = vunpack.c.l.b16 %v8773
  %v9158 = vunpack.c.h.b16 %v8773
  %v9159 = vunpack.c.l.b16 %v8774
  %v9160 = vunpack.c.h.b16 %v8774
  %v9161 = vunpack.c.l.b16 %v8775
  %v9162 = vunpack.c.h.b16 %v8775
  %v9163 = vunpack.c.l.b16 %v8776
  %v9164 = vunpack.c.h.b16 %v8776
  %v9165 = vunpack.c.l.b16 %v8777
  %v9166 = vunpack.c.h.b16 %v8777
  %v9167 = vunpack.c.l.b16 %v8778
  %v9168 = vunpack.c.h.b16 %v8778
  %v9169 = vunpack.c.l.b16 %v8779
  %v9170 = vunpack.c.h.b16 %v8779
  %v9171 = vunpack.c.l.b16 %v8780
  %v9172 = vunpack.c.h.b16 %v8780
  %v9173 = vunpack.c.l.b16 %v8781
  %v9174 = vunpack.c.h.b16 %v8781
  %v9175 = vunpack.c.l.b16 %v8782
  %v9176 = vunpack.c.h.b16 %v8782
  %v9177 = vunpack.c.l.b16 %v8783
  %v9178 = vunpack.c.h.b16 %v8783
  %v9179 = vunpack.c.l.b16 %v8784
  %v9180 = vunpack.c.h.b16 %v8784
  %v9181 = vunpack.c.l.b16 %v8785
  %v9182 = vunpack.c.h.b16 %v8785
  %v9183 = vunpack.c.l.b16 %v8786
  %v9184 = vunpack.c.h.b16 %v8786
  %v9185 = vunpack.c.l.b16 %v8787
  %v9186 = vunpack.c.h.b16 %v8787
  %v9187 = vunpack.c.l.b16 %v8788
  %v9188 = vunpack.c.h.b16 %v8788
  %v9189 = vunpack.c.l.b16 %v8789
  %v9190 = vunpack.c.h.b16 %v8789
  %v9191 = vunpack.c.l.b16 %v8790
  %v9192 = vunpack.c.h.b16 %v8790
  %v9193 = vunpack.c.l.b16 %v8791
  %v9194 = vunpack.c.h.b16 %v8791
  %v9195 = vunpack.c.l.b16 %v8792
  %v9196 = vunpack.c.h.b16 %v8792
  %v9197 = vunpack.c.l.b16 %v8793
  %v9198 = vunpack.c.h.b16 %v8793
  %v9199 = vunpack.c.l.b16 %v8794
  %v9200 = vunpack.c.h.b16 %v8794
  %v9201 = vunpack.c.l.b16 %v8795
  %v9202 = vunpack.c.h.b16 %v8795
  %v9203 = vunpack.c.l.b16 %v8796
  %v9204 = vunpack.c.h.b16 %v8796
  %v9205 = vunpack.c.l.b16 %v8797
  %v9206 = vunpack.c.h.b16 %v8797
  %v9207 = vunpack.c.l.b16 %v8798
  %v9208 = vunpack.c.h.b16 %v8798
  %v9209 = vunpack.c.l.b16 %v8799
  %v9210 = vunpack.c.h.b16 %v8799
  %v9211 = vunpack.c.l.b16 %v8800
  %v9212 = vunpack.c.h.b16 %v8800
  %v9213 = vunpack.c.l.b16 %v8801
  %v9214 = vunpack.c.h.b16 %v8801
  %v9215 = vunpack.c.l.b16 %v8802
  %v9216 = vunpack.c.h.b16 %v8802
  %v9217 = vunpack.c.l.b16 %v8803
  %v9218 = vunpack.c.h.b16 %v8803
  %v9219 = vunpack.c.l.b16 %v8804
  %v9220 = vunpack.c.h.b16 %v8804
  %v9221 = vunpack.c.l.b16 %v8805
  %v9222 = vunpack.c.h.b16 %v8805
  %v9223 = vunpack.c.l.b16 %v8806
  %v9224 = vunpack.c.h.b16 %v8806
  %v9225 = vunpack.c.l.b16 %v8807
  %v9226 = vunpack.c.h.b16 %v8807
  %v9227 = vunpack.c.l.b16 %v8808
  %v9228 = vunpack.c.h.b16 %v8808
  %v9229 = vunpack.c.l.b16 %v8809
  %v9230 = vunpack.c.h.b16 %v8809
  %v9231 = vunpack.c.l.b16 %v8810
  %v9232 = vunpack.c.h.b16 %v8810
  %v9233 = vunpack.c.l.b16 %v8811
  %v9234 = vunpack.c.h.b16 %v8811
  %v9235 = vunpack.c.l.b16 %v8812
  %v9236 = vunpack.c.h.b16 %v8812
  %v9237 = vunpack.c.l.b16 %v8813
  %v9238 = vunpack.c.h.b16 %v8813
  %v9239 = vunpack.c.l.b16 %v8814
  %v9240 = vunpack.c.h.b16 %v8814
  %v9241 = vunpack.c.l.b16 %v8815
  %v9242 = vunpack.c.h.b16 %v8815
  %v9243 = vunpack.c.l.b16 %v8816
  %v9244 = vunpack.c.h.b16 %v8816
  %v9245 = vunpack.c.l.b16 %v8817
  %v9246 = vunpack.c.h.b16 %v8817
  %v9247 = vunpack.c.l.b16 %v8818
  %v9248 = vunpack.c.h.b16 %v8818
  %v9249 = vunpack.c.l.b16 %v8819
  %v9250 = vunpack.c.h.b16 %v8819
  %v9251 = vunpack.c.l.b16 %v8820
  %v9252 = vunpack.c.h.b16 %v8820
  %v9253 = vunpack.c.l.b16 %v8821
  %v9254 = vunpack.c.h.b16 %v8821
  %v9255 = vunpack.c.l.b16 %v8822
  %v9256 = vunpack.c.h.b16 %v8822
  %v9257 = vunpack.c.l.b16 %v8823
  %v9258 = vunpack.c.h.b16 %v8823
  %v9259 = vunpack.c.l.b16 %v8824
  %v9260 = vunpack.c.h.b16 %v8824
  %v9261 = vunpack.c.l.b16 %v8825
  %v9262 = vunpack.c.h.b16 %v8825
  %v9263 = vunpack.c.l.b16 %v8826
  %v9264 = vunpack.c.h.b16 %v8826
  %v9265 = vunpack.c.l.b16 %v8827
  %v9266 = vunpack.c.h.b16 %v8827
  %v9267 = vunpack.c.l.b16 %v8828
  %v9268 = vunpack.c.h.b16 %v8828
  %v9269 = vunpack.c.l.b16 %v8829
  %v9270 = vunpack.c.h.b16 %v8829
  %v9271 = vunpack.c.l.b16 %v8830
  %v9272 = vunpack.c.h.b16 %v8830
  %v9273 = vunpack.c.l.b16 %v8831
  %v9274 = vunpack.c.h.b16 %v8831
  %v9275 = vunpack.c.l.b16 %v8832
  %v9276 = vunpack.c.h.b16 %v8832
  %v9277 = vpack.c.b16 %v8991, %v8989
  %v9278 = vpack.c.b16 %v8992, %v8990
  %v9279 = vpack.c.b16 %v8995, %v8993
  %v9280 = vpack.c.b16 %v8996, %v8994
  %v9281 = vpack.c.b16 %v8999, %v8997
  %v9282 = vpack.c.b16 %v9000, %v8998
  %v9283 = vpack.c.b16 %v9003, %v9001
  %v9284 = vpack.c.b16 %v9004, %v9002
  %v9285 = vpack.c.b16 %v9007, %v9005
  %v9286 = vpack.c.b16 %v9008, %v9006
  %v9287 = vpack.c.b16 %v9011, %v9009
  %v9288 = vpack.c.b16 %v9012, %v9010
  %v9289 = vpack.c.b16 %v9015, %v9013
  %v9290 = vpack.c.b16 %v9016, %v9014
  %v9291 = vpack.c.b16 %v9019, %v9017
  %v9292 = vpack.c.b16 %v9020, %v9018
  %v9293 = vpack.c.b16 %v9023, %v9021
  %v9294 = vpack.c.b16 %v9024, %v9022
  %v9295 = vpack.c.b16 %v9027, %v9025
  %v9296 = vpack.c.b16 %v9028, %v9026
  %v9297 = vpack.c.b16 %v9031, %v9029
  %v9298 = vpack.c.b16 %v9032, %v9030
  %v9299 = vpack.c.b16 %v9035, %v9033
  %v9300 = vpack.c.b16 %v9036, %v9034
  %v9301 = vpack.c.b16 %v9039, %v9037
  %v9302 = vpack.c.b16 %v9040, %v9038
  %v9303 = vpack.c.b16 %v9043, %v9041
  %v9304 = vpack.c.b16 %v9044, %v9042
  %v9305 = vpack.c.b16 %v9047, %v9045
  %v9306 = vpack.c.b16 %v9048, %v9046
  %v9307 = vpack.c.b16 %v9051, %v9049
  %v9308 = vpack.c.b16 %v9052, %v9050
  %v9309 = vpack.c.b16 %v9055, %v9053
  %v9310 = vpack.c.b16 %v9056, %v9054
  %v9311 = vpack.c.b16 %v9059, %v9057
  %v9312 = vpack.c.b16 %v9060, %v9058
  %v9313 = vpack.c.b16 %v9063, %v9061
  %v9314 = vpack.c.b16 %v9064, %v9062
  %v9315 = vpack.c.b16 %v9067, %v9065
  %v9316 = vpack.c.b16 %v9068, %v9066
  %v9317 = vpack.c.b16 %v9071, %v9069
  %v9318 = vpack.c.b16 %v9072, %v9070
  %v9319 = vpack.c.b16 %v9075, %v9073
  %v9320 = vpack.c.b16 %v9076, %v9074
  %v9321 = vpack.c.b16 %v9079, %v9077
  %v9322 = vpack.c.b16 %v9080, %v9078
  %v9323 = vpack.c.b16 %v9083, %v9081
  %v9324 = vpack.c.b16 %v9084, %v9082
  %v9325 = vpack.c.b16 %v9087, %v9085
  %v9326 = vpack.c.b16 %v9088, %v9086
  %v9327 = vpack.c.b16 %v9091, %v9089
  %v9328 = vpack.c.b16 %v9092, %v9090
  %v9329 = vpack.c.b16 %v9095, %v9093
  %v9330 = vpack.c.b16 %v9096, %v9094
  %v9331 = vpack.c.b16 %v9099, %v9097
  %v9332 = vpack.c.b16 %v9100, %v9098
  %v9333 = vpack.c.b16 %v9103, %v9101
  %v9334 = vpack.c.b16 %v9104, %v9102
  %v9335 = vpack.c.b16 %v9107, %v9105
  %v9336 = vpack.c.b16 %v9108, %v9106
  %v9337 = vpack.c.b16 %v9111, %v9109
  %v9338 = vpack.c.b16 %v9112, %v9110
  %v9339 = vpack.c.b16 %v9115, %v9113
  %v9340 = vpack.c.b16 %v9116, %v9114
  %v9341 = vpack.c.b16 %v9119, %v9117
  %v9342 = vpack.c.b16 %v9120, %v9118
  %v9343 = vpack.c.b16 %v9123, %v9121
  %v9344 = vpack.c.b16 %v9124, %v9122
  %v9345 = vpack.c.b16 %v9127, %v9125
  %v9346 = vpack.c.b16 %v9128, %v9126
  %v9347 = vpack.c.b16 %v9131, %v9129
  %v9348 = vpack.c.b16 %v9132, %v9130
  %v9349 = vpack.c.b16 %v9135, %v9133
  %v9350 = vpack.c.b16 %v9136, %v9134
  %v9351 = vpack.c.b16 %v9139, %v9137
  %v9352 = vpack.c.b16 %v9140, %v9138
  %v9353 = vpack.c.b16 %v9143, %v9141
  %v9354 = vpack.c.b16 %v9144, %v9142
  %v9355 = vpack.c.b16 %v9147, %v9145
  %v9356 = vpack.c.b16 %v9148, %v9146
  %v9357 = vpack.c.b16 %v9151, %v9149
  %v9358 = vpack.c.b16 %v9152, %v9150
  %v9359 = vpack.c.b16 %v9155, %v9153
  %v9360 = vpack.c.b16 %v9156, %v9154
  %v9361 = vpack.c.b16 %v9159, %v9157
  %v9362 = vpack.c.b16 %v9160, %v9158
  %v9363 = vpack.c.b16 %v9163, %v9161
  %v9364 = vpack.c.b16 %v9164, %v9162
  %v9365 = vpack.c.b16 %v9167, %v9165
  %v9366 = vpack.c.b16 %v9168, %v9166
  %v9367 = vpack.c.b16 %v9171, %v9169
  %v9368 = vpack.c.b16 %v9172, %v9170
  %v9369 = vpack.c.b16 %v9175, %v9173
  %v9370 = vpack.c.b16 %v9176, %v9174
  %v9371 = vpack.c.b16 %v9179, %v9177
  %v9372 = vpack.c.b16 %v9180, %v9178
  %v9373 = vpack.c.b16 %v9183, %v9181
  %v9374 = vpack.c.b16 %v9184, %v9182
  %v9375 = vpack.c.b16 %v9187, %v9185
  %v9376 = vpack.c.b16 %v9188, %v9186
  %v9377 = vpack.c.b16 %v9191, %v9189
  %v9378 = vpack.c.b16 %v9192, %v9190
  %v9379 = vpack.c.b16 %v9195, %v9193
  %v9380 = vpack.c.b16 %v9196, %v9194
  %v9381 = vpack.c.b16 %v9199, %v9197
  %v9382 = vpack.c.b16 %v9200, %v9198
  %v9383 = vpack.c.b16 %v9203, %v9201
  %v9384 = vpack.c.b16 %v9204, %v9202
  %v9385 = vpack.c.b16 %v9207, %v9205
  %v9386 = vpack.c.b16 %v9208, %v9206
  %v9387 = vpack.c.b16 %v9211, %v9209
  %v9388 = vpack.c.b16 %v9212, %v9210
  %v9389 = vpack.c.b16 %v9215, %v9213
  %v9390 = vpack.c.b16 %v9216, %v9214
  %v9391 = vpack.c.b16 %v9219, %v9217
  %v9392 = vpack.c.b16 %v9220, %v9218
  %v9393 = vpack.c.b16 %v9223, %v9221
  %v9394 = vpack.c.b16 %v9224, %v9222
  %v9395 = vpack.c.b16 %v9227, %v9225
  %v9396 = vpack.c.b16 %v9228, %v9226
  %v9397 = vpack.c.b16 %v9231, %v9229
  %v9398 = vpack.c.b16 %v9232, %v9230
  %v9399 = vpack.c.b16 %v9235, %v9233
  %v9400 = vpack.c.b16 %v9236, %v9234
  %v9401 = vpack.c.b16 %v9239, %v9237
  %v9402 = vpack.c.b16 %v9240, %v9238
  %v9403 = vpack.c.b16 %v9243, %v9241
  %v9404 = vpack.c.b16 %v9244, %v9242
  %v9405 = vpack.c.b16 %v9247, %v9245
  %v9406 = vpack.c.b16 %v9248, %v9246
  %v9407 = vpack.c.b16 %v9251, %v9249
  %v9408 = vpack.c.b16 %v9252, %v9250
  %v9409 = vpack.c.b16 %v9255, %v9253
  %v9410 = vpack.c.b16 %v9256, %v9254
  %v9411 = vpack.c.b16 %v9259, %v9257
  %v9412 = vpack.c.b16 %v9260, %v9258
  %v9413 = vpack.c.b16 %v9263, %v9261
  %v9414 = vpack.c.b16 %v9264, %v9262
  %v9415 = vpack.c.b16 %v9267, %v9265
  %v9416 = vpack.c.b16 %v9268, %v9266
  %v9417 = vpack.c.b16 %v9271, %v9269
  %v9418 = vpack.c.b16 %v9272, %v9270
  %v9419 = vpack.c.b16 %v9275, %v9273
  %v9420 = vpack.c.b16 %v9276, %v9274
  %9565 = vmatprep.subr.bf16.mxu0 %v9278
  %9566 = vmatpush1.bf16.msra.mxu0 %v9277
  %9567 = vmatprep.subr.bf16.mxu0 %v9280
  %9568 = vmatpush1.bf16.msra.mxu0 %v9279
  %9569 = vmatprep.subr.bf16.mxu0 %v9282
  %9570 = vmatpush1.bf16.msra.mxu0 %v9281
  %9571 = vmatprep.subr.bf16.mxu0 %v9284
  %9572 = vmatpush1.bf16.msra.mxu0 %v9283
  %9573 = vmatprep.subr.bf16.mxu0 %v9286
  %9574 = vmatpush1.bf16.msra.mxu0 %v9285
  %9575 = vmatprep.subr.bf16.mxu0 %v9288
  %9576 = vmatpush1.bf16.msra.mxu0 %v9287
  %9577 = vmatprep.subr.bf16.mxu0 %v9290
  %9578 = vmatpush1.bf16.msra.mxu0 %v9289
  %9579 = vmatprep.subr.bf16.mxu0 %v9292
  %9580 = vmatpush1.bf16.msra.mxu0 %v9291
  %9581 = vmatprep.subr.bf16.mxu0 %v9294
  %9582 = vmatpush1.bf16.msra.mxu0 %v9293
  %9583 = vmatprep.subr.bf16.mxu0 %v9296
  %9584 = vmatpush1.bf16.msra.mxu0 %v9295
  %9585 = vmatprep.subr.bf16.mxu0 %v9298
  %9586 = vmatpush1.bf16.msra.mxu0 %v9297
  %9587 = vmatprep.subr.bf16.mxu0 %v9300
  %9588 = vmatpush1.bf16.msra.mxu0 %v9299
  %9589 = vmatprep.subr.bf16.mxu0 %v9302
  %9590 = vmatpush1.bf16.msra.mxu0 %v9301
  %9591 = vmatprep.subr.bf16.mxu0 %v9304
  %9592 = vmatpush1.bf16.msra.mxu0 %v9303
  %9593 = vmatprep.subr.bf16.mxu0 %v9306
  %9594 = vmatpush1.bf16.msra.mxu0 %v9305
  %9595 = vmatprep.subr.bf16.mxu0 %v9308
  %9596 = vmatpush1.bf16.msra.mxu0 %v9307
  %9597 = vmatprep.mubr.bf16.mxu0 %v8636
  %9598 = vmatmul.mubr.bf16.gmra.mrb[0].mxu0 %v8635
  %v9599 = vpop.f32.mrb[0].mxu0
  %v9600 = vadd.f32 %v8838, %v9599
  %v9601 = vpop.f32.mrb[0].mxu0
  %v9602 = vadd.f32 %v8842, %v9601
  %v9603 = vpop.f32.mrb[0].mxu0
  %v9604 = vadd.f32 %v8838, %v9603
  %v9605 = vpop.f32.mrb[0].mxu0
  %v9606 = vadd.f32 %v8842, %v9605
  %9607 = vmatprep.mubr.bf16.mxu0 %v8642
  %9608 = vmatmul.mubr.bf16.gmra.mrb[0].mxu0 %v8641
  %v9609 = vpop.f32.mrb[0].mxu0
  %v9610 = vadd.f32 %v8838, %v9609
  %v9611 = vpop.f32.mrb[0].mxu0
  %v9612 = vadd.f32 %v8842, %v9611
  %v9613 = vpop.f32.mrb[0].mxu0
  %v9614 = vadd.f32 %v8838, %v9613
  %v9615 = vpop.f32.mrb[0].mxu0
  %v9616 = vadd.f32 %v8842, %v9615
  %9617 = vmatprep.mubr.bf16.mxu0 %v8648
  %9618 = vmatmul.mubr.bf16.gmra.mrb[0].mxu0 %v8647
  %v9619 = vpop.f32.mrb[0].mxu0
  %v9620 = vadd.f32 %v8838, %v9619
  %v9621 = vpop.f32.mrb[0].mxu0
  %v9622 = vadd.f32 %v8842, %v9621
  %v9623 = vpop.f32.mrb[0].mxu0
  %v9624 = vadd.f32 %v8838, %v9623
  %v9625 = vpop.f32.mrb[0].mxu0
  %v9626 = vadd.f32 %v8842, %v9625
  %9627 = vmatprep.mubr.bf16.mxu0 %v8654
  %9628 = vmatmul.mubr.bf16.gmra.mrb[0].mxu0 %v8653
  %v9629 = vpop.f32.mrb[0].mxu0
  %v9630 = vadd.f32 %v8838, %v9629
  %v9631 = vpop.f32.mrb[0].mxu0
  %v9632 = vadd.f32 %v8842, %v9631
  %v9633 = vpop.f32.mrb[0].mxu0
  %v9634 = vadd.f32 %v8838, %v9633
  %v9635 = vpop.f32.mrb[0].mxu0
  %v9636 = vadd.f32 %v8842, %v9635
  %9637 = vmatprep.mubr.bf16.mxu0 %v8663
  %9638 = vmatmul.mubr.bf16.gmra.mrb[0].mxu0 %v8662
  %v9639 = vpop.f32.mrb[0].mxu0
  %v9640 = vadd.f32 %v8838, %v9639
  %v9641 = vpop.f32.mrb[0].mxu0
  %v9642 = vadd.f32 %v8842, %v9641
  %v9643 = vpop.f32.mrb[0].mxu0
  %v9644 = vadd.f32 %v8838, %v9643
  %v9645 = vpop.f32.mrb[0].mxu0
  %v9646 = vadd.f32 %v8842, %v9645
  %9647 = vmatprep.mubr.bf16.mxu0 %v8669
  %9648 = vmatmul.mubr.bf16.gmra.mrb[0].mxu0 %v8668
  %v9649 = vpop.f32.mrb[0].mxu0
  %v9650 = vadd.f32 %v8838, %v9649
  %v9651 = vpop.f32.mrb[0].mxu0
  %v9652 = vadd.f32 %v8842, %v9651
  %v9653 = vpop.f32.mrb[0].mxu0
  %v9654 = vadd.f32 %v8838, %v9653
  %v9655 = vpop.f32.mrb[0].mxu0
  %v9656 = vadd.f32 %v8842, %v9655
  %9657 = vmatprep.mubr.bf16.mxu0 %v8675
  %9658 = vmatmul.mubr.bf16.gmra.mrb[0].mxu0 %v8674
  %v9659 = vpop.f32.mrb[0].mxu0
  %v9660 = vadd.f32 %v8838, %v9659
  %v9661 = vpop.f32.mrb[0].mxu0
  %v9662 = vadd.f32 %v8842, %v9661
  %v9663 = vpop.f32.mrb[0].mxu0
  %v9664 = vadd.f32 %v8838, %v9663
  %v9665 = vpop.f32.mrb[0].mxu0
  %v9666 = vadd.f32 %v8842, %v9665
  %9667 = vmatprep.mubr.bf16.mxu0 %v8681
  %9668 = vmatmul.mubr.bf16.gmra.mrb[0].mxu0 %v8680
  %v9669 = vpop.f32.mrb[0].mxu0
  %v9670 = vadd.f32 %v8838, %v9669
  %v9671 = vpop.f32.mrb[0].mxu0
  %v9672 = vadd.f32 %v8842, %v9671
  %v9673 = vpop.f32.mrb[0].mxu0
  %v9674 = vadd.f32 %v8838, %v9673
  %v9675 = vpop.f32.mrb[0].mxu0
  %v9676 = vadd.f32 %v8842, %v9675
  %9677 = vdwg.mxu0
  %9678 = vmatprep.subr.bf16.mxu0 %v9310
  %9679 = vmatpush1.bf16.msra.mxu0 %v9309
  %9680 = vmatprep.subr.bf16.mxu0 %v9312
  %9681 = vmatpush1.bf16.msra.mxu0 %v9311
  %9682 = vmatprep.subr.bf16.mxu0 %v9314
  %9683 = vmatpush1.bf16.msra.mxu0 %v9313
  %9684 = vmatprep.subr.bf16.mxu0 %v9316
  %9685 = vmatpush1.bf16.msra.mxu0 %v9315
  %9686 = vmatprep.subr.bf16.mxu0 %v9318
  %9687 = vmatpush1.bf16.msra.mxu0 %v9317
  %9688 = vmatprep.subr.bf16.mxu0 %v9320
  %9689 = vmatpush1.bf16.msra.mxu0 %v9319
  %9690 = vmatprep.subr.bf16.mxu0 %v9322
  %9691 = vmatpush1.bf16.msra.mxu0 %v9321
  %9692 = vmatprep.subr.bf16.mxu0 %v9324
  %9693 = vmatpush1.bf16.msra.mxu0 %v9323
  %9694 = vmatprep.subr.bf16.mxu0 %v9326
  %9695 = vmatpush1.bf16.msra.mxu0 %v9325
  %9696 = vmatprep.subr.bf16.mxu0 %v9328
  %9697 = vmatpush1.bf16.msra.mxu0 %v9327
  %9698 = vmatprep.subr.bf16.mxu0 %v9330
  %9699 = vmatpush1.bf16.msra.mxu0 %v9329
  %9700 = vmatprep.subr.bf16.mxu0 %v9332
  %9701 = vmatpush1.bf16.msra.mxu0 %v9331
  %9702 = vmatprep.subr.bf16.mxu0 %v9334
  %9703 = vmatpush1.bf16.msra.mxu0 %v9333
  %9704 = vmatprep.subr.bf16.mxu0 %v9336
  %9705 = vmatpush1.bf16.msra.mxu0 %v9335
  %9706 = vmatprep.subr.bf16.mxu0 %v9338
  %9707 = vmatpush1.bf16.msra.mxu0 %v9337
  %9708 = vmatprep.subr.bf16.mxu0 %v9340
  %9709 = vmatpush1.bf16.msra.mxu0 %v9339
  %9710 = vmatprep.mubr.bf16.mxu0 %v8638
  %9711 = vmatmul.mubr.bf16.gmra.mrb[0].mxu0 %v8637
  %v9712 = vpop.f32.mrb[0].mxu0
  %v9713 = vadd.f32 %v9600, %v9712
  %v9714 = vpop.f32.mrb[0].mxu0
  %v9715 = vadd.f32 %v9602, %v9714
  %v9716 = vpop.f32.mrb[0].mxu0
  %v9717 = vadd.f32 %v9604, %v9716
  %v9718 = vpop.f32.mrb[0].mxu0
  %v9719 = vadd.f32 %v9606, %v9718
  %9720 = vmatprep.mubr.bf16.mxu0 %v8644
  %9721 = vmatmul.mubr.bf16.gmra.mrb[0].mxu0 %v8643
  %v9722 = vpop.f32.mrb[0].mxu0
  %v9723 = vadd.f32 %v9610, %v9722
  %v9724 = vpop.f32.mrb[0].mxu0
  %v9725 = vadd.f32 %v9612, %v9724
  %v9726 = vpop.f32.mrb[0].mxu0
  %v9727 = vadd.f32 %v9614, %v9726
  %v9728 = vpop.f32.mrb[0].mxu0
  %v9729 = vadd.f32 %v9616, %v9728
  %9730 = vmatprep.mubr.bf16.mxu0 %v8650
  %9731 = vmatmul.mubr.bf16.gmra.mrb[0].mxu0 %v8649
  %v9732 = vpop.f32.mrb[0].mxu0
  %v9733 = vadd.f32 %v9620, %v9732
  %v9734 = vpop.f32.mrb[0].mxu0
  %v9735 = vadd.f32 %v9622, %v9734
  %v9736 = vpop.f32.mrb[0].mxu0
  %v9737 = vadd.f32 %v9624, %v9736
  %v9738 = vpop.f32.mrb[0].mxu0
  %v9739 = vadd.f32 %v9626, %v9738
  %9740 = vmatprep.mubr.bf16.mxu0 %v8656
  %9741 = vmatmul.mubr.bf16.gmra.mrb[0].mxu0 %v8655
  %v9742 = vpop.f32.mrb[0].mxu0
  %v9743 = vadd.f32 %v9630, %v9742
  %v9744 = vpop.f32.mrb[0].mxu0
  %v9745 = vadd.f32 %v9632, %v9744
  %v9746 = vpop.f32.mrb[0].mxu0
  %v9747 = vadd.f32 %v9634, %v9746
  %v9748 = vpop.f32.mrb[0].mxu0
  %v9749 = vadd.f32 %v9636, %v9748
  %9750 = vmatprep.mubr.bf16.mxu0 %v8665
  %9751 = vmatmul.mubr.bf16.gmra.mrb[0].mxu0 %v8664
  %v9752 = vpop.f32.mrb[0].mxu0
  %v9753 = vadd.f32 %v9640, %v9752
  %v9754 = vpop.f32.mrb[0].mxu0
  %v9755 = vadd.f32 %v9642, %v9754
  %v9756 = vpop.f32.mrb[0].mxu0
  %v9757 = vadd.f32 %v9644, %v9756
  %v9758 = vpop.f32.mrb[0].mxu0
  %v9759 = vadd.f32 %v9646, %v9758
  %9760 = vmatprep.mubr.bf16.mxu0 %v8671
  %9761 = vmatmul.mubr.bf16.gmra.mrb[0].mxu0 %v8670
  %v9762 = vpop.f32.mrb[0].mxu0
  %v9763 = vadd.f32 %v9650, %v9762
  %v9764 = vpop.f32.mrb[0].mxu0
  %v9765 = vadd.f32 %v9652, %v9764
  %v9766 = vpop.f32.mrb[0].mxu0
  %v9767 = vadd.f32 %v9654, %v9766
  %v9768 = vpop.f32.mrb[0].mxu0
  %v9769 = vadd.f32 %v9656, %v9768
  %9770 = vmatprep.mubr.bf16.mxu0 %v8677
  %9771 = vmatmul.mubr.bf16.gmra.mrb[0].mxu0 %v8676
  %v9772 = vpop.f32.mrb[0].mxu0
  %v9773 = vadd.f32 %v9660, %v9772
  %v9774 = vpop.f32.mrb[0].mxu0
  %v9775 = vadd.f32 %v9662, %v9774
  %v9776 = vpop.f32.mrb[0].mxu0
  %v9777 = vadd.f32 %v9664, %v9776
  %v9778 = vpop.f32.mrb[0].mxu0
  %v9779 = vadd.f32 %v9666, %v9778
  %9780 = vmatprep.mubr.bf16.mxu0 %v8683
  %9781 = vmatmul.mubr.bf16.gmra.mrb[0].mxu0 %v8682
  %v9782 = vpop.f32.mrb[0].mxu0
  %v9783 = vadd.f32 %v9670, %v9782
  %v9784 = vpop.f32.mrb[0].mxu0
  %v9785 = vadd.f32 %v9672, %v9784
  %v9786 = vpop.f32.mrb[0].mxu0
  %v9787 = vadd.f32 %v9674, %v9786
  %v9788 = vpop.f32.mrb[0].mxu0
  %v9789 = vadd.f32 %v9676, %v9788
  %9790 = vdwg.mxu0
  %9791 = vmatprep.subr.bf16.mxu0 %v9342
  %9792 = vmatpush1.bf16.msra.mxu0 %v9341
  %9793 = vmatprep.subr.bf16.mxu0 %v9344
  %9794 = vmatpush1.bf16.msra.mxu0 %v9343
  %9795 = vmatprep.subr.bf16.mxu0 %v9346
  %9796 = vmatpush1.bf16.msra.mxu0 %v9345
  %9797 = vmatprep.subr.bf16.mxu0 %v9348
  %9798 = vmatpush1.bf16.msra.mxu0 %v9347
  %9799 = vmatprep.subr.bf16.mxu0 %v9350
  %9800 = vmatpush1.bf16.msra.mxu0 %v9349
  %9801 = vmatprep.subr.bf16.mxu0 %v9352
  %9802 = vmatpush1.bf16.msra.mxu0 %v9351
  %9803 = vmatprep.subr.bf16.mxu0 %v9354
  %9804 = vmatpush1.bf16.msra.mxu0 %v9353
  %9805 = vmatprep.subr.bf16.mxu0 %v9356
  %9806 = vmatpush1.bf16.msra.mxu0 %v9355
  %9807 = vmatprep.subr.bf16.mxu0 %v9358
  %9808 = vmatpush1.bf16.msra.mxu0 %v9357
  %9809 = vmatprep.subr.bf16.mxu0 %v9360
  %9810 = vmatpush1.bf16.msra.mxu0 %v9359
  %9811 = vmatprep.subr.bf16.mxu0 %v9362
  %9812 = vmatpush1.bf16.msra.mxu0 %v9361
  %9813 = vmatprep.subr.bf16.mxu0 %v9364
  %9814 = vmatpush1.bf16.msra.mxu0 %v9363
  %9815 = vmatprep.subr.bf16.mxu0 %v9366
  %9816 = vmatpush1.bf16.msra.mxu0 %v9365
  %9817 = vmatprep.subr.bf16.mxu0 %v9368
  %9818 = vmatpush1.bf16.msra.mxu0 %v9367
  %9819 = vmatprep.subr.bf16.mxu0 %v9370
  %9820 = vmatpush1.bf16.msra.mxu0 %v9369
  %9821 = vmatprep.subr.bf16.mxu0 %v9372
  %9822 = vmatpush1.bf16.msra.mxu0 %v9371
  %9823 = vmatprep.mubr.bf16.mxu0 %v8640
  %9824 = vmatmul.mubr.bf16.gmra.mrb[0].mxu0 %v8639
  %v9825 = vpop.f32.mrb[0].mxu0
  %v9826 = vadd.f32 %v9713, %v9825
  %v9827 = vpop.f32.mrb[0].mxu0
  %v9828 = vadd.f32 %v9715, %v9827
  %v9829 = vpop.f32.mrb[0].mxu0
  %v9830 = vadd.f32 %v9717, %v9829
  %v9831 = vpop.f32.mrb[0].mxu0
  %v9832 = vadd.f32 %v9719, %v9831
  %9833 = vmatprep.mubr.bf16.mxu0 %v8646
  %9834 = vmatmul.mubr.bf16.gmra.mrb[0].mxu0 %v8645
  %v9835 = vpop.f32.mrb[0].mxu0
  %v9836 = vadd.f32 %v9723, %v9835
  %v9837 = vpop.f32.mrb[0].mxu0
  %v9838 = vadd.f32 %v9725, %v9837
  %v9839 = vpop.f32.mrb[0].mxu0
  %v9840 = vadd.f32 %v9727, %v9839
  %v9841 = vpop.f32.mrb[0].mxu0
  %v9842 = vadd.f32 %v9729, %v9841
  %9843 = vmatprep.mubr.bf16.mxu0 %v8652
  %9844 = vmatmul.mubr.bf16.gmra.mrb[0].mxu0 %v8651
  %v9845 = vpop.f32.mrb[0].mxu0
  %v9846 = vadd.f32 %v9733, %v9845
  %v9847 = vpop.f32.mrb[0].mxu0
  %v9848 = vadd.f32 %v9735, %v9847
  %v9849 = vpop.f32.mrb[0].mxu0
  %v9850 = vadd.f32 %v9737, %v9849
  %v9851 = vpop.f32.mrb[0].mxu0
  %v9852 = vadd.f32 %v9739, %v9851
  %9853 = vmatprep.mubr.bf16.mxu0 %v8658
  %9854 = vmatmul.mubr.bf16.gmra.mrb[0].mxu0 %v8657
  %v9855 = vpop.f32.mrb[0].mxu0
  %v9856 = vadd.f32 %v9743, %v9855
  %v9857 = vpop.f32.mrb[0].mxu0
  %v9858 = vadd.f32 %v9745, %v9857
  %v9859 = vpop.f32.mrb[0].mxu0
  %v9860 = vadd.f32 %v9747, %v9859
  %v9861 = vpop.f32.mrb[0].mxu0
  %v9862 = vadd.f32 %v9749, %v9861
  %9863 = vmatprep.mubr.bf16.mxu0 %v8667
  %9864 = vmatmul.mubr.bf16.gmra.mrb[0].mxu0 %v8666
  %v9865 = vpop.f32.mrb[0].mxu0
  %v9866 = vadd.f32 %v9753, %v9865
  %v9867 = vpop.f32.mrb[0].mxu0
  %v9868 = vadd.f32 %v9755, %v9867
  %v9869 = vpop.f32.mrb[0].mxu0
  %v9870 = vadd.f32 %v9757, %v9869
  %v9871 = vpop.f32.mrb[0].mxu0
  %v9872 = vadd.f32 %v9759, %v9871
  %9873 = vmatprep.mubr.bf16.mxu0 %v8673
  %9874 = vmatmul.mubr.bf16.gmra.mrb[0].mxu0 %v8672
  %v9875 = vpop.f32.mrb[0].mxu0
  %v9876 = vadd.f32 %v9763, %v9875
  %v9877 = vpop.f32.mrb[0].mxu0
  %v9878 = vadd.f32 %v9765, %v9877
  %v9879 = vpop.f32.mrb[0].mxu0
  %v9880 = vadd.f32 %v9767, %v9879
  %v9881 = vpop.f32.mrb[0].mxu0
  %v9882 = vadd.f32 %v9769, %v9881
  %9883 = vmatprep.mubr.bf16.mxu0 %v8679
  %9884 = vmatmul.mubr.bf16.gmra.mrb[0].mxu0 %v8678
  %v9885 = vpop.f32.mrb[0].mxu0
  %v9886 = vadd.f32 %v9773, %v9885
  %v9887 = vpop.f32.mrb[0].mxu0
  %v9888 = vadd.f32 %v9775, %v9887
  %v9889 = vpop.f32.mrb[0].mxu0
  %v9890 = vadd.f32 %v9777, %v9889
  %v9891 = vpop.f32.mrb[0].mxu0
  %v9892 = vadd.f32 %v9779, %v9891
  %9893 = vmatprep.mubr.bf16.mxu0 %v8685
  %9894 = vmatmul.mubr.bf16.gmra.mrb[0].mxu0 %v8684
  %v9895 = vpop.f32.mrb[0].mxu0
  %v9896 = vadd.f32 %v9783, %v9895
  %v9897 = vpop.f32.mrb[0].mxu0
  %v9898 = vadd.f32 %v9785, %v9897
  %v9899 = vpop.f32.mrb[0].mxu0
  %v9900 = vadd.f32 %v9787, %v9899
  %v9901 = vpop.f32.mrb[0].mxu0
  %v9902 = vadd.f32 %v9789, %v9901
  %9903 = vdwg.mxu0
  %9904 = vmatprep.subr.bf16.mxu0 %v9374
  %9905 = vmatpush1.bf16.msra.mxu0 %v9373
  %9906 = vmatprep.subr.bf16.mxu0 %v9376
  %9907 = vmatpush1.bf16.msra.mxu0 %v9375
  %9908 = vmatprep.subr.bf16.mxu0 %v9378
  %9909 = vmatpush1.bf16.msra.mxu0 %v9377
  %9910 = vmatprep.subr.bf16.mxu0 %v9380
  %9911 = vmatpush1.bf16.msra.mxu0 %v9379
  %9912 = vmatprep.subr.bf16.mxu0 %v9382
  %9913 = vmatpush1.bf16.msra.mxu0 %v9381
  %9914 = vmatprep.subr.bf16.mxu0 %v9384
  %9915 = vmatpush1.bf16.msra.mxu0 %v9383
  %9916 = vmatprep.subr.bf16.mxu0 %v9386
  %9917 = vmatpush1.bf16.msra.mxu0 %v9385
  %9918 = vmatprep.subr.bf16.mxu0 %v9388
  %9919 = vmatpush1.bf16.msra.mxu0 %v9387
  %9920 = vmatprep.subr.bf16.mxu0 %v9390
  %9921 = vmatpush1.bf16.msra.mxu0 %v9389
  %9922 = vmatprep.subr.bf16.mxu0 %v9392
  %9923 = vmatpush1.bf16.msra.mxu0 %v9391
  %9924 = vmatprep.subr.bf16.mxu0 %v9394
  %9925 = vmatpush1.bf16.msra.mxu0 %v9393
  %9926 = vmatprep.subr.bf16.mxu0 %v9396
  %9927 = vmatpush1.bf16.msra.mxu0 %v9395
  %9928 = vmatprep.subr.bf16.mxu0 %v9398
  %9929 = vmatpush1.bf16.msra.mxu0 %v9397
  %9930 = vmatprep.subr.bf16.mxu0 %v9400
  %9931 = vmatpush1.bf16.msra.mxu0 %v9399
  %9932 = vmatprep.subr.bf16.mxu0 %v9402
  %9933 = vmatpush1.bf16.msra.mxu0 %v9401
  %9934 = vmatprep.subr.bf16.mxu0 %v9404
  %9935 = vmatpush1.bf16.msra.mxu0 %v9403
  %9936 = vmatprep.mubr.bf16.mxu0 %v8642
  %9937 = vmatmul.mubr.bf16.gmra.mrb[0].mxu0 %v8641
  %v9938 = vpop.f32.mrb[0].mxu0
  %v9939 = vadd.f32 %v9826, %v9938
  %v9940 = vpop.f32.mrb[0].mxu0
  %v9941 = vadd.f32 %v9828, %v9940
  %v9942 = vpop.f32.mrb[0].mxu0
  %v9943 = vadd.f32 %v9830, %v9942
  %v9944 = vpop.f32.mrb[0].mxu0
  %v9945 = vadd.f32 %v9832, %v9944
  %9946 = vmatprep.mubr.bf16.mxu0 %v8648
  %9947 = vmatmul.mubr.bf16.gmra.mrb[0].mxu0 %v8647
  %v9948 = vpop.f32.mrb[0].mxu0
  %v9949 = vadd.f32 %v9836, %v9948
  %v9950 = vpop.f32.mrb[0].mxu0
  %v9951 = vadd.f32 %v9838, %v9950
  %v9952 = vpop.f32.mrb[0].mxu0
  %v9953 = vadd.f32 %v9840, %v9952
  %v9954 = vpop.f32.mrb[0].mxu0
  %v9955 = vadd.f32 %v9842, %v9954
  %9956 = vmatprep.mubr.bf16.mxu0 %v8654
  %9957 = vmatmul.mubr.bf16.gmra.mrb[0].mxu0 %v8653
  %v9958 = vpop.f32.mrb[0].mxu0
  %v9959 = vadd.f32 %v9846, %v9958
  %v9960 = vpop.f32.mrb[0].mxu0
  %v9961 = vadd.f32 %v9848, %v9960
  %v9962 = vpop.f32.mrb[0].mxu0
  %v9963 = vadd.f32 %v9850, %v9962
  %v9964 = vpop.f32.mrb[0].mxu0
  %v9965 = vadd.f32 %v9852, %v9964
  %9966 = vmatprep.mubr.bf16.mxu0 %v8660
  %9967 = vmatmul.mubr.bf16.gmra.mrb[0].mxu0 %v8659
  %v9968 = vpop.f32.mrb[0].mxu0
  %v9969 = vadd.f32 %v9856, %v9968
  %v9970 = vpop.f32.mrb[0].mxu0
  %v9971 = vadd.f32 %v9858, %v9970
  %v9972 = vpop.f32.mrb[0].mxu0
  %v9973 = vadd.f32 %v9860, %v9972
  %v9974 = vpop.f32.mrb[0].mxu0
  %v9975 = vadd.f32 %v9862, %v9974
  %9976 = vmatprep.mubr.bf16.mxu0 %v8669
  %9977 = vmatmul.mubr.bf16.gmra.mrb[0].mxu0 %v8668
  %v9978 = vpop.f32.mrb[0].mxu0
  %v9979 = vadd.f32 %v9866, %v9978
  %v9980 = vpop.f32.mrb[0].mxu0
  %v9981 = vadd.f32 %v9868, %v9980
  %v9982 = vpop.f32.mrb[0].mxu0
  %v9983 = vadd.f32 %v9870, %v9982
  %v9984 = vpop.f32.mrb[0].mxu0
  %v9985 = vadd.f32 %v9872, %v9984
  %9986 = vmatprep.mubr.bf16.mxu0 %v8675
  %9987 = vmatmul.mubr.bf16.gmra.mrb[0].mxu0 %v8674
  %v9988 = vpop.f32.mrb[0].mxu0
  %v9989 = vadd.f32 %v9876, %v9988
  %v9990 = vpop.f32.mrb[0].mxu0
  %v9991 = vadd.f32 %v9878, %v9990
  %v9992 = vpop.f32.mrb[0].mxu0
  %v9993 = vadd.f32 %v9880, %v9992
  %v9994 = vpop.f32.mrb[0].mxu0
  %v9995 = vadd.f32 %v9882, %v9994
  %9996 = vmatprep.mubr.bf16.mxu0 %v8681
  %9997 = vmatmul.mubr.bf16.gmra.mrb[0].mxu0 %v8680
  %v9998 = vpop.f32.mrb[0].mxu0
  %v9999 = vadd.f32 %v9886, %v9998
  %v10000 = vpop.f32.mrb[0].mxu0
  %v10001 = vadd.f32 %v9888, %v10000
  %v10002 = vpop.f32.mrb[0].mxu0
  %v10003 = vadd.f32 %v9890, %v10002
  %v10004 = vpop.f32.mrb[0].mxu0
  %v10005 = vadd.f32 %v9892, %v10004
  %10006 = vmatprep.mubr.bf16.mxu0 %v8687
  %10007 = vmatmul.mubr.bf16.gmra.mrb[0].mxu0 %v8686
  %v10008 = vpop.f32.mrb[0].mxu0
  %v10009 = vadd.f32 %v9896, %v10008
  %v10010 = vpop.f32.mrb[0].mxu0
  %v10011 = vadd.f32 %v9898, %v10010
  %v10012 = vpop.f32.mrb[0].mxu0
  %v10013 = vadd.f32 %v9900, %v10012
  %v10014 = vpop.f32.mrb[0].mxu0
  %v10015 = vadd.f32 %v9902, %v10014
  %10016 = vdwg.mxu0
  %10017 = vmatprep.subr.bf16.mxu0 %v9406
  %10018 = vmatpush1.bf16.msra.mxu0 %v9405
  %10019 = vmatprep.subr.bf16.mxu0 %v9408
  %10020 = vmatpush1.bf16.msra.mxu0 %v9407
  %10021 = vmatprep.subr.bf16.mxu0 %v9410
  %10022 = vmatpush1.bf16.msra.mxu0 %v9409
  %10023 = vmatprep.subr.bf16.mxu0 %v9412
  %10024 = vmatpush1.bf16.msra.mxu0 %v9411
  %10025 = vmatprep.subr.bf16.mxu0 %v9414
  %10026 = vmatpush1.bf16.msra.mxu0 %v9413
  %10027 = vmatprep.subr.bf16.mxu0 %v9416
  %10028 = vmatpush1.bf16.msra.mxu0 %v9415
  %10029 = vmatprep.subr.bf16.mxu0 %v9418
  %10030 = vmatpush1.bf16.msra.mxu0 %v9417
  %10031 = vmatprep.subr.bf16.mxu0 %v9420
  %10032 = vmatpush1.bf16.msra.mxu0 %v9419
  %10033 = vmatprep.subr.bf16.mxu0 0
  %10034 = vmatpush1.bf16.msra.mxu0 0
  %10035 = vmatprep.subr.bf16.mxu0 0
  %10036 = vmatpush1.bf16.msra.mxu0 0
  %10037 = vmatprep.subr.bf16.mxu0 0
  %10038 = vmatpush1.bf16.msra.mxu0 0
  %10039 = vmatprep.subr.bf16.mxu0 0
  %10040 = vmatpush1.bf16.msra.mxu0 0
  %10041 = vmatprep.subr.bf16.mxu0 0
  %10042 = vmatpush1.bf16.msra.mxu0 0
  %10043 = vmatprep.subr.bf16.mxu0 0
  %10044 = vmatpush1.bf16.msra.mxu0 0
  %10045 = vmatprep.subr.bf16.mxu0 0
  %10046 = vmatpush1.bf16.msra.mxu0 0
  %10047 = vmatprep.subr.bf16.mxu0 0
  %10048 = vmatpush1.bf16.msra.mxu0 0
  %10049 = vmatprep.mubr.bf16.mxu0 0
  %10050 = vmatmul.mubr.bf16.gmra.mrb[0].mxu0 %v8643
  %v10051 = vpop.f32.mrb[0].mxu0
  %v10052 = vadd.f32 %v9939, %v10051
  %v10053 = vpop.f32.mrb[0].mxu0
  %v10054 = vadd.f32 %v9941, %v10053
  %v10055 = vpop.f32.mrb[0].mxu0
  %v10056 = vadd.f32 %v9943, %v10055
  %v10057 = vpop.f32.mrb[0].mxu0
  %v10058 = vadd.f32 %v9945, %v10057
  %10059 = vmatprep.mubr.bf16.mxu0 0
  %10060 = vmatmul.mubr.bf16.gmra.mrb[0].mxu0 %v8649
  %v10061 = vpop.f32.mrb[0].mxu0
  %v10062 = vadd.f32 %v9949, %v10061
  %v10063 = vpop.f32.mrb[0].mxu0
  %v10064 = vadd.f32 %v9951, %v10063
  %v10065 = vpop.f32.mrb[0].mxu0
  %v10066 = vadd.f32 %v9953, %v10065
  %v10067 = vpop.f32.mrb[0].mxu0
  %v10068 = vadd.f32 %v9955, %v10067
  %10069 = vmatprep.mubr.bf16.mxu0 0
  %10070 = vmatmul.mubr.bf16.gmra.mrb[0].mxu0 %v8655
  %v10071 = vpop.f32.mrb[0].mxu0
  %v10072 = vadd.f32 %v9959, %v10071
  %v10073 = vpop.f32.mrb[0].mxu0
  %v10074 = vadd.f32 %v9961, %v10073
  %v10075 = vpop.f32.mrb[0].mxu0
  %v10076 = vadd.f32 %v9963, %v10075
  %v10077 = vpop.f32.mrb[0].mxu0
  %v10078 = vadd.f32 %v9965, %v10077
  %10079 = vmatprep.mubr.bf16.mxu0 0
  %10080 = vmatmul.mubr.bf16.gmra.mrb[0].mxu0 %v8661
  %v10081 = vpop.f32.mrb[0].mxu0
  %v10082 = vadd.f32 %v9969, %v10081
  %v10083 = vpop.f32.mrb[0].mxu0
  %v10084 = vadd.f32 %v9971, %v10083
  %v10085 = vpop.f32.mrb[0].mxu0
  %v10086 = vadd.f32 %v9973, %v10085
  %v10087 = vpop.f32.mrb[0].mxu0
  %v10088 = vadd.f32 %v9975, %v10087
  %10089 = vmatprep.mubr.bf16.mxu0 0
  %10090 = vmatmul.mubr.bf16.gmra.mrb[0].mxu0 %v8670
  %v10091 = vpop.f32.mrb[0].mxu0
  %v10092 = vadd.f32 %v9979, %v10091
  %v10093 = vpop.f32.mrb[0].mxu0
  %v10094 = vadd.f32 %v9981, %v10093
  %v10095 = vpop.f32.mrb[0].mxu0
  %v10096 = vadd.f32 %v9983, %v10095
  %v10097 = vpop.f32.mrb[0].mxu0
  %v10098 = vadd.f32 %v9985, %v10097
  %10099 = vmatprep.mubr.bf16.mxu0 0
  %10100 = vmatmul.mubr.bf16.gmra.mrb[0].mxu0 %v8676
  %v10101 = vpop.f32.mrb[0].mxu0
  %v10102 = vadd.f32 %v9989, %v10101
  %v10103 = vpop.f32.mrb[0].mxu0
  %v10104 = vadd.f32 %v9991, %v10103
  %v10105 = vpop.f32.mrb[0].mxu0
  %v10106 = vadd.f32 %v9993, %v10105
  %v10107 = vpop.f32.mrb[0].mxu0
  %v10108 = vadd.f32 %v9995, %v10107
  %10109 = vmatprep.mubr.bf16.mxu0 0
  %10110 = vmatmul.mubr.bf16.gmra.mrb[0].mxu0 %v8682
  %v10111 = vpop.f32.mrb[0].mxu0
  %v10112 = vadd.f32 %v9999, %v10111
  %v10113 = vpop.f32.mrb[0].mxu0
  %v10114 = vadd.f32 %v10001, %v10113
  %v10115 = vpop.f32.mrb[0].mxu0
  %v10116 = vadd.f32 %v10003, %v10115
  %v10117 = vpop.f32.mrb[0].mxu0
  %v10118 = vadd.f32 %v10005, %v10117
  %10119 = vmatprep.mubr.bf16.mxu0 0
  %10120 = vmatmul.mubr.bf16.gmra.mrb[0].mxu0 %v8688
  %v10121 = vpop.f32.mrb[0].mxu0
  %v10122 = vadd.f32 %v10009, %v10121
  %v10123 = vpop.f32.mrb[0].mxu0
  %v10124 = vadd.f32 %v10011, %v10123
  %v10125 = vpop.f32.mrb[0].mxu0
  %v10126 = vadd.f32 %v10013, %v10125
  %v10127 = vpop.f32.mrb[0].mxu0
  %v10128 = vadd.f32 %v10015, %v10127
  %10129 = vdwg.mxu0
  %v10130 = vmax.f32 %v10052, 0.0
  %v10131 = vmax.f32 %v10056, 0.0
  %v10132 = vmax.f32 %v10062, 0.0
  %v10133 = vmax.f32 %v10066, 0.0
  %v10134 = vmax.f32 %v10072, 0.0
  %v10135 = vmax.f32 %v10076, 0.0
  %v10136 = vmax.f32 %v10082, 0.0
  %v10137 = vmax.f32 %v10086, 0.0
  %v10138 = vmax.f32 %v10092, 0.0
  %v10139 = vmax.f32 %v10096, 0.0
  %v10140 = vmax.f32 %v10102, 0.0
  %v10141 = vmax.f32 %v10106, 0.0
  %v10142 = vmax.f32 %v10112, 0.0
  %v10143 = vmax.f32 %v10116, 0.0
  %v10144 = vmax.f32 %v10122, 0.0
  %v10145 = vmax.f32 %v10126, 0.0
  %v10146 = vld [vmem:[%s7] sm:$0xff]
  %v10147 = vld [vmem:[%s7 + $0x8] sm:$0xff]
  %v10148 = vld [vmem:[%s7 + $0x10] sm:$0xff]
  %v10149 = vld [vmem:[%s7 + $0x18] sm:$0xff]
  %v10150 = vld [vmem:[%s7 + $0x20] sm:$0xff]
  %v10151 = vld [vmem:[%s7 + $0x28] sm:$0xff]
  %v10152 = vld [vmem:[%s7 + $0x30] sm:$0xff]
  %v10153 = vld [vmem:[%s7 + $0x38] sm:$0xff]
  %v10154 = vld [vmem:[%s7 + $0x40] sm:$0xff]
  %v10155 = vld [vmem:[%s7 + $0x48] sm:$0xff]
  %v10156 = vld [vmem:[%s7 + $0x50] sm:$0xff]
  %v10157 = vld [vmem:[%s7 + $0x58] sm:$0xff]
  %v10158 = vld [vmem:[%s7 + $0x60] sm:$0xff]
  %v10159 = vld [vmem:[%s7 + $0x68] sm:$0xff]
  %v10160 = vld [vmem:[%s7 + $0x70] sm:$0xff]
  %v10161 = vld [vmem:[%s7 + $0x78] sm:$0xff]
  %v10162 = vld [vmem:[#allocation2] sm:$0x1]
  %v10164 = vlaneseq
  %v10165 = vshrl.u32 %v10164, 7
  %v10166 = vsub.s32 0, %v10165
  %v10167 = vrot.slane %v10162, %v10166
  %10169 = vmatprep.subr.mxu0 0.0
  %10170 = vmatpush1.msra.mxu0 %v10146
  %10171 = vmatprep.subr.mxu0 0.0
  %10172 = vmatpush1.msra.mxu0 %v10147
  %10173 = vmatprep.subr.mxu0 0.0
  %10174 = vmatpush1.msra.mxu0 %v10148
  %10175 = vmatprep.subr.mxu0 0.0
  %10176 = vmatpush1.msra.mxu0 %v10149
  %10177 = vmatprep.subr.mxu0 0.0
  %10178 = vmatpush1.msra.mxu0 %v10150
  %10179 = vmatprep.subr.mxu0 0.0
  %10180 = vmatpush1.msra.mxu0 %v10151
  %10181 = vmatprep.subr.mxu0 0.0
  %10182 = vmatpush1.msra.mxu0 %v10152
  %10183 = vmatprep.subr.mxu0 0.0
  %10184 = vmatpush1.msra.mxu0 %v10153
  %10185 = vmatprep.subr.mxu0 0.0
  %10186 = vmatpush1.msra.mxu0 %v10154
  %10187 = vmatprep.subr.mxu0 0.0
  %10188 = vmatpush1.msra.mxu0 %v10155
  %10189 = vmatprep.subr.mxu0 0.0
  %10190 = vmatpush1.msra.mxu0 %v10156
  %10191 = vmatprep.subr.mxu0 0.0
  %10192 = vmatpush1.msra.mxu0 %v10157
  %10193 = vmatprep.subr.mxu0 0.0
  %10194 = vmatpush1.msra.mxu0 %v10158
  %10195 = vmatprep.subr.mxu0 0.0
  %10196 = vmatpush1.msra.mxu0 %v10159
  %10197 = vmatprep.subr.mxu0 0.0
  %10198 = vmatpush1.msra.mxu0 %v10160
  %10199 = vmatprep.subr.mxu0 0.0
  %10200 = vmatpush1.msra.mxu0 %v10161
  %10201 = vmatprep.subr.mxu0 0.0
  %10202 = vmatpush1.msra.mxu0 0.0
  %10203 = vmatprep.subr.mxu0 0.0
  %10204 = vmatpush1.msra.mxu0 0.0
  %10205 = vmatprep.subr.mxu0 0.0
  %10206 = vmatpush1.msra.mxu0 0.0
  %10207 = vmatprep.subr.mxu0 0.0
  %10208 = vmatpush1.msra.mxu0 0.0
  %10209 = vmatprep.subr.mxu0 0.0
  %10210 = vmatpush1.msra.mxu0 0.0
  %10211 = vmatprep.subr.mxu0 0.0
  %10212 = vmatpush1.msra.mxu0 0.0
  %10213 = vmatprep.subr.mxu0 0.0
  %10214 = vmatpush1.msra.mxu0 0.0
  %10215 = vmatprep.subr.mxu0 0.0
  %10216 = vmatpush1.msra.mxu0 0.0
  %10217 = vmatprep.subr.mxu0 0.0
  %10218 = vmatpush1.msra.mxu0 0.0
  %10219 = vmatprep.subr.mxu0 0.0
  %10220 = vmatpush1.msra.mxu0 0.0
  %10221 = vmatprep.subr.mxu0 0.0
  %10222 = vmatpush1.msra.mxu0 0.0
  %10223 = vmatprep.subr.mxu0 0.0
  %10224 = vmatpush1.msra.mxu0 0.0
  %10225 = vmatprep.subr.mxu0 0.0
  %10226 = vmatpush1.msra.mxu0 0.0
  %10227 = vmatprep.subr.mxu0 0.0
  %10228 = vmatpush1.msra.mxu0 0.0
  %10229 = vmatprep.subr.mxu0 0.0
  %10230 = vmatpush1.msra.mxu0 0.0
  %10231 = vmatprep.subr.mxu0 0.0
  %10232 = vmatpush1.msra.mxu0 0.0
  %10233 = vmatprep.mubr.f32.mxu0 0.0
  %10234 = vmatmul.mubr.f32.gmra.mrb[0].mxu0 %v10130
  %v10235 = vpop.f32.mrb[0].mxu0
  %v10236 = vadd.f32 %v10167, %v10235
  %v10237 = vpop.f32.mrb[0].mxu0
  %10238 = vmatprep.mubr.f32.mxu0 0.0
  %10239 = vmatmul.mubr.f32.gmra.mrb[0].mxu0 %v10131
  %v10240 = vpop.f32.mrb[0].mxu0
  %v10241 = vadd.f32 %v10167, %v10240
  %v10242 = vpop.f32.mrb[0].mxu0
  %10243 = vmatprep.mubr.f32.mxu0 0.0
  %10244 = vmatmul.mubr.f32.gmra.mrb[0].mxu0 %v10132
  %v10245 = vpop.f32.mrb[0].mxu0
  %v10246 = vadd.f32 %v10167, %v10245
  %v10247 = vpop.f32.mrb[0].mxu0
  %10248 = vmatprep.mubr.f32.mxu0 0.0
  %10249 = vmatmul.mubr.f32.gmra.mrb[0].mxu0 %v10133
  %v10250 = vpop.f32.mrb[0].mxu0
  %v10251 = vadd.f32 %v10167, %v10250
  %v10252 = vpop.f32.mrb[0].mxu0
  %10253 = vmatprep.mubr.f32.mxu0 0.0
  %10254 = vmatmul.mubr.f32.gmra.mrb[0].mxu0 %v10134
  %v10255 = vpop.f32.mrb[0].mxu0
  %v10256 = vadd.f32 %v10167, %v10255
  %v10257 = vpop.f32.mrb[0].mxu0
  %10258 = vmatprep.mubr.f32.mxu0 0.0
  %10259 = vmatmul.mubr.f32.gmra.mrb[0].mxu0 %v10135
  %v10260 = vpop.f32.mrb[0].mxu0
  %v10261 = vadd.f32 %v10167, %v10260
  %v10262 = vpop.f32.mrb[0].mxu0
  %10263 = vmatprep.mubr.f32.mxu0 0.0
  %10264 = vmatmul.mubr.f32.gmra.mrb[0].mxu0 %v10136
  %v10265 = vpop.f32.mrb[0].mxu0
  %v10266 = vadd.f32 %v10167, %v10265
  %v10267 = vpop.f32.mrb[0].mxu0
  %10268 = vmatprep.mubr.f32.mxu0 0.0
  %10269 = vmatmul.mubr.f32.gmra.mrb[0].mxu0 %v10137
  %v10270 = vpop.f32.mrb[0].mxu0
  %v10271 = vadd.f32 %v10167, %v10270
  %v10272 = vpop.f32.mrb[0].mxu0
  %10273 = vmatprep.mubr.f32.mxu0 0.0
  %10274 = vmatmul.mubr.f32.gmra.mrb[0].mxu0 %v10138
  %v10275 = vpop.f32.mrb[0].mxu0
  %v10276 = vadd.f32 %v10167, %v10275
  %v10277 = vpop.f32.mrb[0].mxu0
  %10278 = vmatprep.mubr.f32.mxu0 0.0
  %10279 = vmatmul.mubr.f32.gmra.mrb[0].mxu0 %v10139
  %v10280 = vpop.f32.mrb[0].mxu0
  %v10281 = vadd.f32 %v10167, %v10280
  %v10282 = vpop.f32.mrb[0].mxu0
  %10283 = vmatprep.mubr.f32.mxu0 0.0
  %10284 = vmatmul.mubr.f32.gmra.mrb[0].mxu0 %v10140
  %v10285 = vpop.f32.mrb[0].mxu0
  %v10286 = vadd.f32 %v10167, %v10285
  %v10287 = vpop.f32.mrb[0].mxu0
  %10288 = vmatprep.mubr.f32.mxu0 0.0
  %10289 = vmatmul.mubr.f32.gmra.mrb[0].mxu0 %v10141
  %v10290 = vpop.f32.mrb[0].mxu0
  %v10291 = vadd.f32 %v10167, %v10290
  %v10292 = vpop.f32.mrb[0].mxu0
  %10293 = vmatprep.mubr.f32.mxu0 0.0
  %10294 = vmatmul.mubr.f32.gmra.mrb[0].mxu0 %v10142
  %v10295 = vpop.f32.mrb[0].mxu0
  %v10296 = vadd.f32 %v10167, %v10295
  %v10297 = vpop.f32.mrb[0].mxu0
  %10298 = vmatprep.mubr.f32.mxu0 0.0
  %10299 = vmatmul.mubr.f32.gmra.mrb[0].mxu0 %v10143
  %v10300 = vpop.f32.mrb[0].mxu0
  %v10301 = vadd.f32 %v10167, %v10300
  %v10302 = vpop.f32.mrb[0].mxu0
  %10303 = vmatprep.mubr.f32.mxu0 0.0
  %10304 = vmatmul.mubr.f32.gmra.mrb[0].mxu0 %v10144
  %v10305 = vpop.f32.mrb[0].mxu0
  %v10306 = vadd.f32 %v10167, %v10305
  %v10307 = vpop.f32.mrb[0].mxu0
  %10308 = vmatprep.mubr.f32.mxu0 0.0
  %10309 = vmatmul.mubr.f32.gmra.mrb[0].mxu0 %v10145
  %v10310 = vpop.f32.mrb[0].mxu0
  %v10311 = vadd.f32 %v10167, %v10310
  %v10312 = vpop.f32.mrb[0].mxu0
  %10313 = vdwg.mxu0
  %v10314 = vmax.f32 %v10236, 0.0
  %v10315 = vmax.f32 %v10241, 0.0
  %v10316 = vmax.f32 %v10246, 0.0
  %v10317 = vmax.f32 %v10251, 0.0
  %v10318 = vmax.f32 %v10256, 0.0
  %v10319 = vmax.f32 %v10261, 0.0
  %v10320 = vmax.f32 %v10266, 0.0
  %v10321 = vmax.f32 %v10271, 0.0
  %v10322 = vmax.f32 %v10276, 0.0
  %v10323 = vmax.f32 %v10281, 0.0
  %v10324 = vmax.f32 %v10286, 0.0
  %v10325 = vmax.f32 %v10291, 0.0
  %v10326 = vmax.f32 %v10296, 0.0
  %v10327 = vmax.f32 %v10301, 0.0
  %v10328 = vmax.f32 %v10306, 0.0
  %v10329 = vmax.f32 %v10311, 0.0
  %v10330 = vld [vmem:[%s9] sm:$0xff]
  %v10331 = vld [vmem:[%s9 + $0x8] sm:$0xff]
  %v10332 = vld [vmem:[%s9 + $0x10] sm:$0xff]
  %v10333 = vld [vmem:[%s9 + $0x18] sm:$0xff]
  %v10334 = vld [vmem:[%s9 + $0x20] sm:$0xff]
  %v10335 = vld [vmem:[%s9 + $0x28] sm:$0xff]
  %v10336 = vld [vmem:[%s9 + $0x30] sm:$0xff]
  %v10337 = vld [vmem:[%s9 + $0x38] sm:$0xff]
  %v10338 = vld [vmem:[%s9 + $0x40] sm:$0xff]
  %v10339 = vld [vmem:[%s9 + $0x48] sm:$0xff]
  %v10340 = vld [vmem:[%s9 + $0x50] sm:$0xff]
  %v10341 = vld [vmem:[%s9 + $0x58] sm:$0xff]
  %v10342 = vld [vmem:[%s9 + $0x60] sm:$0xff]
  %v10343 = vld [vmem:[%s9 + $0x68] sm:$0xff]
  %v10344 = vld [vmem:[%s9 + $0x70] sm:$0xff]
  %v10345 = vld [vmem:[%s9 + $0x78] sm:$0xff]
  %v10346 = vld [vmem:[%s10] sm:$0x3]
  %v10347 = vld [vmem:[%s11] sm:$0xff]
  %v10348 = vld [vmem:[%s11 + $0x8] sm:$0xff]
  %v10349 = vld [vmem:[%s11 + $0x10] sm:$0xff]
  %v10350 = vld [vmem:[%s11 + $0x18] sm:$0xff]
  %v10351 = vld [vmem:[%s11 + $0x20] sm:$0xff]
  %v10352 = vld [vmem:[%s11 + $0x28] sm:$0xff]
  %v10353 = vld [vmem:[%s11 + $0x30] sm:$0xff]
  %v10354 = vld [vmem:[%s11 + $0x38] sm:$0xff]
  %v10355 = vld [vmem:[%s11 + $0x40] sm:$0xff]
  %v10356 = vld [vmem:[%s11 + $0x48] sm:$0xff]
  %v10357 = vld [vmem:[%s11 + $0x50] sm:$0xff]
  %v10358 = vld [vmem:[%s11 + $0x58] sm:$0xff]
  %v10359 = vld [vmem:[%s11 + $0x60] sm:$0xff]
  %v10360 = vld [vmem:[%s11 + $0x68] sm:$0xff]
  %v10361 = vld [vmem:[%s11 + $0x70] sm:$0xff]
  %v10362 = vld [vmem:[%s11 + $0x78] sm:$0xff]
  %v10363 = vld [vmem:[%s11 + $0x80] sm:$0xff]
  %v10364 = vld [vmem:[%s11 + $0x88] sm:$0xff]
  %v10365 = vld [vmem:[%s11 + $0x90] sm:$0xff]
  %v10366 = vld [vmem:[%s11 + $0x98] sm:$0xff]
  %v10367 = vld [vmem:[%s11 + $0xa0] sm:$0xff]
  %v10368 = vld [vmem:[%s11 + $0xa8] sm:$0xff]
  %v10369 = vld [vmem:[%s11 + $0xb0] sm:$0xff]
  %v10370 = vld [vmem:[%s11 + $0xb8] sm:$0xff]
  %v10371 = vld [vmem:[%s11 + $0xc0] sm:$0xff]
  %v10372 = vld [vmem:[%s11 + $0xc8] sm:$0xff]
  %v10373 = vld [vmem:[%s11 + $0xd0] sm:$0xff]
  %v10374 = vld [vmem:[%s11 + $0xd8] sm:$0xff]
  %v10375 = vld [vmem:[%s11 + $0xe0] sm:$0xff]
  %v10376 = vld [vmem:[%s11 + $0xe8] sm:$0xff]
  %v10377 = vld [vmem:[%s11 + $0xf0] sm:$0xff]
  %v10378 = vld [vmem:[%s11 + $0xf8] sm:$0xff]
  %v10379 = vld [vmem:[#allocation3] sm:$0x1]
  %vm10380 = vcmask 7168
  %v10381 = vsel %vm10380, %v10054, -inf
  %v10382 = vsel %vm10380, %v10058, -inf
  %v10383 = vsel %vm10380, %v10064, -inf
  %v10384 = vsel %vm10380, %v10068, -inf
  %v10385 = vsel %vm10380, %v10074, -inf
  %v10386 = vmax.f32 %v10381, %v10385
  %v10387 = vsel %vm10380, %v10078, -inf
  %v10388 = vmax.f32 %v10382, %v10387
  %v10389 = vsel %vm10380, %v10084, -inf
  %v10390 = vmax.f32 %v10383, %v10389
  %v10391 = vsel %vm10380, %v10088, -inf
  %v10392 = vmax.f32 %v10384, %v10391
  %v10393 = vmax.f32 %v10386, %v10388
  %v10394 = vmax.f32 %v10390, %v10392
  %v10395 = vmax.f32 %v10393, %v10394
  %v10396 = vrot.slane %v10395, 4
  %v10397 = vmax.f32 %v10395, %v10396
  %v10398 = vrot.slane %v10397, 2
  %v10399 = vmax.f32 %v10397, %v10398
  %v10400 = vrot.slane %v10399, 1
  %v10401 = vmax.f32 %v10399, %v10400
  %v10402 = vsub.f32 %v10054, %v10401
  %v10403 = vsub.f32 %v10058, %v10401
  %v10404 = vsub.f32 %v10064, %v10401
  %v10405 = vsub.f32 %v10068, %v10401
  %v10406 = vsub.f32 %v10074, %v10401
  %v10407 = vsub.f32 %v10078, %v10401
  %v10408 = vsub.f32 %v10084, %v10401
  %v10409 = vsub.f32 %v10088, %v10401
  %v10410 = vmul.f32 %v10402, 1.442695
  %v10411 = vpow.pop %v10410
  %v10412 = vmul.f32 %v10403, 1.442695
  %v10413 = vpow.pop %v10412
  %v10414 = vmul.f32 %v10404, 1.442695
  %v10415 = vpow.pop %v10414
  %v10416 = vmul.f32 %v10405, 1.442695
  %v10417 = vpow.pop %v10416
  %v10418 = vmul.f32 %v10406, 1.442695
  %v10419 = vpow.pop %v10418
  %v10420 = vmul.f32 %v10407, 1.442695
  %v10421 = vpow.pop %v10420
  %v10422 = vmul.f32 %v10408, 1.442695
  %v10423 = vpow.pop %v10422
  %v10424 = vmul.f32 %v10409, 1.442695
  %v10425 = vpow.pop %v10424
  %v10426 = vsel %vm10380, %v10411, 0.0
  %v10427 = vsel %vm10380, %v10413, 0.0
  %v10428 = vadd.f32 %v10426, %v10427
  %v10429 = vsel %vm10380, %v10415, 0.0
  %v10430 = vadd.f32 %v10428, %v10429
  %v10431 = vsel %vm10380, %v10417, 0.0
  %v10432 = vadd.f32 %v10430, %v10431
  %v10433 = vsel %vm10380, %v10419, 0.0
  %v10434 = vadd.f32 %v10432, %v10433
  %v10435 = vsel %vm10380, %v10421, 0.0
  %v10436 = vadd.f32 %v10434, %v10435
  %v10437 = vsel %vm10380, %v10423, 0.0
  %v10438 = vadd.f32 %v10436, %v10437
  %v10439 = vsel %vm10380, %v10425, 0.0
  %v10440 = vadd.f32 %v10438, %v10439
  %v10441 = vrot.slane %v10440, 4
  %v10442 = vadd.f32 %v10440, %v10441
  %v10443 = vrot.slane %v10442, 2
  %v10444 = vadd.f32 %v10442, %v10443
  %v10445 = vrot.slane %v10444, 1
  %v10446 = vadd.f32 %v10444, %v10445
  %v10447 = vrcp.pop %v10446
  %v10448 = vmul.f32 %v10411, %v10447
  %v10449 = vmul.f32 %v10413, %v10447
  %v10450 = vmul.f32 %v10415, %v10447
  %v10451 = vmul.f32 %v10417, %v10447
  %v10452 = vmul.f32 %v10419, %v10447
  %v10453 = vmul.f32 %v10421, %v10447
  %v10454 = vmul.f32 %v10423, %v10447
  %v10455 = vmul.f32 %v10425, %v10447
  %10456 = vst.msk [vmem:[%s13] sm:$0xff] %vm10380, %v10448
  %10457 = vst.msk [vmem:[%s13 + $0x8] sm:$0xff] %vm10380, %v10449
  %10458 = vst.msk [vmem:[%s13 + $0x10] sm:$0xff] %vm10380, %v10450
  %10459 = vst.msk [vmem:[%s13 + $0x18] sm:$0xff] %vm10380, %v10451
  %10460 = vst.msk [vmem:[%s13 + $0x20] sm:$0xff] %vm10380, %v10452
  %10461 = vst.msk [vmem:[%s13 + $0x28] sm:$0xff] %vm10380, %v10453
  %10462 = vst.msk [vmem:[%s13 + $0x30] sm:$0xff] %vm10380, %v10454
  %10463 = vst.msk [vmem:[%s13 + $0x38] sm:$0xff] %vm10380, %v10455
  %10465 = vset.pattern.permute.xlu0 0
  %10466 = vperm.xlu0 %10465, %v10314
  %v10467 = vpop.permute.xlu0 %10466
  %10470 = vset.pattern.permute.xlu0 0
  %10471 = vperm.xlu0 %10470, %v10315
  %v10472 = vpop.permute.xlu0 %10471
  %10475 = vset.pattern.permute.xlu0 0
  %10476 = vperm.xlu0 %10475, %v10316
  %v10477 = vpop.permute.xlu0 %10476
  %10480 = vset.pattern.permute.xlu0 0
  %10481 = vperm.xlu0 %10480, %v10317
  %v10482 = vpop.permute.xlu0 %10481
  %10485 = vset.pattern.permute.xlu0 0
  %10486 = vperm.xlu0 %10485, %v10318
  %v10487 = vpop.permute.xlu0 %10486
  %10490 = vset.pattern.permute.xlu0 0
  %10491 = vperm.xlu0 %10490, %v10319
  %v10492 = vpop.permute.xlu0 %10491
  %10495 = vset.pattern.permute.xlu0 0
  %10496 = vperm.xlu0 %10495, %v10320
  %v10497 = vpop.permute.xlu0 %10496
  %10500 = vset.pattern.permute.xlu0 0
  %10501 = vperm.xlu0 %10500, %v10321
  %v10502 = vpop.permute.xlu0 %10501
  %v10504 = vmul.f32 %v10467, %v10330
  %v10505 = vmul.f32 %v10467, %v10331
  %v10506 = vmul.f32 %v10472, %v10332
  %v10507 = vmul.f32 %v10472, %v10333
  %v10508 = vmul.f32 %v10477, %v10334
  %v10509 = vmul.f32 %v10477, %v10335
  %v10510 = vmul.f32 %v10482, %v10336
  %v10511 = vmul.f32 %v10482, %v10337
  %v10512 = vmul.f32 %v10487, %v10338
  %v10513 = vmul.f32 %v10487, %v10339
  %v10514 = vmul.f32 %v10492, %v10340
  %v10515 = vmul.f32 %v10492, %v10341
  %v10516 = vmul.f32 %v10497, %v10342
  %v10517 = vmul.f32 %v10497, %v10343
  %v10518 = vmul.f32 %v10502, %v10344
  %v10519 = vmul.f32 %v10502, %v10345
  %v10520 = vadd.f32 %v10504, %v10506
  %v10521 = vadd.f32 %v10520, %v10508
  %v10522 = vadd.f32 %v10521, %v10510
  %v10523 = vadd.f32 %v10522, %v10512
  %v10524 = vadd.f32 %v10523, %v10514
  %v10525 = vadd.f32 %v10524, %v10516
  %v10526 = vadd.f32 %v10525, %v10518
  %v10527 = vrot.slane %v10526, 4
  %v10528 = vadd.f32 %v10526, %v10527
  %v10529 = vrot.slane %v10528, 2
  %v10530 = vadd.f32 %v10528, %v10529
  %v10531 = vrot.slane %v10530, 1
  %v10532 = vadd.f32 %v10530, %v10531
  %v10533 = vadd.f32 %v10505, %v10507
  %v10534 = vadd.f32 %v10533, %v10509
  %v10535 = vadd.f32 %v10534, %v10511
  %v10536 = vadd.f32 %v10535, %v10513
  %v10537 = vadd.f32 %v10536, %v10515
  %v10538 = vadd.f32 %v10537, %v10517
  %v10539 = vadd.f32 %v10538, %v10519
  %v10540 = vrot.slane %v10539, 4
  %v10541 = vadd.f32 %v10539, %v10540
  %v10542 = vrot.slane %v10541, 2
  %v10543 = vadd.f32 %v10541, %v10542
  %v10544 = vrot.slane %v10543, 1
  %v10545 = vadd.f32 %v10543, %v10544
  %v10547 = vlaneseq
  %v10548 = vshrl.u32 %v10547, 7
  %v10549 = vsub.s32 0, %v10548
  %v10550 = vrot.slane %v10346, %v10549
  %v10551 = vlaneseq
  %v10552 = vshrl.u32 %v10551, 7
  %v10553 = vsub.s32 1, %v10552
  %v10554 = vrot.slane %v10346, %v10553
  %v10557 = vadd.f32 %v10532, %v10550
  %v10558 = vadd.f32 %v10545, %v10554
  %v10559 = vmax.f32 %v10557, 0.0
  %v10560 = vmax.f32 %v10558, 0.0
  %10561 = vmatprep.subr.mxu0 0.0
  %10562 = vmatpush1.msra.mxu0 %v10347
  %10563 = vmatprep.subr.mxu0 0.0
  %10564 = vmatpush1.msra.mxu0 %v10348
  %10565 = vmatprep.subr.mxu0 0.0
  %10566 = vmatpush1.msra.mxu0 %v10349
  %10567 = vmatprep.subr.mxu0 0.0
  %10568 = vmatpush1.msra.mxu0 %v10350
  %10569 = vmatprep.subr.mxu0 0.0
  %10570 = vmatpush1.msra.mxu0 %v10351
  %10571 = vmatprep.subr.mxu0 0.0
  %10572 = vmatpush1.msra.mxu0 %v10352
  %10573 = vmatprep.subr.mxu0 0.0
  %10574 = vmatpush1.msra.mxu0 %v10353
  %10575 = vmatprep.subr.mxu0 0.0
  %10576 = vmatpush1.msra.mxu0 %v10354
  %10577 = vmatprep.subr.mxu0 0.0
  %10578 = vmatpush1.msra.mxu0 %v10355
  %10579 = vmatprep.subr.mxu0 0.0
  %10580 = vmatpush1.msra.mxu0 %v10356
  %10581 = vmatprep.subr.mxu0 0.0
  %10582 = vmatpush1.msra.mxu0 %v10357
  %10583 = vmatprep.subr.mxu0 0.0
  %10584 = vmatpush1.msra.mxu0 %v10358
  %10585 = vmatprep.subr.mxu0 0.0
  %10586 = vmatpush1.msra.mxu0 %v10359
  %10587 = vmatprep.subr.mxu0 0.0
  %10588 = vmatpush1.msra.mxu0 %v10360
  %10589 = vmatprep.subr.mxu0 0.0
  %10590 = vmatpush1.msra.mxu0 %v10361
  %10591 = vmatprep.subr.mxu0 0.0
  %10592 = vmatpush1.msra.mxu0 %v10362
  %10593 = vmatprep.subr.mxu0 0.0
  %10594 = vmatpush1.msra.mxu0 %v10363
  %10595 = vmatprep.subr.mxu0 0.0
  %10596 = vmatpush1.msra.mxu0 %v10364
  %10597 = vmatprep.subr.mxu0 0.0
  %10598 = vmatpush1.msra.mxu0 %v10365
  %10599 = vmatprep.subr.mxu0 0.0
  %10600 = vmatpush1.msra.mxu0 %v10366
  %10601 = vmatprep.subr.mxu0 0.0
  %10602 = vmatpush1.msra.mxu0 %v10367
  %10603 = vmatprep.subr.mxu0 0.0
  %10604 = vmatpush1.msra.mxu0 %v10368
  %10605 = vmatprep.subr.mxu0 0.0
  %10606 = vmatpush1.msra.mxu0 %v10369
  %10607 = vmatprep.subr.mxu0 0.0
  %10608 = vmatpush1.msra.mxu0 %v10370
  %10609 = vmatprep.subr.mxu0 0.0
  %10610 = vmatpush1.msra.mxu0 %v10371
  %10611 = vmatprep.subr.mxu0 0.0
  %10612 = vmatpush1.msra.mxu0 %v10372
  %10613 = vmatprep.subr.mxu0 0.0
  %10614 = vmatpush1.msra.mxu0 %v10373
  %10615 = vmatprep.subr.mxu0 0.0
  %10616 = vmatpush1.msra.mxu0 %v10374
  %10617 = vmatprep.subr.mxu0 0.0
  %10618 = vmatpush1.msra.mxu0 %v10375
  %10619 = vmatprep.subr.mxu0 0.0
  %10620 = vmatpush1.msra.mxu0 %v10376
  %10621 = vmatprep.subr.mxu0 0.0
  %10622 = vmatpush1.msra.mxu0 %v10377
  %10623 = vmatprep.subr.mxu0 0.0
  %10624 = vmatpush1.msra.mxu0 %v10378
  %10625 = vmatprep.mubr.f32.mxu0 %v10560
  %10626 = vmatmul.mubr.f32.gmra.mrb[0].mxu0 %v10559
  %v10627 = vpop.f32.mrb[0].mxu0
  %v10628 = vadd.f32 %v10379, %v10627
  %v10629 = vpop.f32.mrb[0].mxu0
  %10630 = vdwg.mxu0
  %v10631 = vtanh.pop %v10628
  %vm10632 = vcmask 0
  %10633 = vst.msk [vmem:[%s14] sm:$0x1] %vm10632, %v10631
  %v10634 = vsel %vm10380, %v10094, -inf
  %v10635 = vsel %vm10380, %v10098, -inf
  %v10636 = vsel %vm10380, %v10104, -inf
  %v10637 = vsel %vm10380, %v10108, -inf
  %v10638 = vsel %vm10380, %v10114, -inf
  %v10639 = vmax.f32 %v10634, %v10638
  %v10640 = vsel %vm10380, %v10118, -inf
  %v10641 = vmax.f32 %v10635, %v10640
  %v10642 = vsel %vm10380, %v10124, -inf
  %v10643 = vmax.f32 %v10636, %v10642
  %v10644 = vsel %vm10380, %v10128, -inf
  %v10645 = vmax.f32 %v10637, %v10644
  %v10646 = vmax.f32 %v10639, %v10641
  %v10647 = vmax.f32 %v10643, %v10645
  %v10648 = vmax.f32 %v10646, %v10647
  %v10649 = vrot.slane %v10648, 4
  %v10650 = vmax.f32 %v10648, %v10649
  %v10651 = vrot.slane %v10650, 2
  %v10652 = vmax.f32 %v10650, %v10651
  %v10653 = vrot.slane %v10652, 1
  %v10654 = vmax.f32 %v10652, %v10653
  %v10655 = vsub.f32 %v10094, %v10654
  %v10656 = vsub.f32 %v10098, %v10654
  %v10657 = vsub.f32 %v10104, %v10654
  %v10658 = vsub.f32 %v10108, %v10654
  %v10659 = vsub.f32 %v10114, %v10654
  %v10660 = vsub.f32 %v10118, %v10654
  %v10661 = vsub.f32 %v10124, %v10654
  %v10662 = vsub.f32 %v10128, %v10654
  %v10663 = vmul.f32 %v10655, 1.442695
  %v10664 = vpow.pop %v10663
  %v10665 = vmul.f32 %v10656, 1.442695
  %v10666 = vpow.pop %v10665
  %v10667 = vmul.f32 %v10657, 1.442695
  %v10668 = vpow.pop %v10667
  %v10669 = vmul.f32 %v10658, 1.442695
  %v10670 = vpow.pop %v10669
  %v10671 = vmul.f32 %v10659, 1.442695
  %v10672 = vpow.pop %v10671
  %v10673 = vmul.f32 %v10660, 1.442695
  %v10674 = vpow.pop %v10673
  %v10675 = vmul.f32 %v10661, 1.442695
  %v10676 = vpow.pop %v10675
  %v10677 = vmul.f32 %v10662, 1.442695
  %v10678 = vpow.pop %v10677
  %v10679 = vsel %vm10380, %v10664, 0.0
  %v10680 = vsel %vm10380, %v10666, 0.0
  %v10681 = vadd.f32 %v10679, %v10680
  %v10682 = vsel %vm10380, %v10668, 0.0
  %v10683 = vadd.f32 %v10681, %v10682
  %v10684 = vsel %vm10380, %v10670, 0.0
  %v10685 = vadd.f32 %v10683, %v10684
  %v10686 = vsel %vm10380, %v10672, 0.0
  %v10687 = vadd.f32 %v10685, %v10686
  %v10688 = vsel %vm10380, %v10674, 0.0
  %v10689 = vadd.f32 %v10687, %v10688
  %v10690 = vsel %vm10380, %v10676, 0.0
  %v10691 = vadd.f32 %v10689, %v10690
  %v10692 = vsel %vm10380, %v10678, 0.0
  %v10693 = vadd.f32 %v10691, %v10692
  %v10694 = vrot.slane %v10693, 4
  %v10695 = vadd.f32 %v10693, %v10694
  %v10696 = vrot.slane %v10695, 2
  %v10697 = vadd.f32 %v10695, %v10696
  %v10698 = vrot.slane %v10697, 1
  %v10699 = vadd.f32 %v10697, %v10698
  %v10700 = vrcp.pop %v10699
  %v10701 = vmul.f32 %v10664, %v10700
  %v10702 = vmul.f32 %v10666, %v10700
  %v10703 = vmul.f32 %v10668, %v10700
  %v10704 = vmul.f32 %v10670, %v10700
  %v10705 = vmul.f32 %v10672, %v10700
  %v10706 = vmul.f32 %v10674, %v10700
  %v10707 = vmul.f32 %v10676, %v10700
  %v10708 = vmul.f32 %v10678, %v10700
  %s10709 = scalar_lea.vmem %s13, 64
  %10710 = vst.msk [vmem:[%s10709] sm:$0xff] %vm10380, %v10701
  %10711 = vst.msk [vmem:[%s10709 + $0x8] sm:$0xff] %vm10380, %v10702
  %10712 = vst.msk [vmem:[%s10709 + $0x10] sm:$0xff] %vm10380, %v10703
  %10713 = vst.msk [vmem:[%s10709 + $0x18] sm:$0xff] %vm10380, %v10704
  %10714 = vst.msk [vmem:[%s10709 + $0x20] sm:$0xff] %vm10380, %v10705
  %10715 = vst.msk [vmem:[%s10709 + $0x28] sm:$0xff] %vm10380, %v10706
  %10716 = vst.msk [vmem:[%s10709 + $0x30] sm:$0xff] %vm10380, %v10707
  %10717 = vst.msk [vmem:[%s10709 + $0x38] sm:$0xff] %vm10380, %v10708
  %10719 = vset.pattern.permute.xlu0 0
  %10720 = vperm.xlu0 %10719, %v10322
  %v10721 = vpop.permute.xlu0 %10720
  %10724 = vset.pattern.permute.xlu0 0
  %10725 = vperm.xlu0 %10724, %v10323
  %v10726 = vpop.permute.xlu0 %10725
  %10729 = vset.pattern.permute.xlu0 0
  %10730 = vperm.xlu0 %10729, %v10324
  %v10731 = vpop.permute.xlu0 %10730
  %10734 = vset.pattern.permute.xlu0 0
  %10735 = vperm.xlu0 %10734, %v10325
  %v10736 = vpop.permute.xlu0 %10735
  %10739 = vset.pattern.permute.xlu0 0
  %10740 = vperm.xlu0 %10739, %v10326
  %v10741 = vpop.permute.xlu0 %10740
  %10744 = vset.pattern.permute.xlu0 0
  %10745 = vperm.xlu0 %10744, %v10327
  %v10746 = vpop.permute.xlu0 %10745
  %10749 = vset.pattern.permute.xlu0 0
  %10750 = vperm.xlu0 %10749, %v10328
  %v10751 = vpop.permute.xlu0 %10750
  %10754 = vset.pattern.permute.xlu0 0
  %10755 = vperm.xlu0 %10754, %v10329
  %v10756 = vpop.permute.xlu0 %10755
  %v10758 = vmul.f32 %v10721, %v10330
  %v10759 = vmul.f32 %v10721, %v10331
  %v10760 = vmul.f32 %v10726, %v10332
  %v10761 = vmul.f32 %v10726, %v10333
  %v10762 = vmul.f32 %v10731, %v10334
  %v10763 = vmul.f32 %v10731, %v10335
  %v10764 = vmul.f32 %v10736, %v10336
  %v10765 = vmul.f32 %v10736, %v10337
  %v10766 = vmul.f32 %v10741, %v10338
  %v10767 = vmul.f32 %v10741, %v10339
  %v10768 = vmul.f32 %v10746, %v10340
  %v10769 = vmul.f32 %v10746, %v10341
  %v10770 = vmul.f32 %v10751, %v10342
  %v10771 = vmul.f32 %v10751, %v10343
  %v10772 = vmul.f32 %v10756, %v10344
  %v10773 = vmul.f32 %v10756, %v10345
  %v10774 = vadd.f32 %v10758, %v10760
  %v10775 = vadd.f32 %v10774, %v10762
  %v10776 = vadd.f32 %v10775, %v10764
  %v10777 = vadd.f32 %v10776, %v10766
  %v10778 = vadd.f32 %v10777, %v10768
  %v10779 = vadd.f32 %v10778, %v10770
  %v10780 = vadd.f32 %v10779, %v10772
  %v10781 = vrot.slane %v10780, 4
  %v10782 = vadd.f32 %v10780, %v10781
  %v10783 = vrot.slane %v10782, 2
  %v10784 = vadd.f32 %v10782, %v10783
  %v10785 = vrot.slane %v10784, 1
  %v10786 = vadd.f32 %v10784, %v10785
  %v10787 = vadd.f32 %v10759, %v10761
  %v10788 = vadd.f32 %v10787, %v10763
  %v10789 = vadd.f32 %v10788, %v10765
  %v10790 = vadd.f32 %v10789, %v10767
  %v10791 = vadd.f32 %v10790, %v10769
  %v10792 = vadd.f32 %v10791, %v10771
  %v10793 = vadd.f32 %v10792, %v10773
  %v10794 = vrot.slane %v10793, 4
  %v10795 = vadd.f32 %v10793, %v10794
  %v10796 = vrot.slane %v10795, 2
  %v10797 = vadd.f32 %v10795, %v10796
  %v10798 = vrot.slane %v10797, 1
  %v10799 = vadd.f32 %v10797, %v10798
  %v10800 = vadd.f32 %v10786, %v10550
  %v10801 = vadd.f32 %v10799, %v10554
  %v10802 = vmax.f32 %v10800, 0.0
  %v10803 = vmax.f32 %v10801, 0.0
  %10804 = vmatprep.subr.mxu0 0.0
  %10805 = vmatpush1.msra.mxu0 %v10347
  %10806 = vmatprep.subr.mxu0 0.0
  %10807 = vmatpush1.msra.mxu0 %v10348
  %10808 = vmatprep.subr.mxu0 0.0
  %10809 = vmatpush1.msra.mxu0 %v10349
  %10810 = vmatprep.subr.mxu0 0.0
  %10811 = vmatpush1.msra.mxu0 %v10350
  %10812 = vmatprep.subr.mxu0 0.0
  %10813 = vmatpush1.msra.mxu0 %v10351
  %10814 = vmatprep.subr.mxu0 0.0
  %10815 = vmatpush1.msra.mxu0 %v10352
  %10816 = vmatprep.subr.mxu0 0.0
  %10817 = vmatpush1.msra.mxu0 %v10353
  %10818 = vmatprep.subr.mxu0 0.0
  %10819 = vmatpush1.msra.mxu0 %v10354
  %10820 = vmatprep.subr.mxu0 0.0
  %10821 = vmatpush1.msra.mxu0 %v10355
  %10822 = vmatprep.subr.mxu0 0.0
  %10823 = vmatpush1.msra.mxu0 %v10356
  %10824 = vmatprep.subr.mxu0 0.0
  %10825 = vmatpush1.msra.mxu0 %v10357
  %10826 = vmatprep.subr.mxu0 0.0
  %10827 = vmatpush1.msra.mxu0 %v10358
  %10828 = vmatprep.subr.mxu0 0.0
  %10829 = vmatpush1.msra.mxu0 %v10359
  %10830 = vmatprep.subr.mxu0 0.0
  %10831 = vmatpush1.msra.mxu0 %v10360
  %10832 = vmatprep.subr.mxu0 0.0
  %10833 = vmatpush1.msra.mxu0 %v10361
  %10834 = vmatprep.subr.mxu0 0.0
  %10835 = vmatpush1.msra.mxu0 %v10362
  %10836 = vmatprep.subr.mxu0 0.0
  %10837 = vmatpush1.msra.mxu0 %v10363
  %10838 = vmatprep.subr.mxu0 0.0
  %10839 = vmatpush1.msra.mxu0 %v10364
  %10840 = vmatprep.subr.mxu0 0.0
  %10841 = vmatpush1.msra.mxu0 %v10365
  %10842 = vmatprep.subr.mxu0 0.0
  %10843 = vmatpush1.msra.mxu0 %v10366
  %10844 = vmatprep.subr.mxu0 0.0
  %10845 = vmatpush1.msra.mxu0 %v10367
  %10846 = vmatprep.subr.mxu0 0.0
  %10847 = vmatpush1.msra.mxu0 %v10368
  %10848 = vmatprep.subr.mxu0 0.0
  %10849 = vmatpush1.msra.mxu0 %v10369
  %10850 = vmatprep.subr.mxu0 0.0
  %10851 = vmatpush1.msra.mxu0 %v10370
  %10852 = vmatprep.subr.mxu0 0.0
  %10853 = vmatpush1.msra.mxu0 %v10371
  %10854 = vmatprep.subr.mxu0 0.0
  %10855 = vmatpush1.msra.mxu0 %v10372
  %10856 = vmatprep.subr.mxu0 0.0
  %10857 = vmatpush1.msra.mxu0 %v10373
  %10858 = vmatprep.subr.mxu0 0.0
  %10859 = vmatpush1.msra.mxu0 %v10374
  %10860 = vmatprep.subr.mxu0 0.0
  %10861 = vmatpush1.msra.mxu0 %v10375
  %10862 = vmatprep.subr.mxu0 0.0
  %10863 = vmatpush1.msra.mxu0 %v10376
  %10864 = vmatprep.subr.mxu0 0.0
  %10865 = vmatpush1.msra.mxu0 %v10377
  %10866 = vmatprep.subr.mxu0 0.0
  %10867 = vmatpush1.msra.mxu0 %v10378
  %10868 = vmatprep.mubr.f32.mxu0 %v10803
  %10869 = vmatmul.mubr.f32.gmra.mrb[0].mxu0 %v10802
  %v10870 = vpop.f32.mrb[0].mxu0
  %v10871 = vadd.f32 %v10379, %v10870
  %v10872 = vpop.f32.mrb[0].mxu0
  %10873 = vdwg.mxu0
  %v10874 = vtanh.pop %v10871
  %s10875 = scalar_lea.vmem %s14, 1
  %10876 = vst.msk [vmem:[%s10875] sm:$0x1] %vm10632, %v10874
  // Predicated region
  $region54: #{acnet_forward.1} parent=0 // pred_check
    _
  $region55: #{acnet_forward.1} parent=0 // pred_check_branch
    %10878 = sbr.rel (0) target = $region57
  $region56: #{acnet_forward.1} parent=0 // pred_region
    _
  $region57: #{acnet_forward.1} parent=0 // pred_fallthru
    _
  // Predicated region
  $region58: #{acnet_forward.1} parent=0 // pred_check
    _
  $region59: #{acnet_forward.1} parent=0 // pred_check_branch
    %10880 = sbr.rel (0) target = $region61
  $region60: #{acnet_forward.1} parent=0 // pred_region
    _
  $region61: #{acnet_forward.1} parent=0 // pred_fallthru
    _
  // Predicated region
  $region62: #{acnet_forward.1} parent=0 // pred_check
    _
  $region63: #{acnet_forward.1} parent=0 // pred_check_branch
    %10882 = sbr.rel (0) target = $region65
  $region64: #{acnet_forward.1} parent=0 // pred_region
    _
  $region65: #{acnet_forward.1} parent=0 // pred_fallthru
    _
  // Predicated region
  $region66: #{acnet_forward.1} parent=0 // pred_check
    _
  $region67: #{acnet_forward.1} parent=0 // pred_check_branch
    %10884 = sbr.rel (0) target = $region69
  $region68: #{acnet_forward.1} parent=0 // pred_region
    _
  $region69: #{acnet_forward.1} parent=0 // pred_fallthru
    _

</llo_original>
